<compile_context>
chip_gen: v6e
topology: v6e:2x2x1
jax: 0.10.0
libtpu: 0.0.40
codegen_flags: <defaults>
</compile_context>

<pallas_src>
import math

import jax
import jax.numpy as jnp
from jax.experimental import pallas as pl
from jax.experimental.pallas import tpu as pltpu

BT = 4   # images packed into the 128-lane axis
CP = 32  # channel slots per image (conv channels padded to 32); BT*CP == 128


# ----------------------------- kernel A: conv stage ---------------------------

def _conv_stage_kernel(x_ref, w1_ref, b1_ref, w2_ref, b2_ref, o_ref, s1, p1s, s2):
    # x_ref  : (28, 28, 128)  input pixels, lane = img*32 + replica
    # w1_ref : (32, 128)      conv1 tap t=di*5+dj -> lane img*32+c = w1[c,0,di,dj]
    # b1_ref : (1, 128)
    # w2_ref : (25, 128, 128) conv2 taps, block-diagonal (ci -> co) per image
    # b2_ref : (1, 128)
    # o_ref  : (4, 4, 128)    pooled conv2 output, lane = img*32 + co

    # ---- conv1 (5x5, Cin=1): 25 lane-dense VPU broadcast-MACs ----
    acc = None
    for di in range(5):
        for dj in range(5):
            xs = x_ref[pl.ds(di, 24), pl.ds(dj, 24), :]            # (24,24,128)
            t = xs * w1_ref[di * 5 + dj].reshape(1, 1, 128)
            acc = t if acc is None else acc + t
    acc = acc + b1_ref[0].reshape(1, 1, 128)                       # (24,24,128)

    # ---- 2x2 max-pool, then relu ----
    accp = acc.reshape(12, 2, 24, 128)                             # split H (leading)
    s1[...] = jnp.maximum(accp[:, 0], accp[:, 1])                  # (12,24,128)
    p1 = jnp.maximum(s1[:, pl.ds(0, 12, stride=2), :],             # pool over W
                     s1[:, pl.ds(1, 12, stride=2), :])
    p1s[...] = jnp.maximum(p1, 0.0)                                # (12,12,128)

    # ---- conv2 (5x5, Cin=10): 25 block-diagonal MXU matmuls ----
    acc2 = None
    for di in range(5):
        for dj in range(5):
            xs = p1s[pl.ds(di, 8), pl.ds(dj, 8), :].reshape(64, 128)
            t = jnp.dot(xs, w2_ref[di * 5 + dj],
                        preferred_element_type=jnp.float32)
            acc2 = t if acc2 is None else acc2 + t
    acc2 = acc2 + b2_ref[0].reshape(1, 128)                        # (64,128) rows = h*8+w

    # ---- 2x2 max-pool, then relu ----
    y2 = acc2.reshape(4, 2, 8, 128)                                # split H
    s2[...] = jnp.maximum(y2[:, 0], y2[:, 1])                      # (4,8,128)
    p2 = jnp.maximum(s2[:, pl.ds(0, 4, stride=2), :],
                     s2[:, pl.ds(1, 4, stride=2), :])
    o_ref[...] = jnp.maximum(p2, 0.0)                              # (4,4,128)


def conv_stage(x_rep, w1t, b1t, w2blk, b2t):
    G = x_rep.shape[-1] // 128
    flops = G * (24 * 24 * 128 * 25 * 2 + 64 * 128 * 128 * 25 * 2)
    bytes_accessed = 4 * (G * (28 * 28 * 128 + 4 * 4 * 128)
                          + 32 * 128 + 128 + 25 * 128 * 128 + 128)
    return pl.pallas_call(
        _conv_stage_kernel,
        out_shape=jax.ShapeDtypeStruct((4, 4, G * 128), jnp.float32),
        grid_spec=pltpu.PrefetchScalarGridSpec(
            num_scalar_prefetch=0,
            grid=(G,),
            in_specs=[
                pl.BlockSpec((28, 28, 128), lambda i: (0, 0, i)),
                pl.BlockSpec((32, 128), lambda i: (0, 0)),
                pl.BlockSpec((1, 128), lambda i: (0, 0)),
                pl.BlockSpec((25, 128, 128), lambda i: (0, 0, 0)),
                pl.BlockSpec((1, 128), lambda i: (0, 0)),
            ],
            out_specs=pl.BlockSpec((4, 4, 128), lambda i: (0, 0, i)),
            scratch_shapes=[
                pltpu.VMEM((12, 24, 128), jnp.float32),   # H-pooled conv1
                pltpu.VMEM((12, 12, 128), jnp.float32),   # pooled+relu conv1
                pltpu.VMEM((4, 8, 128), jnp.float32),     # H-pooled conv2
            ],
        ),
        compiler_params=pltpu.CompilerParams(
            dimension_semantics=("parallel",),
            vmem_limit_bytes=32 * 1024 * 1024,
        ),
        cost_estimate=pl.CostEstimate(
            flops=flops, transcendentals=0, bytes_accessed=bytes_accessed),
    )(x_rep, w1t, b1t, w2blk, b2t)


# ----------------------------- kernel B: fc stage -----------------------------

def _fc_kernel(x_ref, w1_ref, b1_ref, w2_ref, b2_ref, o_ref):
    h = jnp.dot(x_ref[...], w1_ref[...],
                preferred_element_type=jnp.float32) + b1_ref[...]
    h = jnp.maximum(h, 0.0)
    # padded logit lanes (>=10) carry a -1e9 bias, so max/exp/log ignore them
    logits = jnp.dot(h, w2_ref[...],
                     preferred_element_type=jnp.float32) + b2_ref[...]
    m = jnp.max(logits, axis=-1, keepdims=True)
    s = logits - m
    lse = jnp.log(jnp.sum(jnp.exp(s), axis=-1, keepdims=True))
    o_ref[...] = s - lse                                           # (RT,128) lane-dense


def fc_stage(yf, wf1p, bf1p, wf2p, bf2p, RT):
    M = yf.shape[0]
    return pl.pallas_call(
        _fc_kernel,
        out_shape=jax.ShapeDtypeStruct((M, 128), jnp.float32),
        grid_spec=pltpu.PrefetchScalarGridSpec(
            num_scalar_prefetch=0,
            grid=(M // RT,),
            in_specs=[
                pl.BlockSpec((RT, 512), lambda i: (i, 0)),
                pl.BlockSpec((512, 64), lambda i: (0, 0)),
                pl.BlockSpec((1, 64), lambda i: (0, 0)),
                pl.BlockSpec((64, 128), lambda i: (0, 0)),
                pl.BlockSpec((1, 128), lambda i: (0, 0)),
            ],
            out_specs=pl.BlockSpec((RT, 128), lambda i: (i, 0)),
        ),
        compiler_params=pltpu.CompilerParams(
            dimension_semantics=("parallel",),
            vmem_limit_bytes=32 * 1024 * 1024,
        ),
        cost_estimate=pl.CostEstimate(
            flops=2 * M * (512 * 64 + 64 * 128),
            transcendentals=M * 128,
            bytes_accessed=4 * (M * 512 + 512 * 64 + 64 * 128 + M * 128)),
    )(yf, wf1p, bf1p, wf2p, bf2p)


# ----------------------------- params -----------------------------------------

def init_raw_params(key):
    """PyTorch-layout synthetic params, U(-1/sqrt(fan_in), +1/sqrt(fan_in))."""
    ks = jax.random.split(key, 8)

    def u(k, shape, fan_in):
        b = 1.0 / math.sqrt(fan_in)
        return jax.random.uniform(k, shape, jnp.float32, -b, b)

    return {
        "w1": u(ks[0], (10, 1, 5, 5), 25),   "b1": u(ks[1], (10,), 25),
        "w2": u(ks[2], (20, 10, 5, 5), 250), "b2": u(ks[3], (20,), 250),
        "wf1": u(ks[4], (50, 320), 320),     "bf1": u(ks[5], (50,), 320),
        "wf2": u(ks[6], (10, 50), 50),       "bf2": u(ks[7], (10,), 50),
    }


def prep_params(raw):
    """One-time packing/padding into the lane-fused TPU layouts."""
    w1, b1 = raw["w1"], raw["b1"]
    w2, b2 = raw["w2"], raw["b2"]
    wf1, bf1 = raw["wf1"], raw["bf1"]
    wf2, bf2 = raw["wf2"], raw["bf2"]

    # conv1: tap-major (25,10) -> pad channels to CP, tile across the BT images
    t1 = jnp.transpose(w1[:, 0], (1, 2, 0)).reshape(25, 10)
    t1 = jnp.pad(t1, ((0, 7), (0, CP - 10)))                       # (32, 32)
    w1t = jnp.tile(t1, (1, BT))                                    # (32, 128)
    b1t = jnp.tile(jnp.pad(b1, (0, CP - 10)), BT).reshape(1, 128)

    # conv2: tap-major (25,cin,cout) -> block-diagonal over the BT images
    t2 = jnp.transpose(w2, (2, 3, 1, 0)).reshape(25, 10, 20)
    t2 = jnp.pad(t2, ((0, 0), (0, CP - 10), (0, CP - 20)))         # (25, 32, 32)
    eye = jnp.eye(BT, dtype=jnp.float32)
    w2blk = (eye[None, :, None, :, None]
             * t2[:, None, :, None, :]).reshape(25, 128, 128)
    b2t = jnp.tile(jnp.pad(b2, (0, CP - 20)), BT).reshape(1, 128)

    # fc1: permute input rows so the kernel-A output order (h*128 + w*32 + c)
    # feeds it directly (torch flatten order is c*16 + h*4 + w); hidden 50->64
    wf1_in = wf1.T.reshape(20, 4, 4, 50)                           # [c, h, w, o]
    wf1p = jnp.zeros((4, 4, CP, 64), jnp.float32)
    wf1p = wf1p.at[:, :, :20, :50].set(jnp.transpose(wf1_in, (1, 2, 0, 3)))
    wf1p = wf1p.reshape(4 * 4 * CP, 64)                            # (512, 64)
    bf1p = jnp.pad(bf1, (0, 14)).reshape(1, 64)

    # fc2: pad output lanes to 128 (lane-dense stores); padded lanes get a
    # -1e9 bias so they never affect the softmax max / sum.
    wf2p = jnp.zeros((64, 128), jnp.float32).at[:50, :10].set(wf2.T)
    bf2p = jnp.full((1, 128), -1e9, jnp.float32).at[0, :10].set(bf2)

    return {"w1t": w1t, "b1t": b1t, "w2blk": w2blk, "b2t": b2t,
            "wf1p": wf1p, "bf1p": bf1p, "wf2p": wf2p, "bf2p": bf2p}


# ----------------------------- forward pass ------------------------------------

def net_forward(x_nchw, p):
    N = x_nchw.shape[0]
    G = (N + BT - 1) // BT
    Npad = G * BT

    # NCHW -> (28, 28, Npad*CP): lane = img*CP + replica (tiny XLA prep, no im2col)
    xp = jnp.pad(x_nchw[:, 0], ((0, Npad - N), (0, 0), (0, 0)))    # (Npad,28,28)
    xr = jnp.transpose(xp, (1, 2, 0))                              # (28,28,Npad)
    xr = jnp.broadcast_to(xr[..., None], (28, 28, Npad, CP))
    xr = xr.reshape(28, 28, Npad * CP)

    y = conv_stage(xr, p["w1t"], p["b1t"], p["w2blk"], p["b2t"])   # (4,4,Npad*CP)

    # pull the batch index out of the lane axis (tiny (Npad,512) shuffle)
    y = y.reshape(4, 4, G, BT, CP).transpose(2, 3, 0, 1, 4).reshape(Npad, 4 * 4 * CP)
    y = y[:N]

    rows8 = ((N + 7) // 8) * 8
    RT = 256 if rows8 >= 256 else rows8
    Npad2 = ((N + RT - 1) // RT) * RT
    yf = jnp.pad(y, ((0, Npad2 - N), (0, 0)))

    out = fc_stage(yf, p["wf1p"], p["bf1p"], p["wf2p"], p["bf2p"], RT)
    return out[:N, :10]


# ----------------------------- pure-JAX reference ------------------------------

def reference_forward(x, raw):
    dn = ("NCHW", "OIHW", "NCHW")
    hp = jax.lax.Precision.HIGHEST
    y = jax.lax.conv_general_dilated(x, raw["w1"], (1, 1), "VALID",
                                     dimension_numbers=dn, precision=hp)
    y = y + raw["b1"].reshape(1, -1, 1, 1)
    y = jax.lax.reduce_window(y, -jnp.inf, jax.lax.max,
                              (1, 1, 2, 2), (1, 1, 2, 2), "VALID")
    y = jnp.maximum(y, 0.0)
    y = jax.lax.conv_general_dilated(y, raw["w2"], (1, 1), "VALID",
                                     dimension_numbers=dn, precision=hp)
    y = y + raw["b2"].reshape(1, -1, 1, 1)
    y = jax.lax.reduce_window(y, -jnp.inf, jax.lax.max,
                              (1, 1, 2, 2), (1, 1, 2, 2), "VALID")
    y = jnp.maximum(y, 0.0)
    y = y.reshape(x.shape[0], 320)
    y = jnp.maximum(y @ raw["wf1"].T + raw["bf1"], 0.0)
    y = y @ raw["wf2"].T + raw["bf2"]
    return jax.nn.log_softmax(y, axis=-1)


# ----------------------------- main ---------------------------------------------

if __name__ == "__main__":
    key = jax.random.PRNGKey(0)
    k_param, k_input = jax.random.split(key)

    raw = init_raw_params(k_param)
    params = prep_params(raw)

    # input: batch=2, MNIST-style (N, C=1, H=28, W=28), NCHW
    x = jax.random.normal(k_input, (2, 1, 28, 28), dtype=jnp.float32)

    out = jax.jit(net_forward)(x, params)
    out = jax.block_until_ready(out)

    assert out.shape == (2, 10), out.shape
    # log_softmax rows must sum to ~1 in prob space
    assert jnp.allclose(jnp.sum(jnp.exp(out), axis=-1), 1.0, atol=1e-4)

    # numerical check against the pure-JAX reference of the PyTorch Net
    ref = reference_forward(x, raw)
    max_err = float(jnp.max(jnp.abs(out - ref)))
    assert jnp.allclose(out, ref, atol=5e-2, rtol=0.0), max_err

    print("KERNEL_OK")
</pallas_src>

<mosaic_0001>
module attributes {stable_mosaic.version = 11 : i64} {
  func.func @_conv_stage_kernel(%arg0: i32, %arg1: memref<28x28x128xf32, #tpu.memory_space<vmem>>, %arg2: memref<32x128xf32, #tpu.memory_space<vmem>>, %arg3: memref<1x128xf32, #tpu.memory_space<vmem>>, %arg4: memref<25x128x128xf32, #tpu.memory_space<vmem>>, %arg5: memref<1x128xf32, #tpu.memory_space<vmem>>, %arg6: memref<4x4x128xf32, #tpu.memory_space<vmem>>, %arg7: memref<12x24x128xf32, #tpu.memory_space<vmem>>, %arg8: memref<12x12x128xf32, #tpu.memory_space<vmem>>, %arg9: memref<4x8x128xf32, #tpu.memory_space<vmem>>) attributes {dimension_semantics = [#tpu.dimension_semantics<parallel>], iteration_bounds = array<i64: 1>, scalar_prefetch = 0 : i64, scratch_operands = 3 : i64, tpu.core_type = #tpu.core_type<tc>, window_params = [{transform_indices = @transform_0, window_bounds = array<i64: 28, 28, 128>}, {pipeline_mode = #tpu.pipeline_mode<synchronous>, transform_indices = @transform_1, window_bounds = array<i64: 32, 128>}, {pipeline_mode = #tpu.pipeline_mode<synchronous>, transform_indices = @transform_2, window_bounds = array<i64: 1, 128>}, {pipeline_mode = #tpu.pipeline_mode<synchronous>, transform_indices = @transform_3, window_bounds = array<i64: 25, 128, 128>}, {pipeline_mode = #tpu.pipeline_mode<synchronous>, transform_indices = @transform_4, window_bounds = array<i64: 1, 128>}, {transform_indices = @transform_5, window_bounds = array<i64: 4, 4, 128>}]} {
    %c0 = arith.constant 0 : index
    %c0_0 = arith.constant 0 : index
    %c0_1 = arith.constant 0 : index
    %0 = vector.load %arg1[%c0, %c0_0, %c0_1] : memref<28x28x128xf32, #tpu.memory_space<vmem>>, vector<24x24x128xf32>
    %c0_2 = arith.constant 0 : index
    %c0_3 = arith.constant 0 : index
    %1 = vector.load %arg2[%c0_2, %c0_3] : memref<32x128xf32, #tpu.memory_space<vmem>>, vector<1x128xf32>
    %2 = vector.shape_cast %1 : vector<1x128xf32> to vector<128xf32>
    %3 = vector.shape_cast %2 : vector<128xf32> to vector<1x1x128xf32>
    %4 = vector.broadcast %3 : vector<1x1x128xf32> to vector<24x24x128xf32>
    %5 = arith.mulf %0, %4 : vector<24x24x128xf32>
    %c0_4 = arith.constant 0 : index
    %c1 = arith.constant 1 : index
    %c0_5 = arith.constant 0 : index
    %6 = vector.load %arg1[%c0_4, %c1, %c0_5] : memref<28x28x128xf32, #tpu.memory_space<vmem>>, vector<24x24x128xf32>
    %c1_6 = arith.constant 1 : index
    %c0_7 = arith.constant 0 : index
    %7 = vector.load %arg2[%c1_6, %c0_7] : memref<32x128xf32, #tpu.memory_space<vmem>>, vector<1x128xf32>
    %8 = vector.shape_cast %7 : vector<1x128xf32> to vector<128xf32>
    %9 = vector.shape_cast %8 : vector<128xf32> to vector<1x1x128xf32>
    %10 = vector.broadcast %9 : vector<1x1x128xf32> to vector<24x24x128xf32>
    %11 = arith.mulf %6, %10 : vector<24x24x128xf32>
    %12 = arith.addf %5, %11 : vector<24x24x128xf32>
    %c0_8 = arith.constant 0 : index
    %c2 = arith.constant 2 : index
    %c0_9 = arith.constant 0 : index
    %13 = vector.load %arg1[%c0_8, %c2, %c0_9] : memref<28x28x128xf32, #tpu.memory_space<vmem>>, vector<24x24x128xf32>
    %c2_10 = arith.constant 2 : index
    %c0_11 = arith.constant 0 : index
    %14 = vector.load %arg2[%c2_10, %c0_11] : memref<32x128xf32, #tpu.memory_space<vmem>>, vector<1x128xf32>
    %15 = vector.shape_cast %14 : vector<1x128xf32> to vector<128xf32>
    %16 = vector.shape_cast %15 : vector<128xf32> to vector<1x1x128xf32>
    %17 = vector.broadcast %16 : vector<1x1x128xf32> to vector<24x24x128xf32>
    %18 = arith.mulf %13, %17 : vector<24x24x128xf32>
    %19 = arith.addf %12, %18 : vector<24x24x128xf32>
    %c0_12 = arith.constant 0 : index
    %c3 = arith.constant 3 : index
    %c0_13 = arith.constant 0 : index
    %20 = vector.load %arg1[%c0_12, %c3, %c0_13] : memref<28x28x128xf32, #tpu.memory_space<vmem>>, vector<24x24x128xf32>
    %c3_14 = arith.constant 3 : index
    %c0_15 = arith.constant 0 : index
    %21 = vector.load %arg2[%c3_14, %c0_15] : memref<32x128xf32, #tpu.memory_space<vmem>>, vector<1x128xf32>
    %22 = vector.shape_cast %21 : vector<1x128xf32> to vector<128xf32>
    %23 = vector.shape_cast %22 : vector<128xf32> to vector<1x1x128xf32>
    %24 = vector.broadcast %23 : vector<1x1x128xf32> to vector<24x24x128xf32>
    %25 = arith.mulf %20, %24 : vector<24x24x128xf32>
    %26 = arith.addf %19, %25 : vector<24x24x128xf32>
    %c0_16 = arith.constant 0 : index
    %c4 = arith.constant 4 : index
    %c0_17 = arith.constant 0 : index
    %27 = vector.load %arg1[%c0_16, %c4, %c0_17] : memref<28x28x128xf32, #tpu.memory_space<vmem>>, vector<24x24x128xf32>
    %c4_18 = arith.constant 4 : index
    %c0_19 = arith.constant 0 : index
    %28 = vector.load %arg2[%c4_18, %c0_19] : memref<32x128xf32, #tpu.memory_space<vmem>>, vector<1x128xf32>
    %29 = vector.shape_cast %28 : vector<1x128xf32> to vector<128xf32>
    %30 = vector.shape_cast %29 : vector<128xf32> to vector<1x1x128xf32>
    %31 = vector.broadcast %30 : vector<1x1x128xf32> to vector<24x24x128xf32>
    %32 = arith.mulf %27, %31 : vector<24x24x128xf32>
    %33 = arith.addf %26, %32 : vector<24x24x128xf32>
    %c1_20 = arith.constant 1 : index
    %c0_21 = arith.constant 0 : index
    %c0_22 = arith.constant 0 : index
    %34 = vector.load %arg1[%c1_20, %c0_21, %c0_22] : memref<28x28x128xf32, #tpu.memory_space<vmem>>, vector<24x24x128xf32>
    %c5 = arith.constant 5 : index
    %c0_23 = arith.constant 0 : index
    %35 = vector.load %arg2[%c5, %c0_23] : memref<32x128xf32, #tpu.memory_space<vmem>>, vector<1x128xf32>
    %36 = vector.shape_cast %35 : vector<1x128xf32> to vector<128xf32>
    %37 = vector.shape_cast %36 : vector<128xf32> to vector<1x1x128xf32>
    %38 = vector.broadcast %37 : vector<1x1x128xf32> to vector<24x24x128xf32>
    %39 = arith.mulf %34, %38 : vector<24x24x128xf32>
    %40 = arith.addf %33, %39 : vector<24x24x128xf32>
    %c1_24 = arith.constant 1 : index
    %c1_25 = arith.constant 1 : index
    %c0_26 = arith.constant 0 : index
    %41 = vector.load %arg1[%c1_24, %c1_25, %c0_26] : memref<28x28x128xf32, #tpu.memory_space<vmem>>, vector<24x24x128xf32>
    %c6 = arith.constant 6 : index
    %c0_27 = arith.constant 0 : index
    %42 = vector.load %arg2[%c6, %c0_27] : memref<32x128xf32, #tpu.memory_space<vmem>>, vector<1x128xf32>
    %43 = vector.shape_cast %42 : vector<1x128xf32> to vector<128xf32>
    %44 = vector.shape_cast %43 : vector<128xf32> to vector<1x1x128xf32>
    %45 = vector.broadcast %44 : vector<1x1x128xf32> to vector<24x24x128xf32>
    %46 = arith.mulf %41, %45 : vector<24x24x128xf32>
    %47 = arith.addf %40, %46 : vector<24x24x128xf32>
    %c1_28 = arith.constant 1 : index
    %c2_29 = arith.constant 2 : index
    %c0_30 = arith.constant 0 : index
    %48 = vector.load %arg1[%c1_28, %c2_29, %c0_30] : memref<28x28x128xf32, #tpu.memory_space<vmem>>, vector<24x24x128xf32>
    %c7 = arith.constant 7 : index
    %c0_31 = arith.constant 0 : index
    %49 = vector.load %arg2[%c7, %c0_31] : memref<32x128xf32, #tpu.memory_space<vmem>>, vector<1x128xf32>
    %50 = vector.shape_cast %49 : vector<1x128xf32> to vector<128xf32>
    %51 = vector.shape_cast %50 : vector<128xf32> to vector<1x1x128xf32>
    %52 = vector.broadcast %51 : vector<1x1x128xf32> to vector<24x24x128xf32>
    %53 = arith.mulf %48, %52 : vector<24x24x128xf32>
    %54 = arith.addf %47, %53 : vector<24x24x128xf32>
    %c1_32 = arith.constant 1 : index
    %c3_33 = arith.constant 3 : index
    %c0_34 = arith.constant 0 : index
    %55 = vector.load %arg1[%c1_32, %c3_33, %c0_34] : memref<28x28x128xf32, #tpu.memory_space<vmem>>, vector<24x24x128xf32>
    %c8 = arith.constant 8 : index
    %c0_35 = arith.constant 0 : index
    %56 = vector.load %arg2[%c8, %c0_35] : memref<32x128xf32, #tpu.memory_space<vmem>>, vector<1x128xf32>
    %57 = vector.shape_cast %56 : vector<1x128xf32> to vector<128xf32>
    %58 = vector.shape_cast %57 : vector<128xf32> to vector<1x1x128xf32>
    %59 = vector.broadcast %58 : vector<1x1x128xf32> to vector<24x24x128xf32>
    %60 = arith.mulf %55, %59 : vector<24x24x128xf32>
    %61 = arith.addf %54, %60 : vector<24x24x128xf32>
    %c1_36 = arith.constant 1 : index
    %c4_37 = arith.constant 4 : index
    %c0_38 = arith.constant 0 : index
    %62 = vector.load %arg1[%c1_36, %c4_37, %c0_38] : memref<28x28x128xf32, #tpu.memory_space<vmem>>, vector<24x24x128xf32>
    %c9 = arith.constant 9 : index
    %c0_39 = arith.constant 0 : index
    %63 = vector.load %arg2[%c9, %c0_39] : memref<32x128xf32, #tpu.memory_space<vmem>>, vector<1x128xf32>
    %64 = vector.shape_cast %63 : vector<1x128xf32> to vector<128xf32>
    %65 = vector.shape_cast %64 : vector<128xf32> to vector<1x1x128xf32>
    %66 = vector.broadcast %65 : vector<1x1x128xf32> to vector<24x24x128xf32>
    %67 = arith.mulf %62, %66 : vector<24x24x128xf32>
    %68 = arith.addf %61, %67 : vector<24x24x128xf32>
    %c2_40 = arith.constant 2 : index
    %c0_41 = arith.constant 0 : index
    %c0_42 = arith.constant 0 : index
    %69 = vector.load %arg1[%c2_40, %c0_41, %c0_42] : memref<28x28x128xf32, #tpu.memory_space<vmem>>, vector<24x24x128xf32>
    %c10 = arith.constant 10 : index
    %c0_43 = arith.constant 0 : index
    %70 = vector.load %arg2[%c10, %c0_43] : memref<32x128xf32, #tpu.memory_space<vmem>>, vector<1x128xf32>
    %71 = vector.shape_cast %70 : vector<1x128xf32> to vector<128xf32>
    %72 = vector.shape_cast %71 : vector<128xf32> to vector<1x1x128xf32>
    %73 = vector.broadcast %72 : vector<1x1x128xf32> to vector<24x24x128xf32>
    %74 = arith.mulf %69, %73 : vector<24x24x128xf32>
    %75 = arith.addf %68, %74 : vector<24x24x128xf32>
    %c2_44 = arith.constant 2 : index
    %c1_45 = arith.constant 1 : index
    %c0_46 = arith.constant 0 : index
    %76 = vector.load %arg1[%c2_44, %c1_45, %c0_46] : memref<28x28x128xf32, #tpu.memory_space<vmem>>, vector<24x24x128xf32>
    %c11 = arith.constant 11 : index
    %c0_47 = arith.constant 0 : index
    %77 = vector.load %arg2[%c11, %c0_47] : memref<32x128xf32, #tpu.memory_space<vmem>>, vector<1x128xf32>
    %78 = vector.shape_cast %77 : vector<1x128xf32> to vector<128xf32>
    %79 = vector.shape_cast %78 : vector<128xf32> to vector<1x1x128xf32>
    %80 = vector.broadcast %79 : vector<1x1x128xf32> to vector<24x24x128xf32>
    %81 = arith.mulf %76, %80 : vector<24x24x128xf32>
    %82 = arith.addf %75, %81 : vector<24x24x128xf32>
    %c2_48 = arith.constant 2 : index
    %c2_49 = arith.constant 2 : index
    %c0_50 = arith.constant 0 : index
    %83 = vector.load %arg1[%c2_48, %c2_49, %c0_50] : memref<28x28x128xf32, #tpu.memory_space<vmem>>, vector<24x24x128xf32>
    %c12 = arith.constant 12 : index
    %c0_51 = arith.constant 0 : index
    %84 = vector.load %arg2[%c12, %c0_51] : memref<32x128xf32, #tpu.memory_space<vmem>>, vector<1x128xf32>
    %85 = vector.shape_cast %84 : vector<1x128xf32> to vector<128xf32>
    %86 = vector.shape_cast %85 : vector<128xf32> to vector<1x1x128xf32>
    %87 = vector.broadcast %86 : vector<1x1x128xf32> to vector<24x24x128xf32>
    %88 = arith.mulf %83, %87 : vector<24x24x128xf32>
    %89 = arith.addf %82, %88 : vector<24x24x128xf32>
    %c2_52 = arith.constant 2 : index
    %c3_53 = arith.constant 3 : index
    %c0_54 = arith.constant 0 : index
    %90 = vector.load %arg1[%c2_52, %c3_53, %c0_54] : memref<28x28x128xf32, #tpu.memory_space<vmem>>, vector<24x24x128xf32>
    %c13 = arith.constant 13 : index
    %c0_55 = arith.constant 0 : index
    %91 = vector.load %arg2[%c13, %c0_55] : memref<32x128xf32, #tpu.memory_space<vmem>>, vector<1x128xf32>
    %92 = vector.shape_cast %91 : vector<1x128xf32> to vector<128xf32>
    %93 = vector.shape_cast %92 : vector<128xf32> to vector<1x1x128xf32>
    %94 = vector.broadcast %93 : vector<1x1x128xf32> to vector<24x24x128xf32>
    %95 = arith.mulf %90, %94 : vector<24x24x128xf32>
    %96 = arith.addf %89, %95 : vector<24x24x128xf32>
    %c2_56 = arith.constant 2 : index
    %c4_57 = arith.constant 4 : index
    %c0_58 = arith.constant 0 : index
    %97 = vector.load %arg1[%c2_56, %c4_57, %c0_58] : memref<28x28x128xf32, #tpu.memory_space<vmem>>, vector<24x24x128xf32>
    %c14 = arith.constant 14 : index
    %c0_59 = arith.constant 0 : index
    %98 = vector.load %arg2[%c14, %c0_59] : memref<32x128xf32, #tpu.memory_space<vmem>>, vector<1x128xf32>
    %99 = vector.shape_cast %98 : vector<1x128xf32> to vector<128xf32>
    %100 = vector.shape_cast %99 : vector<128xf32> to vector<1x1x128xf32>
    %101 = vector.broadcast %100 : vector<1x1x128xf32> to vector<24x24x128xf32>
    %102 = arith.mulf %97, %101 : vector<24x24x128xf32>
    %103 = arith.addf %96, %102 : vector<24x24x128xf32>
    %c3_60 = arith.constant 3 : index
    %c0_61 = arith.constant 0 : index
    %c0_62 = arith.constant 0 : index
    %104 = vector.load %arg1[%c3_60, %c0_61, %c0_62] : memref<28x28x128xf32, #tpu.memory_space<vmem>>, vector<24x24x128xf32>
    %c15 = arith.constant 15 : index
    %c0_63 = arith.constant 0 : index
    %105 = vector.load %arg2[%c15, %c0_63] : memref<32x128xf32, #tpu.memory_space<vmem>>, vector<1x128xf32>
    %106 = vector.shape_cast %105 : vector<1x128xf32> to vector<128xf32>
    %107 = vector.shape_cast %106 : vector<128xf32> to vector<1x1x128xf32>
    %108 = vector.broadcast %107 : vector<1x1x128xf32> to vector<24x24x128xf32>
    %109 = arith.mulf %104, %108 : vector<24x24x128xf32>
    %110 = arith.addf %103, %109 : vector<24x24x128xf32>
    %c3_64 = arith.constant 3 : index
    %c1_65 = arith.constant 1 : index
    %c0_66 = arith.constant 0 : index
    %111 = vector.load %arg1[%c3_64, %c1_65, %c0_66] : memref<28x28x128xf32, #tpu.memory_space<vmem>>, vector<24x24x128xf32>
    %c16 = arith.constant 16 : index
    %c0_67 = arith.constant 0 : index
    %112 = vector.load %arg2[%c16, %c0_67] : memref<32x128xf32, #tpu.memory_space<vmem>>, vector<1x128xf32>
    %113 = vector.shape_cast %112 : vector<1x128xf32> to vector<128xf32>
    %114 = vector.shape_cast %113 : vector<128xf32> to vector<1x1x128xf32>
    %115 = vector.broadcast %114 : vector<1x1x128xf32> to vector<24x24x128xf32>
    %116 = arith.mulf %111, %115 : vector<24x24x128xf32>
    %117 = arith.addf %110, %116 : vector<24x24x128xf32>
    %c3_68 = arith.constant 3 : index
    %c2_69 = arith.constant 2 : index
    %c0_70 = arith.constant 0 : index
    %118 = vector.load %arg1[%c3_68, %c2_69, %c0_70] : memref<28x28x128xf32, #tpu.memory_space<vmem>>, vector<24x24x128xf32>
    %c17 = arith.constant 17 : index
    %c0_71 = arith.constant 0 : index
    %119 = vector.load %arg2[%c17, %c0_71] : memref<32x128xf32, #tpu.memory_space<vmem>>, vector<1x128xf32>
    %120 = vector.shape_cast %119 : vector<1x128xf32> to vector<128xf32>
    %121 = vector.shape_cast %120 : vector<128xf32> to vector<1x1x128xf32>
    %122 = vector.broadcast %121 : vector<1x1x128xf32> to vector<24x24x128xf32>
    %123 = arith.mulf %118, %122 : vector<24x24x128xf32>
    %124 = arith.addf %117, %123 : vector<24x24x128xf32>
    %c3_72 = arith.constant 3 : index
    %c3_73 = arith.constant 3 : index
    %c0_74 = arith.constant 0 : index
    %125 = vector.load %arg1[%c3_72, %c3_73, %c0_74] : memref<28x28x128xf32, #tpu.memory_space<vmem>>, vector<24x24x128xf32>
    %c18 = arith.constant 18 : index
    %c0_75 = arith.constant 0 : index
    %126 = vector.load %arg2[%c18, %c0_75] : memref<32x128xf32, #tpu.memory_space<vmem>>, vector<1x128xf32>
    %127 = vector.shape_cast %126 : vector<1x128xf32> to vector<128xf32>
    %128 = vector.shape_cast %127 : vector<128xf32> to vector<1x1x128xf32>
    %129 = vector.broadcast %128 : vector<1x1x128xf32> to vector<24x24x128xf32>
    %130 = arith.mulf %125, %129 : vector<24x24x128xf32>
    %131 = arith.addf %124, %130 : vector<24x24x128xf32>
    %c3_76 = arith.constant 3 : index
    %c4_77 = arith.constant 4 : index
    %c0_78 = arith.constant 0 : index
    %132 = vector.load %arg1[%c3_76, %c4_77, %c0_78] : memref<28x28x128xf32, #tpu.memory_space<vmem>>, vector<24x24x128xf32>
    %c19 = arith.constant 19 : index
    %c0_79 = arith.constant 0 : index
    %133 = vector.load %arg2[%c19, %c0_79] : memref<32x128xf32, #tpu.memory_space<vmem>>, vector<1x128xf32>
    %134 = vector.shape_cast %133 : vector<1x128xf32> to vector<128xf32>
    %135 = vector.shape_cast %134 : vector<128xf32> to vector<1x1x128xf32>
    %136 = vector.broadcast %135 : vector<1x1x128xf32> to vector<24x24x128xf32>
    %137 = arith.mulf %132, %136 : vector<24x24x128xf32>
    %138 = arith.addf %131, %137 : vector<24x24x128xf32>
    %c4_80 = arith.constant 4 : index
    %c0_81 = arith.constant 0 : index
    %c0_82 = arith.constant 0 : index
    %139 = vector.load %arg1[%c4_80, %c0_81, %c0_82] : memref<28x28x128xf32, #tpu.memory_space<vmem>>, vector<24x24x128xf32>
    %c20 = arith.constant 20 : index
    %c0_83 = arith.constant 0 : index
    %140 = vector.load %arg2[%c20, %c0_83] : memref<32x128xf32, #tpu.memory_space<vmem>>, vector<1x128xf32>
    %141 = vector.shape_cast %140 : vector<1x128xf32> to vector<128xf32>
    %142 = vector.shape_cast %141 : vector<128xf32> to vector<1x1x128xf32>
    %143 = vector.broadcast %142 : vector<1x1x128xf32> to vector<24x24x128xf32>
    %144 = arith.mulf %139, %143 : vector<24x24x128xf32>
    %145 = arith.addf %138, %144 : vector<24x24x128xf32>
    %c4_84 = arith.constant 4 : index
    %c1_85 = arith.constant 1 : index
    %c0_86 = arith.constant 0 : index
    %146 = vector.load %arg1[%c4_84, %c1_85, %c0_86] : memref<28x28x128xf32, #tpu.memory_space<vmem>>, vector<24x24x128xf32>
    %c21 = arith.constant 21 : index
    %c0_87 = arith.constant 0 : index
    %147 = vector.load %arg2[%c21, %c0_87] : memref<32x128xf32, #tpu.memory_space<vmem>>, vector<1x128xf32>
    %148 = vector.shape_cast %147 : vector<1x128xf32> to vector<128xf32>
    %149 = vector.shape_cast %148 : vector<128xf32> to vector<1x1x128xf32>
    %150 = vector.broadcast %149 : vector<1x1x128xf32> to vector<24x24x128xf32>
    %151 = arith.mulf %146, %150 : vector<24x24x128xf32>
    %152 = arith.addf %145, %151 : vector<24x24x128xf32>
    %c4_88 = arith.constant 4 : index
    %c2_89 = arith.constant 2 : index
    %c0_90 = arith.constant 0 : index
    %153 = vector.load %arg1[%c4_88, %c2_89, %c0_90] : memref<28x28x128xf32, #tpu.memory_space<vmem>>, vector<24x24x128xf32>
    %c22 = arith.constant 22 : index
    %c0_91 = arith.constant 0 : index
    %154 = vector.load %arg2[%c22, %c0_91] : memref<32x128xf32, #tpu.memory_space<vmem>>, vector<1x128xf32>
    %155 = vector.shape_cast %154 : vector<1x128xf32> to vector<128xf32>
    %156 = vector.shape_cast %155 : vector<128xf32> to vector<1x1x128xf32>
    %157 = vector.broadcast %156 : vector<1x1x128xf32> to vector<24x24x128xf32>
    %158 = arith.mulf %153, %157 : vector<24x24x128xf32>
    %159 = arith.addf %152, %158 : vector<24x24x128xf32>
    %c4_92 = arith.constant 4 : index
    %c3_93 = arith.constant 3 : index
    %c0_94 = arith.constant 0 : index
    %160 = vector.load %arg1[%c4_92, %c3_93, %c0_94] : memref<28x28x128xf32, #tpu.memory_space<vmem>>, vector<24x24x128xf32>
    %c23 = arith.constant 23 : index
    %c0_95 = arith.constant 0 : index
    %161 = vector.load %arg2[%c23, %c0_95] : memref<32x128xf32, #tpu.memory_space<vmem>>, vector<1x128xf32>
    %162 = vector.shape_cast %161 : vector<1x128xf32> to vector<128xf32>
    %163 = vector.shape_cast %162 : vector<128xf32> to vector<1x1x128xf32>
    %164 = vector.broadcast %163 : vector<1x1x128xf32> to vector<24x24x128xf32>
    %165 = arith.mulf %160, %164 : vector<24x24x128xf32>
    %166 = arith.addf %159, %165 : vector<24x24x128xf32>
    %c4_96 = arith.constant 4 : index
    %c4_97 = arith.constant 4 : index
    %c0_98 = arith.constant 0 : index
    %167 = vector.load %arg1[%c4_96, %c4_97, %c0_98] : memref<28x28x128xf32, #tpu.memory_space<vmem>>, vector<24x24x128xf32>
    %c24 = arith.constant 24 : index
    %c0_99 = arith.constant 0 : index
    %168 = vector.load %arg2[%c24, %c0_99] : memref<32x128xf32, #tpu.memory_space<vmem>>, vector<1x128xf32>
    %169 = vector.shape_cast %168 : vector<1x128xf32> to vector<128xf32>
    %170 = vector.shape_cast %169 : vector<128xf32> to vector<1x1x128xf32>
    %171 = vector.broadcast %170 : vector<1x1x128xf32> to vector<24x24x128xf32>
    %172 = arith.mulf %167, %171 : vector<24x24x128xf32>
    %173 = arith.addf %166, %172 : vector<24x24x128xf32>
    %c0_100 = arith.constant 0 : index
    %c0_101 = arith.constant 0 : index
    %174 = vector.load %arg3[%c0_100, %c0_101] : memref<1x128xf32, #tpu.memory_space<vmem>>, vector<1x128xf32>
    %175 = vector.shape_cast %174 : vector<1x128xf32> to vector<128xf32>
    %176 = vector.shape_cast %175 : vector<128xf32> to vector<1x1x128xf32>
    %177 = vector.broadcast %176 : vector<1x1x128xf32> to vector<24x24x128xf32>
    %178 = arith.addf %173, %177 : vector<24x24x128xf32>
    %179 = vector.shape_cast %178 : vector<24x24x128xf32> to vector<12x2x24x128xf32>
    %180 = vector.extract_strided_slice %179 {offsets = [0, 0, 0, 0], sizes = [12, 1, 24, 128], strides = [1, 1, 1, 1]} : vector<12x2x24x128xf32> to vector<12x1x24x128xf32>
    %181 = vector.shape_cast %180 : vector<12x1x24x128xf32> to vector<12x24x128xf32>
    %182 = vector.extract_strided_slice %179 {offsets = [0, 1, 0, 0], sizes = [12, 1, 24, 128], strides = [1, 1, 1, 1]} : vector<12x2x24x128xf32> to vector<12x1x24x128xf32>
    %183 = vector.shape_cast %182 : vector<12x1x24x128xf32> to vector<12x24x128xf32>
    %184 = arith.maximumf %181, %183 : vector<12x24x128xf32>
    %c0_102 = arith.constant 0 : index
    %c0_103 = arith.constant 0 : index
    %c0_104 = arith.constant 0 : index
    %185 = vector.load %arg7[%c0_102, %c0_103, %c0_104] : memref<12x24x128xf32, #tpu.memory_space<vmem>>, vector<12x24x128xf32>
    tpu.vector_store %arg7[%c0_102, %c0_103, %c0_104], %184 {strides = array<i32>} : memref<12x24x128xf32, #tpu.memory_space<vmem>>, vector<12x24x128xf32>,
    %c0_105 = arith.constant 0 : index
    %c0_106 = arith.constant 0 : index
    %c0_107 = arith.constant 0 : index
    %186 = tpu.strided_load %arg7[%c0_105, %c0_106, %c0_107] {strides = array<i32: 1, 2, 1>} : memref<12x24x128xf32, #tpu.memory_space<vmem>>, vector<12x12x128xf32>
    %c0_108 = arith.constant 0 : index
    %c1_109 = arith.constant 1 : index
    %c0_110 = arith.constant 0 : index
    %187 = tpu.strided_load %arg7[%c0_108, %c1_109, %c0_110] {strides = array<i32: 1, 2, 1>} : memref<12x24x128xf32, #tpu.memory_space<vmem>>, vector<12x12x128xf32>
    %188 = arith.maximumf %186, %187 : vector<12x12x128xf32>
    %cst = arith.constant 0.000000e+00 : f32
    %189 = vector.broadcast %cst : f32 to vector<12x12x128xf32>
    %190 = arith.maximumf %188, %189 : vector<12x12x128xf32>
    %c0_111 = arith.constant 0 : index
    %c0_112 = arith.constant 0 : index
    %c0_113 = arith.constant 0 : index
    %191 = vector.load %arg8[%c0_111, %c0_112, %c0_113] : memref<12x12x128xf32, #tpu.memory_space<vmem>>, vector<12x12x128xf32>
    tpu.vector_store %arg8[%c0_111, %c0_112, %c0_113], %190 {strides = array<i32>} : memref<12x12x128xf32, #tpu.memory_space<vmem>>, vector<12x12x128xf32>,
    %c0_114 = arith.constant 0 : index
    %c0_115 = arith.constant 0 : index
    %c0_116 = arith.constant 0 : index
    %192 = vector.load %arg8[%c0_114, %c0_115, %c0_116] : memref<12x12x128xf32, #tpu.memory_space<vmem>>, vector<8x8x128xf32>
    %193 = vector.shape_cast %192 : vector<8x8x128xf32> to vector<64x128xf32>
    %c0_117 = arith.constant 0 : index
    %c0_118 = arith.constant 0 : index
    %c0_119 = arith.constant 0 : index
    %194 = vector.load %arg4[%c0_117, %c0_118, %c0_119] : memref<25x128x128xf32, #tpu.memory_space<vmem>>, vector<1x128x128xf32>
    %195 = vector.shape_cast %194 : vector<1x128x128xf32> to vector<128x128xf32>
    %cst_120 = arith.constant dense<0.000000e+00> : vector<64x128xf32>
    %196 = tpu.matmul %193, %195, %cst_120 {dimension_numbers = #tpu.dot_dimension_numbers<[1], [0], [0], [1], [0, 0, 1, 1], [], []>} : vector<64x128xf32>, vector<128x128xf32>, vector<64x128xf32> -> vector<64x128xf32>
    %c0_121 = arith.constant 0 : index
    %c1_122 = arith.constant 1 : index
    %c0_123 = arith.constant 0 : index
    %197 = vector.load %arg8[%c0_121, %c1_122, %c0_123] : memref<12x12x128xf32, #tpu.memory_space<vmem>>, vector<8x8x128xf32>
    %198 = vector.shape_cast %197 : vector<8x8x128xf32> to vector<64x128xf32>
    %c1_124 = arith.constant 1 : index
    %c0_125 = arith.constant 0 : index
    %c0_126 = arith.constant 0 : index
    %199 = vector.load %arg4[%c1_124, %c0_125, %c0_126] : memref<25x128x128xf32, #tpu.memory_space<vmem>>, vector<1x128x128xf32>
    %200 = vector.shape_cast %199 : vector<1x128x128xf32> to vector<128x128xf32>
    %cst_127 = arith.constant dense<0.000000e+00> : vector<64x128xf32>
    %201 = tpu.matmul %198, %200, %cst_127 {dimension_numbers = #tpu.dot_dimension_numbers<[1], [0], [0], [1], [0, 0, 1, 1], [], []>} : vector<64x128xf32>, vector<128x128xf32>, vector<64x128xf32> -> vector<64x128xf32>
    %202 = arith.addf %196, %201 : vector<64x128xf32>
    %c0_128 = arith.constant 0 : index
    %c2_129 = arith.constant 2 : index
    %c0_130 = arith.constant 0 : index
    %203 = vector.load %arg8[%c0_128, %c2_129, %c0_130] : memref<12x12x128xf32, #tpu.memory_space<vmem>>, vector<8x8x128xf32>
    %204 = vector.shape_cast %203 : vector<8x8x128xf32> to vector<64x128xf32>
    %c2_131 = arith.constant 2 : index
    %c0_132 = arith.constant 0 : index
    %c0_133 = arith.constant 0 : index
    %205 = vector.load %arg4[%c2_131, %c0_132, %c0_133] : memref<25x128x128xf32, #tpu.memory_space<vmem>>, vector<1x128x128xf32>
    %206 = vector.shape_cast %205 : vector<1x128x128xf32> to vector<128x128xf32>
    %cst_134 = arith.constant dense<0.000000e+00> : vector<64x128xf32>
    %207 = tpu.matmul %204, %206, %cst_134 {dimension_numbers = #tpu.dot_dimension_numbers<[1], [0], [0], [1], [0, 0, 1, 1], [], []>} : vector<64x128xf32>, vector<128x128xf32>, vector<64x128xf32> -> vector<64x128xf32>
    %208 = arith.addf %202, %207 : vector<64x128xf32>
    %c0_135 = arith.constant 0 : index
    %c3_136 = arith.constant 3 : index
    %c0_137 = arith.constant 0 : index
    %209 = vector.load %arg8[%c0_135, %c3_136, %c0_137] : memref<12x12x128xf32, #tpu.memory_space<vmem>>, vector<8x8x128xf32>
    %210 = vector.shape_cast %209 : vector<8x8x128xf32> to vector<64x128xf32>
    %c3_138 = arith.constant 3 : index
    %c0_139 = arith.constant 0 : index
    %c0_140 = arith.constant 0 : index
    %211 = vector.load %arg4[%c3_138, %c0_139, %c0_140] : memref<25x128x128xf32, #tpu.memory_space<vmem>>, vector<1x128x128xf32>
    %212 = vector.shape_cast %211 : vector<1x128x128xf32> to vector<128x128xf32>
    %cst_141 = arith.constant dense<0.000000e+00> : vector<64x128xf32>
    %213 = tpu.matmul %210, %212, %cst_141 {dimension_numbers = #tpu.dot_dimension_numbers<[1], [0], [0], [1], [0, 0, 1, 1], [], []>} : vector<64x128xf32>, vector<128x128xf32>, vector<64x128xf32> -> vector<64x128xf32>
    %214 = arith.addf %208, %213 : vector<64x128xf32>
    %c0_142 = arith.constant 0 : index
    %c4_143 = arith.constant 4 : index
    %c0_144 = arith.constant 0 : index
    %215 = vector.load %arg8[%c0_142, %c4_143, %c0_144] : memref<12x12x128xf32, #tpu.memory_space<vmem>>, vector<8x8x128xf32>
    %216 = vector.shape_cast %215 : vector<8x8x128xf32> to vector<64x128xf32>
    %c4_145 = arith.constant 4 : index
    %c0_146 = arith.constant 0 : index
    %c0_147 = arith.constant 0 : index
    %217 = vector.load %arg4[%c4_145, %c0_146, %c0_147] : memref<25x128x128xf32, #tpu.memory_space<vmem>>, vector<1x128x128xf32>
    %218 = vector.shape_cast %217 : vector<1x128x128xf32> to vector<128x128xf32>
    %cst_148 = arith.constant dense<0.000000e+00> : vector<64x128xf32>
    %219 = tpu.matmul %216, %218, %cst_148 {dimension_numbers = #tpu.dot_dimension_numbers<[1], [0], [0], [1], [0, 0, 1, 1], [], []>} : vector<64x128xf32>, vector<128x128xf32>, vector<64x128xf32> -> vector<64x128xf32>
    %220 = arith.addf %214, %219 : vector<64x128xf32>
    %c1_149 = arith.constant 1 : index
    %c0_150 = arith.constant 0 : index
    %c0_151 = arith.constant 0 : index
    %221 = vector.load %arg8[%c1_149, %c0_150, %c0_151] : memref<12x12x128xf32, #tpu.memory_space<vmem>>, vector<8x8x128xf32>
    %222 = vector.shape_cast %221 : vector<8x8x128xf32> to vector<64x128xf32>
    %c5_152 = arith.constant 5 : index
    %c0_153 = arith.constant 0 : index
    %c0_154 = arith.constant 0 : index
    %223 = vector.load %arg4[%c5_152, %c0_153, %c0_154] : memref<25x128x128xf32, #tpu.memory_space<vmem>>, vector<1x128x128xf32>
    %224 = vector.shape_cast %223 : vector<1x128x128xf32> to vector<128x128xf32>
    %cst_155 = arith.constant dense<0.000000e+00> : vector<64x128xf32>
    %225 = tpu.matmul %222, %224, %cst_155 {dimension_numbers = #tpu.dot_dimension_numbers<[1], [0], [0], [1], [0, 0, 1, 1], [], []>} : vector<64x128xf32>, vector<128x128xf32>, vector<64x128xf32> -> vector<64x128xf32>
    %226 = arith.addf %220, %225 : vector<64x128xf32>
    %c1_156 = arith.constant 1 : index
    %c1_157 = arith.constant 1 : index
    %c0_158 = arith.constant 0 : index
    %227 = vector.load %arg8[%c1_156, %c1_157, %c0_158] : memref<12x12x128xf32, #tpu.memory_space<vmem>>, vector<8x8x128xf32>
    %228 = vector.shape_cast %227 : vector<8x8x128xf32> to vector<64x128xf32>
    %c6_159 = arith.constant 6 : index
    %c0_160 = arith.constant 0 : index
    %c0_161 = arith.constant 0 : index
    %229 = vector.load %arg4[%c6_159, %c0_160, %c0_161] : memref<25x128x128xf32, #tpu.memory_space<vmem>>, vector<1x128x128xf32>
    %230 = vector.shape_cast %229 : vector<1x128x128xf32> to vector<128x128xf32>
    %cst_162 = arith.constant dense<0.000000e+00> : vector<64x128xf32>
    %231 = tpu.matmul %228, %230, %cst_162 {dimension_numbers = #tpu.dot_dimension_numbers<[1], [0], [0], [1], [0, 0, 1, 1], [], []>} : vector<64x128xf32>, vector<128x128xf32>, vector<64x128xf32> -> vector<64x128xf32>
    %232 = arith.addf %226, %231 : vector<64x128xf32>
    %c1_163 = arith.constant 1 : index
    %c2_164 = arith.constant 2 : index
    %c0_165 = arith.constant 0 : index
    %233 = vector.load %arg8[%c1_163, %c2_164, %c0_165] : memref<12x12x128xf32, #tpu.memory_space<vmem>>, vector<8x8x128xf32>
    %234 = vector.shape_cast %233 : vector<8x8x128xf32> to vector<64x128xf32>
    %c7_166 = arith.constant 7 : index
    %c0_167 = arith.constant 0 : index
    %c0_168 = arith.constant 0 : index
    %235 = vector.load %arg4[%c7_166, %c0_167, %c0_168] : memref<25x128x128xf32, #tpu.memory_space<vmem>>, vector<1x128x128xf32>
    %236 = vector.shape_cast %235 : vector<1x128x128xf32> to vector<128x128xf32>
    %cst_169 = arith.constant dense<0.000000e+00> : vector<64x128xf32>
    %237 = tpu.matmul %234, %236, %cst_169 {dimension_numbers = #tpu.dot_dimension_numbers<[1], [0], [0], [1], [0, 0, 1, 1], [], []>} : vector<64x128xf32>, vector<128x128xf32>, vector<64x128xf32> -> vector<64x128xf32>
    %238 = arith.addf %232, %237 : vector<64x128xf32>
    %c1_170 = arith.constant 1 : index
    %c3_171 = arith.constant 3 : index
    %c0_172 = arith.constant 0 : index
    %239 = vector.load %arg8[%c1_170, %c3_171, %c0_172] : memref<12x12x128xf32, #tpu.memory_space<vmem>>, vector<8x8x128xf32>
    %240 = vector.shape_cast %239 : vector<8x8x128xf32> to vector<64x128xf32>
    %c8_173 = arith.constant 8 : index
    %c0_174 = arith.constant 0 : index
    %c0_175 = arith.constant 0 : index
    %241 = vector.load %arg4[%c8_173, %c0_174, %c0_175] : memref<25x128x128xf32, #tpu.memory_space<vmem>>, vector<1x128x128xf32>
    %242 = vector.shape_cast %241 : vector<1x128x128xf32> to vector<128x128xf32>
    %cst_176 = arith.constant dense<0.000000e+00> : vector<64x128xf32>
    %243 = tpu.matmul %240, %242, %cst_176 {dimension_numbers = #tpu.dot_dimension_numbers<[1], [0], [0], [1], [0, 0, 1, 1], [], []>} : vector<64x128xf32>, vector<128x128xf32>, vector<64x128xf32> -> vector<64x128xf32>
    %244 = arith.addf %238, %243 : vector<64x128xf32>
    %c1_177 = arith.constant 1 : index
    %c4_178 = arith.constant 4 : index
    %c0_179 = arith.constant 0 : index
    %245 = vector.load %arg8[%c1_177, %c4_178, %c0_179] : memref<12x12x128xf32, #tpu.memory_space<vmem>>, vector<8x8x128xf32>
    %246 = vector.shape_cast %245 : vector<8x8x128xf32> to vector<64x128xf32>
    %c9_180 = arith.constant 9 : index
    %c0_181 = arith.constant 0 : index
    %c0_182 = arith.constant 0 : index
    %247 = vector.load %arg4[%c9_180, %c0_181, %c0_182] : memref<25x128x128xf32, #tpu.memory_space<vmem>>, vector<1x128x128xf32>
    %248 = vector.shape_cast %247 : vector<1x128x128xf32> to vector<128x128xf32>
    %cst_183 = arith.constant dense<0.000000e+00> : vector<64x128xf32>
    %249 = tpu.matmul %246, %248, %cst_183 {dimension_numbers = #tpu.dot_dimension_numbers<[1], [0], [0], [1], [0, 0, 1, 1], [], []>} : vector<64x128xf32>, vector<128x128xf32>, vector<64x128xf32> -> vector<64x128xf32>
    %250 = arith.addf %244, %249 : vector<64x128xf32>
    %c2_184 = arith.constant 2 : index
    %c0_185 = arith.constant 0 : index
    %c0_186 = arith.constant 0 : index
    %251 = vector.load %arg8[%c2_184, %c0_185, %c0_186] : memref<12x12x128xf32, #tpu.memory_space<vmem>>, vector<8x8x128xf32>
    %252 = vector.shape_cast %251 : vector<8x8x128xf32> to vector<64x128xf32>
    %c10_187 = arith.constant 10 : index
    %c0_188 = arith.constant 0 : index
    %c0_189 = arith.constant 0 : index
    %253 = vector.load %arg4[%c10_187, %c0_188, %c0_189] : memref<25x128x128xf32, #tpu.memory_space<vmem>>, vector<1x128x128xf32>
    %254 = vector.shape_cast %253 : vector<1x128x128xf32> to vector<128x128xf32>
    %cst_190 = arith.constant dense<0.000000e+00> : vector<64x128xf32>
    %255 = tpu.matmul %252, %254, %cst_190 {dimension_numbers = #tpu.dot_dimension_numbers<[1], [0], [0], [1], [0, 0, 1, 1], [], []>} : vector<64x128xf32>, vector<128x128xf32>, vector<64x128xf32> -> vector<64x128xf32>
    %256 = arith.addf %250, %255 : vector<64x128xf32>
    %c2_191 = arith.constant 2 : index
    %c1_192 = arith.constant 1 : index
    %c0_193 = arith.constant 0 : index
    %257 = vector.load %arg8[%c2_191, %c1_192, %c0_193] : memref<12x12x128xf32, #tpu.memory_space<vmem>>, vector<8x8x128xf32>
    %258 = vector.shape_cast %257 : vector<8x8x128xf32> to vector<64x128xf32>
    %c11_194 = arith.constant 11 : index
    %c0_195 = arith.constant 0 : index
    %c0_196 = arith.constant 0 : index
    %259 = vector.load %arg4[%c11_194, %c0_195, %c0_196] : memref<25x128x128xf32, #tpu.memory_space<vmem>>, vector<1x128x128xf32>
    %260 = vector.shape_cast %259 : vector<1x128x128xf32> to vector<128x128xf32>
    %cst_197 = arith.constant dense<0.000000e+00> : vector<64x128xf32>
    %261 = tpu.matmul %258, %260, %cst_197 {dimension_numbers = #tpu.dot_dimension_numbers<[1], [0], [0], [1], [0, 0, 1, 1], [], []>} : vector<64x128xf32>, vector<128x128xf32>, vector<64x128xf32> -> vector<64x128xf32>
    %262 = arith.addf %256, %261 : vector<64x128xf32>
    %c2_198 = arith.constant 2 : index
    %c2_199 = arith.constant 2 : index
    %c0_200 = arith.constant 0 : index
    %263 = vector.load %arg8[%c2_198, %c2_199, %c0_200] : memref<12x12x128xf32, #tpu.memory_space<vmem>>, vector<8x8x128xf32>
    %264 = vector.shape_cast %263 : vector<8x8x128xf32> to vector<64x128xf32>
    %c12_201 = arith.constant 12 : index
    %c0_202 = arith.constant 0 : index
    %c0_203 = arith.constant 0 : index
    %265 = vector.load %arg4[%c12_201, %c0_202, %c0_203] : memref<25x128x128xf32, #tpu.memory_space<vmem>>, vector<1x128x128xf32>
    %266 = vector.shape_cast %265 : vector<1x128x128xf32> to vector<128x128xf32>
    %cst_204 = arith.constant dense<0.000000e+00> : vector<64x128xf32>
    %267 = tpu.matmul %264, %266, %cst_204 {dimension_numbers = #tpu.dot_dimension_numbers<[1], [0], [0], [1], [0, 0, 1, 1], [], []>} : vector<64x128xf32>, vector<128x128xf32>, vector<64x128xf32> -> vector<64x128xf32>
    %268 = arith.addf %262, %267 : vector<64x128xf32>
    %c2_205 = arith.constant 2 : index
    %c3_206 = arith.constant 3 : index
    %c0_207 = arith.constant 0 : index
    %269 = vector.load %arg8[%c2_205, %c3_206, %c0_207] : memref<12x12x128xf32, #tpu.memory_space<vmem>>, vector<8x8x128xf32>
    %270 = vector.shape_cast %269 : vector<8x8x128xf32> to vector<64x128xf32>
    %c13_208 = arith.constant 13 : index
    %c0_209 = arith.constant 0 : index
    %c0_210 = arith.constant 0 : index
    %271 = vector.load %arg4[%c13_208, %c0_209, %c0_210] : memref<25x128x128xf32, #tpu.memory_space<vmem>>, vector<1x128x128xf32>
    %272 = vector.shape_cast %271 : vector<1x128x128xf32> to vector<128x128xf32>
    %cst_211 = arith.constant dense<0.000000e+00> : vector<64x128xf32>
    %273 = tpu.matmul %270, %272, %cst_211 {dimension_numbers = #tpu.dot_dimension_numbers<[1], [0], [0], [1], [0, 0, 1, 1], [], []>} : vector<64x128xf32>, vector<128x128xf32>, vector<64x128xf32> -> vector<64x128xf32>
    %274 = arith.addf %268, %273 : vector<64x128xf32>
    %c2_212 = arith.constant 2 : index
    %c4_213 = arith.constant 4 : index
    %c0_214 = arith.constant 0 : index
    %275 = vector.load %arg8[%c2_212, %c4_213, %c0_214] : memref<12x12x128xf32, #tpu.memory_space<vmem>>, vector<8x8x128xf32>
    %276 = vector.shape_cast %275 : vector<8x8x128xf32> to vector<64x128xf32>
    %c14_215 = arith.constant 14 : index
    %c0_216 = arith.constant 0 : index
    %c0_217 = arith.constant 0 : index
    %277 = vector.load %arg4[%c14_215, %c0_216, %c0_217] : memref<25x128x128xf32, #tpu.memory_space<vmem>>, vector<1x128x128xf32>
    %278 = vector.shape_cast %277 : vector<1x128x128xf32> to vector<128x128xf32>
    %cst_218 = arith.constant dense<0.000000e+00> : vector<64x128xf32>
    %279 = tpu.matmul %276, %278, %cst_218 {dimension_numbers = #tpu.dot_dimension_numbers<[1], [0], [0], [1], [0, 0, 1, 1], [], []>} : vector<64x128xf32>, vector<128x128xf32>, vector<64x128xf32> -> vector<64x128xf32>
    %280 = arith.addf %274, %279 : vector<64x128xf32>
    %c3_219 = arith.constant 3 : index
    %c0_220 = arith.constant 0 : index
    %c0_221 = arith.constant 0 : index
    %281 = vector.load %arg8[%c3_219, %c0_220, %c0_221] : memref<12x12x128xf32, #tpu.memory_space<vmem>>, vector<8x8x128xf32>
    %282 = vector.shape_cast %281 : vector<8x8x128xf32> to vector<64x128xf32>
    %c15_222 = arith.constant 15 : index
    %c0_223 = arith.constant 0 : index
    %c0_224 = arith.constant 0 : index
    %283 = vector.load %arg4[%c15_222, %c0_223, %c0_224] : memref<25x128x128xf32, #tpu.memory_space<vmem>>, vector<1x128x128xf32>
    %284 = vector.shape_cast %283 : vector<1x128x128xf32> to vector<128x128xf32>
    %cst_225 = arith.constant dense<0.000000e+00> : vector<64x128xf32>
    %285 = tpu.matmul %282, %284, %cst_225 {dimension_numbers = #tpu.dot_dimension_numbers<[1], [0], [0], [1], [0, 0, 1, 1], [], []>} : vector<64x128xf32>, vector<128x128xf32>, vector<64x128xf32> -> vector<64x128xf32>
    %286 = arith.addf %280, %285 : vector<64x128xf32>
    %c3_226 = arith.constant 3 : index
    %c1_227 = arith.constant 1 : index
    %c0_228 = arith.constant 0 : index
    %287 = vector.load %arg8[%c3_226, %c1_227, %c0_228] : memref<12x12x128xf32, #tpu.memory_space<vmem>>, vector<8x8x128xf32>
    %288 = vector.shape_cast %287 : vector<8x8x128xf32> to vector<64x128xf32>
    %c16_229 = arith.constant 16 : index
    %c0_230 = arith.constant 0 : index
    %c0_231 = arith.constant 0 : index
    %289 = vector.load %arg4[%c16_229, %c0_230, %c0_231] : memref<25x128x128xf32, #tpu.memory_space<vmem>>, vector<1x128x128xf32>
    %290 = vector.shape_cast %289 : vector<1x128x128xf32> to vector<128x128xf32>
    %cst_232 = arith.constant dense<0.000000e+00> : vector<64x128xf32>
    %291 = tpu.matmul %288, %290, %cst_232 {dimension_numbers = #tpu.dot_dimension_numbers<[1], [0], [0], [1], [0, 0, 1, 1], [], []>} : vector<64x128xf32>, vector<128x128xf32>, vector<64x128xf32> -> vector<64x128xf32>
    %292 = arith.addf %286, %291 : vector<64x128xf32>
    %c3_233 = arith.constant 3 : index
    %c2_234 = arith.constant 2 : index
    %c0_235 = arith.constant 0 : index
    %293 = vector.load %arg8[%c3_233, %c2_234, %c0_235] : memref<12x12x128xf32, #tpu.memory_space<vmem>>, vector<8x8x128xf32>
    %294 = vector.shape_cast %293 : vector<8x8x128xf32> to vector<64x128xf32>
    %c17_236 = arith.constant 17 : index
    %c0_237 = arith.constant 0 : index
    %c0_238 = arith.constant 0 : index
    %295 = vector.load %arg4[%c17_236, %c0_237, %c0_238] : memref<25x128x128xf32, #tpu.memory_space<vmem>>, vector<1x128x128xf32>
    %296 = vector.shape_cast %295 : vector<1x128x128xf32> to vector<128x128xf32>
    %cst_239 = arith.constant dense<0.000000e+00> : vector<64x128xf32>
    %297 = tpu.matmul %294, %296, %cst_239 {dimension_numbers = #tpu.dot_dimension_numbers<[1], [0], [0], [1], [0, 0, 1, 1], [], []>} : vector<64x128xf32>, vector<128x128xf32>, vector<64x128xf32> -> vector<64x128xf32>
    %298 = arith.addf %292, %297 : vector<64x128xf32>
    %c3_240 = arith.constant 3 : index
    %c3_241 = arith.constant 3 : index
    %c0_242 = arith.constant 0 : index
    %299 = vector.load %arg8[%c3_240, %c3_241, %c0_242] : memref<12x12x128xf32, #tpu.memory_space<vmem>>, vector<8x8x128xf32>
    %300 = vector.shape_cast %299 : vector<8x8x128xf32> to vector<64x128xf32>
    %c18_243 = arith.constant 18 : index
    %c0_244 = arith.constant 0 : index
    %c0_245 = arith.constant 0 : index
    %301 = vector.load %arg4[%c18_243, %c0_244, %c0_245] : memref<25x128x128xf32, #tpu.memory_space<vmem>>, vector<1x128x128xf32>
    %302 = vector.shape_cast %301 : vector<1x128x128xf32> to vector<128x128xf32>
    %cst_246 = arith.constant dense<0.000000e+00> : vector<64x128xf32>
    %303 = tpu.matmul %300, %302, %cst_246 {dimension_numbers = #tpu.dot_dimension_numbers<[1], [0], [0], [1], [0, 0, 1, 1], [], []>} : vector<64x128xf32>, vector<128x128xf32>, vector<64x128xf32> -> vector<64x128xf32>
    %304 = arith.addf %298, %303 : vector<64x128xf32>
    %c3_247 = arith.constant 3 : index
    %c4_248 = arith.constant 4 : index
    %c0_249 = arith.constant 0 : index
    %305 = vector.load %arg8[%c3_247, %c4_248, %c0_249] : memref<12x12x128xf32, #tpu.memory_space<vmem>>, vector<8x8x128xf32>
    %306 = vector.shape_cast %305 : vector<8x8x128xf32> to vector<64x128xf32>
    %c19_250 = arith.constant 19 : index
    %c0_251 = arith.constant 0 : index
    %c0_252 = arith.constant 0 : index
    %307 = vector.load %arg4[%c19_250, %c0_251, %c0_252] : memref<25x128x128xf32, #tpu.memory_space<vmem>>, vector<1x128x128xf32>
    %308 = vector.shape_cast %307 : vector<1x128x128xf32> to vector<128x128xf32>
    %cst_253 = arith.constant dense<0.000000e+00> : vector<64x128xf32>
    %309 = tpu.matmul %306, %308, %cst_253 {dimension_numbers = #tpu.dot_dimension_numbers<[1], [0], [0], [1], [0, 0, 1, 1], [], []>} : vector<64x128xf32>, vector<128x128xf32>, vector<64x128xf32> -> vector<64x128xf32>
    %310 = arith.addf %304, %309 : vector<64x128xf32>
    %c4_254 = arith.constant 4 : index
    %c0_255 = arith.constant 0 : index
    %c0_256 = arith.constant 0 : index
    %311 = vector.load %arg8[%c4_254, %c0_255, %c0_256] : memref<12x12x128xf32, #tpu.memory_space<vmem>>, vector<8x8x128xf32>
    %312 = vector.shape_cast %311 : vector<8x8x128xf32> to vector<64x128xf32>
    %c20_257 = arith.constant 20 : index
    %c0_258 = arith.constant 0 : index
    %c0_259 = arith.constant 0 : index
    %313 = vector.load %arg4[%c20_257, %c0_258, %c0_259] : memref<25x128x128xf32, #tpu.memory_space<vmem>>, vector<1x128x128xf32>
    %314 = vector.shape_cast %313 : vector<1x128x128xf32> to vector<128x128xf32>
    %cst_260 = arith.constant dense<0.000000e+00> : vector<64x128xf32>
    %315 = tpu.matmul %312, %314, %cst_260 {dimension_numbers = #tpu.dot_dimension_numbers<[1], [0], [0], [1], [0, 0, 1, 1], [], []>} : vector<64x128xf32>, vector<128x128xf32>, vector<64x128xf32> -> vector<64x128xf32>
    %316 = arith.addf %310, %315 : vector<64x128xf32>
    %c4_261 = arith.constant 4 : index
    %c1_262 = arith.constant 1 : index
    %c0_263 = arith.constant 0 : index
    %317 = vector.load %arg8[%c4_261, %c1_262, %c0_263] : memref<12x12x128xf32, #tpu.memory_space<vmem>>, vector<8x8x128xf32>
    %318 = vector.shape_cast %317 : vector<8x8x128xf32> to vector<64x128xf32>
    %c21_264 = arith.constant 21 : index
    %c0_265 = arith.constant 0 : index
    %c0_266 = arith.constant 0 : index
    %319 = vector.load %arg4[%c21_264, %c0_265, %c0_266] : memref<25x128x128xf32, #tpu.memory_space<vmem>>, vector<1x128x128xf32>
    %320 = vector.shape_cast %319 : vector<1x128x128xf32> to vector<128x128xf32>
    %cst_267 = arith.constant dense<0.000000e+00> : vector<64x128xf32>
    %321 = tpu.matmul %318, %320, %cst_267 {dimension_numbers = #tpu.dot_dimension_numbers<[1], [0], [0], [1], [0, 0, 1, 1], [], []>} : vector<64x128xf32>, vector<128x128xf32>, vector<64x128xf32> -> vector<64x128xf32>
    %322 = arith.addf %316, %321 : vector<64x128xf32>
    %c4_268 = arith.constant 4 : index
    %c2_269 = arith.constant 2 : index
    %c0_270 = arith.constant 0 : index
    %323 = vector.load %arg8[%c4_268, %c2_269, %c0_270] : memref<12x12x128xf32, #tpu.memory_space<vmem>>, vector<8x8x128xf32>
    %324 = vector.shape_cast %323 : vector<8x8x128xf32> to vector<64x128xf32>
    %c22_271 = arith.constant 22 : index
    %c0_272 = arith.constant 0 : index
    %c0_273 = arith.constant 0 : index
    %325 = vector.load %arg4[%c22_271, %c0_272, %c0_273] : memref<25x128x128xf32, #tpu.memory_space<vmem>>, vector<1x128x128xf32>
    %326 = vector.shape_cast %325 : vector<1x128x128xf32> to vector<128x128xf32>
    %cst_274 = arith.constant dense<0.000000e+00> : vector<64x128xf32>
    %327 = tpu.matmul %324, %326, %cst_274 {dimension_numbers = #tpu.dot_dimension_numbers<[1], [0], [0], [1], [0, 0, 1, 1], [], []>} : vector<64x128xf32>, vector<128x128xf32>, vector<64x128xf32> -> vector<64x128xf32>
    %328 = arith.addf %322, %327 : vector<64x128xf32>
    %c4_275 = arith.constant 4 : index
    %c3_276 = arith.constant 3 : index
    %c0_277 = arith.constant 0 : index
    %329 = vector.load %arg8[%c4_275, %c3_276, %c0_277] : memref<12x12x128xf32, #tpu.memory_space<vmem>>, vector<8x8x128xf32>
    %330 = vector.shape_cast %329 : vector<8x8x128xf32> to vector<64x128xf32>
    %c23_278 = arith.constant 23 : index
    %c0_279 = arith.constant 0 : index
    %c0_280 = arith.constant 0 : index
    %331 = vector.load %arg4[%c23_278, %c0_279, %c0_280] : memref<25x128x128xf32, #tpu.memory_space<vmem>>, vector<1x128x128xf32>
    %332 = vector.shape_cast %331 : vector<1x128x128xf32> to vector<128x128xf32>
    %cst_281 = arith.constant dense<0.000000e+00> : vector<64x128xf32>
    %333 = tpu.matmul %330, %332, %cst_281 {dimension_numbers = #tpu.dot_dimension_numbers<[1], [0], [0], [1], [0, 0, 1, 1], [], []>} : vector<64x128xf32>, vector<128x128xf32>, vector<64x128xf32> -> vector<64x128xf32>
    %334 = arith.addf %328, %333 : vector<64x128xf32>
    %c4_282 = arith.constant 4 : index
    %c4_283 = arith.constant 4 : index
    %c0_284 = arith.constant 0 : index
    %335 = vector.load %arg8[%c4_282, %c4_283, %c0_284] : memref<12x12x128xf32, #tpu.memory_space<vmem>>, vector<8x8x128xf32>
    %336 = vector.shape_cast %335 : vector<8x8x128xf32> to vector<64x128xf32>
    %c24_285 = arith.constant 24 : index
    %c0_286 = arith.constant 0 : index
    %c0_287 = arith.constant 0 : index
    %337 = vector.load %arg4[%c24_285, %c0_286, %c0_287] : memref<25x128x128xf32, #tpu.memory_space<vmem>>, vector<1x128x128xf32>
    %338 = vector.shape_cast %337 : vector<1x128x128xf32> to vector<128x128xf32>
    %cst_288 = arith.constant dense<0.000000e+00> : vector<64x128xf32>
    %339 = tpu.matmul %336, %338, %cst_288 {dimension_numbers = #tpu.dot_dimension_numbers<[1], [0], [0], [1], [0, 0, 1, 1], [], []>} : vector<64x128xf32>, vector<128x128xf32>, vector<64x128xf32> -> vector<64x128xf32>
    %340 = arith.addf %334, %339 : vector<64x128xf32>
    %c0_289 = arith.constant 0 : index
    %c0_290 = arith.constant 0 : index
    %341 = vector.load %arg5[%c0_289, %c0_290] : memref<1x128xf32, #tpu.memory_space<vmem>>, vector<1x128xf32>
    %342 = vector.shape_cast %341 : vector<1x128xf32> to vector<128xf32>
    %343 = vector.shape_cast %342 : vector<128xf32> to vector<1x128xf32>
    %344 = vector.broadcast %343 : vector<1x128xf32> to vector<64x128xf32>
    %345 = arith.addf %340, %344 : vector<64x128xf32>
    %346 = vector.shape_cast %345 : vector<64x128xf32> to vector<4x2x8x128xf32>
    %347 = vector.extract_strided_slice %346 {offsets = [0, 0, 0, 0], sizes = [4, 1, 8, 128], strides = [1, 1, 1, 1]} : vector<4x2x8x128xf32> to vector<4x1x8x128xf32>
    %348 = vector.shape_cast %347 : vector<4x1x8x128xf32> to vector<4x8x128xf32>
    %349 = vector.extract_strided_slice %346 {offsets = [0, 1, 0, 0], sizes = [4, 1, 8, 128], strides = [1, 1, 1, 1]} : vector<4x2x8x128xf32> to vector<4x1x8x128xf32>
    %350 = vector.shape_cast %349 : vector<4x1x8x128xf32> to vector<4x8x128xf32>
    %351 = arith.maximumf %348, %350 : vector<4x8x128xf32>
    %c0_291 = arith.constant 0 : index
    %c0_292 = arith.constant 0 : index
    %c0_293 = arith.constant 0 : index
    %352 = vector.load %arg9[%c0_291, %c0_292, %c0_293] : memref<4x8x128xf32, #tpu.memory_space<vmem>>, vector<4x8x128xf32>
    tpu.vector_store %arg9[%c0_291, %c0_292, %c0_293], %351 {strides = array<i32>} : memref<4x8x128xf32, #tpu.memory_space<vmem>>, vector<4x8x128xf32>,
    %c0_294 = arith.constant 0 : index
    %c0_295 = arith.constant 0 : index
    %c0_296 = arith.constant 0 : index
    %353 = tpu.strided_load %arg9[%c0_294, %c0_295, %c0_296] {strides = array<i32: 1, 2, 1>} : memref<4x8x128xf32, #tpu.memory_space<vmem>>, vector<4x4x128xf32>
    %c0_297 = arith.constant 0 : index
    %c1_298 = arith.constant 1 : index
    %c0_299 = arith.constant 0 : index
    %354 = tpu.strided_load %arg9[%c0_297, %c1_298, %c0_299] {strides = array<i32: 1, 2, 1>} : memref<4x8x128xf32, #tpu.memory_space<vmem>>, vector<4x4x128xf32>
    %355 = arith.maximumf %353, %354 : vector<4x4x128xf32>
    %cst_300 = arith.constant 0.000000e+00 : f32
    %356 = vector.broadcast %cst_300 : f32 to vector<4x4x128xf32>
    %357 = arith.maximumf %355, %356 : vector<4x4x128xf32>
    %c0_301 = arith.constant 0 : index
    %c0_302 = arith.constant 0 : index
    %c0_303 = arith.constant 0 : index
    %358 = vector.load %arg6[%c0_301, %c0_302, %c0_303] : memref<4x4x128xf32, #tpu.memory_space<vmem>>, vector<4x4x128xf32>
    tpu.vector_store %arg6[%c0_301, %c0_302, %c0_303], %357 {strides = array<i32>} : memref<4x4x128xf32, #tpu.memory_space<vmem>>, vector<4x4x128xf32>,
    return
  }
  func.func @transform_0(%arg0: i32) -> (i32, i32, i32) {
    %c0_i32 = arith.constant 0 : i32
    %c0_i32_0 = arith.constant 0 : i32
    %c0_i32_1 = arith.constant 0 : i32
    return %c0_i32, %c0_i32_0, %arg0 : i32, i32, i32
  }
  func.func @transform_1(%arg0: i32) -> (i32, i32) {
    %c0_i32 = arith.constant 0 : i32
    %c0_i32_0 = arith.constant 0 : i32
    %c0_i32_1 = arith.constant 0 : i32
    return %c0_i32, %c0_i32_0 : i32, i32
  }
  func.func @transform_2(%arg0: i32) -> (i32, i32) {
    %c0_i32 = arith.constant 0 : i32
    %c0_i32_0 = arith.constant 0 : i32
    %c0_i32_1 = arith.constant 0 : i32
    return %c0_i32, %c0_i32_0 : i32, i32
  }
  func.func @transform_3(%arg0: i32) -> (i32, i32, i32) {
    %c0_i32 = arith.constant 0 : i32
    %c0_i32_0 = arith.constant 0 : i32
    %c0_i32_1 = arith.constant 0 : i32
    %c0_i32_2 = arith.constant 0 : i32
    return %c0_i32, %c0_i32_0, %c0_i32_1 : i32, i32, i32
  }
  func.func @transform_4(%arg0: i32) -> (i32, i32) {
    %c0_i32 = arith.constant 0 : i32
    %c0_i32_0 = arith.constant 0 : i32
    %c0_i32_1 = arith.constant 0 : i32
    return %c0_i32, %c0_i32_0 : i32, i32
  }
  func.func @transform_5(%arg0: i32) -> (i32, i32, i32) {
    %c0_i32 = arith.constant 0 : i32
    %c0_i32_0 = arith.constant 0 : i32
    %c0_i32_1 = arith.constant 0 : i32
    return %c0_i32, %c0_i32_0, %arg0 : i32, i32, i32
  }
}

module attributes {stable_mosaic.version = 11 : i64} {
  func.func @_fc_kernel(%arg0: i32, %arg1: memref<8x512xf32, #tpu.memory_space<vmem>>, %arg2: memref<512x64xf32, #tpu.memory_space<vmem>>, %arg3: memref<1x64xf32, #tpu.memory_space<vmem>>, %arg4: memref<64x128xf32, #tpu.memory_space<vmem>>, %arg5: memref<1x128xf32, #tpu.memory_space<vmem>>, %arg6: memref<8x128xf32, #tpu.memory_space<vmem>>) attributes {dimension_semantics = [#tpu.dimension_semantics<parallel>], iteration_bounds = array<i64: 1>, scalar_prefetch = 0 : i64, scratch_operands = 0 : i64, tpu.core_type = #tpu.core_type<tc>, window_params = [{transform_indices = @transform_0, window_bounds = array<i64: 8, 512>}, {pipeline_mode = #tpu.pipeline_mode<synchronous>, transform_indices = @transform_1, window_bounds = array<i64: 512, 64>}, {pipeline_mode = #tpu.pipeline_mode<synchronous>, transform_indices = @transform_2, window_bounds = array<i64: 1, 64>}, {pipeline_mode = #tpu.pipeline_mode<synchronous>, transform_indices = @transform_3, window_bounds = array<i64: 64, 128>}, {pipeline_mode = #tpu.pipeline_mode<synchronous>, transform_indices = @transform_4, window_bounds = array<i64: 1, 128>}, {transform_indices = @transform_5, window_bounds = array<i64: 8, 128>}]} {
    %c0 = arith.constant 0 : index
    %c0_0 = arith.constant 0 : index
    %0 = vector.load %arg1[%c0, %c0_0] : memref<8x512xf32, #tpu.memory_space<vmem>>, vector<8x512xf32>
    %c0_1 = arith.constant 0 : index
    %c0_2 = arith.constant 0 : index
    %1 = vector.load %arg2[%c0_1, %c0_2] : memref<512x64xf32, #tpu.memory_space<vmem>>, vector<512x64xf32>
    %cst = arith.constant dense<0.000000e+00> : vector<8x64xf32>
    %2 = tpu.matmul %0, %1, %cst {dimension_numbers = #tpu.dot_dimension_numbers<[1], [0], [0], [1], [0, 0, 1, 1], [], []>} : vector<8x512xf32>, vector<512x64xf32>, vector<8x64xf32> -> vector<8x64xf32>
    %c0_3 = arith.constant 0 : index
    %c0_4 = arith.constant 0 : index
    %3 = vector.load %arg3[%c0_3, %c0_4] : memref<1x64xf32, #tpu.memory_space<vmem>>, vector<1x64xf32>
    %4 = vector.broadcast %3 : vector<1x64xf32> to vector<8x64xf32>
    %5 = arith.addf %2, %4 : vector<8x64xf32>
    %cst_5 = arith.constant 0.000000e+00 : f32
    %6 = vector.broadcast %cst_5 : f32 to vector<8x64xf32>
    %7 = arith.maximumf %5, %6 : vector<8x64xf32>
    %c0_6 = arith.constant 0 : index
    %c0_7 = arith.constant 0 : index
    %8 = vector.load %arg4[%c0_6, %c0_7] : memref<64x128xf32, #tpu.memory_space<vmem>>, vector<64x128xf32>
    %cst_8 = arith.constant dense<0.000000e+00> : vector<8x128xf32>
    %9 = tpu.matmul %7, %8, %cst_8 {dimension_numbers = #tpu.dot_dimension_numbers<[1], [0], [0], [1], [0, 0, 1, 1], [], []>} : vector<8x64xf32>, vector<64x128xf32>, vector<8x128xf32> -> vector<8x128xf32>
    %c0_9 = arith.constant 0 : index
    %c0_10 = arith.constant 0 : index
    %10 = vector.load %arg5[%c0_9, %c0_10] : memref<1x128xf32, #tpu.memory_space<vmem>>, vector<1x128xf32>
    %11 = vector.broadcast %10 : vector<1x128xf32> to vector<8x128xf32>
    %12 = arith.addf %9, %11 : vector<8x128xf32>
    %cst_11 = arith.constant dense<0xFF800000> : vector<8xf32>
    %13 = vector.multi_reduction <maximumf>, %12, %cst_11 [1] : vector<8x128xf32> to vector<8xf32>
    %14 = vector.shape_cast %13 : vector<8xf32> to vector<8x1xf32>
    %15 = vector.broadcast %14 : vector<8x1xf32> to vector<8x128xf32>
    %16 = arith.subf %12, %15 : vector<8x128xf32>
    %17 = math.exp %16 : vector<8x128xf32>
    %cst_12 = arith.constant dense<0.000000e+00> : vector<8xf32>
    %18 = vector.multi_reduction <add>, %17, %cst_12 [1] : vector<8x128xf32> to vector<8xf32>
    %19 = vector.shape_cast %18 : vector<8xf32> to vector<8x1xf32>
    %20 = math.log %19 : vector<8x1xf32>
    %21 = vector.broadcast %20 : vector<8x1xf32> to vector<8x128xf32>
    %22 = arith.subf %16, %21 : vector<8x128xf32>
    %c0_13 = arith.constant 0 : index
    %c0_14 = arith.constant 0 : index
    %23 = vector.load %arg6[%c0_13, %c0_14] : memref<8x128xf32, #tpu.memory_space<vmem>>, vector<8x128xf32>
    tpu.vector_store %arg6[%c0_13, %c0_14], %22 {strides = array<i32>} : memref<8x128xf32, #tpu.memory_space<vmem>>, vector<8x128xf32>,
    return
  }
  func.func @transform_0(%arg0: i32) -> (i32, i32) {
    %c0_i32 = arith.constant 0 : i32
    %c0_i32_0 = arith.constant 0 : i32
    return %arg0, %c0_i32 : i32, i32
  }
  func.func @transform_1(%arg0: i32) -> (i32, i32) {
    %c0_i32 = arith.constant 0 : i32
    %c0_i32_0 = arith.constant 0 : i32
    %c0_i32_1 = arith.constant 0 : i32
    return %c0_i32, %c0_i32_0 : i32, i32
  }
  func.func @transform_2(%arg0: i32) -> (i32, i32) {
    %c0_i32 = arith.constant 0 : i32
    %c0_i32_0 = arith.constant 0 : i32
    %c0_i32_1 = arith.constant 0 : i32
    return %c0_i32, %c0_i32_0 : i32, i32
  }
  func.func @transform_3(%arg0: i32) -> (i32, i32) {
    %c0_i32 = arith.constant 0 : i32
    %c0_i32_0 = arith.constant 0 : i32
    %c0_i32_1 = arith.constant 0 : i32
    return %c0_i32, %c0_i32_0 : i32, i32
  }
  func.func @transform_4(%arg0: i32) -> (i32, i32) {
    %c0_i32 = arith.constant 0 : i32
    %c0_i32_0 = arith.constant 0 : i32
    %c0_i32_1 = arith.constant 0 : i32
    return %c0_i32, %c0_i32_0 : i32, i32
  }
  func.func @transform_5(%arg0: i32) -> (i32, i32) {
    %c0_i32 = arith.constant 0 : i32
    %c0_i32_0 = arith.constant 0 : i32
    return %arg0, %c0_i32 : i32, i32
  }
}

</mosaic_0001>

<llo_original>
// kernel: net_forward.3
$region0: #{net_forward.3}
  #allocation0 [shape = 'u32[]', space=smem, size = 0x4, offset = 0x4, fixed_abs, tag = 'smem constant byte address 0x4 - core index']
  #allocation1 [shape = 'u32[144,128]{1,0:T(1,128)}', space=vmem, size = 0x12000, scoped, tag = 'internal scratch']
  %s0 = inlined_call_operand.vmem [shape: f32[8,512], index: 0, kind: input, shape index: {}]
  %s1 = inlined_call_operand.vmem [shape: f32[512,64], index: 1, kind: input, shape index: {}]
  %s2 = inlined_call_operand.vmem [shape: f32[1,64], index: 2, kind: input, shape index: {}]
  %s3 = inlined_call_operand.vmem [shape: f32[64,128], index: 3, kind: input, shape index: {}]
  %s4 = inlined_call_operand.vmem [shape: f32[1,128], index: 4, kind: input, shape index: {}]
  %s5 = inlined_call_operand.vmem [shape: f32[8,128], index: 5, kind: output, shape index: {}]
  %s6 = sld [smem:[#allocation0]]
  $region30: #{net_forward.3} parent=0
    _
  %s8 = ssub.s32 1, %s6
  %s9 = scalar_select 0, %s8, %s6
  // Predicated region
  $region2: #{net_forward.3} parent=0 // pred_check
    _
  $region3: #{net_forward.3} parent=0 // pred_check_branch
    %11 = sbr.rel (0) target = $region5
  $region4: #{net_forward.3} parent=0 // pred_region
    _
  $region5: #{net_forward.3} parent=0 // pred_fallthru
    _
  // Predicated region
  $region6: #{net_forward.3} parent=0 // pred_check
    _
  $region7: #{net_forward.3} parent=0 // pred_check_branch
    %13 = sbr.rel (0) target = $region9
  $region8: #{net_forward.3} parent=0 // pred_region
    _
  $region9: #{net_forward.3} parent=0 // pred_fallthru
    _
  // Predicated region
  $region10: #{net_forward.3} parent=0 // pred_check
    _
  $region11: #{net_forward.3} parent=0 // pred_check_branch
    %15 = sbr.rel (0) target = $region13
  $region12: #{net_forward.3} parent=0 // pred_region
    _
  $region13: #{net_forward.3} parent=0 // pred_fallthru
    _
  // Predicated region
  $region14: #{net_forward.3} parent=0 // pred_check
    _
  $region15: #{net_forward.3} parent=0 // pred_check_branch
    %17 = sbr.rel (0) target = $region17
  $region16: #{net_forward.3} parent=0 // pred_region
    _
  $region17: #{net_forward.3} parent=0 // pred_fallthru
    _
  // Predicated region
  $region18: #{net_forward.3} parent=0 // pred_check
    _
  $region19: #{net_forward.3} parent=0 // pred_check_branch
    %19 = sbr.rel (0) target = $region21
  $region20: #{net_forward.3} parent=0 // pred_region
    _
  $region21: #{net_forward.3} parent=0 // pred_fallthru
    _
  %v20 = vld [vmem:[%s0] sm:$0xff]
  %v21 = vld [vmem:[%s0 + $0x8] sm:$0xff]
  %v22 = vld [vmem:[%s0 + $0x10] sm:$0xff]
  %v23 = vld [vmem:[%s0 + $0x18] sm:$0xff]
  %v24 = vld [vmem:[%s1] sm:$0xff]
  %v25 = vld [vmem:[%s1 + $0x8] sm:$0xff]
  %v26 = vld [vmem:[%s1 + $0x10] sm:$0xff]
  %v27 = vld [vmem:[%s1 + $0x18] sm:$0xff]
  %v28 = vld [vmem:[%s1 + $0x20] sm:$0xff]
  %v29 = vld [vmem:[%s1 + $0x28] sm:$0xff]
  %v30 = vld [vmem:[%s1 + $0x30] sm:$0xff]
  %v31 = vld [vmem:[%s1 + $0x38] sm:$0xff]
  %v32 = vld [vmem:[%s1 + $0x40] sm:$0xff]
  %v33 = vld [vmem:[%s1 + $0x48] sm:$0xff]
  %v34 = vld [vmem:[%s1 + $0x50] sm:$0xff]
  %v35 = vld [vmem:[%s1 + $0x58] sm:$0xff]
  %v36 = vld [vmem:[%s1 + $0x60] sm:$0xff]
  %v37 = vld [vmem:[%s1 + $0x68] sm:$0xff]
  %v38 = vld [vmem:[%s1 + $0x70] sm:$0xff]
  %v39 = vld [vmem:[%s1 + $0x78] sm:$0xff]
  %v40 = vld [vmem:[%s1 + $0x80] sm:$0xff]
  %v41 = vld [vmem:[%s1 + $0x88] sm:$0xff]
  %v42 = vld [vmem:[%s1 + $0x90] sm:$0xff]
  %v43 = vld [vmem:[%s1 + $0x98] sm:$0xff]
  %v44 = vld [vmem:[%s1 + $0xa0] sm:$0xff]
  %v45 = vld [vmem:[%s1 + $0xa8] sm:$0xff]
  %v46 = vld [vmem:[%s1 + $0xb0] sm:$0xff]
  %v47 = vld [vmem:[%s1 + $0xb8] sm:$0xff]
  %v48 = vld [vmem:[%s1 + $0xc0] sm:$0xff]
  %v49 = vld [vmem:[%s1 + $0xc8] sm:$0xff]
  %v50 = vld [vmem:[%s1 + $0xd0] sm:$0xff]
  %v51 = vld [vmem:[%s1 + $0xd8] sm:$0xff]
  %v52 = vld [vmem:[%s1 + $0xe0] sm:$0xff]
  %v53 = vld [vmem:[%s1 + $0xe8] sm:$0xff]
  %v54 = vld [vmem:[%s1 + $0xf0] sm:$0xff]
  %v55 = vld [vmem:[%s1 + $0xf8] sm:$0xff]
  %v56 = vld [vmem:[%s1 + $0x100] sm:$0xff]
  %v57 = vld [vmem:[%s1 + $0x108] sm:$0xff]
  %v58 = vld [vmem:[%s1 + $0x110] sm:$0xff]
  %v59 = vld [vmem:[%s1 + $0x118] sm:$0xff]
  %v60 = vld [vmem:[%s1 + $0x120] sm:$0xff]
  %v61 = vld [vmem:[%s1 + $0x128] sm:$0xff]
  %v62 = vld [vmem:[%s1 + $0x130] sm:$0xff]
  %v63 = vld [vmem:[%s1 + $0x138] sm:$0xff]
  %v64 = vld [vmem:[%s1 + $0x140] sm:$0xff]
  %v65 = vld [vmem:[%s1 + $0x148] sm:$0xff]
  %v66 = vld [vmem:[%s1 + $0x150] sm:$0xff]
  %v67 = vld [vmem:[%s1 + $0x158] sm:$0xff]
  %v68 = vld [vmem:[%s1 + $0x160] sm:$0xff]
  %v69 = vld [vmem:[%s1 + $0x168] sm:$0xff]
  %v70 = vld [vmem:[%s1 + $0x170] sm:$0xff]
  %v71 = vld [vmem:[%s1 + $0x178] sm:$0xff]
  %v72 = vld [vmem:[%s1 + $0x180] sm:$0xff]
  %v73 = vld [vmem:[%s1 + $0x188] sm:$0xff]
  %v74 = vld [vmem:[%s1 + $0x190] sm:$0xff]
  %v75 = vld [vmem:[%s1 + $0x198] sm:$0xff]
  %v76 = vld [vmem:[%s1 + $0x1a0] sm:$0xff]
  %v77 = vld [vmem:[%s1 + $0x1a8] sm:$0xff]
  %v78 = vld [vmem:[%s1 + $0x1b0] sm:$0xff]
  %v79 = vld [vmem:[%s1 + $0x1b8] sm:$0xff]
  %v80 = vld [vmem:[%s1 + $0x1c0] sm:$0xff]
  %v81 = vld [vmem:[%s1 + $0x1c8] sm:$0xff]
  %v82 = vld [vmem:[%s1 + $0x1d0] sm:$0xff]
  %v83 = vld [vmem:[%s1 + $0x1d8] sm:$0xff]
  %v84 = vld [vmem:[%s1 + $0x1e0] sm:$0xff]
  %v85 = vld [vmem:[%s1 + $0x1e8] sm:$0xff]
  %v86 = vld [vmem:[%s1 + $0x1f0] sm:$0xff]
  %v87 = vld [vmem:[%s1 + $0x1f8] sm:$0xff]
  %v88 = vld [vmem:[%s2] sm:$0x1]
  %v90 = vlaneseq
  %v91 = vshrl.u32 %v90, 7
  %v92 = vsub.s32 0, %v91
  %v93 = vrot.slane %v88, %v92
  %95 = vmatprep.subr.mxu0 0.0
  %96 = vmatpush1.msra.mxu0 %v39
  %97 = vmatprep.subr.mxu0 0.0
  %98 = vmatpush1.msra.mxu0 %v38
  %99 = vmatprep.subr.mxu0 0.0
  %100 = vmatpush1.msra.mxu0 %v37
  %101 = vmatprep.subr.mxu0 0.0
  %102 = vmatpush1.msra.mxu0 %v36
  %103 = vmatprep.subr.mxu0 0.0
  %104 = vmatpush1.msra.mxu0 %v35
  %105 = vmatprep.subr.mxu0 0.0
  %106 = vmatpush1.msra.mxu0 %v34
  %107 = vmatprep.subr.mxu0 0.0
  %108 = vmatpush1.msra.mxu0 %v33
  %109 = vmatprep.subr.mxu0 0.0
  %110 = vmatpush1.msra.mxu0 %v32
  %111 = vmatprep.subr.mxu0 0.0
  %112 = vmatpush1.msra.mxu0 %v31
  %113 = vmatprep.subr.mxu0 0.0
  %114 = vmatpush1.msra.mxu0 %v30
  %115 = vmatprep.subr.mxu0 0.0
  %116 = vmatpush1.msra.mxu0 %v29
  %117 = vmatprep.subr.mxu0 0.0
  %118 = vmatpush1.msra.mxu0 %v28
  %119 = vmatprep.subr.mxu0 0.0
  %120 = vmatpush1.msra.mxu0 %v27
  %121 = vmatprep.subr.mxu0 0.0
  %122 = vmatpush1.msra.mxu0 %v26
  %123 = vmatprep.subr.mxu0 0.0
  %124 = vmatpush1.msra.mxu0 %v25
  %125 = vmatprep.subr.mxu0 0.0
  %126 = vmatpush1.msra.mxu0 %v24
  %127 = vmatprep.subr.mxu0 0.0
  %128 = vmatpush2.msra.mxu0 %v55
  %129 = vmatprep.subr.mxu0 0.0
  %130 = vmatpush2.msra.mxu0 %v54
  %131 = vmatprep.subr.mxu0 0.0
  %132 = vmatpush2.msra.mxu0 %v53
  %133 = vmatprep.subr.mxu0 0.0
  %134 = vmatpush2.msra.mxu0 %v52
  %135 = vmatprep.subr.mxu0 0.0
  %136 = vmatpush2.msra.mxu0 %v51
  %137 = vmatprep.subr.mxu0 0.0
  %138 = vmatpush2.msra.mxu0 %v50
  %139 = vmatprep.subr.mxu0 0.0
  %140 = vmatpush2.msra.mxu0 %v49
  %141 = vmatprep.subr.mxu0 0.0
  %142 = vmatpush2.msra.mxu0 %v48
  %143 = vmatprep.subr.mxu0 0.0
  %144 = vmatpush2.msra.mxu0 %v47
  %145 = vmatprep.subr.mxu0 0.0
  %146 = vmatpush2.msra.mxu0 %v46
  %147 = vmatprep.subr.mxu0 0.0
  %148 = vmatpush2.msra.mxu0 %v45
  %149 = vmatprep.subr.mxu0 0.0
  %150 = vmatpush2.msra.mxu0 %v44
  %151 = vmatprep.subr.mxu0 0.0
  %152 = vmatpush2.msra.mxu0 %v43
  %153 = vmatprep.subr.mxu0 0.0
  %154 = vmatpush2.msra.mxu0 %v42
  %155 = vmatprep.subr.mxu0 0.0
  %156 = vmatpush2.msra.mxu0 %v41
  %157 = vmatprep.subr.mxu0 0.0
  %158 = vmatpush2.msra.mxu0 %v40
  %159 = vmatprep.mubr.f32.mxu0 %v21
  %160 = vmatmul.mubr.f32.gmra.mxu0 %v20
  %v161 = vpop.f32.mrf.mxu0
  %v162 = vadd.f32 %v93, %v161
  %v163 = vpop.f32.mrf.mxu0
  %164 = vdwg.mxu0
  %165 = vmatprep.subr.mxu0 0.0
  %166 = vmatpush1.msra.mxu0 %v71
  %167 = vmatprep.subr.mxu0 0.0
  %168 = vmatpush1.msra.mxu0 %v70
  %169 = vmatprep.subr.mxu0 0.0
  %170 = vmatpush1.msra.mxu0 %v69
  %171 = vmatprep.subr.mxu0 0.0
  %172 = vmatpush1.msra.mxu0 %v68
  %173 = vmatprep.subr.mxu0 0.0
  %174 = vmatpush1.msra.mxu0 %v67
  %175 = vmatprep.subr.mxu0 0.0
  %176 = vmatpush1.msra.mxu0 %v66
  %177 = vmatprep.subr.mxu0 0.0
  %178 = vmatpush1.msra.mxu0 %v65
  %179 = vmatprep.subr.mxu0 0.0
  %180 = vmatpush1.msra.mxu0 %v64
  %181 = vmatprep.subr.mxu0 0.0
  %182 = vmatpush1.msra.mxu0 %v63
  %183 = vmatprep.subr.mxu0 0.0
  %184 = vmatpush1.msra.mxu0 %v62
  %185 = vmatprep.subr.mxu0 0.0
  %186 = vmatpush1.msra.mxu0 %v61
  %187 = vmatprep.subr.mxu0 0.0
  %188 = vmatpush1.msra.mxu0 %v60
  %189 = vmatprep.subr.mxu0 0.0
  %190 = vmatpush1.msra.mxu0 %v59
  %191 = vmatprep.subr.mxu0 0.0
  %192 = vmatpush1.msra.mxu0 %v58
  %193 = vmatprep.subr.mxu0 0.0
  %194 = vmatpush1.msra.mxu0 %v57
  %195 = vmatprep.subr.mxu0 0.0
  %196 = vmatpush1.msra.mxu0 %v56
  %197 = vmatprep.subr.mxu0 0.0
  %198 = vmatpush2.msra.mxu0 %v87
  %199 = vmatprep.subr.mxu0 0.0
  %200 = vmatpush2.msra.mxu0 %v86
  %201 = vmatprep.subr.mxu0 0.0
  %202 = vmatpush2.msra.mxu0 %v85
  %203 = vmatprep.subr.mxu0 0.0
  %204 = vmatpush2.msra.mxu0 %v84
  %205 = vmatprep.subr.mxu0 0.0
  %206 = vmatpush2.msra.mxu0 %v83
  %207 = vmatprep.subr.mxu0 0.0
  %208 = vmatpush2.msra.mxu0 %v82
  %209 = vmatprep.subr.mxu0 0.0
  %210 = vmatpush2.msra.mxu0 %v81
  %211 = vmatprep.subr.mxu0 0.0
  %212 = vmatpush2.msra.mxu0 %v80
  %213 = vmatprep.subr.mxu0 0.0
  %214 = vmatpush2.msra.mxu0 %v79
  %215 = vmatprep.subr.mxu0 0.0
  %216 = vmatpush2.msra.mxu0 %v78
  %217 = vmatprep.subr.mxu0 0.0
  %218 = vmatpush2.msra.mxu0 %v77
  %219 = vmatprep.subr.mxu0 0.0
  %220 = vmatpush2.msra.mxu0 %v76
  %221 = vmatprep.subr.mxu0 0.0
  %222 = vmatpush2.msra.mxu0 %v75
  %223 = vmatprep.subr.mxu0 0.0
  %224 = vmatpush2.msra.mxu0 %v74
  %225 = vmatprep.subr.mxu0 0.0
  %226 = vmatpush2.msra.mxu0 %v73
  %227 = vmatprep.subr.mxu0 0.0
  %228 = vmatpush2.msra.mxu0 %v72
  %229 = vmatprep.mubr.f32.mxu0 %v23
  %230 = vmatmul.mubr.f32.gmra.mxu0 %v22
  %v231 = vpop.f32.mrf.mxu0
  %v232 = vadd.f32 %v162, %v231
  %v233 = vpop.f32.mrf.mxu0
  %234 = vdwg.mxu0
  %v235 = vmax.f32 %v232, 0.0
  %v236 = vld [vmem:[%s3] sm:$0xff]
  %v237 = vld [vmem:[%s3 + $0x8] sm:$0xff]
  %v238 = vld [vmem:[%s3 + $0x10] sm:$0xff]
  %v239 = vld [vmem:[%s3 + $0x18] sm:$0xff]
  %v240 = vld [vmem:[%s3 + $0x20] sm:$0xff]
  %v241 = vld [vmem:[%s3 + $0x28] sm:$0xff]
  %v242 = vld [vmem:[%s3 + $0x30] sm:$0xff]
  %v243 = vld [vmem:[%s3 + $0x38] sm:$0xff]
  %v244 = vld [vmem:[%s4] sm:$0x1]
  %v246 = vlaneseq
  %v247 = vshrl.u32 %v246, 7
  %v248 = vsub.s32 0, %v247
  %v249 = vrot.slane %v244, %v248
  %vm251 = vcmask 523264
  %v253 = vsel %vm251, %v235, 0
  %255 = vmatprep.subr.mxu0 0.0
  %256 = vmatpush1.msra.mxu0 0.0
  %257 = vmatprep.subr.mxu0 0.0
  %258 = vmatpush1.msra.mxu0 0.0
  %259 = vmatprep.subr.mxu0 0.0
  %260 = vmatpush1.msra.mxu0 0.0
  %261 = vmatprep.subr.mxu0 0.0
  %262 = vmatpush1.msra.mxu0 0.0
  %263 = vmatprep.subr.mxu0 0.0
  %264 = vmatpush1.msra.mxu0 0.0
  %265 = vmatprep.subr.mxu0 0.0
  %266 = vmatpush1.msra.mxu0 0.0
  %267 = vmatprep.subr.mxu0 0.0
  %268 = vmatpush1.msra.mxu0 0.0
  %269 = vmatprep.subr.mxu0 0.0
  %270 = vmatpush1.msra.mxu0 0.0
  %271 = vmatprep.subr.mxu0 0.0
  %272 = vmatpush1.msra.mxu0 %v243
  %273 = vmatprep.subr.mxu0 0.0
  %274 = vmatpush1.msra.mxu0 %v242
  %275 = vmatprep.subr.mxu0 0.0
  %276 = vmatpush1.msra.mxu0 %v241
  %277 = vmatprep.subr.mxu0 0.0
  %278 = vmatpush1.msra.mxu0 %v240
  %279 = vmatprep.subr.mxu0 0.0
  %280 = vmatpush1.msra.mxu0 %v239
  %281 = vmatprep.subr.mxu0 0.0
  %282 = vmatpush1.msra.mxu0 %v238
  %283 = vmatprep.subr.mxu0 0.0
  %284 = vmatpush1.msra.mxu0 %v237
  %285 = vmatprep.subr.mxu0 0.0
  %286 = vmatpush1.msra.mxu0 %v236
  %287 = vmatprep.subr.mxu0 0.0
  %288 = vmatpush2.msra.mxu0 0.0
  %289 = vmatprep.subr.mxu0 0.0
  %290 = vmatpush2.msra.mxu0 0.0
  %291 = vmatprep.subr.mxu0 0.0
  %292 = vmatpush2.msra.mxu0 0.0
  %293 = vmatprep.subr.mxu0 0.0
  %294 = vmatpush2.msra.mxu0 0.0
  %295 = vmatprep.subr.mxu0 0.0
  %296 = vmatpush2.msra.mxu0 0.0
  %297 = vmatprep.subr.mxu0 0.0
  %298 = vmatpush2.msra.mxu0 0.0
  %299 = vmatprep.subr.mxu0 0.0
  %300 = vmatpush2.msra.mxu0 0.0
  %301 = vmatprep.subr.mxu0 0.0
  %302 = vmatpush2.msra.mxu0 0.0
  %303 = vmatprep.subr.mxu0 0.0
  %304 = vmatpush2.msra.mxu0 0.0
  %305 = vmatprep.subr.mxu0 0.0
  %306 = vmatpush2.msra.mxu0 0.0
  %307 = vmatprep.subr.mxu0 0.0
  %308 = vmatpush2.msra.mxu0 0.0
  %309 = vmatprep.subr.mxu0 0.0
  %310 = vmatpush2.msra.mxu0 0.0
  %311 = vmatprep.subr.mxu0 0.0
  %312 = vmatpush2.msra.mxu0 0.0
  %313 = vmatprep.subr.mxu0 0.0
  %314 = vmatpush2.msra.mxu0 0.0
  %315 = vmatprep.subr.mxu0 0.0
  %316 = vmatpush2.msra.mxu0 0.0
  %317 = vmatprep.subr.mxu0 0.0
  %318 = vmatpush2.msra.mxu0 0.0
  %319 = vmatprep.mubr.f32.mxu0 0.0
  %320 = vmatmul.mubr.f32.gmra.mxu0 %v253
  %v321 = vpop.f32.mrf.mxu0
  %v322 = vadd.f32 %v249, %v321
  %v323 = vpop.f32.mrf.mxu0
  %324 = vdwg.mxu0
  %325 = vmax.xlane.f32.xlu0 %v322
  %v326 = vpop.xlane.xlu0 %325
  %v327 = vsub.f32 %v322, %v326
  %v328 = vmul.f32 %v327, 1.442695
  %v329 = vpow.pop %v328
  %330 = vadd.xlane.f32.xlu0 %v329
  %v331 = vpop.xlane.xlu0 %330
  %v332 = vlog2.pop %v331
  %v333 = vmul.f32 %v332, 0.6931472
  %v334 = vsub.f32 %v327, %v333
  %335 = vst [vmem:[%s5] sm:$0xff] %v334
  // Predicated region
  $region22: #{net_forward.3} parent=0 // pred_check
    _
  $region23: #{net_forward.3} parent=0 // pred_check_branch
    %337 = sbr.rel (0) target = $region25
  $region24: #{net_forward.3} parent=0 // pred_region
    _
  $region25: #{net_forward.3} parent=0 // pred_fallthru
    _
  // Predicated region
  $region26: #{net_forward.3} parent=0 // pred_check
    _
  $region27: #{net_forward.3} parent=0 // pred_check_branch
    %339 = sbr.rel (0) target = $region29
  $region28: #{net_forward.3} parent=0 // pred_region
    _
  $region29: #{net_forward.3} parent=0 // pred_fallthru
    _

// kernel: net_forward.2
$region0: #{net_forward.2}
  #allocation0 [shape = 'u32[]', space=smem, size = 0x4, offset = 0x4, fixed_abs, tag = 'smem constant byte address 0x4 - core index']
  #allocation1 [shape = 'u32[144,128]{1,0:T(1,128)}', space=vmem, size = 0x12000, scoped, tag = 'internal scratch']
  #allocation2 [shape = 'f32[12,24,128]{2,1,0:T(8,128)}', space=vmem, size = 0x24000, scoped, tag = 'scratch operand']
  #allocation3 [shape = 'f32[12,12,128]{2,1,0:T(8,128)}', space=vmem, size = 0x18000, scoped, tag = 'scratch operand']
  #allocation4 [shape = 'f32[4,8,128]{2,1,0:T(8,128)}', space=vmem, size = 0x4000, scoped, tag = 'scratch operand']
  %s0 = inlined_call_operand.vmem [shape: f32[28,28,128], index: 0, kind: input, shape index: {}]
  %s1 = inlined_call_operand.vmem [shape: f32[32,128], index: 1, kind: input, shape index: {}]
  %s2 = inlined_call_operand.vmem [shape: f32[1,128], index: 2, kind: input, shape index: {}]
  %s3 = inlined_call_operand.vmem [shape: f32[25,128,128], index: 3, kind: input, shape index: {}]
  %s4 = inlined_call_operand.vmem [shape: f32[1,128], index: 4, kind: input, shape index: {}]
  %s5 = inlined_call_operand.vmem [shape: f32[4,4,128], index: 5, kind: output, shape index: {}]
  %s6 = sld [smem:[#allocation0]]
  $region30: #{net_forward.2} parent=0
    _
  %s8 = ssub.s32 1, %s6
  %s9 = scalar_select 0, %s8, %s6
  // Predicated region
  $region2: #{net_forward.2} parent=0 // pred_check
    _
  $region3: #{net_forward.2} parent=0 // pred_check_branch
    %11 = sbr.rel (0) target = $region5
  $region4: #{net_forward.2} parent=0 // pred_region
    _
  $region5: #{net_forward.2} parent=0 // pred_fallthru
    _
  // Predicated region
  $region6: #{net_forward.2} parent=0 // pred_check
    _
  $region7: #{net_forward.2} parent=0 // pred_check_branch
    %13 = sbr.rel (0) target = $region9
  $region8: #{net_forward.2} parent=0 // pred_region
    _
  $region9: #{net_forward.2} parent=0 // pred_fallthru
    _
  // Predicated region
  $region10: #{net_forward.2} parent=0 // pred_check
    _
  $region11: #{net_forward.2} parent=0 // pred_check_branch
    %15 = sbr.rel (0) target = $region13
  $region12: #{net_forward.2} parent=0 // pred_region
    _
  $region13: #{net_forward.2} parent=0 // pred_fallthru
    _
  // Predicated region
  $region14: #{net_forward.2} parent=0 // pred_check
    _
  $region15: #{net_forward.2} parent=0 // pred_check_branch
    %17 = sbr.rel (0) target = $region17
  $region16: #{net_forward.2} parent=0 // pred_region
    _
  $region17: #{net_forward.2} parent=0 // pred_fallthru
    _
  // Predicated region
  $region18: #{net_forward.2} parent=0 // pred_check
    _
  $region19: #{net_forward.2} parent=0 // pred_check_branch
    %19 = sbr.rel (0) target = $region21
  $region20: #{net_forward.2} parent=0 // pred_region
    _
  $region21: #{net_forward.2} parent=0 // pred_fallthru
    _
  %v20 = vld [vmem:[%s0] sm:$0xff]
  %v21 = vld [vmem:[%s0 + $0x8] sm:$0xff]
  %v22 = vld [vmem:[%s0 + $0x10] sm:$0xff]
  %v23 = vld [vmem:[%s0 + $0x20] sm:$0xff]
  %v24 = vld [vmem:[%s0 + $0x28] sm:$0xff]
  %v25 = vld [vmem:[%s0 + $0x30] sm:$0xff]
  %v26 = vld [vmem:[%s0 + $0x40] sm:$0xff]
  %v27 = vld [vmem:[%s0 + $0x48] sm:$0xff]
  %v28 = vld [vmem:[%s0 + $0x50] sm:$0xff]
  %v29 = vld [vmem:[%s0 + $0x60] sm:$0xff]
  %v30 = vld [vmem:[%s0 + $0x68] sm:$0xff]
  %v31 = vld [vmem:[%s0 + $0x70] sm:$0xff]
  %v32 = vld [vmem:[%s0 + $0x80] sm:$0xff]
  %v33 = vld [vmem:[%s0 + $0x88] sm:$0xff]
  %v34 = vld [vmem:[%s0 + $0x90] sm:$0xff]
  %v35 = vld [vmem:[%s0 + $0xa0] sm:$0xff]
  %v36 = vld [vmem:[%s0 + $0xa8] sm:$0xff]
  %v37 = vld [vmem:[%s0 + $0xb0] sm:$0xff]
  %v38 = vld [vmem:[%s0 + $0xc0] sm:$0xff]
  %v39 = vld [vmem:[%s0 + $0xc8] sm:$0xff]
  %v40 = vld [vmem:[%s0 + $0xd0] sm:$0xff]
  %v41 = vld [vmem:[%s0 + $0xe0] sm:$0xff]
  %v42 = vld [vmem:[%s0 + $0xe8] sm:$0xff]
  %v43 = vld [vmem:[%s0 + $0xf0] sm:$0xff]
  %v44 = vld [vmem:[%s0 + $0x100] sm:$0xff]
  %v45 = vld [vmem:[%s0 + $0x108] sm:$0xff]
  %v46 = vld [vmem:[%s0 + $0x110] sm:$0xff]
  %v47 = vld [vmem:[%s0 + $0x120] sm:$0xff]
  %v48 = vld [vmem:[%s0 + $0x128] sm:$0xff]
  %v49 = vld [vmem:[%s0 + $0x130] sm:$0xff]
  %v50 = vld [vmem:[%s0 + $0x140] sm:$0xff]
  %v51 = vld [vmem:[%s0 + $0x148] sm:$0xff]
  %v52 = vld [vmem:[%s0 + $0x150] sm:$0xff]
  %v53 = vld [vmem:[%s0 + $0x160] sm:$0xff]
  %v54 = vld [vmem:[%s0 + $0x168] sm:$0xff]
  %v55 = vld [vmem:[%s0 + $0x170] sm:$0xff]
  %v56 = vld [vmem:[%s0 + $0x180] sm:$0xff]
  %v57 = vld [vmem:[%s0 + $0x188] sm:$0xff]
  %v58 = vld [vmem:[%s0 + $0x190] sm:$0xff]
  %v59 = vld [vmem:[%s0 + $0x1a0] sm:$0xff]
  %v60 = vld [vmem:[%s0 + $0x1a8] sm:$0xff]
  %v61 = vld [vmem:[%s0 + $0x1b0] sm:$0xff]
  %v62 = vld [vmem:[%s0 + $0x1c0] sm:$0xff]
  %v63 = vld [vmem:[%s0 + $0x1c8] sm:$0xff]
  %v64 = vld [vmem:[%s0 + $0x1d0] sm:$0xff]
  %v65 = vld [vmem:[%s0 + $0x1e0] sm:$0xff]
  %v66 = vld [vmem:[%s0 + $0x1e8] sm:$0xff]
  %v67 = vld [vmem:[%s0 + $0x1f0] sm:$0xff]
  %v68 = vld [vmem:[%s0 + $0x200] sm:$0xff]
  %v69 = vld [vmem:[%s0 + $0x208] sm:$0xff]
  %v70 = vld [vmem:[%s0 + $0x210] sm:$0xff]
  %v71 = vld [vmem:[%s0 + $0x220] sm:$0xff]
  %v72 = vld [vmem:[%s0 + $0x228] sm:$0xff]
  %v73 = vld [vmem:[%s0 + $0x230] sm:$0xff]
  %v74 = vld [vmem:[%s0 + $0x240] sm:$0xff]
  %v75 = vld [vmem:[%s0 + $0x248] sm:$0xff]
  %v76 = vld [vmem:[%s0 + $0x250] sm:$0xff]
  %v77 = vld [vmem:[%s0 + $0x260] sm:$0xff]
  %v78 = vld [vmem:[%s0 + $0x268] sm:$0xff]
  %v79 = vld [vmem:[%s0 + $0x270] sm:$0xff]
  %v80 = vld [vmem:[%s0 + $0x280] sm:$0xff]
  %v81 = vld [vmem:[%s0 + $0x288] sm:$0xff]
  %v82 = vld [vmem:[%s0 + $0x290] sm:$0xff]
  %v83 = vld [vmem:[%s0 + $0x2a0] sm:$0xff]
  %v84 = vld [vmem:[%s0 + $0x2a8] sm:$0xff]
  %v85 = vld [vmem:[%s0 + $0x2b0] sm:$0xff]
  %v86 = vld [vmem:[%s0 + $0x2c0] sm:$0xff]
  %v87 = vld [vmem:[%s0 + $0x2c8] sm:$0xff]
  %v88 = vld [vmem:[%s0 + $0x2d0] sm:$0xff]
  %v89 = vld [vmem:[%s0 + $0x2e0] sm:$0xff]
  %v90 = vld [vmem:[%s0 + $0x2e8] sm:$0xff]
  %v91 = vld [vmem:[%s0 + $0x2f0] sm:$0xff]
  %v92 = vld [vmem:[%s1] sm:$0x1]
  %v93 = vlaneseq
  %v94 = vshrl.u32 %v93, 7
  %v95 = vsub.s32 0, %v94
  %v96 = vrot.slane %v92, %v95
  %v97 = vmul.f32 %v20, %v96
  %v98 = vmul.f32 %v21, %v96
  %v99 = vmul.f32 %v22, %v96
  %v100 = vmul.f32 %v23, %v96
  %v101 = vmul.f32 %v24, %v96
  %v102 = vmul.f32 %v25, %v96
  %v103 = vmul.f32 %v26, %v96
  %v104 = vmul.f32 %v27, %v96
  %v105 = vmul.f32 %v28, %v96
  %v106 = vmul.f32 %v29, %v96
  %v107 = vmul.f32 %v30, %v96
  %v108 = vmul.f32 %v31, %v96
  %v109 = vmul.f32 %v32, %v96
  %v110 = vmul.f32 %v33, %v96
  %v111 = vmul.f32 %v34, %v96
  %v112 = vmul.f32 %v35, %v96
  %v113 = vmul.f32 %v36, %v96
  %v114 = vmul.f32 %v37, %v96
  %v115 = vmul.f32 %v38, %v96
  %v116 = vmul.f32 %v39, %v96
  %v117 = vmul.f32 %v40, %v96
  %v118 = vmul.f32 %v41, %v96
  %v119 = vmul.f32 %v42, %v96
  %v120 = vmul.f32 %v43, %v96
  %v121 = vmul.f32 %v44, %v96
  %v122 = vmul.f32 %v45, %v96
  %v123 = vmul.f32 %v46, %v96
  %v124 = vmul.f32 %v47, %v96
  %v125 = vmul.f32 %v48, %v96
  %v126 = vmul.f32 %v49, %v96
  %v127 = vmul.f32 %v50, %v96
  %v128 = vmul.f32 %v51, %v96
  %v129 = vmul.f32 %v52, %v96
  %v130 = vmul.f32 %v53, %v96
  %v131 = vmul.f32 %v54, %v96
  %v132 = vmul.f32 %v55, %v96
  %v133 = vmul.f32 %v56, %v96
  %v134 = vmul.f32 %v57, %v96
  %v135 = vmul.f32 %v58, %v96
  %v136 = vmul.f32 %v59, %v96
  %v137 = vmul.f32 %v60, %v96
  %v138 = vmul.f32 %v61, %v96
  %v139 = vmul.f32 %v62, %v96
  %v140 = vmul.f32 %v63, %v96
  %v141 = vmul.f32 %v64, %v96
  %v142 = vmul.f32 %v65, %v96
  %v143 = vmul.f32 %v66, %v96
  %v144 = vmul.f32 %v67, %v96
  %v145 = vmul.f32 %v68, %v96
  %v146 = vmul.f32 %v69, %v96
  %v147 = vmul.f32 %v70, %v96
  %v148 = vmul.f32 %v71, %v96
  %v149 = vmul.f32 %v72, %v96
  %v150 = vmul.f32 %v73, %v96
  %v151 = vmul.f32 %v74, %v96
  %v152 = vmul.f32 %v75, %v96
  %v153 = vmul.f32 %v76, %v96
  %v154 = vmul.f32 %v77, %v96
  %v155 = vmul.f32 %v78, %v96
  %v156 = vmul.f32 %v79, %v96
  %v157 = vmul.f32 %v80, %v96
  %v158 = vmul.f32 %v81, %v96
  %v159 = vmul.f32 %v82, %v96
  %v160 = vmul.f32 %v83, %v96
  %v161 = vmul.f32 %v84, %v96
  %v162 = vmul.f32 %v85, %v96
  %v163 = vmul.f32 %v86, %v96
  %v164 = vmul.f32 %v87, %v96
  %v165 = vmul.f32 %v88, %v96
  %v166 = vmul.f32 %v89, %v96
  %v167 = vmul.f32 %v90, %v96
  %v168 = vmul.f32 %v91, %v96
  %v169 = vld [vmem:[%s0 + $0x1] sm:$0xff]
  %v170 = vld [vmem:[%s0 + $0x9] sm:$0xff]
  %v171 = vld [vmem:[%s0 + $0x11] sm:$0xff]
  %v172 = vld [vmem:[%s0 + $0x21] sm:$0xff]
  %v173 = vld [vmem:[%s0 + $0x29] sm:$0xff]
  %v174 = vld [vmem:[%s0 + $0x31] sm:$0xff]
  %v175 = vld [vmem:[%s0 + $0x41] sm:$0xff]
  %v176 = vld [vmem:[%s0 + $0x49] sm:$0xff]
  %v177 = vld [vmem:[%s0 + $0x51] sm:$0xff]
  %v178 = vld [vmem:[%s0 + $0x61] sm:$0xff]
  %v179 = vld [vmem:[%s0 + $0x69] sm:$0xff]
  %v180 = vld [vmem:[%s0 + $0x71] sm:$0xff]
  %v181 = vld [vmem:[%s0 + $0x81] sm:$0xff]
  %v182 = vld [vmem:[%s0 + $0x89] sm:$0xff]
  %v183 = vld [vmem:[%s0 + $0x91] sm:$0xff]
  %v184 = vld [vmem:[%s0 + $0xa1] sm:$0xff]
  %v185 = vld [vmem:[%s0 + $0xa9] sm:$0xff]
  %v186 = vld [vmem:[%s0 + $0xb1] sm:$0xff]
  %v187 = vld [vmem:[%s0 + $0xc1] sm:$0xff]
  %v188 = vld [vmem:[%s0 + $0xc9] sm:$0xff]
  %v189 = vld [vmem:[%s0 + $0xd1] sm:$0xff]
  %v190 = vld [vmem:[%s0 + $0xe1] sm:$0xff]
  %v191 = vld [vmem:[%s0 + $0xe9] sm:$0xff]
  %v192 = vld [vmem:[%s0 + $0xf1] sm:$0xff]
  %v193 = vld [vmem:[%s0 + $0x101] sm:$0xff]
  %v194 = vld [vmem:[%s0 + $0x109] sm:$0xff]
  %v195 = vld [vmem:[%s0 + $0x111] sm:$0xff]
  %v196 = vld [vmem:[%s0 + $0x121] sm:$0xff]
  %v197 = vld [vmem:[%s0 + $0x129] sm:$0xff]
  %v198 = vld [vmem:[%s0 + $0x131] sm:$0xff]
  %v199 = vld [vmem:[%s0 + $0x141] sm:$0xff]
  %v200 = vld [vmem:[%s0 + $0x149] sm:$0xff]
  %v201 = vld [vmem:[%s0 + $0x151] sm:$0xff]
  %v202 = vld [vmem:[%s0 + $0x161] sm:$0xff]
  %v203 = vld [vmem:[%s0 + $0x169] sm:$0xff]
  %v204 = vld [vmem:[%s0 + $0x171] sm:$0xff]
  %v205 = vld [vmem:[%s0 + $0x181] sm:$0xff]
  %v206 = vld [vmem:[%s0 + $0x189] sm:$0xff]
  %v207 = vld [vmem:[%s0 + $0x191] sm:$0xff]
  %v208 = vld [vmem:[%s0 + $0x1a1] sm:$0xff]
  %v209 = vld [vmem:[%s0 + $0x1a9] sm:$0xff]
  %v210 = vld [vmem:[%s0 + $0x1b1] sm:$0xff]
  %v211 = vld [vmem:[%s0 + $0x1c1] sm:$0xff]
  %v212 = vld [vmem:[%s0 + $0x1c9] sm:$0xff]
  %v213 = vld [vmem:[%s0 + $0x1d1] sm:$0xff]
  %v214 = vld [vmem:[%s0 + $0x1e1] sm:$0xff]
  %v215 = vld [vmem:[%s0 + $0x1e9] sm:$0xff]
  %v216 = vld [vmem:[%s0 + $0x1f1] sm:$0xff]
  %v217 = vld [vmem:[%s0 + $0x201] sm:$0xff]
  %v218 = vld [vmem:[%s0 + $0x209] sm:$0xff]
  %v219 = vld [vmem:[%s0 + $0x211] sm:$0xff]
  %v220 = vld [vmem:[%s0 + $0x221] sm:$0xff]
  %v221 = vld [vmem:[%s0 + $0x229] sm:$0xff]
  %v222 = vld [vmem:[%s0 + $0x231] sm:$0xff]
  %v223 = vld [vmem:[%s0 + $0x241] sm:$0xff]
  %v224 = vld [vmem:[%s0 + $0x249] sm:$0xff]
  %v225 = vld [vmem:[%s0 + $0x251] sm:$0xff]
  %v226 = vld [vmem:[%s0 + $0x261] sm:$0xff]
  %v227 = vld [vmem:[%s0 + $0x269] sm:$0xff]
  %v228 = vld [vmem:[%s0 + $0x271] sm:$0xff]
  %v229 = vld [vmem:[%s0 + $0x281] sm:$0xff]
  %v230 = vld [vmem:[%s0 + $0x289] sm:$0xff]
  %v231 = vld [vmem:[%s0 + $0x291] sm:$0xff]
  %v232 = vld [vmem:[%s0 + $0x2a1] sm:$0xff]
  %v233 = vld [vmem:[%s0 + $0x2a9] sm:$0xff]
  %v234 = vld [vmem:[%s0 + $0x2b1] sm:$0xff]
  %v235 = vld [vmem:[%s0 + $0x2c1] sm:$0xff]
  %v236 = vld [vmem:[%s0 + $0x2c9] sm:$0xff]
  %v237 = vld [vmem:[%s0 + $0x2d1] sm:$0xff]
  %v238 = vld [vmem:[%s0 + $0x2e1] sm:$0xff]
  %v239 = vld [vmem:[%s0 + $0x2e9] sm:$0xff]
  %v240 = vld [vmem:[%s0 + $0x2f1] sm:$0xff]
  %v241 = vld [vmem:[%s1 + $0x1] sm:$0x1]
  %v242 = vlaneseq
  %v243 = vshrl.u32 %v242, 7
  %v244 = vsub.s32 0, %v243
  %v245 = vrot.slane %v241, %v244
  %v246 = vmul.f32 %v169, %v245
  %v247 = vmul.f32 %v170, %v245
  %v248 = vmul.f32 %v171, %v245
  %v249 = vmul.f32 %v172, %v245
  %v250 = vmul.f32 %v173, %v245
  %v251 = vmul.f32 %v174, %v245
  %v252 = vmul.f32 %v175, %v245
  %v253 = vmul.f32 %v176, %v245
  %v254 = vmul.f32 %v177, %v245
  %v255 = vmul.f32 %v178, %v245
  %v256 = vmul.f32 %v179, %v245
  %v257 = vmul.f32 %v180, %v245
  %v258 = vmul.f32 %v181, %v245
  %v259 = vmul.f32 %v182, %v245
  %v260 = vmul.f32 %v183, %v245
  %v261 = vmul.f32 %v184, %v245
  %v262 = vmul.f32 %v185, %v245
  %v263 = vmul.f32 %v186, %v245
  %v264 = vmul.f32 %v187, %v245
  %v265 = vmul.f32 %v188, %v245
  %v266 = vmul.f32 %v189, %v245
  %v267 = vmul.f32 %v190, %v245
  %v268 = vmul.f32 %v191, %v245
  %v269 = vmul.f32 %v192, %v245
  %v270 = vmul.f32 %v193, %v245
  %v271 = vmul.f32 %v194, %v245
  %v272 = vmul.f32 %v195, %v245
  %v273 = vmul.f32 %v196, %v245
  %v274 = vmul.f32 %v197, %v245
  %v275 = vmul.f32 %v198, %v245
  %v276 = vmul.f32 %v199, %v245
  %v277 = vmul.f32 %v200, %v245
  %v278 = vmul.f32 %v201, %v245
  %v279 = vmul.f32 %v202, %v245
  %v280 = vmul.f32 %v203, %v245
  %v281 = vmul.f32 %v204, %v245
  %v282 = vmul.f32 %v205, %v245
  %v283 = vmul.f32 %v206, %v245
  %v284 = vmul.f32 %v207, %v245
  %v285 = vmul.f32 %v208, %v245
  %v286 = vmul.f32 %v209, %v245
  %v287 = vmul.f32 %v210, %v245
  %v288 = vmul.f32 %v211, %v245
  %v289 = vmul.f32 %v212, %v245
  %v290 = vmul.f32 %v213, %v245
  %v291 = vmul.f32 %v214, %v245
  %v292 = vmul.f32 %v215, %v245
  %v293 = vmul.f32 %v216, %v245
  %v294 = vmul.f32 %v217, %v245
  %v295 = vmul.f32 %v218, %v245
  %v296 = vmul.f32 %v219, %v245
  %v297 = vmul.f32 %v220, %v245
  %v298 = vmul.f32 %v221, %v245
  %v299 = vmul.f32 %v222, %v245
  %v300 = vmul.f32 %v223, %v245
  %v301 = vmul.f32 %v224, %v245
  %v302 = vmul.f32 %v225, %v245
  %v303 = vmul.f32 %v226, %v245
  %v304 = vmul.f32 %v227, %v245
  %v305 = vmul.f32 %v228, %v245
  %v306 = vmul.f32 %v229, %v245
  %v307 = vmul.f32 %v230, %v245
  %v308 = vmul.f32 %v231, %v245
  %v309 = vmul.f32 %v232, %v245
  %v310 = vmul.f32 %v233, %v245
  %v311 = vmul.f32 %v234, %v245
  %v312 = vmul.f32 %v235, %v245
  %v313 = vmul.f32 %v236, %v245
  %v314 = vmul.f32 %v237, %v245
  %v315 = vmul.f32 %v238, %v245
  %v316 = vmul.f32 %v239, %v245
  %v317 = vmul.f32 %v240, %v245
  %v318 = vadd.f32 %v97, %v246
  %v319 = vadd.f32 %v98, %v247
  %v320 = vadd.f32 %v99, %v248
  %v321 = vadd.f32 %v100, %v249
  %v322 = vadd.f32 %v101, %v250
  %v323 = vadd.f32 %v102, %v251
  %v324 = vadd.f32 %v103, %v252
  %v325 = vadd.f32 %v104, %v253
  %v326 = vadd.f32 %v105, %v254
  %v327 = vadd.f32 %v106, %v255
  %v328 = vadd.f32 %v107, %v256
  %v329 = vadd.f32 %v108, %v257
  %v330 = vadd.f32 %v109, %v258
  %v331 = vadd.f32 %v110, %v259
  %v332 = vadd.f32 %v111, %v260
  %v333 = vadd.f32 %v112, %v261
  %v334 = vadd.f32 %v113, %v262
  %v335 = vadd.f32 %v114, %v263
  %v336 = vadd.f32 %v115, %v264
  %v337 = vadd.f32 %v116, %v265
  %v338 = vadd.f32 %v117, %v266
  %v339 = vadd.f32 %v118, %v267
  %v340 = vadd.f32 %v119, %v268
  %v341 = vadd.f32 %v120, %v269
  %v342 = vadd.f32 %v121, %v270
  %v343 = vadd.f32 %v122, %v271
  %v344 = vadd.f32 %v123, %v272
  %v345 = vadd.f32 %v124, %v273
  %v346 = vadd.f32 %v125, %v274
  %v347 = vadd.f32 %v126, %v275
  %v348 = vadd.f32 %v127, %v276
  %v349 = vadd.f32 %v128, %v277
  %v350 = vadd.f32 %v129, %v278
  %v351 = vadd.f32 %v130, %v279
  %v352 = vadd.f32 %v131, %v280
  %v353 = vadd.f32 %v132, %v281
  %v354 = vadd.f32 %v133, %v282
  %v355 = vadd.f32 %v134, %v283
  %v356 = vadd.f32 %v135, %v284
  %v357 = vadd.f32 %v136, %v285
  %v358 = vadd.f32 %v137, %v286
  %v359 = vadd.f32 %v138, %v287
  %v360 = vadd.f32 %v139, %v288
  %v361 = vadd.f32 %v140, %v289
  %v362 = vadd.f32 %v141, %v290
  %v363 = vadd.f32 %v142, %v291
  %v364 = vadd.f32 %v143, %v292
  %v365 = vadd.f32 %v144, %v293
  %v366 = vadd.f32 %v145, %v294
  %v367 = vadd.f32 %v146, %v295
  %v368 = vadd.f32 %v147, %v296
  %v369 = vadd.f32 %v148, %v297
  %v370 = vadd.f32 %v149, %v298
  %v371 = vadd.f32 %v150, %v299
  %v372 = vadd.f32 %v151, %v300
  %v373 = vadd.f32 %v152, %v301
  %v374 = vadd.f32 %v153, %v302
  %v375 = vadd.f32 %v154, %v303
  %v376 = vadd.f32 %v155, %v304
  %v377 = vadd.f32 %v156, %v305
  %v378 = vadd.f32 %v157, %v306
  %v379 = vadd.f32 %v158, %v307
  %v380 = vadd.f32 %v159, %v308
  %v381 = vadd.f32 %v160, %v309
  %v382 = vadd.f32 %v161, %v310
  %v383 = vadd.f32 %v162, %v311
  %v384 = vadd.f32 %v163, %v312
  %v385 = vadd.f32 %v164, %v313
  %v386 = vadd.f32 %v165, %v314
  %v387 = vadd.f32 %v166, %v315
  %v388 = vadd.f32 %v167, %v316
  %v389 = vadd.f32 %v168, %v317
  %v390 = vld [vmem:[%s0 + $0x2] sm:$0xff]
  %v391 = vld [vmem:[%s0 + $0xa] sm:$0xff]
  %v392 = vld [vmem:[%s0 + $0x12] sm:$0xff]
  %v393 = vld [vmem:[%s0 + $0x22] sm:$0xff]
  %v394 = vld [vmem:[%s0 + $0x2a] sm:$0xff]
  %v395 = vld [vmem:[%s0 + $0x32] sm:$0xff]
  %v396 = vld [vmem:[%s0 + $0x42] sm:$0xff]
  %v397 = vld [vmem:[%s0 + $0x4a] sm:$0xff]
  %v398 = vld [vmem:[%s0 + $0x52] sm:$0xff]
  %v399 = vld [vmem:[%s0 + $0x62] sm:$0xff]
  %v400 = vld [vmem:[%s0 + $0x6a] sm:$0xff]
  %v401 = vld [vmem:[%s0 + $0x72] sm:$0xff]
  %v402 = vld [vmem:[%s0 + $0x82] sm:$0xff]
  %v403 = vld [vmem:[%s0 + $0x8a] sm:$0xff]
  %v404 = vld [vmem:[%s0 + $0x92] sm:$0xff]
  %v405 = vld [vmem:[%s0 + $0xa2] sm:$0xff]
  %v406 = vld [vmem:[%s0 + $0xaa] sm:$0xff]
  %v407 = vld [vmem:[%s0 + $0xb2] sm:$0xff]
  %v408 = vld [vmem:[%s0 + $0xc2] sm:$0xff]
  %v409 = vld [vmem:[%s0 + $0xca] sm:$0xff]
  %v410 = vld [vmem:[%s0 + $0xd2] sm:$0xff]
  %v411 = vld [vmem:[%s0 + $0xe2] sm:$0xff]
  %v412 = vld [vmem:[%s0 + $0xea] sm:$0xff]
  %v413 = vld [vmem:[%s0 + $0xf2] sm:$0xff]
  %v414 = vld [vmem:[%s0 + $0x102] sm:$0xff]
  %v415 = vld [vmem:[%s0 + $0x10a] sm:$0xff]
  %v416 = vld [vmem:[%s0 + $0x112] sm:$0xff]
  %v417 = vld [vmem:[%s0 + $0x122] sm:$0xff]
  %v418 = vld [vmem:[%s0 + $0x12a] sm:$0xff]
  %v419 = vld [vmem:[%s0 + $0x132] sm:$0xff]
  %v420 = vld [vmem:[%s0 + $0x142] sm:$0xff]
  %v421 = vld [vmem:[%s0 + $0x14a] sm:$0xff]
  %v422 = vld [vmem:[%s0 + $0x152] sm:$0xff]
  %v423 = vld [vmem:[%s0 + $0x162] sm:$0xff]
  %v424 = vld [vmem:[%s0 + $0x16a] sm:$0xff]
  %v425 = vld [vmem:[%s0 + $0x172] sm:$0xff]
  %v426 = vld [vmem:[%s0 + $0x182] sm:$0xff]
  %v427 = vld [vmem:[%s0 + $0x18a] sm:$0xff]
  %v428 = vld [vmem:[%s0 + $0x192] sm:$0xff]
  %v429 = vld [vmem:[%s0 + $0x1a2] sm:$0xff]
  %v430 = vld [vmem:[%s0 + $0x1aa] sm:$0xff]
  %v431 = vld [vmem:[%s0 + $0x1b2] sm:$0xff]
  %v432 = vld [vmem:[%s0 + $0x1c2] sm:$0xff]
  %v433 = vld [vmem:[%s0 + $0x1ca] sm:$0xff]
  %v434 = vld [vmem:[%s0 + $0x1d2] sm:$0xff]
  %v435 = vld [vmem:[%s0 + $0x1e2] sm:$0xff]
  %v436 = vld [vmem:[%s0 + $0x1ea] sm:$0xff]
  %v437 = vld [vmem:[%s0 + $0x1f2] sm:$0xff]
  %v438 = vld [vmem:[%s0 + $0x202] sm:$0xff]
  %v439 = vld [vmem:[%s0 + $0x20a] sm:$0xff]
  %v440 = vld [vmem:[%s0 + $0x212] sm:$0xff]
  %v441 = vld [vmem:[%s0 + $0x222] sm:$0xff]
  %v442 = vld [vmem:[%s0 + $0x22a] sm:$0xff]
  %v443 = vld [vmem:[%s0 + $0x232] sm:$0xff]
  %v444 = vld [vmem:[%s0 + $0x242] sm:$0xff]
  %v445 = vld [vmem:[%s0 + $0x24a] sm:$0xff]
  %v446 = vld [vmem:[%s0 + $0x252] sm:$0xff]
  %v447 = vld [vmem:[%s0 + $0x262] sm:$0xff]
  %v448 = vld [vmem:[%s0 + $0x26a] sm:$0xff]
  %v449 = vld [vmem:[%s0 + $0x272] sm:$0xff]
  %v450 = vld [vmem:[%s0 + $0x282] sm:$0xff]
  %v451 = vld [vmem:[%s0 + $0x28a] sm:$0xff]
  %v452 = vld [vmem:[%s0 + $0x292] sm:$0xff]
  %v453 = vld [vmem:[%s0 + $0x2a2] sm:$0xff]
  %v454 = vld [vmem:[%s0 + $0x2aa] sm:$0xff]
  %v455 = vld [vmem:[%s0 + $0x2b2] sm:$0xff]
  %v456 = vld [vmem:[%s0 + $0x2c2] sm:$0xff]
  %v457 = vld [vmem:[%s0 + $0x2ca] sm:$0xff]
  %v458 = vld [vmem:[%s0 + $0x2d2] sm:$0xff]
  %v459 = vld [vmem:[%s0 + $0x2e2] sm:$0xff]
  %v460 = vld [vmem:[%s0 + $0x2ea] sm:$0xff]
  %v461 = vld [vmem:[%s0 + $0x2f2] sm:$0xff]
  %v462 = vld [vmem:[%s1 + $0x2] sm:$0x1]
  %v463 = vlaneseq
  %v464 = vshrl.u32 %v463, 7
  %v465 = vsub.s32 0, %v464
  %v466 = vrot.slane %v462, %v465
  %v467 = vmul.f32 %v390, %v466
  %v468 = vmul.f32 %v391, %v466
  %v469 = vmul.f32 %v392, %v466
  %v470 = vmul.f32 %v393, %v466
  %v471 = vmul.f32 %v394, %v466
  %v472 = vmul.f32 %v395, %v466
  %v473 = vmul.f32 %v396, %v466
  %v474 = vmul.f32 %v397, %v466
  %v475 = vmul.f32 %v398, %v466
  %v476 = vmul.f32 %v399, %v466
  %v477 = vmul.f32 %v400, %v466
  %v478 = vmul.f32 %v401, %v466
  %v479 = vmul.f32 %v402, %v466
  %v480 = vmul.f32 %v403, %v466
  %v481 = vmul.f32 %v404, %v466
  %v482 = vmul.f32 %v405, %v466
  %v483 = vmul.f32 %v406, %v466
  %v484 = vmul.f32 %v407, %v466
  %v485 = vmul.f32 %v408, %v466
  %v486 = vmul.f32 %v409, %v466
  %v487 = vmul.f32 %v410, %v466
  %v488 = vmul.f32 %v411, %v466
  %v489 = vmul.f32 %v412, %v466
  %v490 = vmul.f32 %v413, %v466
  %v491 = vmul.f32 %v414, %v466
  %v492 = vmul.f32 %v415, %v466
  %v493 = vmul.f32 %v416, %v466
  %v494 = vmul.f32 %v417, %v466
  %v495 = vmul.f32 %v418, %v466
  %v496 = vmul.f32 %v419, %v466
  %v497 = vmul.f32 %v420, %v466
  %v498 = vmul.f32 %v421, %v466
  %v499 = vmul.f32 %v422, %v466
  %v500 = vmul.f32 %v423, %v466
  %v501 = vmul.f32 %v424, %v466
  %v502 = vmul.f32 %v425, %v466
  %v503 = vmul.f32 %v426, %v466
  %v504 = vmul.f32 %v427, %v466
  %v505 = vmul.f32 %v428, %v466
  %v506 = vmul.f32 %v429, %v466
  %v507 = vmul.f32 %v430, %v466
  %v508 = vmul.f32 %v431, %v466
  %v509 = vmul.f32 %v432, %v466
  %v510 = vmul.f32 %v433, %v466
  %v511 = vmul.f32 %v434, %v466
  %v512 = vmul.f32 %v435, %v466
  %v513 = vmul.f32 %v436, %v466
  %v514 = vmul.f32 %v437, %v466
  %v515 = vmul.f32 %v438, %v466
  %v516 = vmul.f32 %v439, %v466
  %v517 = vmul.f32 %v440, %v466
  %v518 = vmul.f32 %v441, %v466
  %v519 = vmul.f32 %v442, %v466
  %v520 = vmul.f32 %v443, %v466
  %v521 = vmul.f32 %v444, %v466
  %v522 = vmul.f32 %v445, %v466
  %v523 = vmul.f32 %v446, %v466
  %v524 = vmul.f32 %v447, %v466
  %v525 = vmul.f32 %v448, %v466
  %v526 = vmul.f32 %v449, %v466
  %v527 = vmul.f32 %v450, %v466
  %v528 = vmul.f32 %v451, %v466
  %v529 = vmul.f32 %v452, %v466
  %v530 = vmul.f32 %v453, %v466
  %v531 = vmul.f32 %v454, %v466
  %v532 = vmul.f32 %v455, %v466
  %v533 = vmul.f32 %v456, %v466
  %v534 = vmul.f32 %v457, %v466
  %v535 = vmul.f32 %v458, %v466
  %v536 = vmul.f32 %v459, %v466
  %v537 = vmul.f32 %v460, %v466
  %v538 = vmul.f32 %v461, %v466
  %v539 = vadd.f32 %v318, %v467
  %v540 = vadd.f32 %v319, %v468
  %v541 = vadd.f32 %v320, %v469
  %v542 = vadd.f32 %v321, %v470
  %v543 = vadd.f32 %v322, %v471
  %v544 = vadd.f32 %v323, %v472
  %v545 = vadd.f32 %v324, %v473
  %v546 = vadd.f32 %v325, %v474
  %v547 = vadd.f32 %v326, %v475
  %v548 = vadd.f32 %v327, %v476
  %v549 = vadd.f32 %v328, %v477
  %v550 = vadd.f32 %v329, %v478
  %v551 = vadd.f32 %v330, %v479
  %v552 = vadd.f32 %v331, %v480
  %v553 = vadd.f32 %v332, %v481
  %v554 = vadd.f32 %v333, %v482
  %v555 = vadd.f32 %v334, %v483
  %v556 = vadd.f32 %v335, %v484
  %v557 = vadd.f32 %v336, %v485
  %v558 = vadd.f32 %v337, %v486
  %v559 = vadd.f32 %v338, %v487
  %v560 = vadd.f32 %v339, %v488
  %v561 = vadd.f32 %v340, %v489
  %v562 = vadd.f32 %v341, %v490
  %v563 = vadd.f32 %v342, %v491
  %v564 = vadd.f32 %v343, %v492
  %v565 = vadd.f32 %v344, %v493
  %v566 = vadd.f32 %v345, %v494
  %v567 = vadd.f32 %v346, %v495
  %v568 = vadd.f32 %v347, %v496
  %v569 = vadd.f32 %v348, %v497
  %v570 = vadd.f32 %v349, %v498
  %v571 = vadd.f32 %v350, %v499
  %v572 = vadd.f32 %v351, %v500
  %v573 = vadd.f32 %v352, %v501
  %v574 = vadd.f32 %v353, %v502
  %v575 = vadd.f32 %v354, %v503
  %v576 = vadd.f32 %v355, %v504
  %v577 = vadd.f32 %v356, %v505
  %v578 = vadd.f32 %v357, %v506
  %v579 = vadd.f32 %v358, %v507
  %v580 = vadd.f32 %v359, %v508
  %v581 = vadd.f32 %v360, %v509
  %v582 = vadd.f32 %v361, %v510
  %v583 = vadd.f32 %v362, %v511
  %v584 = vadd.f32 %v363, %v512
  %v585 = vadd.f32 %v364, %v513
  %v586 = vadd.f32 %v365, %v514
  %v587 = vadd.f32 %v366, %v515
  %v588 = vadd.f32 %v367, %v516
  %v589 = vadd.f32 %v368, %v517
  %v590 = vadd.f32 %v369, %v518
  %v591 = vadd.f32 %v370, %v519
  %v592 = vadd.f32 %v371, %v520
  %v593 = vadd.f32 %v372, %v521
  %v594 = vadd.f32 %v373, %v522
  %v595 = vadd.f32 %v374, %v523
  %v596 = vadd.f32 %v375, %v524
  %v597 = vadd.f32 %v376, %v525
  %v598 = vadd.f32 %v377, %v526
  %v599 = vadd.f32 %v378, %v527
  %v600 = vadd.f32 %v379, %v528
  %v601 = vadd.f32 %v380, %v529
  %v602 = vadd.f32 %v381, %v530
  %v603 = vadd.f32 %v382, %v531
  %v604 = vadd.f32 %v383, %v532
  %v605 = vadd.f32 %v384, %v533
  %v606 = vadd.f32 %v385, %v534
  %v607 = vadd.f32 %v386, %v535
  %v608 = vadd.f32 %v387, %v536
  %v609 = vadd.f32 %v388, %v537
  %v610 = vadd.f32 %v389, %v538
  %v611 = vld [vmem:[%s0 + $0x3] sm:$0xff]
  %v612 = vld [vmem:[%s0 + $0xb] sm:$0xff]
  %v613 = vld [vmem:[%s0 + $0x13] sm:$0xff]
  %v614 = vld [vmem:[%s0 + $0x23] sm:$0xff]
  %v615 = vld [vmem:[%s0 + $0x2b] sm:$0xff]
  %v616 = vld [vmem:[%s0 + $0x33] sm:$0xff]
  %v617 = vld [vmem:[%s0 + $0x43] sm:$0xff]
  %v618 = vld [vmem:[%s0 + $0x4b] sm:$0xff]
  %v619 = vld [vmem:[%s0 + $0x53] sm:$0xff]
  %v620 = vld [vmem:[%s0 + $0x63] sm:$0xff]
  %v621 = vld [vmem:[%s0 + $0x6b] sm:$0xff]
  %v622 = vld [vmem:[%s0 + $0x73] sm:$0xff]
  %v623 = vld [vmem:[%s0 + $0x83] sm:$0xff]
  %v624 = vld [vmem:[%s0 + $0x8b] sm:$0xff]
  %v625 = vld [vmem:[%s0 + $0x93] sm:$0xff]
  %v626 = vld [vmem:[%s0 + $0xa3] sm:$0xff]
  %v627 = vld [vmem:[%s0 + $0xab] sm:$0xff]
  %v628 = vld [vmem:[%s0 + $0xb3] sm:$0xff]
  %v629 = vld [vmem:[%s0 + $0xc3] sm:$0xff]
  %v630 = vld [vmem:[%s0 + $0xcb] sm:$0xff]
  %v631 = vld [vmem:[%s0 + $0xd3] sm:$0xff]
  %v632 = vld [vmem:[%s0 + $0xe3] sm:$0xff]
  %v633 = vld [vmem:[%s0 + $0xeb] sm:$0xff]
  %v634 = vld [vmem:[%s0 + $0xf3] sm:$0xff]
  %v635 = vld [vmem:[%s0 + $0x103] sm:$0xff]
  %v636 = vld [vmem:[%s0 + $0x10b] sm:$0xff]
  %v637 = vld [vmem:[%s0 + $0x113] sm:$0xff]
  %v638 = vld [vmem:[%s0 + $0x123] sm:$0xff]
  %v639 = vld [vmem:[%s0 + $0x12b] sm:$0xff]
  %v640 = vld [vmem:[%s0 + $0x133] sm:$0xff]
  %v641 = vld [vmem:[%s0 + $0x143] sm:$0xff]
  %v642 = vld [vmem:[%s0 + $0x14b] sm:$0xff]
  %v643 = vld [vmem:[%s0 + $0x153] sm:$0xff]
  %v644 = vld [vmem:[%s0 + $0x163] sm:$0xff]
  %v645 = vld [vmem:[%s0 + $0x16b] sm:$0xff]
  %v646 = vld [vmem:[%s0 + $0x173] sm:$0xff]
  %v647 = vld [vmem:[%s0 + $0x183] sm:$0xff]
  %v648 = vld [vmem:[%s0 + $0x18b] sm:$0xff]
  %v649 = vld [vmem:[%s0 + $0x193] sm:$0xff]
  %v650 = vld [vmem:[%s0 + $0x1a3] sm:$0xff]
  %v651 = vld [vmem:[%s0 + $0x1ab] sm:$0xff]
  %v652 = vld [vmem:[%s0 + $0x1b3] sm:$0xff]
  %v653 = vld [vmem:[%s0 + $0x1c3] sm:$0xff]
  %v654 = vld [vmem:[%s0 + $0x1cb] sm:$0xff]
  %v655 = vld [vmem:[%s0 + $0x1d3] sm:$0xff]
  %v656 = vld [vmem:[%s0 + $0x1e3] sm:$0xff]
  %v657 = vld [vmem:[%s0 + $0x1eb] sm:$0xff]
  %v658 = vld [vmem:[%s0 + $0x1f3] sm:$0xff]
  %v659 = vld [vmem:[%s0 + $0x203] sm:$0xff]
  %v660 = vld [vmem:[%s0 + $0x20b] sm:$0xff]
  %v661 = vld [vmem:[%s0 + $0x213] sm:$0xff]
  %v662 = vld [vmem:[%s0 + $0x223] sm:$0xff]
  %v663 = vld [vmem:[%s0 + $0x22b] sm:$0xff]
  %v664 = vld [vmem:[%s0 + $0x233] sm:$0xff]
  %v665 = vld [vmem:[%s0 + $0x243] sm:$0xff]
  %v666 = vld [vmem:[%s0 + $0x24b] sm:$0xff]
  %v667 = vld [vmem:[%s0 + $0x253] sm:$0xff]
  %v668 = vld [vmem:[%s0 + $0x263] sm:$0xff]
  %v669 = vld [vmem:[%s0 + $0x26b] sm:$0xff]
  %v670 = vld [vmem:[%s0 + $0x273] sm:$0xff]
  %v671 = vld [vmem:[%s0 + $0x283] sm:$0xff]
  %v672 = vld [vmem:[%s0 + $0x28b] sm:$0xff]
  %v673 = vld [vmem:[%s0 + $0x293] sm:$0xff]
  %v674 = vld [vmem:[%s0 + $0x2a3] sm:$0xff]
  %v675 = vld [vmem:[%s0 + $0x2ab] sm:$0xff]
  %v676 = vld [vmem:[%s0 + $0x2b3] sm:$0xff]
  %v677 = vld [vmem:[%s0 + $0x2c3] sm:$0xff]
  %v678 = vld [vmem:[%s0 + $0x2cb] sm:$0xff]
  %v679 = vld [vmem:[%s0 + $0x2d3] sm:$0xff]
  %v680 = vld [vmem:[%s0 + $0x2e3] sm:$0xff]
  %v681 = vld [vmem:[%s0 + $0x2eb] sm:$0xff]
  %v682 = vld [vmem:[%s0 + $0x2f3] sm:$0xff]
  %v683 = vld [vmem:[%s1 + $0x3] sm:$0x1]
  %v684 = vlaneseq
  %v685 = vshrl.u32 %v684, 7
  %v686 = vsub.s32 0, %v685
  %v687 = vrot.slane %v683, %v686
  %v688 = vmul.f32 %v611, %v687
  %v689 = vmul.f32 %v612, %v687
  %v690 = vmul.f32 %v613, %v687
  %v691 = vmul.f32 %v614, %v687
  %v692 = vmul.f32 %v615, %v687
  %v693 = vmul.f32 %v616, %v687
  %v694 = vmul.f32 %v617, %v687
  %v695 = vmul.f32 %v618, %v687
  %v696 = vmul.f32 %v619, %v687
  %v697 = vmul.f32 %v620, %v687
  %v698 = vmul.f32 %v621, %v687
  %v699 = vmul.f32 %v622, %v687
  %v700 = vmul.f32 %v623, %v687
  %v701 = vmul.f32 %v624, %v687
  %v702 = vmul.f32 %v625, %v687
  %v703 = vmul.f32 %v626, %v687
  %v704 = vmul.f32 %v627, %v687
  %v705 = vmul.f32 %v628, %v687
  %v706 = vmul.f32 %v629, %v687
  %v707 = vmul.f32 %v630, %v687
  %v708 = vmul.f32 %v631, %v687
  %v709 = vmul.f32 %v632, %v687
  %v710 = vmul.f32 %v633, %v687
  %v711 = vmul.f32 %v634, %v687
  %v712 = vmul.f32 %v635, %v687
  %v713 = vmul.f32 %v636, %v687
  %v714 = vmul.f32 %v637, %v687
  %v715 = vmul.f32 %v638, %v687
  %v716 = vmul.f32 %v639, %v687
  %v717 = vmul.f32 %v640, %v687
  %v718 = vmul.f32 %v641, %v687
  %v719 = vmul.f32 %v642, %v687
  %v720 = vmul.f32 %v643, %v687
  %v721 = vmul.f32 %v644, %v687
  %v722 = vmul.f32 %v645, %v687
  %v723 = vmul.f32 %v646, %v687
  %v724 = vmul.f32 %v647, %v687
  %v725 = vmul.f32 %v648, %v687
  %v726 = vmul.f32 %v649, %v687
  %v727 = vmul.f32 %v650, %v687
  %v728 = vmul.f32 %v651, %v687
  %v729 = vmul.f32 %v652, %v687
  %v730 = vmul.f32 %v653, %v687
  %v731 = vmul.f32 %v654, %v687
  %v732 = vmul.f32 %v655, %v687
  %v733 = vmul.f32 %v656, %v687
  %v734 = vmul.f32 %v657, %v687
  %v735 = vmul.f32 %v658, %v687
  %v736 = vmul.f32 %v659, %v687
  %v737 = vmul.f32 %v660, %v687
  %v738 = vmul.f32 %v661, %v687
  %v739 = vmul.f32 %v662, %v687
  %v740 = vmul.f32 %v663, %v687
  %v741 = vmul.f32 %v664, %v687
  %v742 = vmul.f32 %v665, %v687
  %v743 = vmul.f32 %v666, %v687
  %v744 = vmul.f32 %v667, %v687
  %v745 = vmul.f32 %v668, %v687
  %v746 = vmul.f32 %v669, %v687
  %v747 = vmul.f32 %v670, %v687
  %v748 = vmul.f32 %v671, %v687
  %v749 = vmul.f32 %v672, %v687
  %v750 = vmul.f32 %v673, %v687
  %v751 = vmul.f32 %v674, %v687
  %v752 = vmul.f32 %v675, %v687
  %v753 = vmul.f32 %v676, %v687
  %v754 = vmul.f32 %v677, %v687
  %v755 = vmul.f32 %v678, %v687
  %v756 = vmul.f32 %v679, %v687
  %v757 = vmul.f32 %v680, %v687
  %v758 = vmul.f32 %v681, %v687
  %v759 = vmul.f32 %v682, %v687
  %v760 = vadd.f32 %v539, %v688
  %v761 = vadd.f32 %v540, %v689
  %v762 = vadd.f32 %v541, %v690
  %v763 = vadd.f32 %v542, %v691
  %v764 = vadd.f32 %v543, %v692
  %v765 = vadd.f32 %v544, %v693
  %v766 = vadd.f32 %v545, %v694
  %v767 = vadd.f32 %v546, %v695
  %v768 = vadd.f32 %v547, %v696
  %v769 = vadd.f32 %v548, %v697
  %v770 = vadd.f32 %v549, %v698
  %v771 = vadd.f32 %v550, %v699
  %v772 = vadd.f32 %v551, %v700
  %v773 = vadd.f32 %v552, %v701
  %v774 = vadd.f32 %v553, %v702
  %v775 = vadd.f32 %v554, %v703
  %v776 = vadd.f32 %v555, %v704
  %v777 = vadd.f32 %v556, %v705
  %v778 = vadd.f32 %v557, %v706
  %v779 = vadd.f32 %v558, %v707
  %v780 = vadd.f32 %v559, %v708
  %v781 = vadd.f32 %v560, %v709
  %v782 = vadd.f32 %v561, %v710
  %v783 = vadd.f32 %v562, %v711
  %v784 = vadd.f32 %v563, %v712
  %v785 = vadd.f32 %v564, %v713
  %v786 = vadd.f32 %v565, %v714
  %v787 = vadd.f32 %v566, %v715
  %v788 = vadd.f32 %v567, %v716
  %v789 = vadd.f32 %v568, %v717
  %v790 = vadd.f32 %v569, %v718
  %v791 = vadd.f32 %v570, %v719
  %v792 = vadd.f32 %v571, %v720
  %v793 = vadd.f32 %v572, %v721
  %v794 = vadd.f32 %v573, %v722
  %v795 = vadd.f32 %v574, %v723
  %v796 = vadd.f32 %v575, %v724
  %v797 = vadd.f32 %v576, %v725
  %v798 = vadd.f32 %v577, %v726
  %v799 = vadd.f32 %v578, %v727
  %v800 = vadd.f32 %v579, %v728
  %v801 = vadd.f32 %v580, %v729
  %v802 = vadd.f32 %v581, %v730
  %v803 = vadd.f32 %v582, %v731
  %v804 = vadd.f32 %v583, %v732
  %v805 = vadd.f32 %v584, %v733
  %v806 = vadd.f32 %v585, %v734
  %v807 = vadd.f32 %v586, %v735
  %v808 = vadd.f32 %v587, %v736
  %v809 = vadd.f32 %v588, %v737
  %v810 = vadd.f32 %v589, %v738
  %v811 = vadd.f32 %v590, %v739
  %v812 = vadd.f32 %v591, %v740
  %v813 = vadd.f32 %v592, %v741
  %v814 = vadd.f32 %v593, %v742
  %v815 = vadd.f32 %v594, %v743
  %v816 = vadd.f32 %v595, %v744
  %v817 = vadd.f32 %v596, %v745
  %v818 = vadd.f32 %v597, %v746
  %v819 = vadd.f32 %v598, %v747
  %v820 = vadd.f32 %v599, %v748
  %v821 = vadd.f32 %v600, %v749
  %v822 = vadd.f32 %v601, %v750
  %v823 = vadd.f32 %v602, %v751
  %v824 = vadd.f32 %v603, %v752
  %v825 = vadd.f32 %v604, %v753
  %v826 = vadd.f32 %v605, %v754
  %v827 = vadd.f32 %v606, %v755
  %v828 = vadd.f32 %v607, %v756
  %v829 = vadd.f32 %v608, %v757
  %v830 = vadd.f32 %v609, %v758
  %v831 = vadd.f32 %v610, %v759
  %v832 = vld [vmem:[%s0 + $0x4] sm:$0xff]
  %v833 = vld [vmem:[%s0 + $0xc] sm:$0xff]
  %v834 = vld [vmem:[%s0 + $0x14] sm:$0xff]
  %v835 = vld [vmem:[%s0 + $0x24] sm:$0xff]
  %v836 = vld [vmem:[%s0 + $0x2c] sm:$0xff]
  %v837 = vld [vmem:[%s0 + $0x34] sm:$0xff]
  %v838 = vld [vmem:[%s0 + $0x44] sm:$0xff]
  %v839 = vld [vmem:[%s0 + $0x4c] sm:$0xff]
  %v840 = vld [vmem:[%s0 + $0x54] sm:$0xff]
  %v841 = vld [vmem:[%s0 + $0x64] sm:$0xff]
  %v842 = vld [vmem:[%s0 + $0x6c] sm:$0xff]
  %v843 = vld [vmem:[%s0 + $0x74] sm:$0xff]
  %v844 = vld [vmem:[%s0 + $0x84] sm:$0xff]
  %v845 = vld [vmem:[%s0 + $0x8c] sm:$0xff]
  %v846 = vld [vmem:[%s0 + $0x94] sm:$0xff]
  %v847 = vld [vmem:[%s0 + $0xa4] sm:$0xff]
  %v848 = vld [vmem:[%s0 + $0xac] sm:$0xff]
  %v849 = vld [vmem:[%s0 + $0xb4] sm:$0xff]
  %v850 = vld [vmem:[%s0 + $0xc4] sm:$0xff]
  %v851 = vld [vmem:[%s0 + $0xcc] sm:$0xff]
  %v852 = vld [vmem:[%s0 + $0xd4] sm:$0xff]
  %v853 = vld [vmem:[%s0 + $0xe4] sm:$0xff]
  %v854 = vld [vmem:[%s0 + $0xec] sm:$0xff]
  %v855 = vld [vmem:[%s0 + $0xf4] sm:$0xff]
  %v856 = vld [vmem:[%s0 + $0x104] sm:$0xff]
  %v857 = vld [vmem:[%s0 + $0x10c] sm:$0xff]
  %v858 = vld [vmem:[%s0 + $0x114] sm:$0xff]
  %v859 = vld [vmem:[%s0 + $0x124] sm:$0xff]
  %v860 = vld [vmem:[%s0 + $0x12c] sm:$0xff]
  %v861 = vld [vmem:[%s0 + $0x134] sm:$0xff]
  %v862 = vld [vmem:[%s0 + $0x144] sm:$0xff]
  %v863 = vld [vmem:[%s0 + $0x14c] sm:$0xff]
  %v864 = vld [vmem:[%s0 + $0x154] sm:$0xff]
  %v865 = vld [vmem:[%s0 + $0x164] sm:$0xff]
  %v866 = vld [vmem:[%s0 + $0x16c] sm:$0xff]
  %v867 = vld [vmem:[%s0 + $0x174] sm:$0xff]
  %v868 = vld [vmem:[%s0 + $0x184] sm:$0xff]
  %v869 = vld [vmem:[%s0 + $0x18c] sm:$0xff]
  %v870 = vld [vmem:[%s0 + $0x194] sm:$0xff]
  %v871 = vld [vmem:[%s0 + $0x1a4] sm:$0xff]
  %v872 = vld [vmem:[%s0 + $0x1ac] sm:$0xff]
  %v873 = vld [vmem:[%s0 + $0x1b4] sm:$0xff]
  %v874 = vld [vmem:[%s0 + $0x1c4] sm:$0xff]
  %v875 = vld [vmem:[%s0 + $0x1cc] sm:$0xff]
  %v876 = vld [vmem:[%s0 + $0x1d4] sm:$0xff]
  %v877 = vld [vmem:[%s0 + $0x1e4] sm:$0xff]
  %v878 = vld [vmem:[%s0 + $0x1ec] sm:$0xff]
  %v879 = vld [vmem:[%s0 + $0x1f4] sm:$0xff]
  %v880 = vld [vmem:[%s0 + $0x204] sm:$0xff]
  %v881 = vld [vmem:[%s0 + $0x20c] sm:$0xff]
  %v882 = vld [vmem:[%s0 + $0x214] sm:$0xff]
  %v883 = vld [vmem:[%s0 + $0x224] sm:$0xff]
  %v884 = vld [vmem:[%s0 + $0x22c] sm:$0xff]
  %v885 = vld [vmem:[%s0 + $0x234] sm:$0xff]
  %v886 = vld [vmem:[%s0 + $0x244] sm:$0xff]
  %v887 = vld [vmem:[%s0 + $0x24c] sm:$0xff]
  %v888 = vld [vmem:[%s0 + $0x254] sm:$0xff]
  %v889 = vld [vmem:[%s0 + $0x264] sm:$0xff]
  %v890 = vld [vmem:[%s0 + $0x26c] sm:$0xff]
  %v891 = vld [vmem:[%s0 + $0x274] sm:$0xff]
  %v892 = vld [vmem:[%s0 + $0x284] sm:$0xff]
  %v893 = vld [vmem:[%s0 + $0x28c] sm:$0xff]
  %v894 = vld [vmem:[%s0 + $0x294] sm:$0xff]
  %v895 = vld [vmem:[%s0 + $0x2a4] sm:$0xff]
  %v896 = vld [vmem:[%s0 + $0x2ac] sm:$0xff]
  %v897 = vld [vmem:[%s0 + $0x2b4] sm:$0xff]
  %v898 = vld [vmem:[%s0 + $0x2c4] sm:$0xff]
  %v899 = vld [vmem:[%s0 + $0x2cc] sm:$0xff]
  %v900 = vld [vmem:[%s0 + $0x2d4] sm:$0xff]
  %v901 = vld [vmem:[%s0 + $0x2e4] sm:$0xff]
  %v902 = vld [vmem:[%s0 + $0x2ec] sm:$0xff]
  %v903 = vld [vmem:[%s0 + $0x2f4] sm:$0xff]
  %v904 = vld [vmem:[%s1 + $0x4] sm:$0x1]
  %v905 = vlaneseq
  %v906 = vshrl.u32 %v905, 7
  %v907 = vsub.s32 0, %v906
  %v908 = vrot.slane %v904, %v907
  %v909 = vmul.f32 %v832, %v908
  %v910 = vmul.f32 %v833, %v908
  %v911 = vmul.f32 %v834, %v908
  %v912 = vmul.f32 %v835, %v908
  %v913 = vmul.f32 %v836, %v908
  %v914 = vmul.f32 %v837, %v908
  %v915 = vmul.f32 %v838, %v908
  %v916 = vmul.f32 %v839, %v908
  %v917 = vmul.f32 %v840, %v908
  %v918 = vmul.f32 %v841, %v908
  %v919 = vmul.f32 %v842, %v908
  %v920 = vmul.f32 %v843, %v908
  %v921 = vmul.f32 %v844, %v908
  %v922 = vmul.f32 %v845, %v908
  %v923 = vmul.f32 %v846, %v908
  %v924 = vmul.f32 %v847, %v908
  %v925 = vmul.f32 %v848, %v908
  %v926 = vmul.f32 %v849, %v908
  %v927 = vmul.f32 %v850, %v908
  %v928 = vmul.f32 %v851, %v908
  %v929 = vmul.f32 %v852, %v908
  %v930 = vmul.f32 %v853, %v908
  %v931 = vmul.f32 %v854, %v908
  %v932 = vmul.f32 %v855, %v908
  %v933 = vmul.f32 %v856, %v908
  %v934 = vmul.f32 %v857, %v908
  %v935 = vmul.f32 %v858, %v908
  %v936 = vmul.f32 %v859, %v908
  %v937 = vmul.f32 %v860, %v908
  %v938 = vmul.f32 %v861, %v908
  %v939 = vmul.f32 %v862, %v908
  %v940 = vmul.f32 %v863, %v908
  %v941 = vmul.f32 %v864, %v908
  %v942 = vmul.f32 %v865, %v908
  %v943 = vmul.f32 %v866, %v908
  %v944 = vmul.f32 %v867, %v908
  %v945 = vmul.f32 %v868, %v908
  %v946 = vmul.f32 %v869, %v908
  %v947 = vmul.f32 %v870, %v908
  %v948 = vmul.f32 %v871, %v908
  %v949 = vmul.f32 %v872, %v908
  %v950 = vmul.f32 %v873, %v908
  %v951 = vmul.f32 %v874, %v908
  %v952 = vmul.f32 %v875, %v908
  %v953 = vmul.f32 %v876, %v908
  %v954 = vmul.f32 %v877, %v908
  %v955 = vmul.f32 %v878, %v908
  %v956 = vmul.f32 %v879, %v908
  %v957 = vmul.f32 %v880, %v908
  %v958 = vmul.f32 %v881, %v908
  %v959 = vmul.f32 %v882, %v908
  %v960 = vmul.f32 %v883, %v908
  %v961 = vmul.f32 %v884, %v908
  %v962 = vmul.f32 %v885, %v908
  %v963 = vmul.f32 %v886, %v908
  %v964 = vmul.f32 %v887, %v908
  %v965 = vmul.f32 %v888, %v908
  %v966 = vmul.f32 %v889, %v908
  %v967 = vmul.f32 %v890, %v908
  %v968 = vmul.f32 %v891, %v908
  %v969 = vmul.f32 %v892, %v908
  %v970 = vmul.f32 %v893, %v908
  %v971 = vmul.f32 %v894, %v908
  %v972 = vmul.f32 %v895, %v908
  %v973 = vmul.f32 %v896, %v908
  %v974 = vmul.f32 %v897, %v908
  %v975 = vmul.f32 %v898, %v908
  %v976 = vmul.f32 %v899, %v908
  %v977 = vmul.f32 %v900, %v908
  %v978 = vmul.f32 %v901, %v908
  %v979 = vmul.f32 %v902, %v908
  %v980 = vmul.f32 %v903, %v908
  %v981 = vadd.f32 %v760, %v909
  %v982 = vadd.f32 %v761, %v910
  %v983 = vadd.f32 %v762, %v911
  %v984 = vadd.f32 %v763, %v912
  %v985 = vadd.f32 %v764, %v913
  %v986 = vadd.f32 %v765, %v914
  %v987 = vadd.f32 %v766, %v915
  %v988 = vadd.f32 %v767, %v916
  %v989 = vadd.f32 %v768, %v917
  %v990 = vadd.f32 %v769, %v918
  %v991 = vadd.f32 %v770, %v919
  %v992 = vadd.f32 %v771, %v920
  %v993 = vadd.f32 %v772, %v921
  %v994 = vadd.f32 %v773, %v922
  %v995 = vadd.f32 %v774, %v923
  %v996 = vadd.f32 %v775, %v924
  %v997 = vadd.f32 %v776, %v925
  %v998 = vadd.f32 %v777, %v926
  %v999 = vadd.f32 %v778, %v927
  %v1000 = vadd.f32 %v779, %v928
  %v1001 = vadd.f32 %v780, %v929
  %v1002 = vadd.f32 %v781, %v930
  %v1003 = vadd.f32 %v782, %v931
  %v1004 = vadd.f32 %v783, %v932
  %v1005 = vadd.f32 %v784, %v933
  %v1006 = vadd.f32 %v785, %v934
  %v1007 = vadd.f32 %v786, %v935
  %v1008 = vadd.f32 %v787, %v936
  %v1009 = vadd.f32 %v788, %v937
  %v1010 = vadd.f32 %v789, %v938
  %v1011 = vadd.f32 %v790, %v939
  %v1012 = vadd.f32 %v791, %v940
  %v1013 = vadd.f32 %v792, %v941
  %v1014 = vadd.f32 %v793, %v942
  %v1015 = vadd.f32 %v794, %v943
  %v1016 = vadd.f32 %v795, %v944
  %v1017 = vadd.f32 %v796, %v945
  %v1018 = vadd.f32 %v797, %v946
  %v1019 = vadd.f32 %v798, %v947
  %v1020 = vadd.f32 %v799, %v948
  %v1021 = vadd.f32 %v800, %v949
  %v1022 = vadd.f32 %v801, %v950
  %v1023 = vadd.f32 %v802, %v951
  %v1024 = vadd.f32 %v803, %v952
  %v1025 = vadd.f32 %v804, %v953
  %v1026 = vadd.f32 %v805, %v954
  %v1027 = vadd.f32 %v806, %v955
  %v1028 = vadd.f32 %v807, %v956
  %v1029 = vadd.f32 %v808, %v957
  %v1030 = vadd.f32 %v809, %v958
  %v1031 = vadd.f32 %v810, %v959
  %v1032 = vadd.f32 %v811, %v960
  %v1033 = vadd.f32 %v812, %v961
  %v1034 = vadd.f32 %v813, %v962
  %v1035 = vadd.f32 %v814, %v963
  %v1036 = vadd.f32 %v815, %v964
  %v1037 = vadd.f32 %v816, %v965
  %v1038 = vadd.f32 %v817, %v966
  %v1039 = vadd.f32 %v818, %v967
  %v1040 = vadd.f32 %v819, %v968
  %v1041 = vadd.f32 %v820, %v969
  %v1042 = vadd.f32 %v821, %v970
  %v1043 = vadd.f32 %v822, %v971
  %v1044 = vadd.f32 %v823, %v972
  %v1045 = vadd.f32 %v824, %v973
  %v1046 = vadd.f32 %v825, %v974
  %v1047 = vadd.f32 %v826, %v975
  %v1048 = vadd.f32 %v827, %v976
  %v1049 = vadd.f32 %v828, %v977
  %v1050 = vadd.f32 %v829, %v978
  %v1051 = vadd.f32 %v830, %v979
  %v1052 = vadd.f32 %v831, %v980
  %s1053 = scalar_lea.vmem %s0, 32
  %v1054 = vld [vmem:[%s1053] sm:$0xff]
  %v1055 = vld [vmem:[%s1053 + $0x8] sm:$0xff]
  %v1056 = vld [vmem:[%s1053 + $0x10] sm:$0xff]
  %v1057 = vld [vmem:[%s1053 + $0x20] sm:$0xff]
  %v1058 = vld [vmem:[%s1053 + $0x28] sm:$0xff]
  %v1059 = vld [vmem:[%s1053 + $0x30] sm:$0xff]
  %v1060 = vld [vmem:[%s1053 + $0x40] sm:$0xff]
  %v1061 = vld [vmem:[%s1053 + $0x48] sm:$0xff]
  %v1062 = vld [vmem:[%s1053 + $0x50] sm:$0xff]
  %v1063 = vld [vmem:[%s1053 + $0x60] sm:$0xff]
  %v1064 = vld [vmem:[%s1053 + $0x68] sm:$0xff]
  %v1065 = vld [vmem:[%s1053 + $0x70] sm:$0xff]
  %v1066 = vld [vmem:[%s1053 + $0x80] sm:$0xff]
  %v1067 = vld [vmem:[%s1053 + $0x88] sm:$0xff]
  %v1068 = vld [vmem:[%s1053 + $0x90] sm:$0xff]
  %v1069 = vld [vmem:[%s1053 + $0xa0] sm:$0xff]
  %v1070 = vld [vmem:[%s1053 + $0xa8] sm:$0xff]
  %v1071 = vld [vmem:[%s1053 + $0xb0] sm:$0xff]
  %v1072 = vld [vmem:[%s1053 + $0xc0] sm:$0xff]
  %v1073 = vld [vmem:[%s1053 + $0xc8] sm:$0xff]
  %v1074 = vld [vmem:[%s1053 + $0xd0] sm:$0xff]
  %v1075 = vld [vmem:[%s1053 + $0xe0] sm:$0xff]
  %v1076 = vld [vmem:[%s1053 + $0xe8] sm:$0xff]
  %v1077 = vld [vmem:[%s1053 + $0xf0] sm:$0xff]
  %v1078 = vld [vmem:[%s1053 + $0x100] sm:$0xff]
  %v1079 = vld [vmem:[%s1053 + $0x108] sm:$0xff]
  %v1080 = vld [vmem:[%s1053 + $0x110] sm:$0xff]
  %v1081 = vld [vmem:[%s1053 + $0x120] sm:$0xff]
  %v1082 = vld [vmem:[%s1053 + $0x128] sm:$0xff]
  %v1083 = vld [vmem:[%s1053 + $0x130] sm:$0xff]
  %v1084 = vld [vmem:[%s1053 + $0x140] sm:$0xff]
  %v1085 = vld [vmem:[%s1053 + $0x148] sm:$0xff]
  %v1086 = vld [vmem:[%s1053 + $0x150] sm:$0xff]
  %v1087 = vld [vmem:[%s1053 + $0x160] sm:$0xff]
  %v1088 = vld [vmem:[%s1053 + $0x168] sm:$0xff]
  %v1089 = vld [vmem:[%s1053 + $0x170] sm:$0xff]
  %v1090 = vld [vmem:[%s1053 + $0x180] sm:$0xff]
  %v1091 = vld [vmem:[%s1053 + $0x188] sm:$0xff]
  %v1092 = vld [vmem:[%s1053 + $0x190] sm:$0xff]
  %v1093 = vld [vmem:[%s1053 + $0x1a0] sm:$0xff]
  %v1094 = vld [vmem:[%s1053 + $0x1a8] sm:$0xff]
  %v1095 = vld [vmem:[%s1053 + $0x1b0] sm:$0xff]
  %v1096 = vld [vmem:[%s1053 + $0x1c0] sm:$0xff]
  %v1097 = vld [vmem:[%s1053 + $0x1c8] sm:$0xff]
  %v1098 = vld [vmem:[%s1053 + $0x1d0] sm:$0xff]
  %v1099 = vld [vmem:[%s1053 + $0x1e0] sm:$0xff]
  %v1100 = vld [vmem:[%s1053 + $0x1e8] sm:$0xff]
  %v1101 = vld [vmem:[%s1053 + $0x1f0] sm:$0xff]
  %v1102 = vld [vmem:[%s1053 + $0x200] sm:$0xff]
  %v1103 = vld [vmem:[%s1053 + $0x208] sm:$0xff]
  %v1104 = vld [vmem:[%s1053 + $0x210] sm:$0xff]
  %v1105 = vld [vmem:[%s1053 + $0x220] sm:$0xff]
  %v1106 = vld [vmem:[%s1053 + $0x228] sm:$0xff]
  %v1107 = vld [vmem:[%s1053 + $0x230] sm:$0xff]
  %v1108 = vld [vmem:[%s1053 + $0x240] sm:$0xff]
  %v1109 = vld [vmem:[%s1053 + $0x248] sm:$0xff]
  %v1110 = vld [vmem:[%s1053 + $0x250] sm:$0xff]
  %v1111 = vld [vmem:[%s1053 + $0x260] sm:$0xff]
  %v1112 = vld [vmem:[%s1053 + $0x268] sm:$0xff]
  %v1113 = vld [vmem:[%s1053 + $0x270] sm:$0xff]
  %v1114 = vld [vmem:[%s1053 + $0x280] sm:$0xff]
  %v1115 = vld [vmem:[%s1053 + $0x288] sm:$0xff]
  %v1116 = vld [vmem:[%s1053 + $0x290] sm:$0xff]
  %v1117 = vld [vmem:[%s1053 + $0x2a0] sm:$0xff]
  %v1118 = vld [vmem:[%s1053 + $0x2a8] sm:$0xff]
  %v1119 = vld [vmem:[%s1053 + $0x2b0] sm:$0xff]
  %v1120 = vld [vmem:[%s1053 + $0x2c0] sm:$0xff]
  %v1121 = vld [vmem:[%s1053 + $0x2c8] sm:$0xff]
  %v1122 = vld [vmem:[%s1053 + $0x2d0] sm:$0xff]
  %v1123 = vld [vmem:[%s1053 + $0x2e0] sm:$0xff]
  %v1124 = vld [vmem:[%s1053 + $0x2e8] sm:$0xff]
  %v1125 = vld [vmem:[%s1053 + $0x2f0] sm:$0xff]
  %v1126 = vld [vmem:[%s1 + $0x5] sm:$0x1]
  %v1127 = vlaneseq
  %v1128 = vshrl.u32 %v1127, 7
  %v1129 = vsub.s32 0, %v1128
  %v1130 = vrot.slane %v1126, %v1129
  %v1131 = vmul.f32 %v1054, %v1130
  %v1132 = vmul.f32 %v1055, %v1130
  %v1133 = vmul.f32 %v1056, %v1130
  %v1134 = vmul.f32 %v1057, %v1130
  %v1135 = vmul.f32 %v1058, %v1130
  %v1136 = vmul.f32 %v1059, %v1130
  %v1137 = vmul.f32 %v1060, %v1130
  %v1138 = vmul.f32 %v1061, %v1130
  %v1139 = vmul.f32 %v1062, %v1130
  %v1140 = vmul.f32 %v1063, %v1130
  %v1141 = vmul.f32 %v1064, %v1130
  %v1142 = vmul.f32 %v1065, %v1130
  %v1143 = vmul.f32 %v1066, %v1130
  %v1144 = vmul.f32 %v1067, %v1130
  %v1145 = vmul.f32 %v1068, %v1130
  %v1146 = vmul.f32 %v1069, %v1130
  %v1147 = vmul.f32 %v1070, %v1130
  %v1148 = vmul.f32 %v1071, %v1130
  %v1149 = vmul.f32 %v1072, %v1130
  %v1150 = vmul.f32 %v1073, %v1130
  %v1151 = vmul.f32 %v1074, %v1130
  %v1152 = vmul.f32 %v1075, %v1130
  %v1153 = vmul.f32 %v1076, %v1130
  %v1154 = vmul.f32 %v1077, %v1130
  %v1155 = vmul.f32 %v1078, %v1130
  %v1156 = vmul.f32 %v1079, %v1130
  %v1157 = vmul.f32 %v1080, %v1130
  %v1158 = vmul.f32 %v1081, %v1130
  %v1159 = vmul.f32 %v1082, %v1130
  %v1160 = vmul.f32 %v1083, %v1130
  %v1161 = vmul.f32 %v1084, %v1130
  %v1162 = vmul.f32 %v1085, %v1130
  %v1163 = vmul.f32 %v1086, %v1130
  %v1164 = vmul.f32 %v1087, %v1130
  %v1165 = vmul.f32 %v1088, %v1130
  %v1166 = vmul.f32 %v1089, %v1130
  %v1167 = vmul.f32 %v1090, %v1130
  %v1168 = vmul.f32 %v1091, %v1130
  %v1169 = vmul.f32 %v1092, %v1130
  %v1170 = vmul.f32 %v1093, %v1130
  %v1171 = vmul.f32 %v1094, %v1130
  %v1172 = vmul.f32 %v1095, %v1130
  %v1173 = vmul.f32 %v1096, %v1130
  %v1174 = vmul.f32 %v1097, %v1130
  %v1175 = vmul.f32 %v1098, %v1130
  %v1176 = vmul.f32 %v1099, %v1130
  %v1177 = vmul.f32 %v1100, %v1130
  %v1178 = vmul.f32 %v1101, %v1130
  %v1179 = vmul.f32 %v1102, %v1130
  %v1180 = vmul.f32 %v1103, %v1130
  %v1181 = vmul.f32 %v1104, %v1130
  %v1182 = vmul.f32 %v1105, %v1130
  %v1183 = vmul.f32 %v1106, %v1130
  %v1184 = vmul.f32 %v1107, %v1130
  %v1185 = vmul.f32 %v1108, %v1130
  %v1186 = vmul.f32 %v1109, %v1130
  %v1187 = vmul.f32 %v1110, %v1130
  %v1188 = vmul.f32 %v1111, %v1130
  %v1189 = vmul.f32 %v1112, %v1130
  %v1190 = vmul.f32 %v1113, %v1130
  %v1191 = vmul.f32 %v1114, %v1130
  %v1192 = vmul.f32 %v1115, %v1130
  %v1193 = vmul.f32 %v1116, %v1130
  %v1194 = vmul.f32 %v1117, %v1130
  %v1195 = vmul.f32 %v1118, %v1130
  %v1196 = vmul.f32 %v1119, %v1130
  %v1197 = vmul.f32 %v1120, %v1130
  %v1198 = vmul.f32 %v1121, %v1130
  %v1199 = vmul.f32 %v1122, %v1130
  %v1200 = vmul.f32 %v1123, %v1130
  %v1201 = vmul.f32 %v1124, %v1130
  %v1202 = vmul.f32 %v1125, %v1130
  %v1203 = vadd.f32 %v981, %v1131
  %v1204 = vadd.f32 %v982, %v1132
  %v1205 = vadd.f32 %v983, %v1133
  %v1206 = vadd.f32 %v984, %v1134
  %v1207 = vadd.f32 %v985, %v1135
  %v1208 = vadd.f32 %v986, %v1136
  %v1209 = vadd.f32 %v987, %v1137
  %v1210 = vadd.f32 %v988, %v1138
  %v1211 = vadd.f32 %v989, %v1139
  %v1212 = vadd.f32 %v990, %v1140
  %v1213 = vadd.f32 %v991, %v1141
  %v1214 = vadd.f32 %v992, %v1142
  %v1215 = vadd.f32 %v993, %v1143
  %v1216 = vadd.f32 %v994, %v1144
  %v1217 = vadd.f32 %v995, %v1145
  %v1218 = vadd.f32 %v996, %v1146
  %v1219 = vadd.f32 %v997, %v1147
  %v1220 = vadd.f32 %v998, %v1148
  %v1221 = vadd.f32 %v999, %v1149
  %v1222 = vadd.f32 %v1000, %v1150
  %v1223 = vadd.f32 %v1001, %v1151
  %v1224 = vadd.f32 %v1002, %v1152
  %v1225 = vadd.f32 %v1003, %v1153
  %v1226 = vadd.f32 %v1004, %v1154
  %v1227 = vadd.f32 %v1005, %v1155
  %v1228 = vadd.f32 %v1006, %v1156
  %v1229 = vadd.f32 %v1007, %v1157
  %v1230 = vadd.f32 %v1008, %v1158
  %v1231 = vadd.f32 %v1009, %v1159
  %v1232 = vadd.f32 %v1010, %v1160
  %v1233 = vadd.f32 %v1011, %v1161
  %v1234 = vadd.f32 %v1012, %v1162
  %v1235 = vadd.f32 %v1013, %v1163
  %v1236 = vadd.f32 %v1014, %v1164
  %v1237 = vadd.f32 %v1015, %v1165
  %v1238 = vadd.f32 %v1016, %v1166
  %v1239 = vadd.f32 %v1017, %v1167
  %v1240 = vadd.f32 %v1018, %v1168
  %v1241 = vadd.f32 %v1019, %v1169
  %v1242 = vadd.f32 %v1020, %v1170
  %v1243 = vadd.f32 %v1021, %v1171
  %v1244 = vadd.f32 %v1022, %v1172
  %v1245 = vadd.f32 %v1023, %v1173
  %v1246 = vadd.f32 %v1024, %v1174
  %v1247 = vadd.f32 %v1025, %v1175
  %v1248 = vadd.f32 %v1026, %v1176
  %v1249 = vadd.f32 %v1027, %v1177
  %v1250 = vadd.f32 %v1028, %v1178
  %v1251 = vadd.f32 %v1029, %v1179
  %v1252 = vadd.f32 %v1030, %v1180
  %v1253 = vadd.f32 %v1031, %v1181
  %v1254 = vadd.f32 %v1032, %v1182
  %v1255 = vadd.f32 %v1033, %v1183
  %v1256 = vadd.f32 %v1034, %v1184
  %v1257 = vadd.f32 %v1035, %v1185
  %v1258 = vadd.f32 %v1036, %v1186
  %v1259 = vadd.f32 %v1037, %v1187
  %v1260 = vadd.f32 %v1038, %v1188
  %v1261 = vadd.f32 %v1039, %v1189
  %v1262 = vadd.f32 %v1040, %v1190
  %v1263 = vadd.f32 %v1041, %v1191
  %v1264 = vadd.f32 %v1042, %v1192
  %v1265 = vadd.f32 %v1043, %v1193
  %v1266 = vadd.f32 %v1044, %v1194
  %v1267 = vadd.f32 %v1045, %v1195
  %v1268 = vadd.f32 %v1046, %v1196
  %v1269 = vadd.f32 %v1047, %v1197
  %v1270 = vadd.f32 %v1048, %v1198
  %v1271 = vadd.f32 %v1049, %v1199
  %v1272 = vadd.f32 %v1050, %v1200
  %v1273 = vadd.f32 %v1051, %v1201
  %v1274 = vadd.f32 %v1052, %v1202
  %v1275 = vld [vmem:[%s1053 + $0x1] sm:$0xff]
  %v1276 = vld [vmem:[%s1053 + $0x9] sm:$0xff]
  %v1277 = vld [vmem:[%s1053 + $0x11] sm:$0xff]
  %v1278 = vld [vmem:[%s1053 + $0x21] sm:$0xff]
  %v1279 = vld [vmem:[%s1053 + $0x29] sm:$0xff]
  %v1280 = vld [vmem:[%s1053 + $0x31] sm:$0xff]
  %v1281 = vld [vmem:[%s1053 + $0x41] sm:$0xff]
  %v1282 = vld [vmem:[%s1053 + $0x49] sm:$0xff]
  %v1283 = vld [vmem:[%s1053 + $0x51] sm:$0xff]
  %v1284 = vld [vmem:[%s1053 + $0x61] sm:$0xff]
  %v1285 = vld [vmem:[%s1053 + $0x69] sm:$0xff]
  %v1286 = vld [vmem:[%s1053 + $0x71] sm:$0xff]
  %v1287 = vld [vmem:[%s1053 + $0x81] sm:$0xff]
  %v1288 = vld [vmem:[%s1053 + $0x89] sm:$0xff]
  %v1289 = vld [vmem:[%s1053 + $0x91] sm:$0xff]
  %v1290 = vld [vmem:[%s1053 + $0xa1] sm:$0xff]
  %v1291 = vld [vmem:[%s1053 + $0xa9] sm:$0xff]
  %v1292 = vld [vmem:[%s1053 + $0xb1] sm:$0xff]
  %v1293 = vld [vmem:[%s1053 + $0xc1] sm:$0xff]
  %v1294 = vld [vmem:[%s1053 + $0xc9] sm:$0xff]
  %v1295 = vld [vmem:[%s1053 + $0xd1] sm:$0xff]
  %v1296 = vld [vmem:[%s1053 + $0xe1] sm:$0xff]
  %v1297 = vld [vmem:[%s1053 + $0xe9] sm:$0xff]
  %v1298 = vld [vmem:[%s1053 + $0xf1] sm:$0xff]
  %v1299 = vld [vmem:[%s1053 + $0x101] sm:$0xff]
  %v1300 = vld [vmem:[%s1053 + $0x109] sm:$0xff]
  %v1301 = vld [vmem:[%s1053 + $0x111] sm:$0xff]
  %v1302 = vld [vmem:[%s1053 + $0x121] sm:$0xff]
  %v1303 = vld [vmem:[%s1053 + $0x129] sm:$0xff]
  %v1304 = vld [vmem:[%s1053 + $0x131] sm:$0xff]
  %v1305 = vld [vmem:[%s1053 + $0x141] sm:$0xff]
  %v1306 = vld [vmem:[%s1053 + $0x149] sm:$0xff]
  %v1307 = vld [vmem:[%s1053 + $0x151] sm:$0xff]
  %v1308 = vld [vmem:[%s1053 + $0x161] sm:$0xff]
  %v1309 = vld [vmem:[%s1053 + $0x169] sm:$0xff]
  %v1310 = vld [vmem:[%s1053 + $0x171] sm:$0xff]
  %v1311 = vld [vmem:[%s1053 + $0x181] sm:$0xff]
  %v1312 = vld [vmem:[%s1053 + $0x189] sm:$0xff]
  %v1313 = vld [vmem:[%s1053 + $0x191] sm:$0xff]
  %v1314 = vld [vmem:[%s1053 + $0x1a1] sm:$0xff]
  %v1315 = vld [vmem:[%s1053 + $0x1a9] sm:$0xff]
  %v1316 = vld [vmem:[%s1053 + $0x1b1] sm:$0xff]
  %v1317 = vld [vmem:[%s1053 + $0x1c1] sm:$0xff]
  %v1318 = vld [vmem:[%s1053 + $0x1c9] sm:$0xff]
  %v1319 = vld [vmem:[%s1053 + $0x1d1] sm:$0xff]
  %v1320 = vld [vmem:[%s1053 + $0x1e1] sm:$0xff]
  %v1321 = vld [vmem:[%s1053 + $0x1e9] sm:$0xff]
  %v1322 = vld [vmem:[%s1053 + $0x1f1] sm:$0xff]
  %v1323 = vld [vmem:[%s1053 + $0x201] sm:$0xff]
  %v1324 = vld [vmem:[%s1053 + $0x209] sm:$0xff]
  %v1325 = vld [vmem:[%s1053 + $0x211] sm:$0xff]
  %v1326 = vld [vmem:[%s1053 + $0x221] sm:$0xff]
  %v1327 = vld [vmem:[%s1053 + $0x229] sm:$0xff]
  %v1328 = vld [vmem:[%s1053 + $0x231] sm:$0xff]
  %v1329 = vld [vmem:[%s1053 + $0x241] sm:$0xff]
  %v1330 = vld [vmem:[%s1053 + $0x249] sm:$0xff]
  %v1331 = vld [vmem:[%s1053 + $0x251] sm:$0xff]
  %v1332 = vld [vmem:[%s1053 + $0x261] sm:$0xff]
  %v1333 = vld [vmem:[%s1053 + $0x269] sm:$0xff]
  %v1334 = vld [vmem:[%s1053 + $0x271] sm:$0xff]
  %v1335 = vld [vmem:[%s1053 + $0x281] sm:$0xff]
  %v1336 = vld [vmem:[%s1053 + $0x289] sm:$0xff]
  %v1337 = vld [vmem:[%s1053 + $0x291] sm:$0xff]
  %v1338 = vld [vmem:[%s1053 + $0x2a1] sm:$0xff]
  %v1339 = vld [vmem:[%s1053 + $0x2a9] sm:$0xff]
  %v1340 = vld [vmem:[%s1053 + $0x2b1] sm:$0xff]
  %v1341 = vld [vmem:[%s1053 + $0x2c1] sm:$0xff]
  %v1342 = vld [vmem:[%s1053 + $0x2c9] sm:$0xff]
  %v1343 = vld [vmem:[%s1053 + $0x2d1] sm:$0xff]
  %v1344 = vld [vmem:[%s1053 + $0x2e1] sm:$0xff]
  %v1345 = vld [vmem:[%s1053 + $0x2e9] sm:$0xff]
  %v1346 = vld [vmem:[%s1053 + $0x2f1] sm:$0xff]
  %v1347 = vld [vmem:[%s1 + $0x6] sm:$0x1]
  %v1348 = vlaneseq
  %v1349 = vshrl.u32 %v1348, 7
  %v1350 = vsub.s32 0, %v1349
  %v1351 = vrot.slane %v1347, %v1350
  %v1352 = vmul.f32 %v1275, %v1351
  %v1353 = vmul.f32 %v1276, %v1351
  %v1354 = vmul.f32 %v1277, %v1351
  %v1355 = vmul.f32 %v1278, %v1351
  %v1356 = vmul.f32 %v1279, %v1351
  %v1357 = vmul.f32 %v1280, %v1351
  %v1358 = vmul.f32 %v1281, %v1351
  %v1359 = vmul.f32 %v1282, %v1351
  %v1360 = vmul.f32 %v1283, %v1351
  %v1361 = vmul.f32 %v1284, %v1351
  %v1362 = vmul.f32 %v1285, %v1351
  %v1363 = vmul.f32 %v1286, %v1351
  %v1364 = vmul.f32 %v1287, %v1351
  %v1365 = vmul.f32 %v1288, %v1351
  %v1366 = vmul.f32 %v1289, %v1351
  %v1367 = vmul.f32 %v1290, %v1351
  %v1368 = vmul.f32 %v1291, %v1351
  %v1369 = vmul.f32 %v1292, %v1351
  %v1370 = vmul.f32 %v1293, %v1351
  %v1371 = vmul.f32 %v1294, %v1351
  %v1372 = vmul.f32 %v1295, %v1351
  %v1373 = vmul.f32 %v1296, %v1351
  %v1374 = vmul.f32 %v1297, %v1351
  %v1375 = vmul.f32 %v1298, %v1351
  %v1376 = vmul.f32 %v1299, %v1351
  %v1377 = vmul.f32 %v1300, %v1351
  %v1378 = vmul.f32 %v1301, %v1351
  %v1379 = vmul.f32 %v1302, %v1351
  %v1380 = vmul.f32 %v1303, %v1351
  %v1381 = vmul.f32 %v1304, %v1351
  %v1382 = vmul.f32 %v1305, %v1351
  %v1383 = vmul.f32 %v1306, %v1351
  %v1384 = vmul.f32 %v1307, %v1351
  %v1385 = vmul.f32 %v1308, %v1351
  %v1386 = vmul.f32 %v1309, %v1351
  %v1387 = vmul.f32 %v1310, %v1351
  %v1388 = vmul.f32 %v1311, %v1351
  %v1389 = vmul.f32 %v1312, %v1351
  %v1390 = vmul.f32 %v1313, %v1351
  %v1391 = vmul.f32 %v1314, %v1351
  %v1392 = vmul.f32 %v1315, %v1351
  %v1393 = vmul.f32 %v1316, %v1351
  %v1394 = vmul.f32 %v1317, %v1351
  %v1395 = vmul.f32 %v1318, %v1351
  %v1396 = vmul.f32 %v1319, %v1351
  %v1397 = vmul.f32 %v1320, %v1351
  %v1398 = vmul.f32 %v1321, %v1351
  %v1399 = vmul.f32 %v1322, %v1351
  %v1400 = vmul.f32 %v1323, %v1351
  %v1401 = vmul.f32 %v1324, %v1351
  %v1402 = vmul.f32 %v1325, %v1351
  %v1403 = vmul.f32 %v1326, %v1351
  %v1404 = vmul.f32 %v1327, %v1351
  %v1405 = vmul.f32 %v1328, %v1351
  %v1406 = vmul.f32 %v1329, %v1351
  %v1407 = vmul.f32 %v1330, %v1351
  %v1408 = vmul.f32 %v1331, %v1351
  %v1409 = vmul.f32 %v1332, %v1351
  %v1410 = vmul.f32 %v1333, %v1351
  %v1411 = vmul.f32 %v1334, %v1351
  %v1412 = vmul.f32 %v1335, %v1351
  %v1413 = vmul.f32 %v1336, %v1351
  %v1414 = vmul.f32 %v1337, %v1351
  %v1415 = vmul.f32 %v1338, %v1351
  %v1416 = vmul.f32 %v1339, %v1351
  %v1417 = vmul.f32 %v1340, %v1351
  %v1418 = vmul.f32 %v1341, %v1351
  %v1419 = vmul.f32 %v1342, %v1351
  %v1420 = vmul.f32 %v1343, %v1351
  %v1421 = vmul.f32 %v1344, %v1351
  %v1422 = vmul.f32 %v1345, %v1351
  %v1423 = vmul.f32 %v1346, %v1351
  %v1424 = vadd.f32 %v1203, %v1352
  %v1425 = vadd.f32 %v1204, %v1353
  %v1426 = vadd.f32 %v1205, %v1354
  %v1427 = vadd.f32 %v1206, %v1355
  %v1428 = vadd.f32 %v1207, %v1356
  %v1429 = vadd.f32 %v1208, %v1357
  %v1430 = vadd.f32 %v1209, %v1358
  %v1431 = vadd.f32 %v1210, %v1359
  %v1432 = vadd.f32 %v1211, %v1360
  %v1433 = vadd.f32 %v1212, %v1361
  %v1434 = vadd.f32 %v1213, %v1362
  %v1435 = vadd.f32 %v1214, %v1363
  %v1436 = vadd.f32 %v1215, %v1364
  %v1437 = vadd.f32 %v1216, %v1365
  %v1438 = vadd.f32 %v1217, %v1366
  %v1439 = vadd.f32 %v1218, %v1367
  %v1440 = vadd.f32 %v1219, %v1368
  %v1441 = vadd.f32 %v1220, %v1369
  %v1442 = vadd.f32 %v1221, %v1370
  %v1443 = vadd.f32 %v1222, %v1371
  %v1444 = vadd.f32 %v1223, %v1372
  %v1445 = vadd.f32 %v1224, %v1373
  %v1446 = vadd.f32 %v1225, %v1374
  %v1447 = vadd.f32 %v1226, %v1375
  %v1448 = vadd.f32 %v1227, %v1376
  %v1449 = vadd.f32 %v1228, %v1377
  %v1450 = vadd.f32 %v1229, %v1378
  %v1451 = vadd.f32 %v1230, %v1379
  %v1452 = vadd.f32 %v1231, %v1380
  %v1453 = vadd.f32 %v1232, %v1381
  %v1454 = vadd.f32 %v1233, %v1382
  %v1455 = vadd.f32 %v1234, %v1383
  %v1456 = vadd.f32 %v1235, %v1384
  %v1457 = vadd.f32 %v1236, %v1385
  %v1458 = vadd.f32 %v1237, %v1386
  %v1459 = vadd.f32 %v1238, %v1387
  %v1460 = vadd.f32 %v1239, %v1388
  %v1461 = vadd.f32 %v1240, %v1389
  %v1462 = vadd.f32 %v1241, %v1390
  %v1463 = vadd.f32 %v1242, %v1391
  %v1464 = vadd.f32 %v1243, %v1392
  %v1465 = vadd.f32 %v1244, %v1393
  %v1466 = vadd.f32 %v1245, %v1394
  %v1467 = vadd.f32 %v1246, %v1395
  %v1468 = vadd.f32 %v1247, %v1396
  %v1469 = vadd.f32 %v1248, %v1397
  %v1470 = vadd.f32 %v1249, %v1398
  %v1471 = vadd.f32 %v1250, %v1399
  %v1472 = vadd.f32 %v1251, %v1400
  %v1473 = vadd.f32 %v1252, %v1401
  %v1474 = vadd.f32 %v1253, %v1402
  %v1475 = vadd.f32 %v1254, %v1403
  %v1476 = vadd.f32 %v1255, %v1404
  %v1477 = vadd.f32 %v1256, %v1405
  %v1478 = vadd.f32 %v1257, %v1406
  %v1479 = vadd.f32 %v1258, %v1407
  %v1480 = vadd.f32 %v1259, %v1408
  %v1481 = vadd.f32 %v1260, %v1409
  %v1482 = vadd.f32 %v1261, %v1410
  %v1483 = vadd.f32 %v1262, %v1411
  %v1484 = vadd.f32 %v1263, %v1412
  %v1485 = vadd.f32 %v1264, %v1413
  %v1486 = vadd.f32 %v1265, %v1414
  %v1487 = vadd.f32 %v1266, %v1415
  %v1488 = vadd.f32 %v1267, %v1416
  %v1489 = vadd.f32 %v1268, %v1417
  %v1490 = vadd.f32 %v1269, %v1418
  %v1491 = vadd.f32 %v1270, %v1419
  %v1492 = vadd.f32 %v1271, %v1420
  %v1493 = vadd.f32 %v1272, %v1421
  %v1494 = vadd.f32 %v1273, %v1422
  %v1495 = vadd.f32 %v1274, %v1423
  %v1496 = vld [vmem:[%s1053 + $0x2] sm:$0xff]
  %v1497 = vld [vmem:[%s1053 + $0xa] sm:$0xff]
  %v1498 = vld [vmem:[%s1053 + $0x12] sm:$0xff]
  %v1499 = vld [vmem:[%s1053 + $0x22] sm:$0xff]
  %v1500 = vld [vmem:[%s1053 + $0x2a] sm:$0xff]
  %v1501 = vld [vmem:[%s1053 + $0x32] sm:$0xff]
  %v1502 = vld [vmem:[%s1053 + $0x42] sm:$0xff]
  %v1503 = vld [vmem:[%s1053 + $0x4a] sm:$0xff]
  %v1504 = vld [vmem:[%s1053 + $0x52] sm:$0xff]
  %v1505 = vld [vmem:[%s1053 + $0x62] sm:$0xff]
  %v1506 = vld [vmem:[%s1053 + $0x6a] sm:$0xff]
  %v1507 = vld [vmem:[%s1053 + $0x72] sm:$0xff]
  %v1508 = vld [vmem:[%s1053 + $0x82] sm:$0xff]
  %v1509 = vld [vmem:[%s1053 + $0x8a] sm:$0xff]
  %v1510 = vld [vmem:[%s1053 + $0x92] sm:$0xff]
  %v1511 = vld [vmem:[%s1053 + $0xa2] sm:$0xff]
  %v1512 = vld [vmem:[%s1053 + $0xaa] sm:$0xff]
  %v1513 = vld [vmem:[%s1053 + $0xb2] sm:$0xff]
  %v1514 = vld [vmem:[%s1053 + $0xc2] sm:$0xff]
  %v1515 = vld [vmem:[%s1053 + $0xca] sm:$0xff]
  %v1516 = vld [vmem:[%s1053 + $0xd2] sm:$0xff]
  %v1517 = vld [vmem:[%s1053 + $0xe2] sm:$0xff]
  %v1518 = vld [vmem:[%s1053 + $0xea] sm:$0xff]
  %v1519 = vld [vmem:[%s1053 + $0xf2] sm:$0xff]
  %v1520 = vld [vmem:[%s1053 + $0x102] sm:$0xff]
  %v1521 = vld [vmem:[%s1053 + $0x10a] sm:$0xff]
  %v1522 = vld [vmem:[%s1053 + $0x112] sm:$0xff]
  %v1523 = vld [vmem:[%s1053 + $0x122] sm:$0xff]
  %v1524 = vld [vmem:[%s1053 + $0x12a] sm:$0xff]
  %v1525 = vld [vmem:[%s1053 + $0x132] sm:$0xff]
  %v1526 = vld [vmem:[%s1053 + $0x142] sm:$0xff]
  %v1527 = vld [vmem:[%s1053 + $0x14a] sm:$0xff]
  %v1528 = vld [vmem:[%s1053 + $0x152] sm:$0xff]
  %v1529 = vld [vmem:[%s1053 + $0x162] sm:$0xff]
  %v1530 = vld [vmem:[%s1053 + $0x16a] sm:$0xff]
  %v1531 = vld [vmem:[%s1053 + $0x172] sm:$0xff]
  %v1532 = vld [vmem:[%s1053 + $0x182] sm:$0xff]
  %v1533 = vld [vmem:[%s1053 + $0x18a] sm:$0xff]
  %v1534 = vld [vmem:[%s1053 + $0x192] sm:$0xff]
  %v1535 = vld [vmem:[%s1053 + $0x1a2] sm:$0xff]
  %v1536 = vld [vmem:[%s1053 + $0x1aa] sm:$0xff]
  %v1537 = vld [vmem:[%s1053 + $0x1b2] sm:$0xff]
  %v1538 = vld [vmem:[%s1053 + $0x1c2] sm:$0xff]
  %v1539 = vld [vmem:[%s1053 + $0x1ca] sm:$0xff]
  %v1540 = vld [vmem:[%s1053 + $0x1d2] sm:$0xff]
  %v1541 = vld [vmem:[%s1053 + $0x1e2] sm:$0xff]
  %v1542 = vld [vmem:[%s1053 + $0x1ea] sm:$0xff]
  %v1543 = vld [vmem:[%s1053 + $0x1f2] sm:$0xff]
  %v1544 = vld [vmem:[%s1053 + $0x202] sm:$0xff]
  %v1545 = vld [vmem:[%s1053 + $0x20a] sm:$0xff]
  %v1546 = vld [vmem:[%s1053 + $0x212] sm:$0xff]
  %v1547 = vld [vmem:[%s1053 + $0x222] sm:$0xff]
  %v1548 = vld [vmem:[%s1053 + $0x22a] sm:$0xff]
  %v1549 = vld [vmem:[%s1053 + $0x232] sm:$0xff]
  %v1550 = vld [vmem:[%s1053 + $0x242] sm:$0xff]
  %v1551 = vld [vmem:[%s1053 + $0x24a] sm:$0xff]
  %v1552 = vld [vmem:[%s1053 + $0x252] sm:$0xff]
  %v1553 = vld [vmem:[%s1053 + $0x262] sm:$0xff]
  %v1554 = vld [vmem:[%s1053 + $0x26a] sm:$0xff]
  %v1555 = vld [vmem:[%s1053 + $0x272] sm:$0xff]
  %v1556 = vld [vmem:[%s1053 + $0x282] sm:$0xff]
  %v1557 = vld [vmem:[%s1053 + $0x28a] sm:$0xff]
  %v1558 = vld [vmem:[%s1053 + $0x292] sm:$0xff]
  %v1559 = vld [vmem:[%s1053 + $0x2a2] sm:$0xff]
  %v1560 = vld [vmem:[%s1053 + $0x2aa] sm:$0xff]
  %v1561 = vld [vmem:[%s1053 + $0x2b2] sm:$0xff]
  %v1562 = vld [vmem:[%s1053 + $0x2c2] sm:$0xff]
  %v1563 = vld [vmem:[%s1053 + $0x2ca] sm:$0xff]
  %v1564 = vld [vmem:[%s1053 + $0x2d2] sm:$0xff]
  %v1565 = vld [vmem:[%s1053 + $0x2e2] sm:$0xff]
  %v1566 = vld [vmem:[%s1053 + $0x2ea] sm:$0xff]
  %v1567 = vld [vmem:[%s1053 + $0x2f2] sm:$0xff]
  %v1568 = vld [vmem:[%s1 + $0x7] sm:$0x1]
  %v1569 = vlaneseq
  %v1570 = vshrl.u32 %v1569, 7
  %v1571 = vsub.s32 0, %v1570
  %v1572 = vrot.slane %v1568, %v1571
  %v1573 = vmul.f32 %v1496, %v1572
  %v1574 = vmul.f32 %v1497, %v1572
  %v1575 = vmul.f32 %v1498, %v1572
  %v1576 = vmul.f32 %v1499, %v1572
  %v1577 = vmul.f32 %v1500, %v1572
  %v1578 = vmul.f32 %v1501, %v1572
  %v1579 = vmul.f32 %v1502, %v1572
  %v1580 = vmul.f32 %v1503, %v1572
  %v1581 = vmul.f32 %v1504, %v1572
  %v1582 = vmul.f32 %v1505, %v1572
  %v1583 = vmul.f32 %v1506, %v1572
  %v1584 = vmul.f32 %v1507, %v1572
  %v1585 = vmul.f32 %v1508, %v1572
  %v1586 = vmul.f32 %v1509, %v1572
  %v1587 = vmul.f32 %v1510, %v1572
  %v1588 = vmul.f32 %v1511, %v1572
  %v1589 = vmul.f32 %v1512, %v1572
  %v1590 = vmul.f32 %v1513, %v1572
  %v1591 = vmul.f32 %v1514, %v1572
  %v1592 = vmul.f32 %v1515, %v1572
  %v1593 = vmul.f32 %v1516, %v1572
  %v1594 = vmul.f32 %v1517, %v1572
  %v1595 = vmul.f32 %v1518, %v1572
  %v1596 = vmul.f32 %v1519, %v1572
  %v1597 = vmul.f32 %v1520, %v1572
  %v1598 = vmul.f32 %v1521, %v1572
  %v1599 = vmul.f32 %v1522, %v1572
  %v1600 = vmul.f32 %v1523, %v1572
  %v1601 = vmul.f32 %v1524, %v1572
  %v1602 = vmul.f32 %v1525, %v1572
  %v1603 = vmul.f32 %v1526, %v1572
  %v1604 = vmul.f32 %v1527, %v1572
  %v1605 = vmul.f32 %v1528, %v1572
  %v1606 = vmul.f32 %v1529, %v1572
  %v1607 = vmul.f32 %v1530, %v1572
  %v1608 = vmul.f32 %v1531, %v1572
  %v1609 = vmul.f32 %v1532, %v1572
  %v1610 = vmul.f32 %v1533, %v1572
  %v1611 = vmul.f32 %v1534, %v1572
  %v1612 = vmul.f32 %v1535, %v1572
  %v1613 = vmul.f32 %v1536, %v1572
  %v1614 = vmul.f32 %v1537, %v1572
  %v1615 = vmul.f32 %v1538, %v1572
  %v1616 = vmul.f32 %v1539, %v1572
  %v1617 = vmul.f32 %v1540, %v1572
  %v1618 = vmul.f32 %v1541, %v1572
  %v1619 = vmul.f32 %v1542, %v1572
  %v1620 = vmul.f32 %v1543, %v1572
  %v1621 = vmul.f32 %v1544, %v1572
  %v1622 = vmul.f32 %v1545, %v1572
  %v1623 = vmul.f32 %v1546, %v1572
  %v1624 = vmul.f32 %v1547, %v1572
  %v1625 = vmul.f32 %v1548, %v1572
  %v1626 = vmul.f32 %v1549, %v1572
  %v1627 = vmul.f32 %v1550, %v1572
  %v1628 = vmul.f32 %v1551, %v1572
  %v1629 = vmul.f32 %v1552, %v1572
  %v1630 = vmul.f32 %v1553, %v1572
  %v1631 = vmul.f32 %v1554, %v1572
  %v1632 = vmul.f32 %v1555, %v1572
  %v1633 = vmul.f32 %v1556, %v1572
  %v1634 = vmul.f32 %v1557, %v1572
  %v1635 = vmul.f32 %v1558, %v1572
  %v1636 = vmul.f32 %v1559, %v1572
  %v1637 = vmul.f32 %v1560, %v1572
  %v1638 = vmul.f32 %v1561, %v1572
  %v1639 = vmul.f32 %v1562, %v1572
  %v1640 = vmul.f32 %v1563, %v1572
  %v1641 = vmul.f32 %v1564, %v1572
  %v1642 = vmul.f32 %v1565, %v1572
  %v1643 = vmul.f32 %v1566, %v1572
  %v1644 = vmul.f32 %v1567, %v1572
  %v1645 = vadd.f32 %v1424, %v1573
  %v1646 = vadd.f32 %v1425, %v1574
  %v1647 = vadd.f32 %v1426, %v1575
  %v1648 = vadd.f32 %v1427, %v1576
  %v1649 = vadd.f32 %v1428, %v1577
  %v1650 = vadd.f32 %v1429, %v1578
  %v1651 = vadd.f32 %v1430, %v1579
  %v1652 = vadd.f32 %v1431, %v1580
  %v1653 = vadd.f32 %v1432, %v1581
  %v1654 = vadd.f32 %v1433, %v1582
  %v1655 = vadd.f32 %v1434, %v1583
  %v1656 = vadd.f32 %v1435, %v1584
  %v1657 = vadd.f32 %v1436, %v1585
  %v1658 = vadd.f32 %v1437, %v1586
  %v1659 = vadd.f32 %v1438, %v1587
  %v1660 = vadd.f32 %v1439, %v1588
  %v1661 = vadd.f32 %v1440, %v1589
  %v1662 = vadd.f32 %v1441, %v1590
  %v1663 = vadd.f32 %v1442, %v1591
  %v1664 = vadd.f32 %v1443, %v1592
  %v1665 = vadd.f32 %v1444, %v1593
  %v1666 = vadd.f32 %v1445, %v1594
  %v1667 = vadd.f32 %v1446, %v1595
  %v1668 = vadd.f32 %v1447, %v1596
  %v1669 = vadd.f32 %v1448, %v1597
  %v1670 = vadd.f32 %v1449, %v1598
  %v1671 = vadd.f32 %v1450, %v1599
  %v1672 = vadd.f32 %v1451, %v1600
  %v1673 = vadd.f32 %v1452, %v1601
  %v1674 = vadd.f32 %v1453, %v1602
  %v1675 = vadd.f32 %v1454, %v1603
  %v1676 = vadd.f32 %v1455, %v1604
  %v1677 = vadd.f32 %v1456, %v1605
  %v1678 = vadd.f32 %v1457, %v1606
  %v1679 = vadd.f32 %v1458, %v1607
  %v1680 = vadd.f32 %v1459, %v1608
  %v1681 = vadd.f32 %v1460, %v1609
  %v1682 = vadd.f32 %v1461, %v1610
  %v1683 = vadd.f32 %v1462, %v1611
  %v1684 = vadd.f32 %v1463, %v1612
  %v1685 = vadd.f32 %v1464, %v1613
  %v1686 = vadd.f32 %v1465, %v1614
  %v1687 = vadd.f32 %v1466, %v1615
  %v1688 = vadd.f32 %v1467, %v1616
  %v1689 = vadd.f32 %v1468, %v1617
  %v1690 = vadd.f32 %v1469, %v1618
  %v1691 = vadd.f32 %v1470, %v1619
  %v1692 = vadd.f32 %v1471, %v1620
  %v1693 = vadd.f32 %v1472, %v1621
  %v1694 = vadd.f32 %v1473, %v1622
  %v1695 = vadd.f32 %v1474, %v1623
  %v1696 = vadd.f32 %v1475, %v1624
  %v1697 = vadd.f32 %v1476, %v1625
  %v1698 = vadd.f32 %v1477, %v1626
  %v1699 = vadd.f32 %v1478, %v1627
  %v1700 = vadd.f32 %v1479, %v1628
  %v1701 = vadd.f32 %v1480, %v1629
  %v1702 = vadd.f32 %v1481, %v1630
  %v1703 = vadd.f32 %v1482, %v1631
  %v1704 = vadd.f32 %v1483, %v1632
  %v1705 = vadd.f32 %v1484, %v1633
  %v1706 = vadd.f32 %v1485, %v1634
  %v1707 = vadd.f32 %v1486, %v1635
  %v1708 = vadd.f32 %v1487, %v1636
  %v1709 = vadd.f32 %v1488, %v1637
  %v1710 = vadd.f32 %v1489, %v1638
  %v1711 = vadd.f32 %v1490, %v1639
  %v1712 = vadd.f32 %v1491, %v1640
  %v1713 = vadd.f32 %v1492, %v1641
  %v1714 = vadd.f32 %v1493, %v1642
  %v1715 = vadd.f32 %v1494, %v1643
  %v1716 = vadd.f32 %v1495, %v1644
  %v1717 = vld [vmem:[%s1053 + $0x3] sm:$0xff]
  %v1718 = vld [vmem:[%s1053 + $0xb] sm:$0xff]
  %v1719 = vld [vmem:[%s1053 + $0x13] sm:$0xff]
  %v1720 = vld [vmem:[%s1053 + $0x23] sm:$0xff]
  %v1721 = vld [vmem:[%s1053 + $0x2b] sm:$0xff]
  %v1722 = vld [vmem:[%s1053 + $0x33] sm:$0xff]
  %v1723 = vld [vmem:[%s1053 + $0x43] sm:$0xff]
  %v1724 = vld [vmem:[%s1053 + $0x4b] sm:$0xff]
  %v1725 = vld [vmem:[%s1053 + $0x53] sm:$0xff]
  %v1726 = vld [vmem:[%s1053 + $0x63] sm:$0xff]
  %v1727 = vld [vmem:[%s1053 + $0x6b] sm:$0xff]
  %v1728 = vld [vmem:[%s1053 + $0x73] sm:$0xff]
  %v1729 = vld [vmem:[%s1053 + $0x83] sm:$0xff]
  %v1730 = vld [vmem:[%s1053 + $0x8b] sm:$0xff]
  %v1731 = vld [vmem:[%s1053 + $0x93] sm:$0xff]
  %v1732 = vld [vmem:[%s1053 + $0xa3] sm:$0xff]
  %v1733 = vld [vmem:[%s1053 + $0xab] sm:$0xff]
  %v1734 = vld [vmem:[%s1053 + $0xb3] sm:$0xff]
  %v1735 = vld [vmem:[%s1053 + $0xc3] sm:$0xff]
  %v1736 = vld [vmem:[%s1053 + $0xcb] sm:$0xff]
  %v1737 = vld [vmem:[%s1053 + $0xd3] sm:$0xff]
  %v1738 = vld [vmem:[%s1053 + $0xe3] sm:$0xff]
  %v1739 = vld [vmem:[%s1053 + $0xeb] sm:$0xff]
  %v1740 = vld [vmem:[%s1053 + $0xf3] sm:$0xff]
  %v1741 = vld [vmem:[%s1053 + $0x103] sm:$0xff]
  %v1742 = vld [vmem:[%s1053 + $0x10b] sm:$0xff]
  %v1743 = vld [vmem:[%s1053 + $0x113] sm:$0xff]
  %v1744 = vld [vmem:[%s1053 + $0x123] sm:$0xff]
  %v1745 = vld [vmem:[%s1053 + $0x12b] sm:$0xff]
  %v1746 = vld [vmem:[%s1053 + $0x133] sm:$0xff]
  %v1747 = vld [vmem:[%s1053 + $0x143] sm:$0xff]
  %v1748 = vld [vmem:[%s1053 + $0x14b] sm:$0xff]
  %v1749 = vld [vmem:[%s1053 + $0x153] sm:$0xff]
  %v1750 = vld [vmem:[%s1053 + $0x163] sm:$0xff]
  %v1751 = vld [vmem:[%s1053 + $0x16b] sm:$0xff]
  %v1752 = vld [vmem:[%s1053 + $0x173] sm:$0xff]
  %v1753 = vld [vmem:[%s1053 + $0x183] sm:$0xff]
  %v1754 = vld [vmem:[%s1053 + $0x18b] sm:$0xff]
  %v1755 = vld [vmem:[%s1053 + $0x193] sm:$0xff]
  %v1756 = vld [vmem:[%s1053 + $0x1a3] sm:$0xff]
  %v1757 = vld [vmem:[%s1053 + $0x1ab] sm:$0xff]
  %v1758 = vld [vmem:[%s1053 + $0x1b3] sm:$0xff]
  %v1759 = vld [vmem:[%s1053 + $0x1c3] sm:$0xff]
  %v1760 = vld [vmem:[%s1053 + $0x1cb] sm:$0xff]
  %v1761 = vld [vmem:[%s1053 + $0x1d3] sm:$0xff]
  %v1762 = vld [vmem:[%s1053 + $0x1e3] sm:$0xff]
  %v1763 = vld [vmem:[%s1053 + $0x1eb] sm:$0xff]
  %v1764 = vld [vmem:[%s1053 + $0x1f3] sm:$0xff]
  %v1765 = vld [vmem:[%s1053 + $0x203] sm:$0xff]
  %v1766 = vld [vmem:[%s1053 + $0x20b] sm:$0xff]
  %v1767 = vld [vmem:[%s1053 + $0x213] sm:$0xff]
  %v1768 = vld [vmem:[%s1053 + $0x223] sm:$0xff]
  %v1769 = vld [vmem:[%s1053 + $0x22b] sm:$0xff]
  %v1770 = vld [vmem:[%s1053 + $0x233] sm:$0xff]
  %v1771 = vld [vmem:[%s1053 + $0x243] sm:$0xff]
  %v1772 = vld [vmem:[%s1053 + $0x24b] sm:$0xff]
  %v1773 = vld [vmem:[%s1053 + $0x253] sm:$0xff]
  %v1774 = vld [vmem:[%s1053 + $0x263] sm:$0xff]
  %v1775 = vld [vmem:[%s1053 + $0x26b] sm:$0xff]
  %v1776 = vld [vmem:[%s1053 + $0x273] sm:$0xff]
  %v1777 = vld [vmem:[%s1053 + $0x283] sm:$0xff]
  %v1778 = vld [vmem:[%s1053 + $0x28b] sm:$0xff]
  %v1779 = vld [vmem:[%s1053 + $0x293] sm:$0xff]
  %v1780 = vld [vmem:[%s1053 + $0x2a3] sm:$0xff]
  %v1781 = vld [vmem:[%s1053 + $0x2ab] sm:$0xff]
  %v1782 = vld [vmem:[%s1053 + $0x2b3] sm:$0xff]
  %v1783 = vld [vmem:[%s1053 + $0x2c3] sm:$0xff]
  %v1784 = vld [vmem:[%s1053 + $0x2cb] sm:$0xff]
  %v1785 = vld [vmem:[%s1053 + $0x2d3] sm:$0xff]
  %v1786 = vld [vmem:[%s1053 + $0x2e3] sm:$0xff]
  %v1787 = vld [vmem:[%s1053 + $0x2eb] sm:$0xff]
  %v1788 = vld [vmem:[%s1053 + $0x2f3] sm:$0xff]
  %v1789 = vld [vmem:[%s1 + $0x8] sm:$0x1]
  %v1790 = vlaneseq
  %v1791 = vshrl.u32 %v1790, 7
  %v1792 = vsub.s32 0, %v1791
  %v1793 = vrot.slane %v1789, %v1792
  %v1794 = vmul.f32 %v1717, %v1793
  %v1795 = vmul.f32 %v1718, %v1793
  %v1796 = vmul.f32 %v1719, %v1793
  %v1797 = vmul.f32 %v1720, %v1793
  %v1798 = vmul.f32 %v1721, %v1793
  %v1799 = vmul.f32 %v1722, %v1793
  %v1800 = vmul.f32 %v1723, %v1793
  %v1801 = vmul.f32 %v1724, %v1793
  %v1802 = vmul.f32 %v1725, %v1793
  %v1803 = vmul.f32 %v1726, %v1793
  %v1804 = vmul.f32 %v1727, %v1793
  %v1805 = vmul.f32 %v1728, %v1793
  %v1806 = vmul.f32 %v1729, %v1793
  %v1807 = vmul.f32 %v1730, %v1793
  %v1808 = vmul.f32 %v1731, %v1793
  %v1809 = vmul.f32 %v1732, %v1793
  %v1810 = vmul.f32 %v1733, %v1793
  %v1811 = vmul.f32 %v1734, %v1793
  %v1812 = vmul.f32 %v1735, %v1793
  %v1813 = vmul.f32 %v1736, %v1793
  %v1814 = vmul.f32 %v1737, %v1793
  %v1815 = vmul.f32 %v1738, %v1793
  %v1816 = vmul.f32 %v1739, %v1793
  %v1817 = vmul.f32 %v1740, %v1793
  %v1818 = vmul.f32 %v1741, %v1793
  %v1819 = vmul.f32 %v1742, %v1793
  %v1820 = vmul.f32 %v1743, %v1793
  %v1821 = vmul.f32 %v1744, %v1793
  %v1822 = vmul.f32 %v1745, %v1793
  %v1823 = vmul.f32 %v1746, %v1793
  %v1824 = vmul.f32 %v1747, %v1793
  %v1825 = vmul.f32 %v1748, %v1793
  %v1826 = vmul.f32 %v1749, %v1793
  %v1827 = vmul.f32 %v1750, %v1793
  %v1828 = vmul.f32 %v1751, %v1793
  %v1829 = vmul.f32 %v1752, %v1793
  %v1830 = vmul.f32 %v1753, %v1793
  %v1831 = vmul.f32 %v1754, %v1793
  %v1832 = vmul.f32 %v1755, %v1793
  %v1833 = vmul.f32 %v1756, %v1793
  %v1834 = vmul.f32 %v1757, %v1793
  %v1835 = vmul.f32 %v1758, %v1793
  %v1836 = vmul.f32 %v1759, %v1793
  %v1837 = vmul.f32 %v1760, %v1793
  %v1838 = vmul.f32 %v1761, %v1793
  %v1839 = vmul.f32 %v1762, %v1793
  %v1840 = vmul.f32 %v1763, %v1793
  %v1841 = vmul.f32 %v1764, %v1793
  %v1842 = vmul.f32 %v1765, %v1793
  %v1843 = vmul.f32 %v1766, %v1793
  %v1844 = vmul.f32 %v1767, %v1793
  %v1845 = vmul.f32 %v1768, %v1793
  %v1846 = vmul.f32 %v1769, %v1793
  %v1847 = vmul.f32 %v1770, %v1793
  %v1848 = vmul.f32 %v1771, %v1793
  %v1849 = vmul.f32 %v1772, %v1793
  %v1850 = vmul.f32 %v1773, %v1793
  %v1851 = vmul.f32 %v1774, %v1793
  %v1852 = vmul.f32 %v1775, %v1793
  %v1853 = vmul.f32 %v1776, %v1793
  %v1854 = vmul.f32 %v1777, %v1793
  %v1855 = vmul.f32 %v1778, %v1793
  %v1856 = vmul.f32 %v1779, %v1793
  %v1857 = vmul.f32 %v1780, %v1793
  %v1858 = vmul.f32 %v1781, %v1793
  %v1859 = vmul.f32 %v1782, %v1793
  %v1860 = vmul.f32 %v1783, %v1793
  %v1861 = vmul.f32 %v1784, %v1793
  %v1862 = vmul.f32 %v1785, %v1793
  %v1863 = vmul.f32 %v1786, %v1793
  %v1864 = vmul.f32 %v1787, %v1793
  %v1865 = vmul.f32 %v1788, %v1793
  %v1866 = vadd.f32 %v1645, %v1794
  %v1867 = vadd.f32 %v1646, %v1795
  %v1868 = vadd.f32 %v1647, %v1796
  %v1869 = vadd.f32 %v1648, %v1797
  %v1870 = vadd.f32 %v1649, %v1798
  %v1871 = vadd.f32 %v1650, %v1799
  %v1872 = vadd.f32 %v1651, %v1800
  %v1873 = vadd.f32 %v1652, %v1801
  %v1874 = vadd.f32 %v1653, %v1802
  %v1875 = vadd.f32 %v1654, %v1803
  %v1876 = vadd.f32 %v1655, %v1804
  %v1877 = vadd.f32 %v1656, %v1805
  %v1878 = vadd.f32 %v1657, %v1806
  %v1879 = vadd.f32 %v1658, %v1807
  %v1880 = vadd.f32 %v1659, %v1808
  %v1881 = vadd.f32 %v1660, %v1809
  %v1882 = vadd.f32 %v1661, %v1810
  %v1883 = vadd.f32 %v1662, %v1811
  %v1884 = vadd.f32 %v1663, %v1812
  %v1885 = vadd.f32 %v1664, %v1813
  %v1886 = vadd.f32 %v1665, %v1814
  %v1887 = vadd.f32 %v1666, %v1815
  %v1888 = vadd.f32 %v1667, %v1816
  %v1889 = vadd.f32 %v1668, %v1817
  %v1890 = vadd.f32 %v1669, %v1818
  %v1891 = vadd.f32 %v1670, %v1819
  %v1892 = vadd.f32 %v1671, %v1820
  %v1893 = vadd.f32 %v1672, %v1821
  %v1894 = vadd.f32 %v1673, %v1822
  %v1895 = vadd.f32 %v1674, %v1823
  %v1896 = vadd.f32 %v1675, %v1824
  %v1897 = vadd.f32 %v1676, %v1825
  %v1898 = vadd.f32 %v1677, %v1826
  %v1899 = vadd.f32 %v1678, %v1827
  %v1900 = vadd.f32 %v1679, %v1828
  %v1901 = vadd.f32 %v1680, %v1829
  %v1902 = vadd.f32 %v1681, %v1830
  %v1903 = vadd.f32 %v1682, %v1831
  %v1904 = vadd.f32 %v1683, %v1832
  %v1905 = vadd.f32 %v1684, %v1833
  %v1906 = vadd.f32 %v1685, %v1834
  %v1907 = vadd.f32 %v1686, %v1835
  %v1908 = vadd.f32 %v1687, %v1836
  %v1909 = vadd.f32 %v1688, %v1837
  %v1910 = vadd.f32 %v1689, %v1838
  %v1911 = vadd.f32 %v1690, %v1839
  %v1912 = vadd.f32 %v1691, %v1840
  %v1913 = vadd.f32 %v1692, %v1841
  %v1914 = vadd.f32 %v1693, %v1842
  %v1915 = vadd.f32 %v1694, %v1843
  %v1916 = vadd.f32 %v1695, %v1844
  %v1917 = vadd.f32 %v1696, %v1845
  %v1918 = vadd.f32 %v1697, %v1846
  %v1919 = vadd.f32 %v1698, %v1847
  %v1920 = vadd.f32 %v1699, %v1848
  %v1921 = vadd.f32 %v1700, %v1849
  %v1922 = vadd.f32 %v1701, %v1850
  %v1923 = vadd.f32 %v1702, %v1851
  %v1924 = vadd.f32 %v1703, %v1852
  %v1925 = vadd.f32 %v1704, %v1853
  %v1926 = vadd.f32 %v1705, %v1854
  %v1927 = vadd.f32 %v1706, %v1855
  %v1928 = vadd.f32 %v1707, %v1856
  %v1929 = vadd.f32 %v1708, %v1857
  %v1930 = vadd.f32 %v1709, %v1858
  %v1931 = vadd.f32 %v1710, %v1859
  %v1932 = vadd.f32 %v1711, %v1860
  %v1933 = vadd.f32 %v1712, %v1861
  %v1934 = vadd.f32 %v1713, %v1862
  %v1935 = vadd.f32 %v1714, %v1863
  %v1936 = vadd.f32 %v1715, %v1864
  %v1937 = vadd.f32 %v1716, %v1865
  %v1938 = vld [vmem:[%s1053 + $0x4] sm:$0xff]
  %v1939 = vld [vmem:[%s1053 + $0xc] sm:$0xff]
  %v1940 = vld [vmem:[%s1053 + $0x14] sm:$0xff]
  %v1941 = vld [vmem:[%s1053 + $0x24] sm:$0xff]
  %v1942 = vld [vmem:[%s1053 + $0x2c] sm:$0xff]
  %v1943 = vld [vmem:[%s1053 + $0x34] sm:$0xff]
  %v1944 = vld [vmem:[%s1053 + $0x44] sm:$0xff]
  %v1945 = vld [vmem:[%s1053 + $0x4c] sm:$0xff]
  %v1946 = vld [vmem:[%s1053 + $0x54] sm:$0xff]
  %v1947 = vld [vmem:[%s1053 + $0x64] sm:$0xff]
  %v1948 = vld [vmem:[%s1053 + $0x6c] sm:$0xff]
  %v1949 = vld [vmem:[%s1053 + $0x74] sm:$0xff]
  %v1950 = vld [vmem:[%s1053 + $0x84] sm:$0xff]
  %v1951 = vld [vmem:[%s1053 + $0x8c] sm:$0xff]
  %v1952 = vld [vmem:[%s1053 + $0x94] sm:$0xff]
  %v1953 = vld [vmem:[%s1053 + $0xa4] sm:$0xff]
  %v1954 = vld [vmem:[%s1053 + $0xac] sm:$0xff]
  %v1955 = vld [vmem:[%s1053 + $0xb4] sm:$0xff]
  %v1956 = vld [vmem:[%s1053 + $0xc4] sm:$0xff]
  %v1957 = vld [vmem:[%s1053 + $0xcc] sm:$0xff]
  %v1958 = vld [vmem:[%s1053 + $0xd4] sm:$0xff]
  %v1959 = vld [vmem:[%s1053 + $0xe4] sm:$0xff]
  %v1960 = vld [vmem:[%s1053 + $0xec] sm:$0xff]
  %v1961 = vld [vmem:[%s1053 + $0xf4] sm:$0xff]
  %v1962 = vld [vmem:[%s1053 + $0x104] sm:$0xff]
  %v1963 = vld [vmem:[%s1053 + $0x10c] sm:$0xff]
  %v1964 = vld [vmem:[%s1053 + $0x114] sm:$0xff]
  %v1965 = vld [vmem:[%s1053 + $0x124] sm:$0xff]
  %v1966 = vld [vmem:[%s1053 + $0x12c] sm:$0xff]
  %v1967 = vld [vmem:[%s1053 + $0x134] sm:$0xff]
  %v1968 = vld [vmem:[%s1053 + $0x144] sm:$0xff]
  %v1969 = vld [vmem:[%s1053 + $0x14c] sm:$0xff]
  %v1970 = vld [vmem:[%s1053 + $0x154] sm:$0xff]
  %v1971 = vld [vmem:[%s1053 + $0x164] sm:$0xff]
  %v1972 = vld [vmem:[%s1053 + $0x16c] sm:$0xff]
  %v1973 = vld [vmem:[%s1053 + $0x174] sm:$0xff]
  %v1974 = vld [vmem:[%s1053 + $0x184] sm:$0xff]
  %v1975 = vld [vmem:[%s1053 + $0x18c] sm:$0xff]
  %v1976 = vld [vmem:[%s1053 + $0x194] sm:$0xff]
  %v1977 = vld [vmem:[%s1053 + $0x1a4] sm:$0xff]
  %v1978 = vld [vmem:[%s1053 + $0x1ac] sm:$0xff]
  %v1979 = vld [vmem:[%s1053 + $0x1b4] sm:$0xff]
  %v1980 = vld [vmem:[%s1053 + $0x1c4] sm:$0xff]
  %v1981 = vld [vmem:[%s1053 + $0x1cc] sm:$0xff]
  %v1982 = vld [vmem:[%s1053 + $0x1d4] sm:$0xff]
  %v1983 = vld [vmem:[%s1053 + $0x1e4] sm:$0xff]
  %v1984 = vld [vmem:[%s1053 + $0x1ec] sm:$0xff]
  %v1985 = vld [vmem:[%s1053 + $0x1f4] sm:$0xff]
  %v1986 = vld [vmem:[%s1053 + $0x204] sm:$0xff]
  %v1987 = vld [vmem:[%s1053 + $0x20c] sm:$0xff]
  %v1988 = vld [vmem:[%s1053 + $0x214] sm:$0xff]
  %v1989 = vld [vmem:[%s1053 + $0x224] sm:$0xff]
  %v1990 = vld [vmem:[%s1053 + $0x22c] sm:$0xff]
  %v1991 = vld [vmem:[%s1053 + $0x234] sm:$0xff]
  %v1992 = vld [vmem:[%s1053 + $0x244] sm:$0xff]
  %v1993 = vld [vmem:[%s1053 + $0x24c] sm:$0xff]
  %v1994 = vld [vmem:[%s1053 + $0x254] sm:$0xff]
  %v1995 = vld [vmem:[%s1053 + $0x264] sm:$0xff]
  %v1996 = vld [vmem:[%s1053 + $0x26c] sm:$0xff]
  %v1997 = vld [vmem:[%s1053 + $0x274] sm:$0xff]
  %v1998 = vld [vmem:[%s1053 + $0x284] sm:$0xff]
  %v1999 = vld [vmem:[%s1053 + $0x28c] sm:$0xff]
  %v2000 = vld [vmem:[%s1053 + $0x294] sm:$0xff]
  %v2001 = vld [vmem:[%s1053 + $0x2a4] sm:$0xff]
  %v2002 = vld [vmem:[%s1053 + $0x2ac] sm:$0xff]
  %v2003 = vld [vmem:[%s1053 + $0x2b4] sm:$0xff]
  %v2004 = vld [vmem:[%s1053 + $0x2c4] sm:$0xff]
  %v2005 = vld [vmem:[%s1053 + $0x2cc] sm:$0xff]
  %v2006 = vld [vmem:[%s1053 + $0x2d4] sm:$0xff]
  %v2007 = vld [vmem:[%s1053 + $0x2e4] sm:$0xff]
  %v2008 = vld [vmem:[%s1053 + $0x2ec] sm:$0xff]
  %v2009 = vld [vmem:[%s1053 + $0x2f4] sm:$0xff]
  %v2010 = vld [vmem:[%s1 + $0x9] sm:$0x1]
  %v2011 = vlaneseq
  %v2012 = vshrl.u32 %v2011, 7
  %v2013 = vsub.s32 0, %v2012
  %v2014 = vrot.slane %v2010, %v2013
  %v2015 = vmul.f32 %v1938, %v2014
  %v2016 = vmul.f32 %v1939, %v2014
  %v2017 = vmul.f32 %v1940, %v2014
  %v2018 = vmul.f32 %v1941, %v2014
  %v2019 = vmul.f32 %v1942, %v2014
  %v2020 = vmul.f32 %v1943, %v2014
  %v2021 = vmul.f32 %v1944, %v2014
  %v2022 = vmul.f32 %v1945, %v2014
  %v2023 = vmul.f32 %v1946, %v2014
  %v2024 = vmul.f32 %v1947, %v2014
  %v2025 = vmul.f32 %v1948, %v2014
  %v2026 = vmul.f32 %v1949, %v2014
  %v2027 = vmul.f32 %v1950, %v2014
  %v2028 = vmul.f32 %v1951, %v2014
  %v2029 = vmul.f32 %v1952, %v2014
  %v2030 = vmul.f32 %v1953, %v2014
  %v2031 = vmul.f32 %v1954, %v2014
  %v2032 = vmul.f32 %v1955, %v2014
  %v2033 = vmul.f32 %v1956, %v2014
  %v2034 = vmul.f32 %v1957, %v2014
  %v2035 = vmul.f32 %v1958, %v2014
  %v2036 = vmul.f32 %v1959, %v2014
  %v2037 = vmul.f32 %v1960, %v2014
  %v2038 = vmul.f32 %v1961, %v2014
  %v2039 = vmul.f32 %v1962, %v2014
  %v2040 = vmul.f32 %v1963, %v2014
  %v2041 = vmul.f32 %v1964, %v2014
  %v2042 = vmul.f32 %v1965, %v2014
  %v2043 = vmul.f32 %v1966, %v2014
  %v2044 = vmul.f32 %v1967, %v2014
  %v2045 = vmul.f32 %v1968, %v2014
  %v2046 = vmul.f32 %v1969, %v2014
  %v2047 = vmul.f32 %v1970, %v2014
  %v2048 = vmul.f32 %v1971, %v2014
  %v2049 = vmul.f32 %v1972, %v2014
  %v2050 = vmul.f32 %v1973, %v2014
  %v2051 = vmul.f32 %v1974, %v2014
  %v2052 = vmul.f32 %v1975, %v2014
  %v2053 = vmul.f32 %v1976, %v2014
  %v2054 = vmul.f32 %v1977, %v2014
  %v2055 = vmul.f32 %v1978, %v2014
  %v2056 = vmul.f32 %v1979, %v2014
  %v2057 = vmul.f32 %v1980, %v2014
  %v2058 = vmul.f32 %v1981, %v2014
  %v2059 = vmul.f32 %v1982, %v2014
  %v2060 = vmul.f32 %v1983, %v2014
  %v2061 = vmul.f32 %v1984, %v2014
  %v2062 = vmul.f32 %v1985, %v2014
  %v2063 = vmul.f32 %v1986, %v2014
  %v2064 = vmul.f32 %v1987, %v2014
  %v2065 = vmul.f32 %v1988, %v2014
  %v2066 = vmul.f32 %v1989, %v2014
  %v2067 = vmul.f32 %v1990, %v2014
  %v2068 = vmul.f32 %v1991, %v2014
  %v2069 = vmul.f32 %v1992, %v2014
  %v2070 = vmul.f32 %v1993, %v2014
  %v2071 = vmul.f32 %v1994, %v2014
  %v2072 = vmul.f32 %v1995, %v2014
  %v2073 = vmul.f32 %v1996, %v2014
  %v2074 = vmul.f32 %v1997, %v2014
  %v2075 = vmul.f32 %v1998, %v2014
  %v2076 = vmul.f32 %v1999, %v2014
  %v2077 = vmul.f32 %v2000, %v2014
  %v2078 = vmul.f32 %v2001, %v2014
  %v2079 = vmul.f32 %v2002, %v2014
  %v2080 = vmul.f32 %v2003, %v2014
  %v2081 = vmul.f32 %v2004, %v2014
  %v2082 = vmul.f32 %v2005, %v2014
  %v2083 = vmul.f32 %v2006, %v2014
  %v2084 = vmul.f32 %v2007, %v2014
  %v2085 = vmul.f32 %v2008, %v2014
  %v2086 = vmul.f32 %v2009, %v2014
  %v2087 = vadd.f32 %v1866, %v2015
  %v2088 = vadd.f32 %v1867, %v2016
  %v2089 = vadd.f32 %v1868, %v2017
  %v2090 = vadd.f32 %v1869, %v2018
  %v2091 = vadd.f32 %v1870, %v2019
  %v2092 = vadd.f32 %v1871, %v2020
  %v2093 = vadd.f32 %v1872, %v2021
  %v2094 = vadd.f32 %v1873, %v2022
  %v2095 = vadd.f32 %v1874, %v2023
  %v2096 = vadd.f32 %v1875, %v2024
  %v2097 = vadd.f32 %v1876, %v2025
  %v2098 = vadd.f32 %v1877, %v2026
  %v2099 = vadd.f32 %v1878, %v2027
  %v2100 = vadd.f32 %v1879, %v2028
  %v2101 = vadd.f32 %v1880, %v2029
  %v2102 = vadd.f32 %v1881, %v2030
  %v2103 = vadd.f32 %v1882, %v2031
  %v2104 = vadd.f32 %v1883, %v2032
  %v2105 = vadd.f32 %v1884, %v2033
  %v2106 = vadd.f32 %v1885, %v2034
  %v2107 = vadd.f32 %v1886, %v2035
  %v2108 = vadd.f32 %v1887, %v2036
  %v2109 = vadd.f32 %v1888, %v2037
  %v2110 = vadd.f32 %v1889, %v2038
  %v2111 = vadd.f32 %v1890, %v2039
  %v2112 = vadd.f32 %v1891, %v2040
  %v2113 = vadd.f32 %v1892, %v2041
  %v2114 = vadd.f32 %v1893, %v2042
  %v2115 = vadd.f32 %v1894, %v2043
  %v2116 = vadd.f32 %v1895, %v2044
  %v2117 = vadd.f32 %v1896, %v2045
  %v2118 = vadd.f32 %v1897, %v2046
  %v2119 = vadd.f32 %v1898, %v2047
  %v2120 = vadd.f32 %v1899, %v2048
  %v2121 = vadd.f32 %v1900, %v2049
  %v2122 = vadd.f32 %v1901, %v2050
  %v2123 = vadd.f32 %v1902, %v2051
  %v2124 = vadd.f32 %v1903, %v2052
  %v2125 = vadd.f32 %v1904, %v2053
  %v2126 = vadd.f32 %v1905, %v2054
  %v2127 = vadd.f32 %v1906, %v2055
  %v2128 = vadd.f32 %v1907, %v2056
  %v2129 = vadd.f32 %v1908, %v2057
  %v2130 = vadd.f32 %v1909, %v2058
  %v2131 = vadd.f32 %v1910, %v2059
  %v2132 = vadd.f32 %v1911, %v2060
  %v2133 = vadd.f32 %v1912, %v2061
  %v2134 = vadd.f32 %v1913, %v2062
  %v2135 = vadd.f32 %v1914, %v2063
  %v2136 = vadd.f32 %v1915, %v2064
  %v2137 = vadd.f32 %v1916, %v2065
  %v2138 = vadd.f32 %v1917, %v2066
  %v2139 = vadd.f32 %v1918, %v2067
  %v2140 = vadd.f32 %v1919, %v2068
  %v2141 = vadd.f32 %v1920, %v2069
  %v2142 = vadd.f32 %v1921, %v2070
  %v2143 = vadd.f32 %v1922, %v2071
  %v2144 = vadd.f32 %v1923, %v2072
  %v2145 = vadd.f32 %v1924, %v2073
  %v2146 = vadd.f32 %v1925, %v2074
  %v2147 = vadd.f32 %v1926, %v2075
  %v2148 = vadd.f32 %v1927, %v2076
  %v2149 = vadd.f32 %v1928, %v2077
  %v2150 = vadd.f32 %v1929, %v2078
  %v2151 = vadd.f32 %v1930, %v2079
  %v2152 = vadd.f32 %v1931, %v2080
  %v2153 = vadd.f32 %v1932, %v2081
  %v2154 = vadd.f32 %v1933, %v2082
  %v2155 = vadd.f32 %v1934, %v2083
  %v2156 = vadd.f32 %v1935, %v2084
  %v2157 = vadd.f32 %v1936, %v2085
  %v2158 = vadd.f32 %v1937, %v2086
  %s2159 = scalar_lea.vmem %s0, 64
  %v2160 = vld [vmem:[%s2159] sm:$0xff]
  %v2161 = vld [vmem:[%s2159 + $0x8] sm:$0xff]
  %v2162 = vld [vmem:[%s2159 + $0x10] sm:$0xff]
  %v2163 = vld [vmem:[%s2159 + $0x20] sm:$0xff]
  %v2164 = vld [vmem:[%s2159 + $0x28] sm:$0xff]
  %v2165 = vld [vmem:[%s2159 + $0x30] sm:$0xff]
  %v2166 = vld [vmem:[%s2159 + $0x40] sm:$0xff]
  %v2167 = vld [vmem:[%s2159 + $0x48] sm:$0xff]
  %v2168 = vld [vmem:[%s2159 + $0x50] sm:$0xff]
  %v2169 = vld [vmem:[%s2159 + $0x60] sm:$0xff]
  %v2170 = vld [vmem:[%s2159 + $0x68] sm:$0xff]
  %v2171 = vld [vmem:[%s2159 + $0x70] sm:$0xff]
  %v2172 = vld [vmem:[%s2159 + $0x80] sm:$0xff]
  %v2173 = vld [vmem:[%s2159 + $0x88] sm:$0xff]
  %v2174 = vld [vmem:[%s2159 + $0x90] sm:$0xff]
  %v2175 = vld [vmem:[%s2159 + $0xa0] sm:$0xff]
  %v2176 = vld [vmem:[%s2159 + $0xa8] sm:$0xff]
  %v2177 = vld [vmem:[%s2159 + $0xb0] sm:$0xff]
  %v2178 = vld [vmem:[%s2159 + $0xc0] sm:$0xff]
  %v2179 = vld [vmem:[%s2159 + $0xc8] sm:$0xff]
  %v2180 = vld [vmem:[%s2159 + $0xd0] sm:$0xff]
  %v2181 = vld [vmem:[%s2159 + $0xe0] sm:$0xff]
  %v2182 = vld [vmem:[%s2159 + $0xe8] sm:$0xff]
  %v2183 = vld [vmem:[%s2159 + $0xf0] sm:$0xff]
  %v2184 = vld [vmem:[%s2159 + $0x100] sm:$0xff]
  %v2185 = vld [vmem:[%s2159 + $0x108] sm:$0xff]
  %v2186 = vld [vmem:[%s2159 + $0x110] sm:$0xff]
  %v2187 = vld [vmem:[%s2159 + $0x120] sm:$0xff]
  %v2188 = vld [vmem:[%s2159 + $0x128] sm:$0xff]
  %v2189 = vld [vmem:[%s2159 + $0x130] sm:$0xff]
  %v2190 = vld [vmem:[%s2159 + $0x140] sm:$0xff]
  %v2191 = vld [vmem:[%s2159 + $0x148] sm:$0xff]
  %v2192 = vld [vmem:[%s2159 + $0x150] sm:$0xff]
  %v2193 = vld [vmem:[%s2159 + $0x160] sm:$0xff]
  %v2194 = vld [vmem:[%s2159 + $0x168] sm:$0xff]
  %v2195 = vld [vmem:[%s2159 + $0x170] sm:$0xff]
  %v2196 = vld [vmem:[%s2159 + $0x180] sm:$0xff]
  %v2197 = vld [vmem:[%s2159 + $0x188] sm:$0xff]
  %v2198 = vld [vmem:[%s2159 + $0x190] sm:$0xff]
  %v2199 = vld [vmem:[%s2159 + $0x1a0] sm:$0xff]
  %v2200 = vld [vmem:[%s2159 + $0x1a8] sm:$0xff]
  %v2201 = vld [vmem:[%s2159 + $0x1b0] sm:$0xff]
  %v2202 = vld [vmem:[%s2159 + $0x1c0] sm:$0xff]
  %v2203 = vld [vmem:[%s2159 + $0x1c8] sm:$0xff]
  %v2204 = vld [vmem:[%s2159 + $0x1d0] sm:$0xff]
  %v2205 = vld [vmem:[%s2159 + $0x1e0] sm:$0xff]
  %v2206 = vld [vmem:[%s2159 + $0x1e8] sm:$0xff]
  %v2207 = vld [vmem:[%s2159 + $0x1f0] sm:$0xff]
  %v2208 = vld [vmem:[%s2159 + $0x200] sm:$0xff]
  %v2209 = vld [vmem:[%s2159 + $0x208] sm:$0xff]
  %v2210 = vld [vmem:[%s2159 + $0x210] sm:$0xff]
  %v2211 = vld [vmem:[%s2159 + $0x220] sm:$0xff]
  %v2212 = vld [vmem:[%s2159 + $0x228] sm:$0xff]
  %v2213 = vld [vmem:[%s2159 + $0x230] sm:$0xff]
  %v2214 = vld [vmem:[%s2159 + $0x240] sm:$0xff]
  %v2215 = vld [vmem:[%s2159 + $0x248] sm:$0xff]
  %v2216 = vld [vmem:[%s2159 + $0x250] sm:$0xff]
  %v2217 = vld [vmem:[%s2159 + $0x260] sm:$0xff]
  %v2218 = vld [vmem:[%s2159 + $0x268] sm:$0xff]
  %v2219 = vld [vmem:[%s2159 + $0x270] sm:$0xff]
  %v2220 = vld [vmem:[%s2159 + $0x280] sm:$0xff]
  %v2221 = vld [vmem:[%s2159 + $0x288] sm:$0xff]
  %v2222 = vld [vmem:[%s2159 + $0x290] sm:$0xff]
  %v2223 = vld [vmem:[%s2159 + $0x2a0] sm:$0xff]
  %v2224 = vld [vmem:[%s2159 + $0x2a8] sm:$0xff]
  %v2225 = vld [vmem:[%s2159 + $0x2b0] sm:$0xff]
  %v2226 = vld [vmem:[%s2159 + $0x2c0] sm:$0xff]
  %v2227 = vld [vmem:[%s2159 + $0x2c8] sm:$0xff]
  %v2228 = vld [vmem:[%s2159 + $0x2d0] sm:$0xff]
  %v2229 = vld [vmem:[%s2159 + $0x2e0] sm:$0xff]
  %v2230 = vld [vmem:[%s2159 + $0x2e8] sm:$0xff]
  %v2231 = vld [vmem:[%s2159 + $0x2f0] sm:$0xff]
  %v2232 = vld [vmem:[%s1 + $0xa] sm:$0x1]
  %v2233 = vlaneseq
  %v2234 = vshrl.u32 %v2233, 7
  %v2235 = vsub.s32 0, %v2234
  %v2236 = vrot.slane %v2232, %v2235
  %v2237 = vmul.f32 %v2160, %v2236
  %v2238 = vmul.f32 %v2161, %v2236
  %v2239 = vmul.f32 %v2162, %v2236
  %v2240 = vmul.f32 %v2163, %v2236
  %v2241 = vmul.f32 %v2164, %v2236
  %v2242 = vmul.f32 %v2165, %v2236
  %v2243 = vmul.f32 %v2166, %v2236
  %v2244 = vmul.f32 %v2167, %v2236
  %v2245 = vmul.f32 %v2168, %v2236
  %v2246 = vmul.f32 %v2169, %v2236
  %v2247 = vmul.f32 %v2170, %v2236
  %v2248 = vmul.f32 %v2171, %v2236
  %v2249 = vmul.f32 %v2172, %v2236
  %v2250 = vmul.f32 %v2173, %v2236
  %v2251 = vmul.f32 %v2174, %v2236
  %v2252 = vmul.f32 %v2175, %v2236
  %v2253 = vmul.f32 %v2176, %v2236
  %v2254 = vmul.f32 %v2177, %v2236
  %v2255 = vmul.f32 %v2178, %v2236
  %v2256 = vmul.f32 %v2179, %v2236
  %v2257 = vmul.f32 %v2180, %v2236
  %v2258 = vmul.f32 %v2181, %v2236
  %v2259 = vmul.f32 %v2182, %v2236
  %v2260 = vmul.f32 %v2183, %v2236
  %v2261 = vmul.f32 %v2184, %v2236
  %v2262 = vmul.f32 %v2185, %v2236
  %v2263 = vmul.f32 %v2186, %v2236
  %v2264 = vmul.f32 %v2187, %v2236
  %v2265 = vmul.f32 %v2188, %v2236
  %v2266 = vmul.f32 %v2189, %v2236
  %v2267 = vmul.f32 %v2190, %v2236
  %v2268 = vmul.f32 %v2191, %v2236
  %v2269 = vmul.f32 %v2192, %v2236
  %v2270 = vmul.f32 %v2193, %v2236
  %v2271 = vmul.f32 %v2194, %v2236
  %v2272 = vmul.f32 %v2195, %v2236
  %v2273 = vmul.f32 %v2196, %v2236
  %v2274 = vmul.f32 %v2197, %v2236
  %v2275 = vmul.f32 %v2198, %v2236
  %v2276 = vmul.f32 %v2199, %v2236
  %v2277 = vmul.f32 %v2200, %v2236
  %v2278 = vmul.f32 %v2201, %v2236
  %v2279 = vmul.f32 %v2202, %v2236
  %v2280 = vmul.f32 %v2203, %v2236
  %v2281 = vmul.f32 %v2204, %v2236
  %v2282 = vmul.f32 %v2205, %v2236
  %v2283 = vmul.f32 %v2206, %v2236
  %v2284 = vmul.f32 %v2207, %v2236
  %v2285 = vmul.f32 %v2208, %v2236
  %v2286 = vmul.f32 %v2209, %v2236
  %v2287 = vmul.f32 %v2210, %v2236
  %v2288 = vmul.f32 %v2211, %v2236
  %v2289 = vmul.f32 %v2212, %v2236
  %v2290 = vmul.f32 %v2213, %v2236
  %v2291 = vmul.f32 %v2214, %v2236
  %v2292 = vmul.f32 %v2215, %v2236
  %v2293 = vmul.f32 %v2216, %v2236
  %v2294 = vmul.f32 %v2217, %v2236
  %v2295 = vmul.f32 %v2218, %v2236
  %v2296 = vmul.f32 %v2219, %v2236
  %v2297 = vmul.f32 %v2220, %v2236
  %v2298 = vmul.f32 %v2221, %v2236
  %v2299 = vmul.f32 %v2222, %v2236
  %v2300 = vmul.f32 %v2223, %v2236
  %v2301 = vmul.f32 %v2224, %v2236
  %v2302 = vmul.f32 %v2225, %v2236
  %v2303 = vmul.f32 %v2226, %v2236
  %v2304 = vmul.f32 %v2227, %v2236
  %v2305 = vmul.f32 %v2228, %v2236
  %v2306 = vmul.f32 %v2229, %v2236
  %v2307 = vmul.f32 %v2230, %v2236
  %v2308 = vmul.f32 %v2231, %v2236
  %v2309 = vadd.f32 %v2087, %v2237
  %v2310 = vadd.f32 %v2088, %v2238
  %v2311 = vadd.f32 %v2089, %v2239
  %v2312 = vadd.f32 %v2090, %v2240
  %v2313 = vadd.f32 %v2091, %v2241
  %v2314 = vadd.f32 %v2092, %v2242
  %v2315 = vadd.f32 %v2093, %v2243
  %v2316 = vadd.f32 %v2094, %v2244
  %v2317 = vadd.f32 %v2095, %v2245
  %v2318 = vadd.f32 %v2096, %v2246
  %v2319 = vadd.f32 %v2097, %v2247
  %v2320 = vadd.f32 %v2098, %v2248
  %v2321 = vadd.f32 %v2099, %v2249
  %v2322 = vadd.f32 %v2100, %v2250
  %v2323 = vadd.f32 %v2101, %v2251
  %v2324 = vadd.f32 %v2102, %v2252
  %v2325 = vadd.f32 %v2103, %v2253
  %v2326 = vadd.f32 %v2104, %v2254
  %v2327 = vadd.f32 %v2105, %v2255
  %v2328 = vadd.f32 %v2106, %v2256
  %v2329 = vadd.f32 %v2107, %v2257
  %v2330 = vadd.f32 %v2108, %v2258
  %v2331 = vadd.f32 %v2109, %v2259
  %v2332 = vadd.f32 %v2110, %v2260
  %v2333 = vadd.f32 %v2111, %v2261
  %v2334 = vadd.f32 %v2112, %v2262
  %v2335 = vadd.f32 %v2113, %v2263
  %v2336 = vadd.f32 %v2114, %v2264
  %v2337 = vadd.f32 %v2115, %v2265
  %v2338 = vadd.f32 %v2116, %v2266
  %v2339 = vadd.f32 %v2117, %v2267
  %v2340 = vadd.f32 %v2118, %v2268
  %v2341 = vadd.f32 %v2119, %v2269
  %v2342 = vadd.f32 %v2120, %v2270
  %v2343 = vadd.f32 %v2121, %v2271
  %v2344 = vadd.f32 %v2122, %v2272
  %v2345 = vadd.f32 %v2123, %v2273
  %v2346 = vadd.f32 %v2124, %v2274
  %v2347 = vadd.f32 %v2125, %v2275
  %v2348 = vadd.f32 %v2126, %v2276
  %v2349 = vadd.f32 %v2127, %v2277
  %v2350 = vadd.f32 %v2128, %v2278
  %v2351 = vadd.f32 %v2129, %v2279
  %v2352 = vadd.f32 %v2130, %v2280
  %v2353 = vadd.f32 %v2131, %v2281
  %v2354 = vadd.f32 %v2132, %v2282
  %v2355 = vadd.f32 %v2133, %v2283
  %v2356 = vadd.f32 %v2134, %v2284
  %v2357 = vadd.f32 %v2135, %v2285
  %v2358 = vadd.f32 %v2136, %v2286
  %v2359 = vadd.f32 %v2137, %v2287
  %v2360 = vadd.f32 %v2138, %v2288
  %v2361 = vadd.f32 %v2139, %v2289
  %v2362 = vadd.f32 %v2140, %v2290
  %v2363 = vadd.f32 %v2141, %v2291
  %v2364 = vadd.f32 %v2142, %v2292
  %v2365 = vadd.f32 %v2143, %v2293
  %v2366 = vadd.f32 %v2144, %v2294
  %v2367 = vadd.f32 %v2145, %v2295
  %v2368 = vadd.f32 %v2146, %v2296
  %v2369 = vadd.f32 %v2147, %v2297
  %v2370 = vadd.f32 %v2148, %v2298
  %v2371 = vadd.f32 %v2149, %v2299
  %v2372 = vadd.f32 %v2150, %v2300
  %v2373 = vadd.f32 %v2151, %v2301
  %v2374 = vadd.f32 %v2152, %v2302
  %v2375 = vadd.f32 %v2153, %v2303
  %v2376 = vadd.f32 %v2154, %v2304
  %v2377 = vadd.f32 %v2155, %v2305
  %v2378 = vadd.f32 %v2156, %v2306
  %v2379 = vadd.f32 %v2157, %v2307
  %v2380 = vadd.f32 %v2158, %v2308
  %v2381 = vld [vmem:[%s2159 + $0x1] sm:$0xff]
  %v2382 = vld [vmem:[%s2159 + $0x9] sm:$0xff]
  %v2383 = vld [vmem:[%s2159 + $0x11] sm:$0xff]
  %v2384 = vld [vmem:[%s2159 + $0x21] sm:$0xff]
  %v2385 = vld [vmem:[%s2159 + $0x29] sm:$0xff]
  %v2386 = vld [vmem:[%s2159 + $0x31] sm:$0xff]
  %v2387 = vld [vmem:[%s2159 + $0x41] sm:$0xff]
  %v2388 = vld [vmem:[%s2159 + $0x49] sm:$0xff]
  %v2389 = vld [vmem:[%s2159 + $0x51] sm:$0xff]
  %v2390 = vld [vmem:[%s2159 + $0x61] sm:$0xff]
  %v2391 = vld [vmem:[%s2159 + $0x69] sm:$0xff]
  %v2392 = vld [vmem:[%s2159 + $0x71] sm:$0xff]
  %v2393 = vld [vmem:[%s2159 + $0x81] sm:$0xff]
  %v2394 = vld [vmem:[%s2159 + $0x89] sm:$0xff]
  %v2395 = vld [vmem:[%s2159 + $0x91] sm:$0xff]
  %v2396 = vld [vmem:[%s2159 + $0xa1] sm:$0xff]
  %v2397 = vld [vmem:[%s2159 + $0xa9] sm:$0xff]
  %v2398 = vld [vmem:[%s2159 + $0xb1] sm:$0xff]
  %v2399 = vld [vmem:[%s2159 + $0xc1] sm:$0xff]
  %v2400 = vld [vmem:[%s2159 + $0xc9] sm:$0xff]
  %v2401 = vld [vmem:[%s2159 + $0xd1] sm:$0xff]
  %v2402 = vld [vmem:[%s2159 + $0xe1] sm:$0xff]
  %v2403 = vld [vmem:[%s2159 + $0xe9] sm:$0xff]
  %v2404 = vld [vmem:[%s2159 + $0xf1] sm:$0xff]
  %v2405 = vld [vmem:[%s2159 + $0x101] sm:$0xff]
  %v2406 = vld [vmem:[%s2159 + $0x109] sm:$0xff]
  %v2407 = vld [vmem:[%s2159 + $0x111] sm:$0xff]
  %v2408 = vld [vmem:[%s2159 + $0x121] sm:$0xff]
  %v2409 = vld [vmem:[%s2159 + $0x129] sm:$0xff]
  %v2410 = vld [vmem:[%s2159 + $0x131] sm:$0xff]
  %v2411 = vld [vmem:[%s2159 + $0x141] sm:$0xff]
  %v2412 = vld [vmem:[%s2159 + $0x149] sm:$0xff]
  %v2413 = vld [vmem:[%s2159 + $0x151] sm:$0xff]
  %v2414 = vld [vmem:[%s2159 + $0x161] sm:$0xff]
  %v2415 = vld [vmem:[%s2159 + $0x169] sm:$0xff]
  %v2416 = vld [vmem:[%s2159 + $0x171] sm:$0xff]
  %v2417 = vld [vmem:[%s2159 + $0x181] sm:$0xff]
  %v2418 = vld [vmem:[%s2159 + $0x189] sm:$0xff]
  %v2419 = vld [vmem:[%s2159 + $0x191] sm:$0xff]
  %v2420 = vld [vmem:[%s2159 + $0x1a1] sm:$0xff]
  %v2421 = vld [vmem:[%s2159 + $0x1a9] sm:$0xff]
  %v2422 = vld [vmem:[%s2159 + $0x1b1] sm:$0xff]
  %v2423 = vld [vmem:[%s2159 + $0x1c1] sm:$0xff]
  %v2424 = vld [vmem:[%s2159 + $0x1c9] sm:$0xff]
  %v2425 = vld [vmem:[%s2159 + $0x1d1] sm:$0xff]
  %v2426 = vld [vmem:[%s2159 + $0x1e1] sm:$0xff]
  %v2427 = vld [vmem:[%s2159 + $0x1e9] sm:$0xff]
  %v2428 = vld [vmem:[%s2159 + $0x1f1] sm:$0xff]
  %v2429 = vld [vmem:[%s2159 + $0x201] sm:$0xff]
  %v2430 = vld [vmem:[%s2159 + $0x209] sm:$0xff]
  %v2431 = vld [vmem:[%s2159 + $0x211] sm:$0xff]
  %v2432 = vld [vmem:[%s2159 + $0x221] sm:$0xff]
  %v2433 = vld [vmem:[%s2159 + $0x229] sm:$0xff]
  %v2434 = vld [vmem:[%s2159 + $0x231] sm:$0xff]
  %v2435 = vld [vmem:[%s2159 + $0x241] sm:$0xff]
  %v2436 = vld [vmem:[%s2159 + $0x249] sm:$0xff]
  %v2437 = vld [vmem:[%s2159 + $0x251] sm:$0xff]
  %v2438 = vld [vmem:[%s2159 + $0x261] sm:$0xff]
  %v2439 = vld [vmem:[%s2159 + $0x269] sm:$0xff]
  %v2440 = vld [vmem:[%s2159 + $0x271] sm:$0xff]
  %v2441 = vld [vmem:[%s2159 + $0x281] sm:$0xff]
  %v2442 = vld [vmem:[%s2159 + $0x289] sm:$0xff]
  %v2443 = vld [vmem:[%s2159 + $0x291] sm:$0xff]
  %v2444 = vld [vmem:[%s2159 + $0x2a1] sm:$0xff]
  %v2445 = vld [vmem:[%s2159 + $0x2a9] sm:$0xff]
  %v2446 = vld [vmem:[%s2159 + $0x2b1] sm:$0xff]
  %v2447 = vld [vmem:[%s2159 + $0x2c1] sm:$0xff]
  %v2448 = vld [vmem:[%s2159 + $0x2c9] sm:$0xff]
  %v2449 = vld [vmem:[%s2159 + $0x2d1] sm:$0xff]
  %v2450 = vld [vmem:[%s2159 + $0x2e1] sm:$0xff]
  %v2451 = vld [vmem:[%s2159 + $0x2e9] sm:$0xff]
  %v2452 = vld [vmem:[%s2159 + $0x2f1] sm:$0xff]
  %v2453 = vld [vmem:[%s1 + $0xb] sm:$0x1]
  %v2454 = vlaneseq
  %v2455 = vshrl.u32 %v2454, 7
  %v2456 = vsub.s32 0, %v2455
  %v2457 = vrot.slane %v2453, %v2456
  %v2458 = vmul.f32 %v2381, %v2457
  %v2459 = vmul.f32 %v2382, %v2457
  %v2460 = vmul.f32 %v2383, %v2457
  %v2461 = vmul.f32 %v2384, %v2457
  %v2462 = vmul.f32 %v2385, %v2457
  %v2463 = vmul.f32 %v2386, %v2457
  %v2464 = vmul.f32 %v2387, %v2457
  %v2465 = vmul.f32 %v2388, %v2457
  %v2466 = vmul.f32 %v2389, %v2457
  %v2467 = vmul.f32 %v2390, %v2457
  %v2468 = vmul.f32 %v2391, %v2457
  %v2469 = vmul.f32 %v2392, %v2457
  %v2470 = vmul.f32 %v2393, %v2457
  %v2471 = vmul.f32 %v2394, %v2457
  %v2472 = vmul.f32 %v2395, %v2457
  %v2473 = vmul.f32 %v2396, %v2457
  %v2474 = vmul.f32 %v2397, %v2457
  %v2475 = vmul.f32 %v2398, %v2457
  %v2476 = vmul.f32 %v2399, %v2457
  %v2477 = vmul.f32 %v2400, %v2457
  %v2478 = vmul.f32 %v2401, %v2457
  %v2479 = vmul.f32 %v2402, %v2457
  %v2480 = vmul.f32 %v2403, %v2457
  %v2481 = vmul.f32 %v2404, %v2457
  %v2482 = vmul.f32 %v2405, %v2457
  %v2483 = vmul.f32 %v2406, %v2457
  %v2484 = vmul.f32 %v2407, %v2457
  %v2485 = vmul.f32 %v2408, %v2457
  %v2486 = vmul.f32 %v2409, %v2457
  %v2487 = vmul.f32 %v2410, %v2457
  %v2488 = vmul.f32 %v2411, %v2457
  %v2489 = vmul.f32 %v2412, %v2457
  %v2490 = vmul.f32 %v2413, %v2457
  %v2491 = vmul.f32 %v2414, %v2457
  %v2492 = vmul.f32 %v2415, %v2457
  %v2493 = vmul.f32 %v2416, %v2457
  %v2494 = vmul.f32 %v2417, %v2457
  %v2495 = vmul.f32 %v2418, %v2457
  %v2496 = vmul.f32 %v2419, %v2457
  %v2497 = vmul.f32 %v2420, %v2457
  %v2498 = vmul.f32 %v2421, %v2457
  %v2499 = vmul.f32 %v2422, %v2457
  %v2500 = vmul.f32 %v2423, %v2457
  %v2501 = vmul.f32 %v2424, %v2457
  %v2502 = vmul.f32 %v2425, %v2457
  %v2503 = vmul.f32 %v2426, %v2457
  %v2504 = vmul.f32 %v2427, %v2457
  %v2505 = vmul.f32 %v2428, %v2457
  %v2506 = vmul.f32 %v2429, %v2457
  %v2507 = vmul.f32 %v2430, %v2457
  %v2508 = vmul.f32 %v2431, %v2457
  %v2509 = vmul.f32 %v2432, %v2457
  %v2510 = vmul.f32 %v2433, %v2457
  %v2511 = vmul.f32 %v2434, %v2457
  %v2512 = vmul.f32 %v2435, %v2457
  %v2513 = vmul.f32 %v2436, %v2457
  %v2514 = vmul.f32 %v2437, %v2457
  %v2515 = vmul.f32 %v2438, %v2457
  %v2516 = vmul.f32 %v2439, %v2457
  %v2517 = vmul.f32 %v2440, %v2457
  %v2518 = vmul.f32 %v2441, %v2457
  %v2519 = vmul.f32 %v2442, %v2457
  %v2520 = vmul.f32 %v2443, %v2457
  %v2521 = vmul.f32 %v2444, %v2457
  %v2522 = vmul.f32 %v2445, %v2457
  %v2523 = vmul.f32 %v2446, %v2457
  %v2524 = vmul.f32 %v2447, %v2457
  %v2525 = vmul.f32 %v2448, %v2457
  %v2526 = vmul.f32 %v2449, %v2457
  %v2527 = vmul.f32 %v2450, %v2457
  %v2528 = vmul.f32 %v2451, %v2457
  %v2529 = vmul.f32 %v2452, %v2457
  %v2530 = vadd.f32 %v2309, %v2458
  %v2531 = vadd.f32 %v2310, %v2459
  %v2532 = vadd.f32 %v2311, %v2460
  %v2533 = vadd.f32 %v2312, %v2461
  %v2534 = vadd.f32 %v2313, %v2462
  %v2535 = vadd.f32 %v2314, %v2463
  %v2536 = vadd.f32 %v2315, %v2464
  %v2537 = vadd.f32 %v2316, %v2465
  %v2538 = vadd.f32 %v2317, %v2466
  %v2539 = vadd.f32 %v2318, %v2467
  %v2540 = vadd.f32 %v2319, %v2468
  %v2541 = vadd.f32 %v2320, %v2469
  %v2542 = vadd.f32 %v2321, %v2470
  %v2543 = vadd.f32 %v2322, %v2471
  %v2544 = vadd.f32 %v2323, %v2472
  %v2545 = vadd.f32 %v2324, %v2473
  %v2546 = vadd.f32 %v2325, %v2474
  %v2547 = vadd.f32 %v2326, %v2475
  %v2548 = vadd.f32 %v2327, %v2476
  %v2549 = vadd.f32 %v2328, %v2477
  %v2550 = vadd.f32 %v2329, %v2478
  %v2551 = vadd.f32 %v2330, %v2479
  %v2552 = vadd.f32 %v2331, %v2480
  %v2553 = vadd.f32 %v2332, %v2481
  %v2554 = vadd.f32 %v2333, %v2482
  %v2555 = vadd.f32 %v2334, %v2483
  %v2556 = vadd.f32 %v2335, %v2484
  %v2557 = vadd.f32 %v2336, %v2485
  %v2558 = vadd.f32 %v2337, %v2486
  %v2559 = vadd.f32 %v2338, %v2487
  %v2560 = vadd.f32 %v2339, %v2488
  %v2561 = vadd.f32 %v2340, %v2489
  %v2562 = vadd.f32 %v2341, %v2490
  %v2563 = vadd.f32 %v2342, %v2491
  %v2564 = vadd.f32 %v2343, %v2492
  %v2565 = vadd.f32 %v2344, %v2493
  %v2566 = vadd.f32 %v2345, %v2494
  %v2567 = vadd.f32 %v2346, %v2495
  %v2568 = vadd.f32 %v2347, %v2496
  %v2569 = vadd.f32 %v2348, %v2497
  %v2570 = vadd.f32 %v2349, %v2498
  %v2571 = vadd.f32 %v2350, %v2499
  %v2572 = vadd.f32 %v2351, %v2500
  %v2573 = vadd.f32 %v2352, %v2501
  %v2574 = vadd.f32 %v2353, %v2502
  %v2575 = vadd.f32 %v2354, %v2503
  %v2576 = vadd.f32 %v2355, %v2504
  %v2577 = vadd.f32 %v2356, %v2505
  %v2578 = vadd.f32 %v2357, %v2506
  %v2579 = vadd.f32 %v2358, %v2507
  %v2580 = vadd.f32 %v2359, %v2508
  %v2581 = vadd.f32 %v2360, %v2509
  %v2582 = vadd.f32 %v2361, %v2510
  %v2583 = vadd.f32 %v2362, %v2511
  %v2584 = vadd.f32 %v2363, %v2512
  %v2585 = vadd.f32 %v2364, %v2513
  %v2586 = vadd.f32 %v2365, %v2514
  %v2587 = vadd.f32 %v2366, %v2515
  %v2588 = vadd.f32 %v2367, %v2516
  %v2589 = vadd.f32 %v2368, %v2517
  %v2590 = vadd.f32 %v2369, %v2518
  %v2591 = vadd.f32 %v2370, %v2519
  %v2592 = vadd.f32 %v2371, %v2520
  %v2593 = vadd.f32 %v2372, %v2521
  %v2594 = vadd.f32 %v2373, %v2522
  %v2595 = vadd.f32 %v2374, %v2523
  %v2596 = vadd.f32 %v2375, %v2524
  %v2597 = vadd.f32 %v2376, %v2525
  %v2598 = vadd.f32 %v2377, %v2526
  %v2599 = vadd.f32 %v2378, %v2527
  %v2600 = vadd.f32 %v2379, %v2528
  %v2601 = vadd.f32 %v2380, %v2529
  %v2602 = vld [vmem:[%s2159 + $0x2] sm:$0xff]
  %v2603 = vld [vmem:[%s2159 + $0xa] sm:$0xff]
  %v2604 = vld [vmem:[%s2159 + $0x12] sm:$0xff]
  %v2605 = vld [vmem:[%s2159 + $0x22] sm:$0xff]
  %v2606 = vld [vmem:[%s2159 + $0x2a] sm:$0xff]
  %v2607 = vld [vmem:[%s2159 + $0x32] sm:$0xff]
  %v2608 = vld [vmem:[%s2159 + $0x42] sm:$0xff]
  %v2609 = vld [vmem:[%s2159 + $0x4a] sm:$0xff]
  %v2610 = vld [vmem:[%s2159 + $0x52] sm:$0xff]
  %v2611 = vld [vmem:[%s2159 + $0x62] sm:$0xff]
  %v2612 = vld [vmem:[%s2159 + $0x6a] sm:$0xff]
  %v2613 = vld [vmem:[%s2159 + $0x72] sm:$0xff]
  %v2614 = vld [vmem:[%s2159 + $0x82] sm:$0xff]
  %v2615 = vld [vmem:[%s2159 + $0x8a] sm:$0xff]
  %v2616 = vld [vmem:[%s2159 + $0x92] sm:$0xff]
  %v2617 = vld [vmem:[%s2159 + $0xa2] sm:$0xff]
  %v2618 = vld [vmem:[%s2159 + $0xaa] sm:$0xff]
  %v2619 = vld [vmem:[%s2159 + $0xb2] sm:$0xff]
  %v2620 = vld [vmem:[%s2159 + $0xc2] sm:$0xff]
  %v2621 = vld [vmem:[%s2159 + $0xca] sm:$0xff]
  %v2622 = vld [vmem:[%s2159 + $0xd2] sm:$0xff]
  %v2623 = vld [vmem:[%s2159 + $0xe2] sm:$0xff]
  %v2624 = vld [vmem:[%s2159 + $0xea] sm:$0xff]
  %v2625 = vld [vmem:[%s2159 + $0xf2] sm:$0xff]
  %v2626 = vld [vmem:[%s2159 + $0x102] sm:$0xff]
  %v2627 = vld [vmem:[%s2159 + $0x10a] sm:$0xff]
  %v2628 = vld [vmem:[%s2159 + $0x112] sm:$0xff]
  %v2629 = vld [vmem:[%s2159 + $0x122] sm:$0xff]
  %v2630 = vld [vmem:[%s2159 + $0x12a] sm:$0xff]
  %v2631 = vld [vmem:[%s2159 + $0x132] sm:$0xff]
  %v2632 = vld [vmem:[%s2159 + $0x142] sm:$0xff]
  %v2633 = vld [vmem:[%s2159 + $0x14a] sm:$0xff]
  %v2634 = vld [vmem:[%s2159 + $0x152] sm:$0xff]
  %v2635 = vld [vmem:[%s2159 + $0x162] sm:$0xff]
  %v2636 = vld [vmem:[%s2159 + $0x16a] sm:$0xff]
  %v2637 = vld [vmem:[%s2159 + $0x172] sm:$0xff]
  %v2638 = vld [vmem:[%s2159 + $0x182] sm:$0xff]
  %v2639 = vld [vmem:[%s2159 + $0x18a] sm:$0xff]
  %v2640 = vld [vmem:[%s2159 + $0x192] sm:$0xff]
  %v2641 = vld [vmem:[%s2159 + $0x1a2] sm:$0xff]
  %v2642 = vld [vmem:[%s2159 + $0x1aa] sm:$0xff]
  %v2643 = vld [vmem:[%s2159 + $0x1b2] sm:$0xff]
  %v2644 = vld [vmem:[%s2159 + $0x1c2] sm:$0xff]
  %v2645 = vld [vmem:[%s2159 + $0x1ca] sm:$0xff]
  %v2646 = vld [vmem:[%s2159 + $0x1d2] sm:$0xff]
  %v2647 = vld [vmem:[%s2159 + $0x1e2] sm:$0xff]
  %v2648 = vld [vmem:[%s2159 + $0x1ea] sm:$0xff]
  %v2649 = vld [vmem:[%s2159 + $0x1f2] sm:$0xff]
  %v2650 = vld [vmem:[%s2159 + $0x202] sm:$0xff]
  %v2651 = vld [vmem:[%s2159 + $0x20a] sm:$0xff]
  %v2652 = vld [vmem:[%s2159 + $0x212] sm:$0xff]
  %v2653 = vld [vmem:[%s2159 + $0x222] sm:$0xff]
  %v2654 = vld [vmem:[%s2159 + $0x22a] sm:$0xff]
  %v2655 = vld [vmem:[%s2159 + $0x232] sm:$0xff]
  %v2656 = vld [vmem:[%s2159 + $0x242] sm:$0xff]
  %v2657 = vld [vmem:[%s2159 + $0x24a] sm:$0xff]
  %v2658 = vld [vmem:[%s2159 + $0x252] sm:$0xff]
  %v2659 = vld [vmem:[%s2159 + $0x262] sm:$0xff]
  %v2660 = vld [vmem:[%s2159 + $0x26a] sm:$0xff]
  %v2661 = vld [vmem:[%s2159 + $0x272] sm:$0xff]
  %v2662 = vld [vmem:[%s2159 + $0x282] sm:$0xff]
  %v2663 = vld [vmem:[%s2159 + $0x28a] sm:$0xff]
  %v2664 = vld [vmem:[%s2159 + $0x292] sm:$0xff]
  %v2665 = vld [vmem:[%s2159 + $0x2a2] sm:$0xff]
  %v2666 = vld [vmem:[%s2159 + $0x2aa] sm:$0xff]
  %v2667 = vld [vmem:[%s2159 + $0x2b2] sm:$0xff]
  %v2668 = vld [vmem:[%s2159 + $0x2c2] sm:$0xff]
  %v2669 = vld [vmem:[%s2159 + $0x2ca] sm:$0xff]
  %v2670 = vld [vmem:[%s2159 + $0x2d2] sm:$0xff]
  %v2671 = vld [vmem:[%s2159 + $0x2e2] sm:$0xff]
  %v2672 = vld [vmem:[%s2159 + $0x2ea] sm:$0xff]
  %v2673 = vld [vmem:[%s2159 + $0x2f2] sm:$0xff]
  %v2674 = vld [vmem:[%s1 + $0xc] sm:$0x1]
  %v2675 = vlaneseq
  %v2676 = vshrl.u32 %v2675, 7
  %v2677 = vsub.s32 0, %v2676
  %v2678 = vrot.slane %v2674, %v2677
  %v2679 = vmul.f32 %v2602, %v2678
  %v2680 = vmul.f32 %v2603, %v2678
  %v2681 = vmul.f32 %v2604, %v2678
  %v2682 = vmul.f32 %v2605, %v2678
  %v2683 = vmul.f32 %v2606, %v2678
  %v2684 = vmul.f32 %v2607, %v2678
  %v2685 = vmul.f32 %v2608, %v2678
  %v2686 = vmul.f32 %v2609, %v2678
  %v2687 = vmul.f32 %v2610, %v2678
  %v2688 = vmul.f32 %v2611, %v2678
  %v2689 = vmul.f32 %v2612, %v2678
  %v2690 = vmul.f32 %v2613, %v2678
  %v2691 = vmul.f32 %v2614, %v2678
  %v2692 = vmul.f32 %v2615, %v2678
  %v2693 = vmul.f32 %v2616, %v2678
  %v2694 = vmul.f32 %v2617, %v2678
  %v2695 = vmul.f32 %v2618, %v2678
  %v2696 = vmul.f32 %v2619, %v2678
  %v2697 = vmul.f32 %v2620, %v2678
  %v2698 = vmul.f32 %v2621, %v2678
  %v2699 = vmul.f32 %v2622, %v2678
  %v2700 = vmul.f32 %v2623, %v2678
  %v2701 = vmul.f32 %v2624, %v2678
  %v2702 = vmul.f32 %v2625, %v2678
  %v2703 = vmul.f32 %v2626, %v2678
  %v2704 = vmul.f32 %v2627, %v2678
  %v2705 = vmul.f32 %v2628, %v2678
  %v2706 = vmul.f32 %v2629, %v2678
  %v2707 = vmul.f32 %v2630, %v2678
  %v2708 = vmul.f32 %v2631, %v2678
  %v2709 = vmul.f32 %v2632, %v2678
  %v2710 = vmul.f32 %v2633, %v2678
  %v2711 = vmul.f32 %v2634, %v2678
  %v2712 = vmul.f32 %v2635, %v2678
  %v2713 = vmul.f32 %v2636, %v2678
  %v2714 = vmul.f32 %v2637, %v2678
  %v2715 = vmul.f32 %v2638, %v2678
  %v2716 = vmul.f32 %v2639, %v2678
  %v2717 = vmul.f32 %v2640, %v2678
  %v2718 = vmul.f32 %v2641, %v2678
  %v2719 = vmul.f32 %v2642, %v2678
  %v2720 = vmul.f32 %v2643, %v2678
  %v2721 = vmul.f32 %v2644, %v2678
  %v2722 = vmul.f32 %v2645, %v2678
  %v2723 = vmul.f32 %v2646, %v2678
  %v2724 = vmul.f32 %v2647, %v2678
  %v2725 = vmul.f32 %v2648, %v2678
  %v2726 = vmul.f32 %v2649, %v2678
  %v2727 = vmul.f32 %v2650, %v2678
  %v2728 = vmul.f32 %v2651, %v2678
  %v2729 = vmul.f32 %v2652, %v2678
  %v2730 = vmul.f32 %v2653, %v2678
  %v2731 = vmul.f32 %v2654, %v2678
  %v2732 = vmul.f32 %v2655, %v2678
  %v2733 = vmul.f32 %v2656, %v2678
  %v2734 = vmul.f32 %v2657, %v2678
  %v2735 = vmul.f32 %v2658, %v2678
  %v2736 = vmul.f32 %v2659, %v2678
  %v2737 = vmul.f32 %v2660, %v2678
  %v2738 = vmul.f32 %v2661, %v2678
  %v2739 = vmul.f32 %v2662, %v2678
  %v2740 = vmul.f32 %v2663, %v2678
  %v2741 = vmul.f32 %v2664, %v2678
  %v2742 = vmul.f32 %v2665, %v2678
  %v2743 = vmul.f32 %v2666, %v2678
  %v2744 = vmul.f32 %v2667, %v2678
  %v2745 = vmul.f32 %v2668, %v2678
  %v2746 = vmul.f32 %v2669, %v2678
  %v2747 = vmul.f32 %v2670, %v2678
  %v2748 = vmul.f32 %v2671, %v2678
  %v2749 = vmul.f32 %v2672, %v2678
  %v2750 = vmul.f32 %v2673, %v2678
  %v2751 = vadd.f32 %v2530, %v2679
  %v2752 = vadd.f32 %v2531, %v2680
  %v2753 = vadd.f32 %v2532, %v2681
  %v2754 = vadd.f32 %v2533, %v2682
  %v2755 = vadd.f32 %v2534, %v2683
  %v2756 = vadd.f32 %v2535, %v2684
  %v2757 = vadd.f32 %v2536, %v2685
  %v2758 = vadd.f32 %v2537, %v2686
  %v2759 = vadd.f32 %v2538, %v2687
  %v2760 = vadd.f32 %v2539, %v2688
  %v2761 = vadd.f32 %v2540, %v2689
  %v2762 = vadd.f32 %v2541, %v2690
  %v2763 = vadd.f32 %v2542, %v2691
  %v2764 = vadd.f32 %v2543, %v2692
  %v2765 = vadd.f32 %v2544, %v2693
  %v2766 = vadd.f32 %v2545, %v2694
  %v2767 = vadd.f32 %v2546, %v2695
  %v2768 = vadd.f32 %v2547, %v2696
  %v2769 = vadd.f32 %v2548, %v2697
  %v2770 = vadd.f32 %v2549, %v2698
  %v2771 = vadd.f32 %v2550, %v2699
  %v2772 = vadd.f32 %v2551, %v2700
  %v2773 = vadd.f32 %v2552, %v2701
  %v2774 = vadd.f32 %v2553, %v2702
  %v2775 = vadd.f32 %v2554, %v2703
  %v2776 = vadd.f32 %v2555, %v2704
  %v2777 = vadd.f32 %v2556, %v2705
  %v2778 = vadd.f32 %v2557, %v2706
  %v2779 = vadd.f32 %v2558, %v2707
  %v2780 = vadd.f32 %v2559, %v2708
  %v2781 = vadd.f32 %v2560, %v2709
  %v2782 = vadd.f32 %v2561, %v2710
  %v2783 = vadd.f32 %v2562, %v2711
  %v2784 = vadd.f32 %v2563, %v2712
  %v2785 = vadd.f32 %v2564, %v2713
  %v2786 = vadd.f32 %v2565, %v2714
  %v2787 = vadd.f32 %v2566, %v2715
  %v2788 = vadd.f32 %v2567, %v2716
  %v2789 = vadd.f32 %v2568, %v2717
  %v2790 = vadd.f32 %v2569, %v2718
  %v2791 = vadd.f32 %v2570, %v2719
  %v2792 = vadd.f32 %v2571, %v2720
  %v2793 = vadd.f32 %v2572, %v2721
  %v2794 = vadd.f32 %v2573, %v2722
  %v2795 = vadd.f32 %v2574, %v2723
  %v2796 = vadd.f32 %v2575, %v2724
  %v2797 = vadd.f32 %v2576, %v2725
  %v2798 = vadd.f32 %v2577, %v2726
  %v2799 = vadd.f32 %v2578, %v2727
  %v2800 = vadd.f32 %v2579, %v2728
  %v2801 = vadd.f32 %v2580, %v2729
  %v2802 = vadd.f32 %v2581, %v2730
  %v2803 = vadd.f32 %v2582, %v2731
  %v2804 = vadd.f32 %v2583, %v2732
  %v2805 = vadd.f32 %v2584, %v2733
  %v2806 = vadd.f32 %v2585, %v2734
  %v2807 = vadd.f32 %v2586, %v2735
  %v2808 = vadd.f32 %v2587, %v2736
  %v2809 = vadd.f32 %v2588, %v2737
  %v2810 = vadd.f32 %v2589, %v2738
  %v2811 = vadd.f32 %v2590, %v2739
  %v2812 = vadd.f32 %v2591, %v2740
  %v2813 = vadd.f32 %v2592, %v2741
  %v2814 = vadd.f32 %v2593, %v2742
  %v2815 = vadd.f32 %v2594, %v2743
  %v2816 = vadd.f32 %v2595, %v2744
  %v2817 = vadd.f32 %v2596, %v2745
  %v2818 = vadd.f32 %v2597, %v2746
  %v2819 = vadd.f32 %v2598, %v2747
  %v2820 = vadd.f32 %v2599, %v2748
  %v2821 = vadd.f32 %v2600, %v2749
  %v2822 = vadd.f32 %v2601, %v2750
  %v2823 = vld [vmem:[%s2159 + $0x3] sm:$0xff]
  %v2824 = vld [vmem:[%s2159 + $0xb] sm:$0xff]
  %v2825 = vld [vmem:[%s2159 + $0x13] sm:$0xff]
  %v2826 = vld [vmem:[%s2159 + $0x23] sm:$0xff]
  %v2827 = vld [vmem:[%s2159 + $0x2b] sm:$0xff]
  %v2828 = vld [vmem:[%s2159 + $0x33] sm:$0xff]
  %v2829 = vld [vmem:[%s2159 + $0x43] sm:$0xff]
  %v2830 = vld [vmem:[%s2159 + $0x4b] sm:$0xff]
  %v2831 = vld [vmem:[%s2159 + $0x53] sm:$0xff]
  %v2832 = vld [vmem:[%s2159 + $0x63] sm:$0xff]
  %v2833 = vld [vmem:[%s2159 + $0x6b] sm:$0xff]
  %v2834 = vld [vmem:[%s2159 + $0x73] sm:$0xff]
  %v2835 = vld [vmem:[%s2159 + $0x83] sm:$0xff]
  %v2836 = vld [vmem:[%s2159 + $0x8b] sm:$0xff]
  %v2837 = vld [vmem:[%s2159 + $0x93] sm:$0xff]
  %v2838 = vld [vmem:[%s2159 + $0xa3] sm:$0xff]
  %v2839 = vld [vmem:[%s2159 + $0xab] sm:$0xff]
  %v2840 = vld [vmem:[%s2159 + $0xb3] sm:$0xff]
  %v2841 = vld [vmem:[%s2159 + $0xc3] sm:$0xff]
  %v2842 = vld [vmem:[%s2159 + $0xcb] sm:$0xff]
  %v2843 = vld [vmem:[%s2159 + $0xd3] sm:$0xff]
  %v2844 = vld [vmem:[%s2159 + $0xe3] sm:$0xff]
  %v2845 = vld [vmem:[%s2159 + $0xeb] sm:$0xff]
  %v2846 = vld [vmem:[%s2159 + $0xf3] sm:$0xff]
  %v2847 = vld [vmem:[%s2159 + $0x103] sm:$0xff]
  %v2848 = vld [vmem:[%s2159 + $0x10b] sm:$0xff]
  %v2849 = vld [vmem:[%s2159 + $0x113] sm:$0xff]
  %v2850 = vld [vmem:[%s2159 + $0x123] sm:$0xff]
  %v2851 = vld [vmem:[%s2159 + $0x12b] sm:$0xff]
  %v2852 = vld [vmem:[%s2159 + $0x133] sm:$0xff]
  %v2853 = vld [vmem:[%s2159 + $0x143] sm:$0xff]
  %v2854 = vld [vmem:[%s2159 + $0x14b] sm:$0xff]
  %v2855 = vld [vmem:[%s2159 + $0x153] sm:$0xff]
  %v2856 = vld [vmem:[%s2159 + $0x163] sm:$0xff]
  %v2857 = vld [vmem:[%s2159 + $0x16b] sm:$0xff]
  %v2858 = vld [vmem:[%s2159 + $0x173] sm:$0xff]
  %v2859 = vld [vmem:[%s2159 + $0x183] sm:$0xff]
  %v2860 = vld [vmem:[%s2159 + $0x18b] sm:$0xff]
  %v2861 = vld [vmem:[%s2159 + $0x193] sm:$0xff]
  %v2862 = vld [vmem:[%s2159 + $0x1a3] sm:$0xff]
  %v2863 = vld [vmem:[%s2159 + $0x1ab] sm:$0xff]
  %v2864 = vld [vmem:[%s2159 + $0x1b3] sm:$0xff]
  %v2865 = vld [vmem:[%s2159 + $0x1c3] sm:$0xff]
  %v2866 = vld [vmem:[%s2159 + $0x1cb] sm:$0xff]
  %v2867 = vld [vmem:[%s2159 + $0x1d3] sm:$0xff]
  %v2868 = vld [vmem:[%s2159 + $0x1e3] sm:$0xff]
  %v2869 = vld [vmem:[%s2159 + $0x1eb] sm:$0xff]
  %v2870 = vld [vmem:[%s2159 + $0x1f3] sm:$0xff]
  %v2871 = vld [vmem:[%s2159 + $0x203] sm:$0xff]
  %v2872 = vld [vmem:[%s2159 + $0x20b] sm:$0xff]
  %v2873 = vld [vmem:[%s2159 + $0x213] sm:$0xff]
  %v2874 = vld [vmem:[%s2159 + $0x223] sm:$0xff]
  %v2875 = vld [vmem:[%s2159 + $0x22b] sm:$0xff]
  %v2876 = vld [vmem:[%s2159 + $0x233] sm:$0xff]
  %v2877 = vld [vmem:[%s2159 + $0x243] sm:$0xff]
  %v2878 = vld [vmem:[%s2159 + $0x24b] sm:$0xff]
  %v2879 = vld [vmem:[%s2159 + $0x253] sm:$0xff]
  %v2880 = vld [vmem:[%s2159 + $0x263] sm:$0xff]
  %v2881 = vld [vmem:[%s2159 + $0x26b] sm:$0xff]
  %v2882 = vld [vmem:[%s2159 + $0x273] sm:$0xff]
  %v2883 = vld [vmem:[%s2159 + $0x283] sm:$0xff]
  %v2884 = vld [vmem:[%s2159 + $0x28b] sm:$0xff]
  %v2885 = vld [vmem:[%s2159 + $0x293] sm:$0xff]
  %v2886 = vld [vmem:[%s2159 + $0x2a3] sm:$0xff]
  %v2887 = vld [vmem:[%s2159 + $0x2ab] sm:$0xff]
  %v2888 = vld [vmem:[%s2159 + $0x2b3] sm:$0xff]
  %v2889 = vld [vmem:[%s2159 + $0x2c3] sm:$0xff]
  %v2890 = vld [vmem:[%s2159 + $0x2cb] sm:$0xff]
  %v2891 = vld [vmem:[%s2159 + $0x2d3] sm:$0xff]
  %v2892 = vld [vmem:[%s2159 + $0x2e3] sm:$0xff]
  %v2893 = vld [vmem:[%s2159 + $0x2eb] sm:$0xff]
  %v2894 = vld [vmem:[%s2159 + $0x2f3] sm:$0xff]
  %v2895 = vld [vmem:[%s1 + $0xd] sm:$0x1]
  %v2896 = vlaneseq
  %v2897 = vshrl.u32 %v2896, 7
  %v2898 = vsub.s32 0, %v2897
  %v2899 = vrot.slane %v2895, %v2898
  %v2900 = vmul.f32 %v2823, %v2899
  %v2901 = vmul.f32 %v2824, %v2899
  %v2902 = vmul.f32 %v2825, %v2899
  %v2903 = vmul.f32 %v2826, %v2899
  %v2904 = vmul.f32 %v2827, %v2899
  %v2905 = vmul.f32 %v2828, %v2899
  %v2906 = vmul.f32 %v2829, %v2899
  %v2907 = vmul.f32 %v2830, %v2899
  %v2908 = vmul.f32 %v2831, %v2899
  %v2909 = vmul.f32 %v2832, %v2899
  %v2910 = vmul.f32 %v2833, %v2899
  %v2911 = vmul.f32 %v2834, %v2899
  %v2912 = vmul.f32 %v2835, %v2899
  %v2913 = vmul.f32 %v2836, %v2899
  %v2914 = vmul.f32 %v2837, %v2899
  %v2915 = vmul.f32 %v2838, %v2899
  %v2916 = vmul.f32 %v2839, %v2899
  %v2917 = vmul.f32 %v2840, %v2899
  %v2918 = vmul.f32 %v2841, %v2899
  %v2919 = vmul.f32 %v2842, %v2899
  %v2920 = vmul.f32 %v2843, %v2899
  %v2921 = vmul.f32 %v2844, %v2899
  %v2922 = vmul.f32 %v2845, %v2899
  %v2923 = vmul.f32 %v2846, %v2899
  %v2924 = vmul.f32 %v2847, %v2899
  %v2925 = vmul.f32 %v2848, %v2899
  %v2926 = vmul.f32 %v2849, %v2899
  %v2927 = vmul.f32 %v2850, %v2899
  %v2928 = vmul.f32 %v2851, %v2899
  %v2929 = vmul.f32 %v2852, %v2899
  %v2930 = vmul.f32 %v2853, %v2899
  %v2931 = vmul.f32 %v2854, %v2899
  %v2932 = vmul.f32 %v2855, %v2899
  %v2933 = vmul.f32 %v2856, %v2899
  %v2934 = vmul.f32 %v2857, %v2899
  %v2935 = vmul.f32 %v2858, %v2899
  %v2936 = vmul.f32 %v2859, %v2899
  %v2937 = vmul.f32 %v2860, %v2899
  %v2938 = vmul.f32 %v2861, %v2899
  %v2939 = vmul.f32 %v2862, %v2899
  %v2940 = vmul.f32 %v2863, %v2899
  %v2941 = vmul.f32 %v2864, %v2899
  %v2942 = vmul.f32 %v2865, %v2899
  %v2943 = vmul.f32 %v2866, %v2899
  %v2944 = vmul.f32 %v2867, %v2899
  %v2945 = vmul.f32 %v2868, %v2899
  %v2946 = vmul.f32 %v2869, %v2899
  %v2947 = vmul.f32 %v2870, %v2899
  %v2948 = vmul.f32 %v2871, %v2899
  %v2949 = vmul.f32 %v2872, %v2899
  %v2950 = vmul.f32 %v2873, %v2899
  %v2951 = vmul.f32 %v2874, %v2899
  %v2952 = vmul.f32 %v2875, %v2899
  %v2953 = vmul.f32 %v2876, %v2899
  %v2954 = vmul.f32 %v2877, %v2899
  %v2955 = vmul.f32 %v2878, %v2899
  %v2956 = vmul.f32 %v2879, %v2899
  %v2957 = vmul.f32 %v2880, %v2899
  %v2958 = vmul.f32 %v2881, %v2899
  %v2959 = vmul.f32 %v2882, %v2899
  %v2960 = vmul.f32 %v2883, %v2899
  %v2961 = vmul.f32 %v2884, %v2899
  %v2962 = vmul.f32 %v2885, %v2899
  %v2963 = vmul.f32 %v2886, %v2899
  %v2964 = vmul.f32 %v2887, %v2899
  %v2965 = vmul.f32 %v2888, %v2899
  %v2966 = vmul.f32 %v2889, %v2899
  %v2967 = vmul.f32 %v2890, %v2899
  %v2968 = vmul.f32 %v2891, %v2899
  %v2969 = vmul.f32 %v2892, %v2899
  %v2970 = vmul.f32 %v2893, %v2899
  %v2971 = vmul.f32 %v2894, %v2899
  %v2972 = vadd.f32 %v2751, %v2900
  %v2973 = vadd.f32 %v2752, %v2901
  %v2974 = vadd.f32 %v2753, %v2902
  %v2975 = vadd.f32 %v2754, %v2903
  %v2976 = vadd.f32 %v2755, %v2904
  %v2977 = vadd.f32 %v2756, %v2905
  %v2978 = vadd.f32 %v2757, %v2906
  %v2979 = vadd.f32 %v2758, %v2907
  %v2980 = vadd.f32 %v2759, %v2908
  %v2981 = vadd.f32 %v2760, %v2909
  %v2982 = vadd.f32 %v2761, %v2910
  %v2983 = vadd.f32 %v2762, %v2911
  %v2984 = vadd.f32 %v2763, %v2912
  %v2985 = vadd.f32 %v2764, %v2913
  %v2986 = vadd.f32 %v2765, %v2914
  %v2987 = vadd.f32 %v2766, %v2915
  %v2988 = vadd.f32 %v2767, %v2916
  %v2989 = vadd.f32 %v2768, %v2917
  %v2990 = vadd.f32 %v2769, %v2918
  %v2991 = vadd.f32 %v2770, %v2919
  %v2992 = vadd.f32 %v2771, %v2920
  %v2993 = vadd.f32 %v2772, %v2921
  %v2994 = vadd.f32 %v2773, %v2922
  %v2995 = vadd.f32 %v2774, %v2923
  %v2996 = vadd.f32 %v2775, %v2924
  %v2997 = vadd.f32 %v2776, %v2925
  %v2998 = vadd.f32 %v2777, %v2926
  %v2999 = vadd.f32 %v2778, %v2927
  %v3000 = vadd.f32 %v2779, %v2928
  %v3001 = vadd.f32 %v2780, %v2929
  %v3002 = vadd.f32 %v2781, %v2930
  %v3003 = vadd.f32 %v2782, %v2931
  %v3004 = vadd.f32 %v2783, %v2932
  %v3005 = vadd.f32 %v2784, %v2933
  %v3006 = vadd.f32 %v2785, %v2934
  %v3007 = vadd.f32 %v2786, %v2935
  %v3008 = vadd.f32 %v2787, %v2936
  %v3009 = vadd.f32 %v2788, %v2937
  %v3010 = vadd.f32 %v2789, %v2938
  %v3011 = vadd.f32 %v2790, %v2939
  %v3012 = vadd.f32 %v2791, %v2940
  %v3013 = vadd.f32 %v2792, %v2941
  %v3014 = vadd.f32 %v2793, %v2942
  %v3015 = vadd.f32 %v2794, %v2943
  %v3016 = vadd.f32 %v2795, %v2944
  %v3017 = vadd.f32 %v2796, %v2945
  %v3018 = vadd.f32 %v2797, %v2946
  %v3019 = vadd.f32 %v2798, %v2947
  %v3020 = vadd.f32 %v2799, %v2948
  %v3021 = vadd.f32 %v2800, %v2949
  %v3022 = vadd.f32 %v2801, %v2950
  %v3023 = vadd.f32 %v2802, %v2951
  %v3024 = vadd.f32 %v2803, %v2952
  %v3025 = vadd.f32 %v2804, %v2953
  %v3026 = vadd.f32 %v2805, %v2954
  %v3027 = vadd.f32 %v2806, %v2955
  %v3028 = vadd.f32 %v2807, %v2956
  %v3029 = vadd.f32 %v2808, %v2957
  %v3030 = vadd.f32 %v2809, %v2958
  %v3031 = vadd.f32 %v2810, %v2959
  %v3032 = vadd.f32 %v2811, %v2960
  %v3033 = vadd.f32 %v2812, %v2961
  %v3034 = vadd.f32 %v2813, %v2962
  %v3035 = vadd.f32 %v2814, %v2963
  %v3036 = vadd.f32 %v2815, %v2964
  %v3037 = vadd.f32 %v2816, %v2965
  %v3038 = vadd.f32 %v2817, %v2966
  %v3039 = vadd.f32 %v2818, %v2967
  %v3040 = vadd.f32 %v2819, %v2968
  %v3041 = vadd.f32 %v2820, %v2969
  %v3042 = vadd.f32 %v2821, %v2970
  %v3043 = vadd.f32 %v2822, %v2971
  %v3044 = vld [vmem:[%s2159 + $0x4] sm:$0xff]
  %v3045 = vld [vmem:[%s2159 + $0xc] sm:$0xff]
  %v3046 = vld [vmem:[%s2159 + $0x14] sm:$0xff]
  %v3047 = vld [vmem:[%s2159 + $0x24] sm:$0xff]
  %v3048 = vld [vmem:[%s2159 + $0x2c] sm:$0xff]
  %v3049 = vld [vmem:[%s2159 + $0x34] sm:$0xff]
  %v3050 = vld [vmem:[%s2159 + $0x44] sm:$0xff]
  %v3051 = vld [vmem:[%s2159 + $0x4c] sm:$0xff]
  %v3052 = vld [vmem:[%s2159 + $0x54] sm:$0xff]
  %v3053 = vld [vmem:[%s2159 + $0x64] sm:$0xff]
  %v3054 = vld [vmem:[%s2159 + $0x6c] sm:$0xff]
  %v3055 = vld [vmem:[%s2159 + $0x74] sm:$0xff]
  %v3056 = vld [vmem:[%s2159 + $0x84] sm:$0xff]
  %v3057 = vld [vmem:[%s2159 + $0x8c] sm:$0xff]
  %v3058 = vld [vmem:[%s2159 + $0x94] sm:$0xff]
  %v3059 = vld [vmem:[%s2159 + $0xa4] sm:$0xff]
  %v3060 = vld [vmem:[%s2159 + $0xac] sm:$0xff]
  %v3061 = vld [vmem:[%s2159 + $0xb4] sm:$0xff]
  %v3062 = vld [vmem:[%s2159 + $0xc4] sm:$0xff]
  %v3063 = vld [vmem:[%s2159 + $0xcc] sm:$0xff]
  %v3064 = vld [vmem:[%s2159 + $0xd4] sm:$0xff]
  %v3065 = vld [vmem:[%s2159 + $0xe4] sm:$0xff]
  %v3066 = vld [vmem:[%s2159 + $0xec] sm:$0xff]
  %v3067 = vld [vmem:[%s2159 + $0xf4] sm:$0xff]
  %v3068 = vld [vmem:[%s2159 + $0x104] sm:$0xff]
  %v3069 = vld [vmem:[%s2159 + $0x10c] sm:$0xff]
  %v3070 = vld [vmem:[%s2159 + $0x114] sm:$0xff]
  %v3071 = vld [vmem:[%s2159 + $0x124] sm:$0xff]
  %v3072 = vld [vmem:[%s2159 + $0x12c] sm:$0xff]
  %v3073 = vld [vmem:[%s2159 + $0x134] sm:$0xff]
  %v3074 = vld [vmem:[%s2159 + $0x144] sm:$0xff]
  %v3075 = vld [vmem:[%s2159 + $0x14c] sm:$0xff]
  %v3076 = vld [vmem:[%s2159 + $0x154] sm:$0xff]
  %v3077 = vld [vmem:[%s2159 + $0x164] sm:$0xff]
  %v3078 = vld [vmem:[%s2159 + $0x16c] sm:$0xff]
  %v3079 = vld [vmem:[%s2159 + $0x174] sm:$0xff]
  %v3080 = vld [vmem:[%s2159 + $0x184] sm:$0xff]
  %v3081 = vld [vmem:[%s2159 + $0x18c] sm:$0xff]
  %v3082 = vld [vmem:[%s2159 + $0x194] sm:$0xff]
  %v3083 = vld [vmem:[%s2159 + $0x1a4] sm:$0xff]
  %v3084 = vld [vmem:[%s2159 + $0x1ac] sm:$0xff]
  %v3085 = vld [vmem:[%s2159 + $0x1b4] sm:$0xff]
  %v3086 = vld [vmem:[%s2159 + $0x1c4] sm:$0xff]
  %v3087 = vld [vmem:[%s2159 + $0x1cc] sm:$0xff]
  %v3088 = vld [vmem:[%s2159 + $0x1d4] sm:$0xff]
  %v3089 = vld [vmem:[%s2159 + $0x1e4] sm:$0xff]
  %v3090 = vld [vmem:[%s2159 + $0x1ec] sm:$0xff]
  %v3091 = vld [vmem:[%s2159 + $0x1f4] sm:$0xff]
  %v3092 = vld [vmem:[%s2159 + $0x204] sm:$0xff]
  %v3093 = vld [vmem:[%s2159 + $0x20c] sm:$0xff]
  %v3094 = vld [vmem:[%s2159 + $0x214] sm:$0xff]
  %v3095 = vld [vmem:[%s2159 + $0x224] sm:$0xff]
  %v3096 = vld [vmem:[%s2159 + $0x22c] sm:$0xff]
  %v3097 = vld [vmem:[%s2159 + $0x234] sm:$0xff]
  %v3098 = vld [vmem:[%s2159 + $0x244] sm:$0xff]
  %v3099 = vld [vmem:[%s2159 + $0x24c] sm:$0xff]
  %v3100 = vld [vmem:[%s2159 + $0x254] sm:$0xff]
  %v3101 = vld [vmem:[%s2159 + $0x264] sm:$0xff]
  %v3102 = vld [vmem:[%s2159 + $0x26c] sm:$0xff]
  %v3103 = vld [vmem:[%s2159 + $0x274] sm:$0xff]
  %v3104 = vld [vmem:[%s2159 + $0x284] sm:$0xff]
  %v3105 = vld [vmem:[%s2159 + $0x28c] sm:$0xff]
  %v3106 = vld [vmem:[%s2159 + $0x294] sm:$0xff]
  %v3107 = vld [vmem:[%s2159 + $0x2a4] sm:$0xff]
  %v3108 = vld [vmem:[%s2159 + $0x2ac] sm:$0xff]
  %v3109 = vld [vmem:[%s2159 + $0x2b4] sm:$0xff]
  %v3110 = vld [vmem:[%s2159 + $0x2c4] sm:$0xff]
  %v3111 = vld [vmem:[%s2159 + $0x2cc] sm:$0xff]
  %v3112 = vld [vmem:[%s2159 + $0x2d4] sm:$0xff]
  %v3113 = vld [vmem:[%s2159 + $0x2e4] sm:$0xff]
  %v3114 = vld [vmem:[%s2159 + $0x2ec] sm:$0xff]
  %v3115 = vld [vmem:[%s2159 + $0x2f4] sm:$0xff]
  %v3116 = vld [vmem:[%s1 + $0xe] sm:$0x1]
  %v3117 = vlaneseq
  %v3118 = vshrl.u32 %v3117, 7
  %v3119 = vsub.s32 0, %v3118
  %v3120 = vrot.slane %v3116, %v3119
  %v3121 = vmul.f32 %v3044, %v3120
  %v3122 = vmul.f32 %v3045, %v3120
  %v3123 = vmul.f32 %v3046, %v3120
  %v3124 = vmul.f32 %v3047, %v3120
  %v3125 = vmul.f32 %v3048, %v3120
  %v3126 = vmul.f32 %v3049, %v3120
  %v3127 = vmul.f32 %v3050, %v3120
  %v3128 = vmul.f32 %v3051, %v3120
  %v3129 = vmul.f32 %v3052, %v3120
  %v3130 = vmul.f32 %v3053, %v3120
  %v3131 = vmul.f32 %v3054, %v3120
  %v3132 = vmul.f32 %v3055, %v3120
  %v3133 = vmul.f32 %v3056, %v3120
  %v3134 = vmul.f32 %v3057, %v3120
  %v3135 = vmul.f32 %v3058, %v3120
  %v3136 = vmul.f32 %v3059, %v3120
  %v3137 = vmul.f32 %v3060, %v3120
  %v3138 = vmul.f32 %v3061, %v3120
  %v3139 = vmul.f32 %v3062, %v3120
  %v3140 = vmul.f32 %v3063, %v3120
  %v3141 = vmul.f32 %v3064, %v3120
  %v3142 = vmul.f32 %v3065, %v3120
  %v3143 = vmul.f32 %v3066, %v3120
  %v3144 = vmul.f32 %v3067, %v3120
  %v3145 = vmul.f32 %v3068, %v3120
  %v3146 = vmul.f32 %v3069, %v3120
  %v3147 = vmul.f32 %v3070, %v3120
  %v3148 = vmul.f32 %v3071, %v3120
  %v3149 = vmul.f32 %v3072, %v3120
  %v3150 = vmul.f32 %v3073, %v3120
  %v3151 = vmul.f32 %v3074, %v3120
  %v3152 = vmul.f32 %v3075, %v3120
  %v3153 = vmul.f32 %v3076, %v3120
  %v3154 = vmul.f32 %v3077, %v3120
  %v3155 = vmul.f32 %v3078, %v3120
  %v3156 = vmul.f32 %v3079, %v3120
  %v3157 = vmul.f32 %v3080, %v3120
  %v3158 = vmul.f32 %v3081, %v3120
  %v3159 = vmul.f32 %v3082, %v3120
  %v3160 = vmul.f32 %v3083, %v3120
  %v3161 = vmul.f32 %v3084, %v3120
  %v3162 = vmul.f32 %v3085, %v3120
  %v3163 = vmul.f32 %v3086, %v3120
  %v3164 = vmul.f32 %v3087, %v3120
  %v3165 = vmul.f32 %v3088, %v3120
  %v3166 = vmul.f32 %v3089, %v3120
  %v3167 = vmul.f32 %v3090, %v3120
  %v3168 = vmul.f32 %v3091, %v3120
  %v3169 = vmul.f32 %v3092, %v3120
  %v3170 = vmul.f32 %v3093, %v3120
  %v3171 = vmul.f32 %v3094, %v3120
  %v3172 = vmul.f32 %v3095, %v3120
  %v3173 = vmul.f32 %v3096, %v3120
  %v3174 = vmul.f32 %v3097, %v3120
  %v3175 = vmul.f32 %v3098, %v3120
  %v3176 = vmul.f32 %v3099, %v3120
  %v3177 = vmul.f32 %v3100, %v3120
  %v3178 = vmul.f32 %v3101, %v3120
  %v3179 = vmul.f32 %v3102, %v3120
  %v3180 = vmul.f32 %v3103, %v3120
  %v3181 = vmul.f32 %v3104, %v3120
  %v3182 = vmul.f32 %v3105, %v3120
  %v3183 = vmul.f32 %v3106, %v3120
  %v3184 = vmul.f32 %v3107, %v3120
  %v3185 = vmul.f32 %v3108, %v3120
  %v3186 = vmul.f32 %v3109, %v3120
  %v3187 = vmul.f32 %v3110, %v3120
  %v3188 = vmul.f32 %v3111, %v3120
  %v3189 = vmul.f32 %v3112, %v3120
  %v3190 = vmul.f32 %v3113, %v3120
  %v3191 = vmul.f32 %v3114, %v3120
  %v3192 = vmul.f32 %v3115, %v3120
  %v3193 = vadd.f32 %v2972, %v3121
  %v3194 = vadd.f32 %v2973, %v3122
  %v3195 = vadd.f32 %v2974, %v3123
  %v3196 = vadd.f32 %v2975, %v3124
  %v3197 = vadd.f32 %v2976, %v3125
  %v3198 = vadd.f32 %v2977, %v3126
  %v3199 = vadd.f32 %v2978, %v3127
  %v3200 = vadd.f32 %v2979, %v3128
  %v3201 = vadd.f32 %v2980, %v3129
  %v3202 = vadd.f32 %v2981, %v3130
  %v3203 = vadd.f32 %v2982, %v3131
  %v3204 = vadd.f32 %v2983, %v3132
  %v3205 = vadd.f32 %v2984, %v3133
  %v3206 = vadd.f32 %v2985, %v3134
  %v3207 = vadd.f32 %v2986, %v3135
  %v3208 = vadd.f32 %v2987, %v3136
  %v3209 = vadd.f32 %v2988, %v3137
  %v3210 = vadd.f32 %v2989, %v3138
  %v3211 = vadd.f32 %v2990, %v3139
  %v3212 = vadd.f32 %v2991, %v3140
  %v3213 = vadd.f32 %v2992, %v3141
  %v3214 = vadd.f32 %v2993, %v3142
  %v3215 = vadd.f32 %v2994, %v3143
  %v3216 = vadd.f32 %v2995, %v3144
  %v3217 = vadd.f32 %v2996, %v3145
  %v3218 = vadd.f32 %v2997, %v3146
  %v3219 = vadd.f32 %v2998, %v3147
  %v3220 = vadd.f32 %v2999, %v3148
  %v3221 = vadd.f32 %v3000, %v3149
  %v3222 = vadd.f32 %v3001, %v3150
  %v3223 = vadd.f32 %v3002, %v3151
  %v3224 = vadd.f32 %v3003, %v3152
  %v3225 = vadd.f32 %v3004, %v3153
  %v3226 = vadd.f32 %v3005, %v3154
  %v3227 = vadd.f32 %v3006, %v3155
  %v3228 = vadd.f32 %v3007, %v3156
  %v3229 = vadd.f32 %v3008, %v3157
  %v3230 = vadd.f32 %v3009, %v3158
  %v3231 = vadd.f32 %v3010, %v3159
  %v3232 = vadd.f32 %v3011, %v3160
  %v3233 = vadd.f32 %v3012, %v3161
  %v3234 = vadd.f32 %v3013, %v3162
  %v3235 = vadd.f32 %v3014, %v3163
  %v3236 = vadd.f32 %v3015, %v3164
  %v3237 = vadd.f32 %v3016, %v3165
  %v3238 = vadd.f32 %v3017, %v3166
  %v3239 = vadd.f32 %v3018, %v3167
  %v3240 = vadd.f32 %v3019, %v3168
  %v3241 = vadd.f32 %v3020, %v3169
  %v3242 = vadd.f32 %v3021, %v3170
  %v3243 = vadd.f32 %v3022, %v3171
  %v3244 = vadd.f32 %v3023, %v3172
  %v3245 = vadd.f32 %v3024, %v3173
  %v3246 = vadd.f32 %v3025, %v3174
  %v3247 = vadd.f32 %v3026, %v3175
  %v3248 = vadd.f32 %v3027, %v3176
  %v3249 = vadd.f32 %v3028, %v3177
  %v3250 = vadd.f32 %v3029, %v3178
  %v3251 = vadd.f32 %v3030, %v3179
  %v3252 = vadd.f32 %v3031, %v3180
  %v3253 = vadd.f32 %v3032, %v3181
  %v3254 = vadd.f32 %v3033, %v3182
  %v3255 = vadd.f32 %v3034, %v3183
  %v3256 = vadd.f32 %v3035, %v3184
  %v3257 = vadd.f32 %v3036, %v3185
  %v3258 = vadd.f32 %v3037, %v3186
  %v3259 = vadd.f32 %v3038, %v3187
  %v3260 = vadd.f32 %v3039, %v3188
  %v3261 = vadd.f32 %v3040, %v3189
  %v3262 = vadd.f32 %v3041, %v3190
  %v3263 = vadd.f32 %v3042, %v3191
  %v3264 = vadd.f32 %v3043, %v3192
  %s3265 = scalar_lea.vmem %s0, 96
  %v3266 = vld [vmem:[%s3265] sm:$0xff]
  %v3267 = vld [vmem:[%s3265 + $0x8] sm:$0xff]
  %v3268 = vld [vmem:[%s3265 + $0x10] sm:$0xff]
  %v3269 = vld [vmem:[%s3265 + $0x20] sm:$0xff]
  %v3270 = vld [vmem:[%s3265 + $0x28] sm:$0xff]
  %v3271 = vld [vmem:[%s3265 + $0x30] sm:$0xff]
  %v3272 = vld [vmem:[%s3265 + $0x40] sm:$0xff]
  %v3273 = vld [vmem:[%s3265 + $0x48] sm:$0xff]
  %v3274 = vld [vmem:[%s3265 + $0x50] sm:$0xff]
  %v3275 = vld [vmem:[%s3265 + $0x60] sm:$0xff]
  %v3276 = vld [vmem:[%s3265 + $0x68] sm:$0xff]
  %v3277 = vld [vmem:[%s3265 + $0x70] sm:$0xff]
  %v3278 = vld [vmem:[%s3265 + $0x80] sm:$0xff]
  %v3279 = vld [vmem:[%s3265 + $0x88] sm:$0xff]
  %v3280 = vld [vmem:[%s3265 + $0x90] sm:$0xff]
  %v3281 = vld [vmem:[%s3265 + $0xa0] sm:$0xff]
  %v3282 = vld [vmem:[%s3265 + $0xa8] sm:$0xff]
  %v3283 = vld [vmem:[%s3265 + $0xb0] sm:$0xff]
  %v3284 = vld [vmem:[%s3265 + $0xc0] sm:$0xff]
  %v3285 = vld [vmem:[%s3265 + $0xc8] sm:$0xff]
  %v3286 = vld [vmem:[%s3265 + $0xd0] sm:$0xff]
  %v3287 = vld [vmem:[%s3265 + $0xe0] sm:$0xff]
  %v3288 = vld [vmem:[%s3265 + $0xe8] sm:$0xff]
  %v3289 = vld [vmem:[%s3265 + $0xf0] sm:$0xff]
  %v3290 = vld [vmem:[%s3265 + $0x100] sm:$0xff]
  %v3291 = vld [vmem:[%s3265 + $0x108] sm:$0xff]
  %v3292 = vld [vmem:[%s3265 + $0x110] sm:$0xff]
  %v3293 = vld [vmem:[%s3265 + $0x120] sm:$0xff]
  %v3294 = vld [vmem:[%s3265 + $0x128] sm:$0xff]
  %v3295 = vld [vmem:[%s3265 + $0x130] sm:$0xff]
  %v3296 = vld [vmem:[%s3265 + $0x140] sm:$0xff]
  %v3297 = vld [vmem:[%s3265 + $0x148] sm:$0xff]
  %v3298 = vld [vmem:[%s3265 + $0x150] sm:$0xff]
  %v3299 = vld [vmem:[%s3265 + $0x160] sm:$0xff]
  %v3300 = vld [vmem:[%s3265 + $0x168] sm:$0xff]
  %v3301 = vld [vmem:[%s3265 + $0x170] sm:$0xff]
  %v3302 = vld [vmem:[%s3265 + $0x180] sm:$0xff]
  %v3303 = vld [vmem:[%s3265 + $0x188] sm:$0xff]
  %v3304 = vld [vmem:[%s3265 + $0x190] sm:$0xff]
  %v3305 = vld [vmem:[%s3265 + $0x1a0] sm:$0xff]
  %v3306 = vld [vmem:[%s3265 + $0x1a8] sm:$0xff]
  %v3307 = vld [vmem:[%s3265 + $0x1b0] sm:$0xff]
  %v3308 = vld [vmem:[%s3265 + $0x1c0] sm:$0xff]
  %v3309 = vld [vmem:[%s3265 + $0x1c8] sm:$0xff]
  %v3310 = vld [vmem:[%s3265 + $0x1d0] sm:$0xff]
  %v3311 = vld [vmem:[%s3265 + $0x1e0] sm:$0xff]
  %v3312 = vld [vmem:[%s3265 + $0x1e8] sm:$0xff]
  %v3313 = vld [vmem:[%s3265 + $0x1f0] sm:$0xff]
  %v3314 = vld [vmem:[%s3265 + $0x200] sm:$0xff]
  %v3315 = vld [vmem:[%s3265 + $0x208] sm:$0xff]
  %v3316 = vld [vmem:[%s3265 + $0x210] sm:$0xff]
  %v3317 = vld [vmem:[%s3265 + $0x220] sm:$0xff]
  %v3318 = vld [vmem:[%s3265 + $0x228] sm:$0xff]
  %v3319 = vld [vmem:[%s3265 + $0x230] sm:$0xff]
  %v3320 = vld [vmem:[%s3265 + $0x240] sm:$0xff]
  %v3321 = vld [vmem:[%s3265 + $0x248] sm:$0xff]
  %v3322 = vld [vmem:[%s3265 + $0x250] sm:$0xff]
  %v3323 = vld [vmem:[%s3265 + $0x260] sm:$0xff]
  %v3324 = vld [vmem:[%s3265 + $0x268] sm:$0xff]
  %v3325 = vld [vmem:[%s3265 + $0x270] sm:$0xff]
  %v3326 = vld [vmem:[%s3265 + $0x280] sm:$0xff]
  %v3327 = vld [vmem:[%s3265 + $0x288] sm:$0xff]
  %v3328 = vld [vmem:[%s3265 + $0x290] sm:$0xff]
  %v3329 = vld [vmem:[%s3265 + $0x2a0] sm:$0xff]
  %v3330 = vld [vmem:[%s3265 + $0x2a8] sm:$0xff]
  %v3331 = vld [vmem:[%s3265 + $0x2b0] sm:$0xff]
  %v3332 = vld [vmem:[%s3265 + $0x2c0] sm:$0xff]
  %v3333 = vld [vmem:[%s3265 + $0x2c8] sm:$0xff]
  %v3334 = vld [vmem:[%s3265 + $0x2d0] sm:$0xff]
  %v3335 = vld [vmem:[%s3265 + $0x2e0] sm:$0xff]
  %v3336 = vld [vmem:[%s3265 + $0x2e8] sm:$0xff]
  %v3337 = vld [vmem:[%s3265 + $0x2f0] sm:$0xff]
  %v3338 = vld [vmem:[%s1 + $0xf] sm:$0x1]
  %v3339 = vlaneseq
  %v3340 = vshrl.u32 %v3339, 7
  %v3341 = vsub.s32 0, %v3340
  %v3342 = vrot.slane %v3338, %v3341
  %v3343 = vmul.f32 %v3266, %v3342
  %v3344 = vmul.f32 %v3267, %v3342
  %v3345 = vmul.f32 %v3268, %v3342
  %v3346 = vmul.f32 %v3269, %v3342
  %v3347 = vmul.f32 %v3270, %v3342
  %v3348 = vmul.f32 %v3271, %v3342
  %v3349 = vmul.f32 %v3272, %v3342
  %v3350 = vmul.f32 %v3273, %v3342
  %v3351 = vmul.f32 %v3274, %v3342
  %v3352 = vmul.f32 %v3275, %v3342
  %v3353 = vmul.f32 %v3276, %v3342
  %v3354 = vmul.f32 %v3277, %v3342
  %v3355 = vmul.f32 %v3278, %v3342
  %v3356 = vmul.f32 %v3279, %v3342
  %v3357 = vmul.f32 %v3280, %v3342
  %v3358 = vmul.f32 %v3281, %v3342
  %v3359 = vmul.f32 %v3282, %v3342
  %v3360 = vmul.f32 %v3283, %v3342
  %v3361 = vmul.f32 %v3284, %v3342
  %v3362 = vmul.f32 %v3285, %v3342
  %v3363 = vmul.f32 %v3286, %v3342
  %v3364 = vmul.f32 %v3287, %v3342
  %v3365 = vmul.f32 %v3288, %v3342
  %v3366 = vmul.f32 %v3289, %v3342
  %v3367 = vmul.f32 %v3290, %v3342
  %v3368 = vmul.f32 %v3291, %v3342
  %v3369 = vmul.f32 %v3292, %v3342
  %v3370 = vmul.f32 %v3293, %v3342
  %v3371 = vmul.f32 %v3294, %v3342
  %v3372 = vmul.f32 %v3295, %v3342
  %v3373 = vmul.f32 %v3296, %v3342
  %v3374 = vmul.f32 %v3297, %v3342
  %v3375 = vmul.f32 %v3298, %v3342
  %v3376 = vmul.f32 %v3299, %v3342
  %v3377 = vmul.f32 %v3300, %v3342
  %v3378 = vmul.f32 %v3301, %v3342
  %v3379 = vmul.f32 %v3302, %v3342
  %v3380 = vmul.f32 %v3303, %v3342
  %v3381 = vmul.f32 %v3304, %v3342
  %v3382 = vmul.f32 %v3305, %v3342
  %v3383 = vmul.f32 %v3306, %v3342
  %v3384 = vmul.f32 %v3307, %v3342
  %v3385 = vmul.f32 %v3308, %v3342
  %v3386 = vmul.f32 %v3309, %v3342
  %v3387 = vmul.f32 %v3310, %v3342
  %v3388 = vmul.f32 %v3311, %v3342
  %v3389 = vmul.f32 %v3312, %v3342
  %v3390 = vmul.f32 %v3313, %v3342
  %v3391 = vmul.f32 %v3314, %v3342
  %v3392 = vmul.f32 %v3315, %v3342
  %v3393 = vmul.f32 %v3316, %v3342
  %v3394 = vmul.f32 %v3317, %v3342
  %v3395 = vmul.f32 %v3318, %v3342
  %v3396 = vmul.f32 %v3319, %v3342
  %v3397 = vmul.f32 %v3320, %v3342
  %v3398 = vmul.f32 %v3321, %v3342
  %v3399 = vmul.f32 %v3322, %v3342
  %v3400 = vmul.f32 %v3323, %v3342
  %v3401 = vmul.f32 %v3324, %v3342
  %v3402 = vmul.f32 %v3325, %v3342
  %v3403 = vmul.f32 %v3326, %v3342
  %v3404 = vmul.f32 %v3327, %v3342
  %v3405 = vmul.f32 %v3328, %v3342
  %v3406 = vmul.f32 %v3329, %v3342
  %v3407 = vmul.f32 %v3330, %v3342
  %v3408 = vmul.f32 %v3331, %v3342
  %v3409 = vmul.f32 %v3332, %v3342
  %v3410 = vmul.f32 %v3333, %v3342
  %v3411 = vmul.f32 %v3334, %v3342
  %v3412 = vmul.f32 %v3335, %v3342
  %v3413 = vmul.f32 %v3336, %v3342
  %v3414 = vmul.f32 %v3337, %v3342
  %v3415 = vadd.f32 %v3193, %v3343
  %v3416 = vadd.f32 %v3194, %v3344
  %v3417 = vadd.f32 %v3195, %v3345
  %v3418 = vadd.f32 %v3196, %v3346
  %v3419 = vadd.f32 %v3197, %v3347
  %v3420 = vadd.f32 %v3198, %v3348
  %v3421 = vadd.f32 %v3199, %v3349
  %v3422 = vadd.f32 %v3200, %v3350
  %v3423 = vadd.f32 %v3201, %v3351
  %v3424 = vadd.f32 %v3202, %v3352
  %v3425 = vadd.f32 %v3203, %v3353
  %v3426 = vadd.f32 %v3204, %v3354
  %v3427 = vadd.f32 %v3205, %v3355
  %v3428 = vadd.f32 %v3206, %v3356
  %v3429 = vadd.f32 %v3207, %v3357
  %v3430 = vadd.f32 %v3208, %v3358
  %v3431 = vadd.f32 %v3209, %v3359
  %v3432 = vadd.f32 %v3210, %v3360
  %v3433 = vadd.f32 %v3211, %v3361
  %v3434 = vadd.f32 %v3212, %v3362
  %v3435 = vadd.f32 %v3213, %v3363
  %v3436 = vadd.f32 %v3214, %v3364
  %v3437 = vadd.f32 %v3215, %v3365
  %v3438 = vadd.f32 %v3216, %v3366
  %v3439 = vadd.f32 %v3217, %v3367
  %v3440 = vadd.f32 %v3218, %v3368
  %v3441 = vadd.f32 %v3219, %v3369
  %v3442 = vadd.f32 %v3220, %v3370
  %v3443 = vadd.f32 %v3221, %v3371
  %v3444 = vadd.f32 %v3222, %v3372
  %v3445 = vadd.f32 %v3223, %v3373
  %v3446 = vadd.f32 %v3224, %v3374
  %v3447 = vadd.f32 %v3225, %v3375
  %v3448 = vadd.f32 %v3226, %v3376
  %v3449 = vadd.f32 %v3227, %v3377
  %v3450 = vadd.f32 %v3228, %v3378
  %v3451 = vadd.f32 %v3229, %v3379
  %v3452 = vadd.f32 %v3230, %v3380
  %v3453 = vadd.f32 %v3231, %v3381
  %v3454 = vadd.f32 %v3232, %v3382
  %v3455 = vadd.f32 %v3233, %v3383
  %v3456 = vadd.f32 %v3234, %v3384
  %v3457 = vadd.f32 %v3235, %v3385
  %v3458 = vadd.f32 %v3236, %v3386
  %v3459 = vadd.f32 %v3237, %v3387
  %v3460 = vadd.f32 %v3238, %v3388
  %v3461 = vadd.f32 %v3239, %v3389
  %v3462 = vadd.f32 %v3240, %v3390
  %v3463 = vadd.f32 %v3241, %v3391
  %v3464 = vadd.f32 %v3242, %v3392
  %v3465 = vadd.f32 %v3243, %v3393
  %v3466 = vadd.f32 %v3244, %v3394
  %v3467 = vadd.f32 %v3245, %v3395
  %v3468 = vadd.f32 %v3246, %v3396
  %v3469 = vadd.f32 %v3247, %v3397
  %v3470 = vadd.f32 %v3248, %v3398
  %v3471 = vadd.f32 %v3249, %v3399
  %v3472 = vadd.f32 %v3250, %v3400
  %v3473 = vadd.f32 %v3251, %v3401
  %v3474 = vadd.f32 %v3252, %v3402
  %v3475 = vadd.f32 %v3253, %v3403
  %v3476 = vadd.f32 %v3254, %v3404
  %v3477 = vadd.f32 %v3255, %v3405
  %v3478 = vadd.f32 %v3256, %v3406
  %v3479 = vadd.f32 %v3257, %v3407
  %v3480 = vadd.f32 %v3258, %v3408
  %v3481 = vadd.f32 %v3259, %v3409
  %v3482 = vadd.f32 %v3260, %v3410
  %v3483 = vadd.f32 %v3261, %v3411
  %v3484 = vadd.f32 %v3262, %v3412
  %v3485 = vadd.f32 %v3263, %v3413
  %v3486 = vadd.f32 %v3264, %v3414
  %v3487 = vld [vmem:[%s3265 + $0x1] sm:$0xff]
  %v3488 = vld [vmem:[%s3265 + $0x9] sm:$0xff]
  %v3489 = vld [vmem:[%s3265 + $0x11] sm:$0xff]
  %v3490 = vld [vmem:[%s3265 + $0x21] sm:$0xff]
  %v3491 = vld [vmem:[%s3265 + $0x29] sm:$0xff]
  %v3492 = vld [vmem:[%s3265 + $0x31] sm:$0xff]
  %v3493 = vld [vmem:[%s3265 + $0x41] sm:$0xff]
  %v3494 = vld [vmem:[%s3265 + $0x49] sm:$0xff]
  %v3495 = vld [vmem:[%s3265 + $0x51] sm:$0xff]
  %v3496 = vld [vmem:[%s3265 + $0x61] sm:$0xff]
  %v3497 = vld [vmem:[%s3265 + $0x69] sm:$0xff]
  %v3498 = vld [vmem:[%s3265 + $0x71] sm:$0xff]
  %v3499 = vld [vmem:[%s3265 + $0x81] sm:$0xff]
  %v3500 = vld [vmem:[%s3265 + $0x89] sm:$0xff]
  %v3501 = vld [vmem:[%s3265 + $0x91] sm:$0xff]
  %v3502 = vld [vmem:[%s3265 + $0xa1] sm:$0xff]
  %v3503 = vld [vmem:[%s3265 + $0xa9] sm:$0xff]
  %v3504 = vld [vmem:[%s3265 + $0xb1] sm:$0xff]
  %v3505 = vld [vmem:[%s3265 + $0xc1] sm:$0xff]
  %v3506 = vld [vmem:[%s3265 + $0xc9] sm:$0xff]
  %v3507 = vld [vmem:[%s3265 + $0xd1] sm:$0xff]
  %v3508 = vld [vmem:[%s3265 + $0xe1] sm:$0xff]
  %v3509 = vld [vmem:[%s3265 + $0xe9] sm:$0xff]
  %v3510 = vld [vmem:[%s3265 + $0xf1] sm:$0xff]
  %v3511 = vld [vmem:[%s3265 + $0x101] sm:$0xff]
  %v3512 = vld [vmem:[%s3265 + $0x109] sm:$0xff]
  %v3513 = vld [vmem:[%s3265 + $0x111] sm:$0xff]
  %v3514 = vld [vmem:[%s3265 + $0x121] sm:$0xff]
  %v3515 = vld [vmem:[%s3265 + $0x129] sm:$0xff]
  %v3516 = vld [vmem:[%s3265 + $0x131] sm:$0xff]
  %v3517 = vld [vmem:[%s3265 + $0x141] sm:$0xff]
  %v3518 = vld [vmem:[%s3265 + $0x149] sm:$0xff]
  %v3519 = vld [vmem:[%s3265 + $0x151] sm:$0xff]
  %v3520 = vld [vmem:[%s3265 + $0x161] sm:$0xff]
  %v3521 = vld [vmem:[%s3265 + $0x169] sm:$0xff]
  %v3522 = vld [vmem:[%s3265 + $0x171] sm:$0xff]
  %v3523 = vld [vmem:[%s3265 + $0x181] sm:$0xff]
  %v3524 = vld [vmem:[%s3265 + $0x189] sm:$0xff]
  %v3525 = vld [vmem:[%s3265 + $0x191] sm:$0xff]
  %v3526 = vld [vmem:[%s3265 + $0x1a1] sm:$0xff]
  %v3527 = vld [vmem:[%s3265 + $0x1a9] sm:$0xff]
  %v3528 = vld [vmem:[%s3265 + $0x1b1] sm:$0xff]
  %v3529 = vld [vmem:[%s3265 + $0x1c1] sm:$0xff]
  %v3530 = vld [vmem:[%s3265 + $0x1c9] sm:$0xff]
  %v3531 = vld [vmem:[%s3265 + $0x1d1] sm:$0xff]
  %v3532 = vld [vmem:[%s3265 + $0x1e1] sm:$0xff]
  %v3533 = vld [vmem:[%s3265 + $0x1e9] sm:$0xff]
  %v3534 = vld [vmem:[%s3265 + $0x1f1] sm:$0xff]
  %v3535 = vld [vmem:[%s3265 + $0x201] sm:$0xff]
  %v3536 = vld [vmem:[%s3265 + $0x209] sm:$0xff]
  %v3537 = vld [vmem:[%s3265 + $0x211] sm:$0xff]
  %v3538 = vld [vmem:[%s3265 + $0x221] sm:$0xff]
  %v3539 = vld [vmem:[%s3265 + $0x229] sm:$0xff]
  %v3540 = vld [vmem:[%s3265 + $0x231] sm:$0xff]
  %v3541 = vld [vmem:[%s3265 + $0x241] sm:$0xff]
  %v3542 = vld [vmem:[%s3265 + $0x249] sm:$0xff]
  %v3543 = vld [vmem:[%s3265 + $0x251] sm:$0xff]
  %v3544 = vld [vmem:[%s3265 + $0x261] sm:$0xff]
  %v3545 = vld [vmem:[%s3265 + $0x269] sm:$0xff]
  %v3546 = vld [vmem:[%s3265 + $0x271] sm:$0xff]
  %v3547 = vld [vmem:[%s3265 + $0x281] sm:$0xff]
  %v3548 = vld [vmem:[%s3265 + $0x289] sm:$0xff]
  %v3549 = vld [vmem:[%s3265 + $0x291] sm:$0xff]
  %v3550 = vld [vmem:[%s3265 + $0x2a1] sm:$0xff]
  %v3551 = vld [vmem:[%s3265 + $0x2a9] sm:$0xff]
  %v3552 = vld [vmem:[%s3265 + $0x2b1] sm:$0xff]
  %v3553 = vld [vmem:[%s3265 + $0x2c1] sm:$0xff]
  %v3554 = vld [vmem:[%s3265 + $0x2c9] sm:$0xff]
  %v3555 = vld [vmem:[%s3265 + $0x2d1] sm:$0xff]
  %v3556 = vld [vmem:[%s3265 + $0x2e1] sm:$0xff]
  %v3557 = vld [vmem:[%s3265 + $0x2e9] sm:$0xff]
  %v3558 = vld [vmem:[%s3265 + $0x2f1] sm:$0xff]
  %v3559 = vld [vmem:[%s1 + $0x10] sm:$0x1]
  %v3560 = vlaneseq
  %v3561 = vshrl.u32 %v3560, 7
  %v3562 = vsub.s32 0, %v3561
  %v3563 = vrot.slane %v3559, %v3562
  %v3564 = vmul.f32 %v3487, %v3563
  %v3565 = vmul.f32 %v3488, %v3563
  %v3566 = vmul.f32 %v3489, %v3563
  %v3567 = vmul.f32 %v3490, %v3563
  %v3568 = vmul.f32 %v3491, %v3563
  %v3569 = vmul.f32 %v3492, %v3563
  %v3570 = vmul.f32 %v3493, %v3563
  %v3571 = vmul.f32 %v3494, %v3563
  %v3572 = vmul.f32 %v3495, %v3563
  %v3573 = vmul.f32 %v3496, %v3563
  %v3574 = vmul.f32 %v3497, %v3563
  %v3575 = vmul.f32 %v3498, %v3563
  %v3576 = vmul.f32 %v3499, %v3563
  %v3577 = vmul.f32 %v3500, %v3563
  %v3578 = vmul.f32 %v3501, %v3563
  %v3579 = vmul.f32 %v3502, %v3563
  %v3580 = vmul.f32 %v3503, %v3563
  %v3581 = vmul.f32 %v3504, %v3563
  %v3582 = vmul.f32 %v3505, %v3563
  %v3583 = vmul.f32 %v3506, %v3563
  %v3584 = vmul.f32 %v3507, %v3563
  %v3585 = vmul.f32 %v3508, %v3563
  %v3586 = vmul.f32 %v3509, %v3563
  %v3587 = vmul.f32 %v3510, %v3563
  %v3588 = vmul.f32 %v3511, %v3563
  %v3589 = vmul.f32 %v3512, %v3563
  %v3590 = vmul.f32 %v3513, %v3563
  %v3591 = vmul.f32 %v3514, %v3563
  %v3592 = vmul.f32 %v3515, %v3563
  %v3593 = vmul.f32 %v3516, %v3563
  %v3594 = vmul.f32 %v3517, %v3563
  %v3595 = vmul.f32 %v3518, %v3563
  %v3596 = vmul.f32 %v3519, %v3563
  %v3597 = vmul.f32 %v3520, %v3563
  %v3598 = vmul.f32 %v3521, %v3563
  %v3599 = vmul.f32 %v3522, %v3563
  %v3600 = vmul.f32 %v3523, %v3563
  %v3601 = vmul.f32 %v3524, %v3563
  %v3602 = vmul.f32 %v3525, %v3563
  %v3603 = vmul.f32 %v3526, %v3563
  %v3604 = vmul.f32 %v3527, %v3563
  %v3605 = vmul.f32 %v3528, %v3563
  %v3606 = vmul.f32 %v3529, %v3563
  %v3607 = vmul.f32 %v3530, %v3563
  %v3608 = vmul.f32 %v3531, %v3563
  %v3609 = vmul.f32 %v3532, %v3563
  %v3610 = vmul.f32 %v3533, %v3563
  %v3611 = vmul.f32 %v3534, %v3563
  %v3612 = vmul.f32 %v3535, %v3563
  %v3613 = vmul.f32 %v3536, %v3563
  %v3614 = vmul.f32 %v3537, %v3563
  %v3615 = vmul.f32 %v3538, %v3563
  %v3616 = vmul.f32 %v3539, %v3563
  %v3617 = vmul.f32 %v3540, %v3563
  %v3618 = vmul.f32 %v3541, %v3563
  %v3619 = vmul.f32 %v3542, %v3563
  %v3620 = vmul.f32 %v3543, %v3563
  %v3621 = vmul.f32 %v3544, %v3563
  %v3622 = vmul.f32 %v3545, %v3563
  %v3623 = vmul.f32 %v3546, %v3563
  %v3624 = vmul.f32 %v3547, %v3563
  %v3625 = vmul.f32 %v3548, %v3563
  %v3626 = vmul.f32 %v3549, %v3563
  %v3627 = vmul.f32 %v3550, %v3563
  %v3628 = vmul.f32 %v3551, %v3563
  %v3629 = vmul.f32 %v3552, %v3563
  %v3630 = vmul.f32 %v3553, %v3563
  %v3631 = vmul.f32 %v3554, %v3563
  %v3632 = vmul.f32 %v3555, %v3563
  %v3633 = vmul.f32 %v3556, %v3563
  %v3634 = vmul.f32 %v3557, %v3563
  %v3635 = vmul.f32 %v3558, %v3563
  %v3636 = vadd.f32 %v3415, %v3564
  %v3637 = vadd.f32 %v3416, %v3565
  %v3638 = vadd.f32 %v3417, %v3566
  %v3639 = vadd.f32 %v3418, %v3567
  %v3640 = vadd.f32 %v3419, %v3568
  %v3641 = vadd.f32 %v3420, %v3569
  %v3642 = vadd.f32 %v3421, %v3570
  %v3643 = vadd.f32 %v3422, %v3571
  %v3644 = vadd.f32 %v3423, %v3572
  %v3645 = vadd.f32 %v3424, %v3573
  %v3646 = vadd.f32 %v3425, %v3574
  %v3647 = vadd.f32 %v3426, %v3575
  %v3648 = vadd.f32 %v3427, %v3576
  %v3649 = vadd.f32 %v3428, %v3577
  %v3650 = vadd.f32 %v3429, %v3578
  %v3651 = vadd.f32 %v3430, %v3579
  %v3652 = vadd.f32 %v3431, %v3580
  %v3653 = vadd.f32 %v3432, %v3581
  %v3654 = vadd.f32 %v3433, %v3582
  %v3655 = vadd.f32 %v3434, %v3583
  %v3656 = vadd.f32 %v3435, %v3584
  %v3657 = vadd.f32 %v3436, %v3585
  %v3658 = vadd.f32 %v3437, %v3586
  %v3659 = vadd.f32 %v3438, %v3587
  %v3660 = vadd.f32 %v3439, %v3588
  %v3661 = vadd.f32 %v3440, %v3589
  %v3662 = vadd.f32 %v3441, %v3590
  %v3663 = vadd.f32 %v3442, %v3591
  %v3664 = vadd.f32 %v3443, %v3592
  %v3665 = vadd.f32 %v3444, %v3593
  %v3666 = vadd.f32 %v3445, %v3594
  %v3667 = vadd.f32 %v3446, %v3595
  %v3668 = vadd.f32 %v3447, %v3596
  %v3669 = vadd.f32 %v3448, %v3597
  %v3670 = vadd.f32 %v3449, %v3598
  %v3671 = vadd.f32 %v3450, %v3599
  %v3672 = vadd.f32 %v3451, %v3600
  %v3673 = vadd.f32 %v3452, %v3601
  %v3674 = vadd.f32 %v3453, %v3602
  %v3675 = vadd.f32 %v3454, %v3603
  %v3676 = vadd.f32 %v3455, %v3604
  %v3677 = vadd.f32 %v3456, %v3605
  %v3678 = vadd.f32 %v3457, %v3606
  %v3679 = vadd.f32 %v3458, %v3607
  %v3680 = vadd.f32 %v3459, %v3608
  %v3681 = vadd.f32 %v3460, %v3609
  %v3682 = vadd.f32 %v3461, %v3610
  %v3683 = vadd.f32 %v3462, %v3611
  %v3684 = vadd.f32 %v3463, %v3612
  %v3685 = vadd.f32 %v3464, %v3613
  %v3686 = vadd.f32 %v3465, %v3614
  %v3687 = vadd.f32 %v3466, %v3615
  %v3688 = vadd.f32 %v3467, %v3616
  %v3689 = vadd.f32 %v3468, %v3617
  %v3690 = vadd.f32 %v3469, %v3618
  %v3691 = vadd.f32 %v3470, %v3619
  %v3692 = vadd.f32 %v3471, %v3620
  %v3693 = vadd.f32 %v3472, %v3621
  %v3694 = vadd.f32 %v3473, %v3622
  %v3695 = vadd.f32 %v3474, %v3623
  %v3696 = vadd.f32 %v3475, %v3624
  %v3697 = vadd.f32 %v3476, %v3625
  %v3698 = vadd.f32 %v3477, %v3626
  %v3699 = vadd.f32 %v3478, %v3627
  %v3700 = vadd.f32 %v3479, %v3628
  %v3701 = vadd.f32 %v3480, %v3629
  %v3702 = vadd.f32 %v3481, %v3630
  %v3703 = vadd.f32 %v3482, %v3631
  %v3704 = vadd.f32 %v3483, %v3632
  %v3705 = vadd.f32 %v3484, %v3633
  %v3706 = vadd.f32 %v3485, %v3634
  %v3707 = vadd.f32 %v3486, %v3635
  %v3708 = vld [vmem:[%s3265 + $0x2] sm:$0xff]
  %v3709 = vld [vmem:[%s3265 + $0xa] sm:$0xff]
  %v3710 = vld [vmem:[%s3265 + $0x12] sm:$0xff]
  %v3711 = vld [vmem:[%s3265 + $0x22] sm:$0xff]
  %v3712 = vld [vmem:[%s3265 + $0x2a] sm:$0xff]
  %v3713 = vld [vmem:[%s3265 + $0x32] sm:$0xff]
  %v3714 = vld [vmem:[%s3265 + $0x42] sm:$0xff]
  %v3715 = vld [vmem:[%s3265 + $0x4a] sm:$0xff]
  %v3716 = vld [vmem:[%s3265 + $0x52] sm:$0xff]
  %v3717 = vld [vmem:[%s3265 + $0x62] sm:$0xff]
  %v3718 = vld [vmem:[%s3265 + $0x6a] sm:$0xff]
  %v3719 = vld [vmem:[%s3265 + $0x72] sm:$0xff]
  %v3720 = vld [vmem:[%s3265 + $0x82] sm:$0xff]
  %v3721 = vld [vmem:[%s3265 + $0x8a] sm:$0xff]
  %v3722 = vld [vmem:[%s3265 + $0x92] sm:$0xff]
  %v3723 = vld [vmem:[%s3265 + $0xa2] sm:$0xff]
  %v3724 = vld [vmem:[%s3265 + $0xaa] sm:$0xff]
  %v3725 = vld [vmem:[%s3265 + $0xb2] sm:$0xff]
  %v3726 = vld [vmem:[%s3265 + $0xc2] sm:$0xff]
  %v3727 = vld [vmem:[%s3265 + $0xca] sm:$0xff]
  %v3728 = vld [vmem:[%s3265 + $0xd2] sm:$0xff]
  %v3729 = vld [vmem:[%s3265 + $0xe2] sm:$0xff]
  %v3730 = vld [vmem:[%s3265 + $0xea] sm:$0xff]
  %v3731 = vld [vmem:[%s3265 + $0xf2] sm:$0xff]
  %v3732 = vld [vmem:[%s3265 + $0x102] sm:$0xff]
  %v3733 = vld [vmem:[%s3265 + $0x10a] sm:$0xff]
  %v3734 = vld [vmem:[%s3265 + $0x112] sm:$0xff]
  %v3735 = vld [vmem:[%s3265 + $0x122] sm:$0xff]
  %v3736 = vld [vmem:[%s3265 + $0x12a] sm:$0xff]
  %v3737 = vld [vmem:[%s3265 + $0x132] sm:$0xff]
  %v3738 = vld [vmem:[%s3265 + $0x142] sm:$0xff]
  %v3739 = vld [vmem:[%s3265 + $0x14a] sm:$0xff]
  %v3740 = vld [vmem:[%s3265 + $0x152] sm:$0xff]
  %v3741 = vld [vmem:[%s3265 + $0x162] sm:$0xff]
  %v3742 = vld [vmem:[%s3265 + $0x16a] sm:$0xff]
  %v3743 = vld [vmem:[%s3265 + $0x172] sm:$0xff]
  %v3744 = vld [vmem:[%s3265 + $0x182] sm:$0xff]
  %v3745 = vld [vmem:[%s3265 + $0x18a] sm:$0xff]
  %v3746 = vld [vmem:[%s3265 + $0x192] sm:$0xff]
  %v3747 = vld [vmem:[%s3265 + $0x1a2] sm:$0xff]
  %v3748 = vld [vmem:[%s3265 + $0x1aa] sm:$0xff]
  %v3749 = vld [vmem:[%s3265 + $0x1b2] sm:$0xff]
  %v3750 = vld [vmem:[%s3265 + $0x1c2] sm:$0xff]
  %v3751 = vld [vmem:[%s3265 + $0x1ca] sm:$0xff]
  %v3752 = vld [vmem:[%s3265 + $0x1d2] sm:$0xff]
  %v3753 = vld [vmem:[%s3265 + $0x1e2] sm:$0xff]
  %v3754 = vld [vmem:[%s3265 + $0x1ea] sm:$0xff]
  %v3755 = vld [vmem:[%s3265 + $0x1f2] sm:$0xff]
  %v3756 = vld [vmem:[%s3265 + $0x202] sm:$0xff]
  %v3757 = vld [vmem:[%s3265 + $0x20a] sm:$0xff]
  %v3758 = vld [vmem:[%s3265 + $0x212] sm:$0xff]
  %v3759 = vld [vmem:[%s3265 + $0x222] sm:$0xff]
  %v3760 = vld [vmem:[%s3265 + $0x22a] sm:$0xff]
  %v3761 = vld [vmem:[%s3265 + $0x232] sm:$0xff]
  %v3762 = vld [vmem:[%s3265 + $0x242] sm:$0xff]
  %v3763 = vld [vmem:[%s3265 + $0x24a] sm:$0xff]
  %v3764 = vld [vmem:[%s3265 + $0x252] sm:$0xff]
  %v3765 = vld [vmem:[%s3265 + $0x262] sm:$0xff]
  %v3766 = vld [vmem:[%s3265 + $0x26a] sm:$0xff]
  %v3767 = vld [vmem:[%s3265 + $0x272] sm:$0xff]
  %v3768 = vld [vmem:[%s3265 + $0x282] sm:$0xff]
  %v3769 = vld [vmem:[%s3265 + $0x28a] sm:$0xff]
  %v3770 = vld [vmem:[%s3265 + $0x292] sm:$0xff]
  %v3771 = vld [vmem:[%s3265 + $0x2a2] sm:$0xff]
  %v3772 = vld [vmem:[%s3265 + $0x2aa] sm:$0xff]
  %v3773 = vld [vmem:[%s3265 + $0x2b2] sm:$0xff]
  %v3774 = vld [vmem:[%s3265 + $0x2c2] sm:$0xff]
  %v3775 = vld [vmem:[%s3265 + $0x2ca] sm:$0xff]
  %v3776 = vld [vmem:[%s3265 + $0x2d2] sm:$0xff]
  %v3777 = vld [vmem:[%s3265 + $0x2e2] sm:$0xff]
  %v3778 = vld [vmem:[%s3265 + $0x2ea] sm:$0xff]
  %v3779 = vld [vmem:[%s3265 + $0x2f2] sm:$0xff]
  %v3780 = vld [vmem:[%s1 + $0x11] sm:$0x1]
  %v3781 = vlaneseq
  %v3782 = vshrl.u32 %v3781, 7
  %v3783 = vsub.s32 0, %v3782
  %v3784 = vrot.slane %v3780, %v3783
  %v3785 = vmul.f32 %v3708, %v3784
  %v3786 = vmul.f32 %v3709, %v3784
  %v3787 = vmul.f32 %v3710, %v3784
  %v3788 = vmul.f32 %v3711, %v3784
  %v3789 = vmul.f32 %v3712, %v3784
  %v3790 = vmul.f32 %v3713, %v3784
  %v3791 = vmul.f32 %v3714, %v3784
  %v3792 = vmul.f32 %v3715, %v3784
  %v3793 = vmul.f32 %v3716, %v3784
  %v3794 = vmul.f32 %v3717, %v3784
  %v3795 = vmul.f32 %v3718, %v3784
  %v3796 = vmul.f32 %v3719, %v3784
  %v3797 = vmul.f32 %v3720, %v3784
  %v3798 = vmul.f32 %v3721, %v3784
  %v3799 = vmul.f32 %v3722, %v3784
  %v3800 = vmul.f32 %v3723, %v3784
  %v3801 = vmul.f32 %v3724, %v3784
  %v3802 = vmul.f32 %v3725, %v3784
  %v3803 = vmul.f32 %v3726, %v3784
  %v3804 = vmul.f32 %v3727, %v3784
  %v3805 = vmul.f32 %v3728, %v3784
  %v3806 = vmul.f32 %v3729, %v3784
  %v3807 = vmul.f32 %v3730, %v3784
  %v3808 = vmul.f32 %v3731, %v3784
  %v3809 = vmul.f32 %v3732, %v3784
  %v3810 = vmul.f32 %v3733, %v3784
  %v3811 = vmul.f32 %v3734, %v3784
  %v3812 = vmul.f32 %v3735, %v3784
  %v3813 = vmul.f32 %v3736, %v3784
  %v3814 = vmul.f32 %v3737, %v3784
  %v3815 = vmul.f32 %v3738, %v3784
  %v3816 = vmul.f32 %v3739, %v3784
  %v3817 = vmul.f32 %v3740, %v3784
  %v3818 = vmul.f32 %v3741, %v3784
  %v3819 = vmul.f32 %v3742, %v3784
  %v3820 = vmul.f32 %v3743, %v3784
  %v3821 = vmul.f32 %v3744, %v3784
  %v3822 = vmul.f32 %v3745, %v3784
  %v3823 = vmul.f32 %v3746, %v3784
  %v3824 = vmul.f32 %v3747, %v3784
  %v3825 = vmul.f32 %v3748, %v3784
  %v3826 = vmul.f32 %v3749, %v3784
  %v3827 = vmul.f32 %v3750, %v3784
  %v3828 = vmul.f32 %v3751, %v3784
  %v3829 = vmul.f32 %v3752, %v3784
  %v3830 = vmul.f32 %v3753, %v3784
  %v3831 = vmul.f32 %v3754, %v3784
  %v3832 = vmul.f32 %v3755, %v3784
  %v3833 = vmul.f32 %v3756, %v3784
  %v3834 = vmul.f32 %v3757, %v3784
  %v3835 = vmul.f32 %v3758, %v3784
  %v3836 = vmul.f32 %v3759, %v3784
  %v3837 = vmul.f32 %v3760, %v3784
  %v3838 = vmul.f32 %v3761, %v3784
  %v3839 = vmul.f32 %v3762, %v3784
  %v3840 = vmul.f32 %v3763, %v3784
  %v3841 = vmul.f32 %v3764, %v3784
  %v3842 = vmul.f32 %v3765, %v3784
  %v3843 = vmul.f32 %v3766, %v3784
  %v3844 = vmul.f32 %v3767, %v3784
  %v3845 = vmul.f32 %v3768, %v3784
  %v3846 = vmul.f32 %v3769, %v3784
  %v3847 = vmul.f32 %v3770, %v3784
  %v3848 = vmul.f32 %v3771, %v3784
  %v3849 = vmul.f32 %v3772, %v3784
  %v3850 = vmul.f32 %v3773, %v3784
  %v3851 = vmul.f32 %v3774, %v3784
  %v3852 = vmul.f32 %v3775, %v3784
  %v3853 = vmul.f32 %v3776, %v3784
  %v3854 = vmul.f32 %v3777, %v3784
  %v3855 = vmul.f32 %v3778, %v3784
  %v3856 = vmul.f32 %v3779, %v3784
  %v3857 = vadd.f32 %v3636, %v3785
  %v3858 = vadd.f32 %v3637, %v3786
  %v3859 = vadd.f32 %v3638, %v3787
  %v3860 = vadd.f32 %v3639, %v3788
  %v3861 = vadd.f32 %v3640, %v3789
  %v3862 = vadd.f32 %v3641, %v3790
  %v3863 = vadd.f32 %v3642, %v3791
  %v3864 = vadd.f32 %v3643, %v3792
  %v3865 = vadd.f32 %v3644, %v3793
  %v3866 = vadd.f32 %v3645, %v3794
  %v3867 = vadd.f32 %v3646, %v3795
  %v3868 = vadd.f32 %v3647, %v3796
  %v3869 = vadd.f32 %v3648, %v3797
  %v3870 = vadd.f32 %v3649, %v3798
  %v3871 = vadd.f32 %v3650, %v3799
  %v3872 = vadd.f32 %v3651, %v3800
  %v3873 = vadd.f32 %v3652, %v3801
  %v3874 = vadd.f32 %v3653, %v3802
  %v3875 = vadd.f32 %v3654, %v3803
  %v3876 = vadd.f32 %v3655, %v3804
  %v3877 = vadd.f32 %v3656, %v3805
  %v3878 = vadd.f32 %v3657, %v3806
  %v3879 = vadd.f32 %v3658, %v3807
  %v3880 = vadd.f32 %v3659, %v3808
  %v3881 = vadd.f32 %v3660, %v3809
  %v3882 = vadd.f32 %v3661, %v3810
  %v3883 = vadd.f32 %v3662, %v3811
  %v3884 = vadd.f32 %v3663, %v3812
  %v3885 = vadd.f32 %v3664, %v3813
  %v3886 = vadd.f32 %v3665, %v3814
  %v3887 = vadd.f32 %v3666, %v3815
  %v3888 = vadd.f32 %v3667, %v3816
  %v3889 = vadd.f32 %v3668, %v3817
  %v3890 = vadd.f32 %v3669, %v3818
  %v3891 = vadd.f32 %v3670, %v3819
  %v3892 = vadd.f32 %v3671, %v3820
  %v3893 = vadd.f32 %v3672, %v3821
  %v3894 = vadd.f32 %v3673, %v3822
  %v3895 = vadd.f32 %v3674, %v3823
  %v3896 = vadd.f32 %v3675, %v3824
  %v3897 = vadd.f32 %v3676, %v3825
  %v3898 = vadd.f32 %v3677, %v3826
  %v3899 = vadd.f32 %v3678, %v3827
  %v3900 = vadd.f32 %v3679, %v3828
  %v3901 = vadd.f32 %v3680, %v3829
  %v3902 = vadd.f32 %v3681, %v3830
  %v3903 = vadd.f32 %v3682, %v3831
  %v3904 = vadd.f32 %v3683, %v3832
  %v3905 = vadd.f32 %v3684, %v3833
  %v3906 = vadd.f32 %v3685, %v3834
  %v3907 = vadd.f32 %v3686, %v3835
  %v3908 = vadd.f32 %v3687, %v3836
  %v3909 = vadd.f32 %v3688, %v3837
  %v3910 = vadd.f32 %v3689, %v3838
  %v3911 = vadd.f32 %v3690, %v3839
  %v3912 = vadd.f32 %v3691, %v3840
  %v3913 = vadd.f32 %v3692, %v3841
  %v3914 = vadd.f32 %v3693, %v3842
  %v3915 = vadd.f32 %v3694, %v3843
  %v3916 = vadd.f32 %v3695, %v3844
  %v3917 = vadd.f32 %v3696, %v3845
  %v3918 = vadd.f32 %v3697, %v3846
  %v3919 = vadd.f32 %v3698, %v3847
  %v3920 = vadd.f32 %v3699, %v3848
  %v3921 = vadd.f32 %v3700, %v3849
  %v3922 = vadd.f32 %v3701, %v3850
  %v3923 = vadd.f32 %v3702, %v3851
  %v3924 = vadd.f32 %v3703, %v3852
  %v3925 = vadd.f32 %v3704, %v3853
  %v3926 = vadd.f32 %v3705, %v3854
  %v3927 = vadd.f32 %v3706, %v3855
  %v3928 = vadd.f32 %v3707, %v3856
  %v3929 = vld [vmem:[%s3265 + $0x3] sm:$0xff]
  %v3930 = vld [vmem:[%s3265 + $0xb] sm:$0xff]
  %v3931 = vld [vmem:[%s3265 + $0x13] sm:$0xff]
  %v3932 = vld [vmem:[%s3265 + $0x23] sm:$0xff]
  %v3933 = vld [vmem:[%s3265 + $0x2b] sm:$0xff]
  %v3934 = vld [vmem:[%s3265 + $0x33] sm:$0xff]
  %v3935 = vld [vmem:[%s3265 + $0x43] sm:$0xff]
  %v3936 = vld [vmem:[%s3265 + $0x4b] sm:$0xff]
  %v3937 = vld [vmem:[%s3265 + $0x53] sm:$0xff]
  %v3938 = vld [vmem:[%s3265 + $0x63] sm:$0xff]
  %v3939 = vld [vmem:[%s3265 + $0x6b] sm:$0xff]
  %v3940 = vld [vmem:[%s3265 + $0x73] sm:$0xff]
  %v3941 = vld [vmem:[%s3265 + $0x83] sm:$0xff]
  %v3942 = vld [vmem:[%s3265 + $0x8b] sm:$0xff]
  %v3943 = vld [vmem:[%s3265 + $0x93] sm:$0xff]
  %v3944 = vld [vmem:[%s3265 + $0xa3] sm:$0xff]
  %v3945 = vld [vmem:[%s3265 + $0xab] sm:$0xff]
  %v3946 = vld [vmem:[%s3265 + $0xb3] sm:$0xff]
  %v3947 = vld [vmem:[%s3265 + $0xc3] sm:$0xff]
  %v3948 = vld [vmem:[%s3265 + $0xcb] sm:$0xff]
  %v3949 = vld [vmem:[%s3265 + $0xd3] sm:$0xff]
  %v3950 = vld [vmem:[%s3265 + $0xe3] sm:$0xff]
  %v3951 = vld [vmem:[%s3265 + $0xeb] sm:$0xff]
  %v3952 = vld [vmem:[%s3265 + $0xf3] sm:$0xff]
  %v3953 = vld [vmem:[%s3265 + $0x103] sm:$0xff]
  %v3954 = vld [vmem:[%s3265 + $0x10b] sm:$0xff]
  %v3955 = vld [vmem:[%s3265 + $0x113] sm:$0xff]
  %v3956 = vld [vmem:[%s3265 + $0x123] sm:$0xff]
  %v3957 = vld [vmem:[%s3265 + $0x12b] sm:$0xff]
  %v3958 = vld [vmem:[%s3265 + $0x133] sm:$0xff]
  %v3959 = vld [vmem:[%s3265 + $0x143] sm:$0xff]
  %v3960 = vld [vmem:[%s3265 + $0x14b] sm:$0xff]
  %v3961 = vld [vmem:[%s3265 + $0x153] sm:$0xff]
  %v3962 = vld [vmem:[%s3265 + $0x163] sm:$0xff]
  %v3963 = vld [vmem:[%s3265 + $0x16b] sm:$0xff]
  %v3964 = vld [vmem:[%s3265 + $0x173] sm:$0xff]
  %v3965 = vld [vmem:[%s3265 + $0x183] sm:$0xff]
  %v3966 = vld [vmem:[%s3265 + $0x18b] sm:$0xff]
  %v3967 = vld [vmem:[%s3265 + $0x193] sm:$0xff]
  %v3968 = vld [vmem:[%s3265 + $0x1a3] sm:$0xff]
  %v3969 = vld [vmem:[%s3265 + $0x1ab] sm:$0xff]
  %v3970 = vld [vmem:[%s3265 + $0x1b3] sm:$0xff]
  %v3971 = vld [vmem:[%s3265 + $0x1c3] sm:$0xff]
  %v3972 = vld [vmem:[%s3265 + $0x1cb] sm:$0xff]
  %v3973 = vld [vmem:[%s3265 + $0x1d3] sm:$0xff]
  %v3974 = vld [vmem:[%s3265 + $0x1e3] sm:$0xff]
  %v3975 = vld [vmem:[%s3265 + $0x1eb] sm:$0xff]
  %v3976 = vld [vmem:[%s3265 + $0x1f3] sm:$0xff]
  %v3977 = vld [vmem:[%s3265 + $0x203] sm:$0xff]
  %v3978 = vld [vmem:[%s3265 + $0x20b] sm:$0xff]
  %v3979 = vld [vmem:[%s3265 + $0x213] sm:$0xff]
  %v3980 = vld [vmem:[%s3265 + $0x223] sm:$0xff]
  %v3981 = vld [vmem:[%s3265 + $0x22b] sm:$0xff]
  %v3982 = vld [vmem:[%s3265 + $0x233] sm:$0xff]
  %v3983 = vld [vmem:[%s3265 + $0x243] sm:$0xff]
  %v3984 = vld [vmem:[%s3265 + $0x24b] sm:$0xff]
  %v3985 = vld [vmem:[%s3265 + $0x253] sm:$0xff]
  %v3986 = vld [vmem:[%s3265 + $0x263] sm:$0xff]
  %v3987 = vld [vmem:[%s3265 + $0x26b] sm:$0xff]
  %v3988 = vld [vmem:[%s3265 + $0x273] sm:$0xff]
  %v3989 = vld [vmem:[%s3265 + $0x283] sm:$0xff]
  %v3990 = vld [vmem:[%s3265 + $0x28b] sm:$0xff]
  %v3991 = vld [vmem:[%s3265 + $0x293] sm:$0xff]
  %v3992 = vld [vmem:[%s3265 + $0x2a3] sm:$0xff]
  %v3993 = vld [vmem:[%s3265 + $0x2ab] sm:$0xff]
  %v3994 = vld [vmem:[%s3265 + $0x2b3] sm:$0xff]
  %v3995 = vld [vmem:[%s3265 + $0x2c3] sm:$0xff]
  %v3996 = vld [vmem:[%s3265 + $0x2cb] sm:$0xff]
  %v3997 = vld [vmem:[%s3265 + $0x2d3] sm:$0xff]
  %v3998 = vld [vmem:[%s3265 + $0x2e3] sm:$0xff]
  %v3999 = vld [vmem:[%s3265 + $0x2eb] sm:$0xff]
  %v4000 = vld [vmem:[%s3265 + $0x2f3] sm:$0xff]
  %v4001 = vld [vmem:[%s1 + $0x12] sm:$0x1]
  %v4002 = vlaneseq
  %v4003 = vshrl.u32 %v4002, 7
  %v4004 = vsub.s32 0, %v4003
  %v4005 = vrot.slane %v4001, %v4004
  %v4006 = vmul.f32 %v3929, %v4005
  %v4007 = vmul.f32 %v3930, %v4005
  %v4008 = vmul.f32 %v3931, %v4005
  %v4009 = vmul.f32 %v3932, %v4005
  %v4010 = vmul.f32 %v3933, %v4005
  %v4011 = vmul.f32 %v3934, %v4005
  %v4012 = vmul.f32 %v3935, %v4005
  %v4013 = vmul.f32 %v3936, %v4005
  %v4014 = vmul.f32 %v3937, %v4005
  %v4015 = vmul.f32 %v3938, %v4005
  %v4016 = vmul.f32 %v3939, %v4005
  %v4017 = vmul.f32 %v3940, %v4005
  %v4018 = vmul.f32 %v3941, %v4005
  %v4019 = vmul.f32 %v3942, %v4005
  %v4020 = vmul.f32 %v3943, %v4005
  %v4021 = vmul.f32 %v3944, %v4005
  %v4022 = vmul.f32 %v3945, %v4005
  %v4023 = vmul.f32 %v3946, %v4005
  %v4024 = vmul.f32 %v3947, %v4005
  %v4025 = vmul.f32 %v3948, %v4005
  %v4026 = vmul.f32 %v3949, %v4005
  %v4027 = vmul.f32 %v3950, %v4005
  %v4028 = vmul.f32 %v3951, %v4005
  %v4029 = vmul.f32 %v3952, %v4005
  %v4030 = vmul.f32 %v3953, %v4005
  %v4031 = vmul.f32 %v3954, %v4005
  %v4032 = vmul.f32 %v3955, %v4005
  %v4033 = vmul.f32 %v3956, %v4005
  %v4034 = vmul.f32 %v3957, %v4005
  %v4035 = vmul.f32 %v3958, %v4005
  %v4036 = vmul.f32 %v3959, %v4005
  %v4037 = vmul.f32 %v3960, %v4005
  %v4038 = vmul.f32 %v3961, %v4005
  %v4039 = vmul.f32 %v3962, %v4005
  %v4040 = vmul.f32 %v3963, %v4005
  %v4041 = vmul.f32 %v3964, %v4005
  %v4042 = vmul.f32 %v3965, %v4005
  %v4043 = vmul.f32 %v3966, %v4005
  %v4044 = vmul.f32 %v3967, %v4005
  %v4045 = vmul.f32 %v3968, %v4005
  %v4046 = vmul.f32 %v3969, %v4005
  %v4047 = vmul.f32 %v3970, %v4005
  %v4048 = vmul.f32 %v3971, %v4005
  %v4049 = vmul.f32 %v3972, %v4005
  %v4050 = vmul.f32 %v3973, %v4005
  %v4051 = vmul.f32 %v3974, %v4005
  %v4052 = vmul.f32 %v3975, %v4005
  %v4053 = vmul.f32 %v3976, %v4005
  %v4054 = vmul.f32 %v3977, %v4005
  %v4055 = vmul.f32 %v3978, %v4005
  %v4056 = vmul.f32 %v3979, %v4005
  %v4057 = vmul.f32 %v3980, %v4005
  %v4058 = vmul.f32 %v3981, %v4005
  %v4059 = vmul.f32 %v3982, %v4005
  %v4060 = vmul.f32 %v3983, %v4005
  %v4061 = vmul.f32 %v3984, %v4005
  %v4062 = vmul.f32 %v3985, %v4005
  %v4063 = vmul.f32 %v3986, %v4005
  %v4064 = vmul.f32 %v3987, %v4005
  %v4065 = vmul.f32 %v3988, %v4005
  %v4066 = vmul.f32 %v3989, %v4005
  %v4067 = vmul.f32 %v3990, %v4005
  %v4068 = vmul.f32 %v3991, %v4005
  %v4069 = vmul.f32 %v3992, %v4005
  %v4070 = vmul.f32 %v3993, %v4005
  %v4071 = vmul.f32 %v3994, %v4005
  %v4072 = vmul.f32 %v3995, %v4005
  %v4073 = vmul.f32 %v3996, %v4005
  %v4074 = vmul.f32 %v3997, %v4005
  %v4075 = vmul.f32 %v3998, %v4005
  %v4076 = vmul.f32 %v3999, %v4005
  %v4077 = vmul.f32 %v4000, %v4005
  %v4078 = vadd.f32 %v3857, %v4006
  %v4079 = vadd.f32 %v3858, %v4007
  %v4080 = vadd.f32 %v3859, %v4008
  %v4081 = vadd.f32 %v3860, %v4009
  %v4082 = vadd.f32 %v3861, %v4010
  %v4083 = vadd.f32 %v3862, %v4011
  %v4084 = vadd.f32 %v3863, %v4012
  %v4085 = vadd.f32 %v3864, %v4013
  %v4086 = vadd.f32 %v3865, %v4014
  %v4087 = vadd.f32 %v3866, %v4015
  %v4088 = vadd.f32 %v3867, %v4016
  %v4089 = vadd.f32 %v3868, %v4017
  %v4090 = vadd.f32 %v3869, %v4018
  %v4091 = vadd.f32 %v3870, %v4019
  %v4092 = vadd.f32 %v3871, %v4020
  %v4093 = vadd.f32 %v3872, %v4021
  %v4094 = vadd.f32 %v3873, %v4022
  %v4095 = vadd.f32 %v3874, %v4023
  %v4096 = vadd.f32 %v3875, %v4024
  %v4097 = vadd.f32 %v3876, %v4025
  %v4098 = vadd.f32 %v3877, %v4026
  %v4099 = vadd.f32 %v3878, %v4027
  %v4100 = vadd.f32 %v3879, %v4028
  %v4101 = vadd.f32 %v3880, %v4029
  %v4102 = vadd.f32 %v3881, %v4030
  %v4103 = vadd.f32 %v3882, %v4031
  %v4104 = vadd.f32 %v3883, %v4032
  %v4105 = vadd.f32 %v3884, %v4033
  %v4106 = vadd.f32 %v3885, %v4034
  %v4107 = vadd.f32 %v3886, %v4035
  %v4108 = vadd.f32 %v3887, %v4036
  %v4109 = vadd.f32 %v3888, %v4037
  %v4110 = vadd.f32 %v3889, %v4038
  %v4111 = vadd.f32 %v3890, %v4039
  %v4112 = vadd.f32 %v3891, %v4040
  %v4113 = vadd.f32 %v3892, %v4041
  %v4114 = vadd.f32 %v3893, %v4042
  %v4115 = vadd.f32 %v3894, %v4043
  %v4116 = vadd.f32 %v3895, %v4044
  %v4117 = vadd.f32 %v3896, %v4045
  %v4118 = vadd.f32 %v3897, %v4046
  %v4119 = vadd.f32 %v3898, %v4047
  %v4120 = vadd.f32 %v3899, %v4048
  %v4121 = vadd.f32 %v3900, %v4049
  %v4122 = vadd.f32 %v3901, %v4050
  %v4123 = vadd.f32 %v3902, %v4051
  %v4124 = vadd.f32 %v3903, %v4052
  %v4125 = vadd.f32 %v3904, %v4053
  %v4126 = vadd.f32 %v3905, %v4054
  %v4127 = vadd.f32 %v3906, %v4055
  %v4128 = vadd.f32 %v3907, %v4056
  %v4129 = vadd.f32 %v3908, %v4057
  %v4130 = vadd.f32 %v3909, %v4058
  %v4131 = vadd.f32 %v3910, %v4059
  %v4132 = vadd.f32 %v3911, %v4060
  %v4133 = vadd.f32 %v3912, %v4061
  %v4134 = vadd.f32 %v3913, %v4062
  %v4135 = vadd.f32 %v3914, %v4063
  %v4136 = vadd.f32 %v3915, %v4064
  %v4137 = vadd.f32 %v3916, %v4065
  %v4138 = vadd.f32 %v3917, %v4066
  %v4139 = vadd.f32 %v3918, %v4067
  %v4140 = vadd.f32 %v3919, %v4068
  %v4141 = vadd.f32 %v3920, %v4069
  %v4142 = vadd.f32 %v3921, %v4070
  %v4143 = vadd.f32 %v3922, %v4071
  %v4144 = vadd.f32 %v3923, %v4072
  %v4145 = vadd.f32 %v3924, %v4073
  %v4146 = vadd.f32 %v3925, %v4074
  %v4147 = vadd.f32 %v3926, %v4075
  %v4148 = vadd.f32 %v3927, %v4076
  %v4149 = vadd.f32 %v3928, %v4077
  %v4150 = vld [vmem:[%s3265 + $0x4] sm:$0xff]
  %v4151 = vld [vmem:[%s3265 + $0xc] sm:$0xff]
  %v4152 = vld [vmem:[%s3265 + $0x14] sm:$0xff]
  %v4153 = vld [vmem:[%s3265 + $0x24] sm:$0xff]
  %v4154 = vld [vmem:[%s3265 + $0x2c] sm:$0xff]
  %v4155 = vld [vmem:[%s3265 + $0x34] sm:$0xff]
  %v4156 = vld [vmem:[%s3265 + $0x44] sm:$0xff]
  %v4157 = vld [vmem:[%s3265 + $0x4c] sm:$0xff]
  %v4158 = vld [vmem:[%s3265 + $0x54] sm:$0xff]
  %v4159 = vld [vmem:[%s3265 + $0x64] sm:$0xff]
  %v4160 = vld [vmem:[%s3265 + $0x6c] sm:$0xff]
  %v4161 = vld [vmem:[%s3265 + $0x74] sm:$0xff]
  %v4162 = vld [vmem:[%s3265 + $0x84] sm:$0xff]
  %v4163 = vld [vmem:[%s3265 + $0x8c] sm:$0xff]
  %v4164 = vld [vmem:[%s3265 + $0x94] sm:$0xff]
  %v4165 = vld [vmem:[%s3265 + $0xa4] sm:$0xff]
  %v4166 = vld [vmem:[%s3265 + $0xac] sm:$0xff]
  %v4167 = vld [vmem:[%s3265 + $0xb4] sm:$0xff]
  %v4168 = vld [vmem:[%s3265 + $0xc4] sm:$0xff]
  %v4169 = vld [vmem:[%s3265 + $0xcc] sm:$0xff]
  %v4170 = vld [vmem:[%s3265 + $0xd4] sm:$0xff]
  %v4171 = vld [vmem:[%s3265 + $0xe4] sm:$0xff]
  %v4172 = vld [vmem:[%s3265 + $0xec] sm:$0xff]
  %v4173 = vld [vmem:[%s3265 + $0xf4] sm:$0xff]
  %v4174 = vld [vmem:[%s3265 + $0x104] sm:$0xff]
  %v4175 = vld [vmem:[%s3265 + $0x10c] sm:$0xff]
  %v4176 = vld [vmem:[%s3265 + $0x114] sm:$0xff]
  %v4177 = vld [vmem:[%s3265 + $0x124] sm:$0xff]
  %v4178 = vld [vmem:[%s3265 + $0x12c] sm:$0xff]
  %v4179 = vld [vmem:[%s3265 + $0x134] sm:$0xff]
  %v4180 = vld [vmem:[%s3265 + $0x144] sm:$0xff]
  %v4181 = vld [vmem:[%s3265 + $0x14c] sm:$0xff]
  %v4182 = vld [vmem:[%s3265 + $0x154] sm:$0xff]
  %v4183 = vld [vmem:[%s3265 + $0x164] sm:$0xff]
  %v4184 = vld [vmem:[%s3265 + $0x16c] sm:$0xff]
  %v4185 = vld [vmem:[%s3265 + $0x174] sm:$0xff]
  %v4186 = vld [vmem:[%s3265 + $0x184] sm:$0xff]
  %v4187 = vld [vmem:[%s3265 + $0x18c] sm:$0xff]
  %v4188 = vld [vmem:[%s3265 + $0x194] sm:$0xff]
  %v4189 = vld [vmem:[%s3265 + $0x1a4] sm:$0xff]
  %v4190 = vld [vmem:[%s3265 + $0x1ac] sm:$0xff]
  %v4191 = vld [vmem:[%s3265 + $0x1b4] sm:$0xff]
  %v4192 = vld [vmem:[%s3265 + $0x1c4] sm:$0xff]
  %v4193 = vld [vmem:[%s3265 + $0x1cc] sm:$0xff]
  %v4194 = vld [vmem:[%s3265 + $0x1d4] sm:$0xff]
  %v4195 = vld [vmem:[%s3265 + $0x1e4] sm:$0xff]
  %v4196 = vld [vmem:[%s3265 + $0x1ec] sm:$0xff]
  %v4197 = vld [vmem:[%s3265 + $0x1f4] sm:$0xff]
  %v4198 = vld [vmem:[%s3265 + $0x204] sm:$0xff]
  %v4199 = vld [vmem:[%s3265 + $0x20c] sm:$0xff]
  %v4200 = vld [vmem:[%s3265 + $0x214] sm:$0xff]
  %v4201 = vld [vmem:[%s3265 + $0x224] sm:$0xff]
  %v4202 = vld [vmem:[%s3265 + $0x22c] sm:$0xff]
  %v4203 = vld [vmem:[%s3265 + $0x234] sm:$0xff]
  %v4204 = vld [vmem:[%s3265 + $0x244] sm:$0xff]
  %v4205 = vld [vmem:[%s3265 + $0x24c] sm:$0xff]
  %v4206 = vld [vmem:[%s3265 + $0x254] sm:$0xff]
  %v4207 = vld [vmem:[%s3265 + $0x264] sm:$0xff]
  %v4208 = vld [vmem:[%s3265 + $0x26c] sm:$0xff]
  %v4209 = vld [vmem:[%s3265 + $0x274] sm:$0xff]
  %v4210 = vld [vmem:[%s3265 + $0x284] sm:$0xff]
  %v4211 = vld [vmem:[%s3265 + $0x28c] sm:$0xff]
  %v4212 = vld [vmem:[%s3265 + $0x294] sm:$0xff]
  %v4213 = vld [vmem:[%s3265 + $0x2a4] sm:$0xff]
  %v4214 = vld [vmem:[%s3265 + $0x2ac] sm:$0xff]
  %v4215 = vld [vmem:[%s3265 + $0x2b4] sm:$0xff]
  %v4216 = vld [vmem:[%s3265 + $0x2c4] sm:$0xff]
  %v4217 = vld [vmem:[%s3265 + $0x2cc] sm:$0xff]
  %v4218 = vld [vmem:[%s3265 + $0x2d4] sm:$0xff]
  %v4219 = vld [vmem:[%s3265 + $0x2e4] sm:$0xff]
  %v4220 = vld [vmem:[%s3265 + $0x2ec] sm:$0xff]
  %v4221 = vld [vmem:[%s3265 + $0x2f4] sm:$0xff]
  %v4222 = vld [vmem:[%s1 + $0x13] sm:$0x1]
  %v4223 = vlaneseq
  %v4224 = vshrl.u32 %v4223, 7
  %v4225 = vsub.s32 0, %v4224
  %v4226 = vrot.slane %v4222, %v4225
  %v4227 = vmul.f32 %v4150, %v4226
  %v4228 = vmul.f32 %v4151, %v4226
  %v4229 = vmul.f32 %v4152, %v4226
  %v4230 = vmul.f32 %v4153, %v4226
  %v4231 = vmul.f32 %v4154, %v4226
  %v4232 = vmul.f32 %v4155, %v4226
  %v4233 = vmul.f32 %v4156, %v4226
  %v4234 = vmul.f32 %v4157, %v4226
  %v4235 = vmul.f32 %v4158, %v4226
  %v4236 = vmul.f32 %v4159, %v4226
  %v4237 = vmul.f32 %v4160, %v4226
  %v4238 = vmul.f32 %v4161, %v4226
  %v4239 = vmul.f32 %v4162, %v4226
  %v4240 = vmul.f32 %v4163, %v4226
  %v4241 = vmul.f32 %v4164, %v4226
  %v4242 = vmul.f32 %v4165, %v4226
  %v4243 = vmul.f32 %v4166, %v4226
  %v4244 = vmul.f32 %v4167, %v4226
  %v4245 = vmul.f32 %v4168, %v4226
  %v4246 = vmul.f32 %v4169, %v4226
  %v4247 = vmul.f32 %v4170, %v4226
  %v4248 = vmul.f32 %v4171, %v4226
  %v4249 = vmul.f32 %v4172, %v4226
  %v4250 = vmul.f32 %v4173, %v4226
  %v4251 = vmul.f32 %v4174, %v4226
  %v4252 = vmul.f32 %v4175, %v4226
  %v4253 = vmul.f32 %v4176, %v4226
  %v4254 = vmul.f32 %v4177, %v4226
  %v4255 = vmul.f32 %v4178, %v4226
  %v4256 = vmul.f32 %v4179, %v4226
  %v4257 = vmul.f32 %v4180, %v4226
  %v4258 = vmul.f32 %v4181, %v4226
  %v4259 = vmul.f32 %v4182, %v4226
  %v4260 = vmul.f32 %v4183, %v4226
  %v4261 = vmul.f32 %v4184, %v4226
  %v4262 = vmul.f32 %v4185, %v4226
  %v4263 = vmul.f32 %v4186, %v4226
  %v4264 = vmul.f32 %v4187, %v4226
  %v4265 = vmul.f32 %v4188, %v4226
  %v4266 = vmul.f32 %v4189, %v4226
  %v4267 = vmul.f32 %v4190, %v4226
  %v4268 = vmul.f32 %v4191, %v4226
  %v4269 = vmul.f32 %v4192, %v4226
  %v4270 = vmul.f32 %v4193, %v4226
  %v4271 = vmul.f32 %v4194, %v4226
  %v4272 = vmul.f32 %v4195, %v4226
  %v4273 = vmul.f32 %v4196, %v4226
  %v4274 = vmul.f32 %v4197, %v4226
  %v4275 = vmul.f32 %v4198, %v4226
  %v4276 = vmul.f32 %v4199, %v4226
  %v4277 = vmul.f32 %v4200, %v4226
  %v4278 = vmul.f32 %v4201, %v4226
  %v4279 = vmul.f32 %v4202, %v4226
  %v4280 = vmul.f32 %v4203, %v4226
  %v4281 = vmul.f32 %v4204, %v4226
  %v4282 = vmul.f32 %v4205, %v4226
  %v4283 = vmul.f32 %v4206, %v4226
  %v4284 = vmul.f32 %v4207, %v4226
  %v4285 = vmul.f32 %v4208, %v4226
  %v4286 = vmul.f32 %v4209, %v4226
  %v4287 = vmul.f32 %v4210, %v4226
  %v4288 = vmul.f32 %v4211, %v4226
  %v4289 = vmul.f32 %v4212, %v4226
  %v4290 = vmul.f32 %v4213, %v4226
  %v4291 = vmul.f32 %v4214, %v4226
  %v4292 = vmul.f32 %v4215, %v4226
  %v4293 = vmul.f32 %v4216, %v4226
  %v4294 = vmul.f32 %v4217, %v4226
  %v4295 = vmul.f32 %v4218, %v4226
  %v4296 = vmul.f32 %v4219, %v4226
  %v4297 = vmul.f32 %v4220, %v4226
  %v4298 = vmul.f32 %v4221, %v4226
  %v4299 = vadd.f32 %v4078, %v4227
  %v4300 = vadd.f32 %v4079, %v4228
  %v4301 = vadd.f32 %v4080, %v4229
  %v4302 = vadd.f32 %v4081, %v4230
  %v4303 = vadd.f32 %v4082, %v4231
  %v4304 = vadd.f32 %v4083, %v4232
  %v4305 = vadd.f32 %v4084, %v4233
  %v4306 = vadd.f32 %v4085, %v4234
  %v4307 = vadd.f32 %v4086, %v4235
  %v4308 = vadd.f32 %v4087, %v4236
  %v4309 = vadd.f32 %v4088, %v4237
  %v4310 = vadd.f32 %v4089, %v4238
  %v4311 = vadd.f32 %v4090, %v4239
  %v4312 = vadd.f32 %v4091, %v4240
  %v4313 = vadd.f32 %v4092, %v4241
  %v4314 = vadd.f32 %v4093, %v4242
  %v4315 = vadd.f32 %v4094, %v4243
  %v4316 = vadd.f32 %v4095, %v4244
  %v4317 = vadd.f32 %v4096, %v4245
  %v4318 = vadd.f32 %v4097, %v4246
  %v4319 = vadd.f32 %v4098, %v4247
  %v4320 = vadd.f32 %v4099, %v4248
  %v4321 = vadd.f32 %v4100, %v4249
  %v4322 = vadd.f32 %v4101, %v4250
  %v4323 = vadd.f32 %v4102, %v4251
  %v4324 = vadd.f32 %v4103, %v4252
  %v4325 = vadd.f32 %v4104, %v4253
  %v4326 = vadd.f32 %v4105, %v4254
  %v4327 = vadd.f32 %v4106, %v4255
  %v4328 = vadd.f32 %v4107, %v4256
  %v4329 = vadd.f32 %v4108, %v4257
  %v4330 = vadd.f32 %v4109, %v4258
  %v4331 = vadd.f32 %v4110, %v4259
  %v4332 = vadd.f32 %v4111, %v4260
  %v4333 = vadd.f32 %v4112, %v4261
  %v4334 = vadd.f32 %v4113, %v4262
  %v4335 = vadd.f32 %v4114, %v4263
  %v4336 = vadd.f32 %v4115, %v4264
  %v4337 = vadd.f32 %v4116, %v4265
  %v4338 = vadd.f32 %v4117, %v4266
  %v4339 = vadd.f32 %v4118, %v4267
  %v4340 = vadd.f32 %v4119, %v4268
  %v4341 = vadd.f32 %v4120, %v4269
  %v4342 = vadd.f32 %v4121, %v4270
  %v4343 = vadd.f32 %v4122, %v4271
  %v4344 = vadd.f32 %v4123, %v4272
  %v4345 = vadd.f32 %v4124, %v4273
  %v4346 = vadd.f32 %v4125, %v4274
  %v4347 = vadd.f32 %v4126, %v4275
  %v4348 = vadd.f32 %v4127, %v4276
  %v4349 = vadd.f32 %v4128, %v4277
  %v4350 = vadd.f32 %v4129, %v4278
  %v4351 = vadd.f32 %v4130, %v4279
  %v4352 = vadd.f32 %v4131, %v4280
  %v4353 = vadd.f32 %v4132, %v4281
  %v4354 = vadd.f32 %v4133, %v4282
  %v4355 = vadd.f32 %v4134, %v4283
  %v4356 = vadd.f32 %v4135, %v4284
  %v4357 = vadd.f32 %v4136, %v4285
  %v4358 = vadd.f32 %v4137, %v4286
  %v4359 = vadd.f32 %v4138, %v4287
  %v4360 = vadd.f32 %v4139, %v4288
  %v4361 = vadd.f32 %v4140, %v4289
  %v4362 = vadd.f32 %v4141, %v4290
  %v4363 = vadd.f32 %v4142, %v4291
  %v4364 = vadd.f32 %v4143, %v4292
  %v4365 = vadd.f32 %v4144, %v4293
  %v4366 = vadd.f32 %v4145, %v4294
  %v4367 = vadd.f32 %v4146, %v4295
  %v4368 = vadd.f32 %v4147, %v4296
  %v4369 = vadd.f32 %v4148, %v4297
  %v4370 = vadd.f32 %v4149, %v4298
  %s4371 = scalar_lea.vmem %s0, 128
  %v4372 = vld [vmem:[%s4371] sm:$0xff]
  %v4373 = vld [vmem:[%s4371 + $0x8] sm:$0xff]
  %v4374 = vld [vmem:[%s4371 + $0x10] sm:$0xff]
  %v4375 = vld [vmem:[%s4371 + $0x20] sm:$0xff]
  %v4376 = vld [vmem:[%s4371 + $0x28] sm:$0xff]
  %v4377 = vld [vmem:[%s4371 + $0x30] sm:$0xff]
  %v4378 = vld [vmem:[%s4371 + $0x40] sm:$0xff]
  %v4379 = vld [vmem:[%s4371 + $0x48] sm:$0xff]
  %v4380 = vld [vmem:[%s4371 + $0x50] sm:$0xff]
  %v4381 = vld [vmem:[%s4371 + $0x60] sm:$0xff]
  %v4382 = vld [vmem:[%s4371 + $0x68] sm:$0xff]
  %v4383 = vld [vmem:[%s4371 + $0x70] sm:$0xff]
  %v4384 = vld [vmem:[%s4371 + $0x80] sm:$0xff]
  %v4385 = vld [vmem:[%s4371 + $0x88] sm:$0xff]
  %v4386 = vld [vmem:[%s4371 + $0x90] sm:$0xff]
  %v4387 = vld [vmem:[%s4371 + $0xa0] sm:$0xff]
  %v4388 = vld [vmem:[%s4371 + $0xa8] sm:$0xff]
  %v4389 = vld [vmem:[%s4371 + $0xb0] sm:$0xff]
  %v4390 = vld [vmem:[%s4371 + $0xc0] sm:$0xff]
  %v4391 = vld [vmem:[%s4371 + $0xc8] sm:$0xff]
  %v4392 = vld [vmem:[%s4371 + $0xd0] sm:$0xff]
  %v4393 = vld [vmem:[%s4371 + $0xe0] sm:$0xff]
  %v4394 = vld [vmem:[%s4371 + $0xe8] sm:$0xff]
  %v4395 = vld [vmem:[%s4371 + $0xf0] sm:$0xff]
  %v4396 = vld [vmem:[%s4371 + $0x100] sm:$0xff]
  %v4397 = vld [vmem:[%s4371 + $0x108] sm:$0xff]
  %v4398 = vld [vmem:[%s4371 + $0x110] sm:$0xff]
  %v4399 = vld [vmem:[%s4371 + $0x120] sm:$0xff]
  %v4400 = vld [vmem:[%s4371 + $0x128] sm:$0xff]
  %v4401 = vld [vmem:[%s4371 + $0x130] sm:$0xff]
  %v4402 = vld [vmem:[%s4371 + $0x140] sm:$0xff]
  %v4403 = vld [vmem:[%s4371 + $0x148] sm:$0xff]
  %v4404 = vld [vmem:[%s4371 + $0x150] sm:$0xff]
  %v4405 = vld [vmem:[%s4371 + $0x160] sm:$0xff]
  %v4406 = vld [vmem:[%s4371 + $0x168] sm:$0xff]
  %v4407 = vld [vmem:[%s4371 + $0x170] sm:$0xff]
  %v4408 = vld [vmem:[%s4371 + $0x180] sm:$0xff]
  %v4409 = vld [vmem:[%s4371 + $0x188] sm:$0xff]
  %v4410 = vld [vmem:[%s4371 + $0x190] sm:$0xff]
  %v4411 = vld [vmem:[%s4371 + $0x1a0] sm:$0xff]
  %v4412 = vld [vmem:[%s4371 + $0x1a8] sm:$0xff]
  %v4413 = vld [vmem:[%s4371 + $0x1b0] sm:$0xff]
  %v4414 = vld [vmem:[%s4371 + $0x1c0] sm:$0xff]
  %v4415 = vld [vmem:[%s4371 + $0x1c8] sm:$0xff]
  %v4416 = vld [vmem:[%s4371 + $0x1d0] sm:$0xff]
  %v4417 = vld [vmem:[%s4371 + $0x1e0] sm:$0xff]
  %v4418 = vld [vmem:[%s4371 + $0x1e8] sm:$0xff]
  %v4419 = vld [vmem:[%s4371 + $0x1f0] sm:$0xff]
  %v4420 = vld [vmem:[%s4371 + $0x200] sm:$0xff]
  %v4421 = vld [vmem:[%s4371 + $0x208] sm:$0xff]
  %v4422 = vld [vmem:[%s4371 + $0x210] sm:$0xff]
  %v4423 = vld [vmem:[%s4371 + $0x220] sm:$0xff]
  %v4424 = vld [vmem:[%s4371 + $0x228] sm:$0xff]
  %v4425 = vld [vmem:[%s4371 + $0x230] sm:$0xff]
  %v4426 = vld [vmem:[%s4371 + $0x240] sm:$0xff]
  %v4427 = vld [vmem:[%s4371 + $0x248] sm:$0xff]
  %v4428 = vld [vmem:[%s4371 + $0x250] sm:$0xff]
  %v4429 = vld [vmem:[%s4371 + $0x260] sm:$0xff]
  %v4430 = vld [vmem:[%s4371 + $0x268] sm:$0xff]
  %v4431 = vld [vmem:[%s4371 + $0x270] sm:$0xff]
  %v4432 = vld [vmem:[%s4371 + $0x280] sm:$0xff]
  %v4433 = vld [vmem:[%s4371 + $0x288] sm:$0xff]
  %v4434 = vld [vmem:[%s4371 + $0x290] sm:$0xff]
  %v4435 = vld [vmem:[%s4371 + $0x2a0] sm:$0xff]
  %v4436 = vld [vmem:[%s4371 + $0x2a8] sm:$0xff]
  %v4437 = vld [vmem:[%s4371 + $0x2b0] sm:$0xff]
  %v4438 = vld [vmem:[%s4371 + $0x2c0] sm:$0xff]
  %v4439 = vld [vmem:[%s4371 + $0x2c8] sm:$0xff]
  %v4440 = vld [vmem:[%s4371 + $0x2d0] sm:$0xff]
  %v4441 = vld [vmem:[%s4371 + $0x2e0] sm:$0xff]
  %v4442 = vld [vmem:[%s4371 + $0x2e8] sm:$0xff]
  %v4443 = vld [vmem:[%s4371 + $0x2f0] sm:$0xff]
  %v4444 = vld [vmem:[%s1 + $0x14] sm:$0x1]
  %v4445 = vlaneseq
  %v4446 = vshrl.u32 %v4445, 7
  %v4447 = vsub.s32 0, %v4446
  %v4448 = vrot.slane %v4444, %v4447
  %v4449 = vmul.f32 %v4372, %v4448
  %v4450 = vmul.f32 %v4373, %v4448
  %v4451 = vmul.f32 %v4374, %v4448
  %v4452 = vmul.f32 %v4375, %v4448
  %v4453 = vmul.f32 %v4376, %v4448
  %v4454 = vmul.f32 %v4377, %v4448
  %v4455 = vmul.f32 %v4378, %v4448
  %v4456 = vmul.f32 %v4379, %v4448
  %v4457 = vmul.f32 %v4380, %v4448
  %v4458 = vmul.f32 %v4381, %v4448
  %v4459 = vmul.f32 %v4382, %v4448
  %v4460 = vmul.f32 %v4383, %v4448
  %v4461 = vmul.f32 %v4384, %v4448
  %v4462 = vmul.f32 %v4385, %v4448
  %v4463 = vmul.f32 %v4386, %v4448
  %v4464 = vmul.f32 %v4387, %v4448
  %v4465 = vmul.f32 %v4388, %v4448
  %v4466 = vmul.f32 %v4389, %v4448
  %v4467 = vmul.f32 %v4390, %v4448
  %v4468 = vmul.f32 %v4391, %v4448
  %v4469 = vmul.f32 %v4392, %v4448
  %v4470 = vmul.f32 %v4393, %v4448
  %v4471 = vmul.f32 %v4394, %v4448
  %v4472 = vmul.f32 %v4395, %v4448
  %v4473 = vmul.f32 %v4396, %v4448
  %v4474 = vmul.f32 %v4397, %v4448
  %v4475 = vmul.f32 %v4398, %v4448
  %v4476 = vmul.f32 %v4399, %v4448
  %v4477 = vmul.f32 %v4400, %v4448
  %v4478 = vmul.f32 %v4401, %v4448
  %v4479 = vmul.f32 %v4402, %v4448
  %v4480 = vmul.f32 %v4403, %v4448
  %v4481 = vmul.f32 %v4404, %v4448
  %v4482 = vmul.f32 %v4405, %v4448
  %v4483 = vmul.f32 %v4406, %v4448
  %v4484 = vmul.f32 %v4407, %v4448
  %v4485 = vmul.f32 %v4408, %v4448
  %v4486 = vmul.f32 %v4409, %v4448
  %v4487 = vmul.f32 %v4410, %v4448
  %v4488 = vmul.f32 %v4411, %v4448
  %v4489 = vmul.f32 %v4412, %v4448
  %v4490 = vmul.f32 %v4413, %v4448
  %v4491 = vmul.f32 %v4414, %v4448
  %v4492 = vmul.f32 %v4415, %v4448
  %v4493 = vmul.f32 %v4416, %v4448
  %v4494 = vmul.f32 %v4417, %v4448
  %v4495 = vmul.f32 %v4418, %v4448
  %v4496 = vmul.f32 %v4419, %v4448
  %v4497 = vmul.f32 %v4420, %v4448
  %v4498 = vmul.f32 %v4421, %v4448
  %v4499 = vmul.f32 %v4422, %v4448
  %v4500 = vmul.f32 %v4423, %v4448
  %v4501 = vmul.f32 %v4424, %v4448
  %v4502 = vmul.f32 %v4425, %v4448
  %v4503 = vmul.f32 %v4426, %v4448
  %v4504 = vmul.f32 %v4427, %v4448
  %v4505 = vmul.f32 %v4428, %v4448
  %v4506 = vmul.f32 %v4429, %v4448
  %v4507 = vmul.f32 %v4430, %v4448
  %v4508 = vmul.f32 %v4431, %v4448
  %v4509 = vmul.f32 %v4432, %v4448
  %v4510 = vmul.f32 %v4433, %v4448
  %v4511 = vmul.f32 %v4434, %v4448
  %v4512 = vmul.f32 %v4435, %v4448
  %v4513 = vmul.f32 %v4436, %v4448
  %v4514 = vmul.f32 %v4437, %v4448
  %v4515 = vmul.f32 %v4438, %v4448
  %v4516 = vmul.f32 %v4439, %v4448
  %v4517 = vmul.f32 %v4440, %v4448
  %v4518 = vmul.f32 %v4441, %v4448
  %v4519 = vmul.f32 %v4442, %v4448
  %v4520 = vmul.f32 %v4443, %v4448
  %v4521 = vadd.f32 %v4299, %v4449
  %v4522 = vadd.f32 %v4300, %v4450
  %v4523 = vadd.f32 %v4301, %v4451
  %v4524 = vadd.f32 %v4302, %v4452
  %v4525 = vadd.f32 %v4303, %v4453
  %v4526 = vadd.f32 %v4304, %v4454
  %v4527 = vadd.f32 %v4305, %v4455
  %v4528 = vadd.f32 %v4306, %v4456
  %v4529 = vadd.f32 %v4307, %v4457
  %v4530 = vadd.f32 %v4308, %v4458
  %v4531 = vadd.f32 %v4309, %v4459
  %v4532 = vadd.f32 %v4310, %v4460
  %v4533 = vadd.f32 %v4311, %v4461
  %v4534 = vadd.f32 %v4312, %v4462
  %v4535 = vadd.f32 %v4313, %v4463
  %v4536 = vadd.f32 %v4314, %v4464
  %v4537 = vadd.f32 %v4315, %v4465
  %v4538 = vadd.f32 %v4316, %v4466
  %v4539 = vadd.f32 %v4317, %v4467
  %v4540 = vadd.f32 %v4318, %v4468
  %v4541 = vadd.f32 %v4319, %v4469
  %v4542 = vadd.f32 %v4320, %v4470
  %v4543 = vadd.f32 %v4321, %v4471
  %v4544 = vadd.f32 %v4322, %v4472
  %v4545 = vadd.f32 %v4323, %v4473
  %v4546 = vadd.f32 %v4324, %v4474
  %v4547 = vadd.f32 %v4325, %v4475
  %v4548 = vadd.f32 %v4326, %v4476
  %v4549 = vadd.f32 %v4327, %v4477
  %v4550 = vadd.f32 %v4328, %v4478
  %v4551 = vadd.f32 %v4329, %v4479
  %v4552 = vadd.f32 %v4330, %v4480
  %v4553 = vadd.f32 %v4331, %v4481
  %v4554 = vadd.f32 %v4332, %v4482
  %v4555 = vadd.f32 %v4333, %v4483
  %v4556 = vadd.f32 %v4334, %v4484
  %v4557 = vadd.f32 %v4335, %v4485
  %v4558 = vadd.f32 %v4336, %v4486
  %v4559 = vadd.f32 %v4337, %v4487
  %v4560 = vadd.f32 %v4338, %v4488
  %v4561 = vadd.f32 %v4339, %v4489
  %v4562 = vadd.f32 %v4340, %v4490
  %v4563 = vadd.f32 %v4341, %v4491
  %v4564 = vadd.f32 %v4342, %v4492
  %v4565 = vadd.f32 %v4343, %v4493
  %v4566 = vadd.f32 %v4344, %v4494
  %v4567 = vadd.f32 %v4345, %v4495
  %v4568 = vadd.f32 %v4346, %v4496
  %v4569 = vadd.f32 %v4347, %v4497
  %v4570 = vadd.f32 %v4348, %v4498
  %v4571 = vadd.f32 %v4349, %v4499
  %v4572 = vadd.f32 %v4350, %v4500
  %v4573 = vadd.f32 %v4351, %v4501
  %v4574 = vadd.f32 %v4352, %v4502
  %v4575 = vadd.f32 %v4353, %v4503
  %v4576 = vadd.f32 %v4354, %v4504
  %v4577 = vadd.f32 %v4355, %v4505
  %v4578 = vadd.f32 %v4356, %v4506
  %v4579 = vadd.f32 %v4357, %v4507
  %v4580 = vadd.f32 %v4358, %v4508
  %v4581 = vadd.f32 %v4359, %v4509
  %v4582 = vadd.f32 %v4360, %v4510
  %v4583 = vadd.f32 %v4361, %v4511
  %v4584 = vadd.f32 %v4362, %v4512
  %v4585 = vadd.f32 %v4363, %v4513
  %v4586 = vadd.f32 %v4364, %v4514
  %v4587 = vadd.f32 %v4365, %v4515
  %v4588 = vadd.f32 %v4366, %v4516
  %v4589 = vadd.f32 %v4367, %v4517
  %v4590 = vadd.f32 %v4368, %v4518
  %v4591 = vadd.f32 %v4369, %v4519
  %v4592 = vadd.f32 %v4370, %v4520
  %v4593 = vld [vmem:[%s4371 + $0x1] sm:$0xff]
  %v4594 = vld [vmem:[%s4371 + $0x9] sm:$0xff]
  %v4595 = vld [vmem:[%s4371 + $0x11] sm:$0xff]
  %v4596 = vld [vmem:[%s4371 + $0x21] sm:$0xff]
  %v4597 = vld [vmem:[%s4371 + $0x29] sm:$0xff]
  %v4598 = vld [vmem:[%s4371 + $0x31] sm:$0xff]
  %v4599 = vld [vmem:[%s4371 + $0x41] sm:$0xff]
  %v4600 = vld [vmem:[%s4371 + $0x49] sm:$0xff]
  %v4601 = vld [vmem:[%s4371 + $0x51] sm:$0xff]
  %v4602 = vld [vmem:[%s4371 + $0x61] sm:$0xff]
  %v4603 = vld [vmem:[%s4371 + $0x69] sm:$0xff]
  %v4604 = vld [vmem:[%s4371 + $0x71] sm:$0xff]
  %v4605 = vld [vmem:[%s4371 + $0x81] sm:$0xff]
  %v4606 = vld [vmem:[%s4371 + $0x89] sm:$0xff]
  %v4607 = vld [vmem:[%s4371 + $0x91] sm:$0xff]
  %v4608 = vld [vmem:[%s4371 + $0xa1] sm:$0xff]
  %v4609 = vld [vmem:[%s4371 + $0xa9] sm:$0xff]
  %v4610 = vld [vmem:[%s4371 + $0xb1] sm:$0xff]
  %v4611 = vld [vmem:[%s4371 + $0xc1] sm:$0xff]
  %v4612 = vld [vmem:[%s4371 + $0xc9] sm:$0xff]
  %v4613 = vld [vmem:[%s4371 + $0xd1] sm:$0xff]
  %v4614 = vld [vmem:[%s4371 + $0xe1] sm:$0xff]
  %v4615 = vld [vmem:[%s4371 + $0xe9] sm:$0xff]
  %v4616 = vld [vmem:[%s4371 + $0xf1] sm:$0xff]
  %v4617 = vld [vmem:[%s4371 + $0x101] sm:$0xff]
  %v4618 = vld [vmem:[%s4371 + $0x109] sm:$0xff]
  %v4619 = vld [vmem:[%s4371 + $0x111] sm:$0xff]
  %v4620 = vld [vmem:[%s4371 + $0x121] sm:$0xff]
  %v4621 = vld [vmem:[%s4371 + $0x129] sm:$0xff]
  %v4622 = vld [vmem:[%s4371 + $0x131] sm:$0xff]
  %v4623 = vld [vmem:[%s4371 + $0x141] sm:$0xff]
  %v4624 = vld [vmem:[%s4371 + $0x149] sm:$0xff]
  %v4625 = vld [vmem:[%s4371 + $0x151] sm:$0xff]
  %v4626 = vld [vmem:[%s4371 + $0x161] sm:$0xff]
  %v4627 = vld [vmem:[%s4371 + $0x169] sm:$0xff]
  %v4628 = vld [vmem:[%s4371 + $0x171] sm:$0xff]
  %v4629 = vld [vmem:[%s4371 + $0x181] sm:$0xff]
  %v4630 = vld [vmem:[%s4371 + $0x189] sm:$0xff]
  %v4631 = vld [vmem:[%s4371 + $0x191] sm:$0xff]
  %v4632 = vld [vmem:[%s4371 + $0x1a1] sm:$0xff]
  %v4633 = vld [vmem:[%s4371 + $0x1a9] sm:$0xff]
  %v4634 = vld [vmem:[%s4371 + $0x1b1] sm:$0xff]
  %v4635 = vld [vmem:[%s4371 + $0x1c1] sm:$0xff]
  %v4636 = vld [vmem:[%s4371 + $0x1c9] sm:$0xff]
  %v4637 = vld [vmem:[%s4371 + $0x1d1] sm:$0xff]
  %v4638 = vld [vmem:[%s4371 + $0x1e1] sm:$0xff]
  %v4639 = vld [vmem:[%s4371 + $0x1e9] sm:$0xff]
  %v4640 = vld [vmem:[%s4371 + $0x1f1] sm:$0xff]
  %v4641 = vld [vmem:[%s4371 + $0x201] sm:$0xff]
  %v4642 = vld [vmem:[%s4371 + $0x209] sm:$0xff]
  %v4643 = vld [vmem:[%s4371 + $0x211] sm:$0xff]
  %v4644 = vld [vmem:[%s4371 + $0x221] sm:$0xff]
  %v4645 = vld [vmem:[%s4371 + $0x229] sm:$0xff]
  %v4646 = vld [vmem:[%s4371 + $0x231] sm:$0xff]
  %v4647 = vld [vmem:[%s4371 + $0x241] sm:$0xff]
  %v4648 = vld [vmem:[%s4371 + $0x249] sm:$0xff]
  %v4649 = vld [vmem:[%s4371 + $0x251] sm:$0xff]
  %v4650 = vld [vmem:[%s4371 + $0x261] sm:$0xff]
  %v4651 = vld [vmem:[%s4371 + $0x269] sm:$0xff]
  %v4652 = vld [vmem:[%s4371 + $0x271] sm:$0xff]
  %v4653 = vld [vmem:[%s4371 + $0x281] sm:$0xff]
  %v4654 = vld [vmem:[%s4371 + $0x289] sm:$0xff]
  %v4655 = vld [vmem:[%s4371 + $0x291] sm:$0xff]
  %v4656 = vld [vmem:[%s4371 + $0x2a1] sm:$0xff]
  %v4657 = vld [vmem:[%s4371 + $0x2a9] sm:$0xff]
  %v4658 = vld [vmem:[%s4371 + $0x2b1] sm:$0xff]
  %v4659 = vld [vmem:[%s4371 + $0x2c1] sm:$0xff]
  %v4660 = vld [vmem:[%s4371 + $0x2c9] sm:$0xff]
  %v4661 = vld [vmem:[%s4371 + $0x2d1] sm:$0xff]
  %v4662 = vld [vmem:[%s4371 + $0x2e1] sm:$0xff]
  %v4663 = vld [vmem:[%s4371 + $0x2e9] sm:$0xff]
  %v4664 = vld [vmem:[%s4371 + $0x2f1] sm:$0xff]
  %v4665 = vld [vmem:[%s1 + $0x15] sm:$0x1]
  %v4666 = vlaneseq
  %v4667 = vshrl.u32 %v4666, 7
  %v4668 = vsub.s32 0, %v4667
  %v4669 = vrot.slane %v4665, %v4668
  %v4670 = vmul.f32 %v4593, %v4669
  %v4671 = vmul.f32 %v4594, %v4669
  %v4672 = vmul.f32 %v4595, %v4669
  %v4673 = vmul.f32 %v4596, %v4669
  %v4674 = vmul.f32 %v4597, %v4669
  %v4675 = vmul.f32 %v4598, %v4669
  %v4676 = vmul.f32 %v4599, %v4669
  %v4677 = vmul.f32 %v4600, %v4669
  %v4678 = vmul.f32 %v4601, %v4669
  %v4679 = vmul.f32 %v4602, %v4669
  %v4680 = vmul.f32 %v4603, %v4669
  %v4681 = vmul.f32 %v4604, %v4669
  %v4682 = vmul.f32 %v4605, %v4669
  %v4683 = vmul.f32 %v4606, %v4669
  %v4684 = vmul.f32 %v4607, %v4669
  %v4685 = vmul.f32 %v4608, %v4669
  %v4686 = vmul.f32 %v4609, %v4669
  %v4687 = vmul.f32 %v4610, %v4669
  %v4688 = vmul.f32 %v4611, %v4669
  %v4689 = vmul.f32 %v4612, %v4669
  %v4690 = vmul.f32 %v4613, %v4669
  %v4691 = vmul.f32 %v4614, %v4669
  %v4692 = vmul.f32 %v4615, %v4669
  %v4693 = vmul.f32 %v4616, %v4669
  %v4694 = vmul.f32 %v4617, %v4669
  %v4695 = vmul.f32 %v4618, %v4669
  %v4696 = vmul.f32 %v4619, %v4669
  %v4697 = vmul.f32 %v4620, %v4669
  %v4698 = vmul.f32 %v4621, %v4669
  %v4699 = vmul.f32 %v4622, %v4669
  %v4700 = vmul.f32 %v4623, %v4669
  %v4701 = vmul.f32 %v4624, %v4669
  %v4702 = vmul.f32 %v4625, %v4669
  %v4703 = vmul.f32 %v4626, %v4669
  %v4704 = vmul.f32 %v4627, %v4669
  %v4705 = vmul.f32 %v4628, %v4669
  %v4706 = vmul.f32 %v4629, %v4669
  %v4707 = vmul.f32 %v4630, %v4669
  %v4708 = vmul.f32 %v4631, %v4669
  %v4709 = vmul.f32 %v4632, %v4669
  %v4710 = vmul.f32 %v4633, %v4669
  %v4711 = vmul.f32 %v4634, %v4669
  %v4712 = vmul.f32 %v4635, %v4669
  %v4713 = vmul.f32 %v4636, %v4669
  %v4714 = vmul.f32 %v4637, %v4669
  %v4715 = vmul.f32 %v4638, %v4669
  %v4716 = vmul.f32 %v4639, %v4669
  %v4717 = vmul.f32 %v4640, %v4669
  %v4718 = vmul.f32 %v4641, %v4669
  %v4719 = vmul.f32 %v4642, %v4669
  %v4720 = vmul.f32 %v4643, %v4669
  %v4721 = vmul.f32 %v4644, %v4669
  %v4722 = vmul.f32 %v4645, %v4669
  %v4723 = vmul.f32 %v4646, %v4669
  %v4724 = vmul.f32 %v4647, %v4669
  %v4725 = vmul.f32 %v4648, %v4669
  %v4726 = vmul.f32 %v4649, %v4669
  %v4727 = vmul.f32 %v4650, %v4669
  %v4728 = vmul.f32 %v4651, %v4669
  %v4729 = vmul.f32 %v4652, %v4669
  %v4730 = vmul.f32 %v4653, %v4669
  %v4731 = vmul.f32 %v4654, %v4669
  %v4732 = vmul.f32 %v4655, %v4669
  %v4733 = vmul.f32 %v4656, %v4669
  %v4734 = vmul.f32 %v4657, %v4669
  %v4735 = vmul.f32 %v4658, %v4669
  %v4736 = vmul.f32 %v4659, %v4669
  %v4737 = vmul.f32 %v4660, %v4669
  %v4738 = vmul.f32 %v4661, %v4669
  %v4739 = vmul.f32 %v4662, %v4669
  %v4740 = vmul.f32 %v4663, %v4669
  %v4741 = vmul.f32 %v4664, %v4669
  %v4742 = vadd.f32 %v4521, %v4670
  %v4743 = vadd.f32 %v4522, %v4671
  %v4744 = vadd.f32 %v4523, %v4672
  %v4745 = vadd.f32 %v4524, %v4673
  %v4746 = vadd.f32 %v4525, %v4674
  %v4747 = vadd.f32 %v4526, %v4675
  %v4748 = vadd.f32 %v4527, %v4676
  %v4749 = vadd.f32 %v4528, %v4677
  %v4750 = vadd.f32 %v4529, %v4678
  %v4751 = vadd.f32 %v4530, %v4679
  %v4752 = vadd.f32 %v4531, %v4680
  %v4753 = vadd.f32 %v4532, %v4681
  %v4754 = vadd.f32 %v4533, %v4682
  %v4755 = vadd.f32 %v4534, %v4683
  %v4756 = vadd.f32 %v4535, %v4684
  %v4757 = vadd.f32 %v4536, %v4685
  %v4758 = vadd.f32 %v4537, %v4686
  %v4759 = vadd.f32 %v4538, %v4687
  %v4760 = vadd.f32 %v4539, %v4688
  %v4761 = vadd.f32 %v4540, %v4689
  %v4762 = vadd.f32 %v4541, %v4690
  %v4763 = vadd.f32 %v4542, %v4691
  %v4764 = vadd.f32 %v4543, %v4692
  %v4765 = vadd.f32 %v4544, %v4693
  %v4766 = vadd.f32 %v4545, %v4694
  %v4767 = vadd.f32 %v4546, %v4695
  %v4768 = vadd.f32 %v4547, %v4696
  %v4769 = vadd.f32 %v4548, %v4697
  %v4770 = vadd.f32 %v4549, %v4698
  %v4771 = vadd.f32 %v4550, %v4699
  %v4772 = vadd.f32 %v4551, %v4700
  %v4773 = vadd.f32 %v4552, %v4701
  %v4774 = vadd.f32 %v4553, %v4702
  %v4775 = vadd.f32 %v4554, %v4703
  %v4776 = vadd.f32 %v4555, %v4704
  %v4777 = vadd.f32 %v4556, %v4705
  %v4778 = vadd.f32 %v4557, %v4706
  %v4779 = vadd.f32 %v4558, %v4707
  %v4780 = vadd.f32 %v4559, %v4708
  %v4781 = vadd.f32 %v4560, %v4709
  %v4782 = vadd.f32 %v4561, %v4710
  %v4783 = vadd.f32 %v4562, %v4711
  %v4784 = vadd.f32 %v4563, %v4712
  %v4785 = vadd.f32 %v4564, %v4713
  %v4786 = vadd.f32 %v4565, %v4714
  %v4787 = vadd.f32 %v4566, %v4715
  %v4788 = vadd.f32 %v4567, %v4716
  %v4789 = vadd.f32 %v4568, %v4717
  %v4790 = vadd.f32 %v4569, %v4718
  %v4791 = vadd.f32 %v4570, %v4719
  %v4792 = vadd.f32 %v4571, %v4720
  %v4793 = vadd.f32 %v4572, %v4721
  %v4794 = vadd.f32 %v4573, %v4722
  %v4795 = vadd.f32 %v4574, %v4723
  %v4796 = vadd.f32 %v4575, %v4724
  %v4797 = vadd.f32 %v4576, %v4725
  %v4798 = vadd.f32 %v4577, %v4726
  %v4799 = vadd.f32 %v4578, %v4727
  %v4800 = vadd.f32 %v4579, %v4728
  %v4801 = vadd.f32 %v4580, %v4729
  %v4802 = vadd.f32 %v4581, %v4730
  %v4803 = vadd.f32 %v4582, %v4731
  %v4804 = vadd.f32 %v4583, %v4732
  %v4805 = vadd.f32 %v4584, %v4733
  %v4806 = vadd.f32 %v4585, %v4734
  %v4807 = vadd.f32 %v4586, %v4735
  %v4808 = vadd.f32 %v4587, %v4736
  %v4809 = vadd.f32 %v4588, %v4737
  %v4810 = vadd.f32 %v4589, %v4738
  %v4811 = vadd.f32 %v4590, %v4739
  %v4812 = vadd.f32 %v4591, %v4740
  %v4813 = vadd.f32 %v4592, %v4741
  %v4814 = vld [vmem:[%s4371 + $0x2] sm:$0xff]
  %v4815 = vld [vmem:[%s4371 + $0xa] sm:$0xff]
  %v4816 = vld [vmem:[%s4371 + $0x12] sm:$0xff]
  %v4817 = vld [vmem:[%s4371 + $0x22] sm:$0xff]
  %v4818 = vld [vmem:[%s4371 + $0x2a] sm:$0xff]
  %v4819 = vld [vmem:[%s4371 + $0x32] sm:$0xff]
  %v4820 = vld [vmem:[%s4371 + $0x42] sm:$0xff]
  %v4821 = vld [vmem:[%s4371 + $0x4a] sm:$0xff]
  %v4822 = vld [vmem:[%s4371 + $0x52] sm:$0xff]
  %v4823 = vld [vmem:[%s4371 + $0x62] sm:$0xff]
  %v4824 = vld [vmem:[%s4371 + $0x6a] sm:$0xff]
  %v4825 = vld [vmem:[%s4371 + $0x72] sm:$0xff]
  %v4826 = vld [vmem:[%s4371 + $0x82] sm:$0xff]
  %v4827 = vld [vmem:[%s4371 + $0x8a] sm:$0xff]
  %v4828 = vld [vmem:[%s4371 + $0x92] sm:$0xff]
  %v4829 = vld [vmem:[%s4371 + $0xa2] sm:$0xff]
  %v4830 = vld [vmem:[%s4371 + $0xaa] sm:$0xff]
  %v4831 = vld [vmem:[%s4371 + $0xb2] sm:$0xff]
  %v4832 = vld [vmem:[%s4371 + $0xc2] sm:$0xff]
  %v4833 = vld [vmem:[%s4371 + $0xca] sm:$0xff]
  %v4834 = vld [vmem:[%s4371 + $0xd2] sm:$0xff]
  %v4835 = vld [vmem:[%s4371 + $0xe2] sm:$0xff]
  %v4836 = vld [vmem:[%s4371 + $0xea] sm:$0xff]
  %v4837 = vld [vmem:[%s4371 + $0xf2] sm:$0xff]
  %v4838 = vld [vmem:[%s4371 + $0x102] sm:$0xff]
  %v4839 = vld [vmem:[%s4371 + $0x10a] sm:$0xff]
  %v4840 = vld [vmem:[%s4371 + $0x112] sm:$0xff]
  %v4841 = vld [vmem:[%s4371 + $0x122] sm:$0xff]
  %v4842 = vld [vmem:[%s4371 + $0x12a] sm:$0xff]
  %v4843 = vld [vmem:[%s4371 + $0x132] sm:$0xff]
  %v4844 = vld [vmem:[%s4371 + $0x142] sm:$0xff]
  %v4845 = vld [vmem:[%s4371 + $0x14a] sm:$0xff]
  %v4846 = vld [vmem:[%s4371 + $0x152] sm:$0xff]
  %v4847 = vld [vmem:[%s4371 + $0x162] sm:$0xff]
  %v4848 = vld [vmem:[%s4371 + $0x16a] sm:$0xff]
  %v4849 = vld [vmem:[%s4371 + $0x172] sm:$0xff]
  %v4850 = vld [vmem:[%s4371 + $0x182] sm:$0xff]
  %v4851 = vld [vmem:[%s4371 + $0x18a] sm:$0xff]
  %v4852 = vld [vmem:[%s4371 + $0x192] sm:$0xff]
  %v4853 = vld [vmem:[%s4371 + $0x1a2] sm:$0xff]
  %v4854 = vld [vmem:[%s4371 + $0x1aa] sm:$0xff]
  %v4855 = vld [vmem:[%s4371 + $0x1b2] sm:$0xff]
  %v4856 = vld [vmem:[%s4371 + $0x1c2] sm:$0xff]
  %v4857 = vld [vmem:[%s4371 + $0x1ca] sm:$0xff]
  %v4858 = vld [vmem:[%s4371 + $0x1d2] sm:$0xff]
  %v4859 = vld [vmem:[%s4371 + $0x1e2] sm:$0xff]
  %v4860 = vld [vmem:[%s4371 + $0x1ea] sm:$0xff]
  %v4861 = vld [vmem:[%s4371 + $0x1f2] sm:$0xff]
  %v4862 = vld [vmem:[%s4371 + $0x202] sm:$0xff]
  %v4863 = vld [vmem:[%s4371 + $0x20a] sm:$0xff]
  %v4864 = vld [vmem:[%s4371 + $0x212] sm:$0xff]
  %v4865 = vld [vmem:[%s4371 + $0x222] sm:$0xff]
  %v4866 = vld [vmem:[%s4371 + $0x22a] sm:$0xff]
  %v4867 = vld [vmem:[%s4371 + $0x232] sm:$0xff]
  %v4868 = vld [vmem:[%s4371 + $0x242] sm:$0xff]
  %v4869 = vld [vmem:[%s4371 + $0x24a] sm:$0xff]
  %v4870 = vld [vmem:[%s4371 + $0x252] sm:$0xff]
  %v4871 = vld [vmem:[%s4371 + $0x262] sm:$0xff]
  %v4872 = vld [vmem:[%s4371 + $0x26a] sm:$0xff]
  %v4873 = vld [vmem:[%s4371 + $0x272] sm:$0xff]
  %v4874 = vld [vmem:[%s4371 + $0x282] sm:$0xff]
  %v4875 = vld [vmem:[%s4371 + $0x28a] sm:$0xff]
  %v4876 = vld [vmem:[%s4371 + $0x292] sm:$0xff]
  %v4877 = vld [vmem:[%s4371 + $0x2a2] sm:$0xff]
  %v4878 = vld [vmem:[%s4371 + $0x2aa] sm:$0xff]
  %v4879 = vld [vmem:[%s4371 + $0x2b2] sm:$0xff]
  %v4880 = vld [vmem:[%s4371 + $0x2c2] sm:$0xff]
  %v4881 = vld [vmem:[%s4371 + $0x2ca] sm:$0xff]
  %v4882 = vld [vmem:[%s4371 + $0x2d2] sm:$0xff]
  %v4883 = vld [vmem:[%s4371 + $0x2e2] sm:$0xff]
  %v4884 = vld [vmem:[%s4371 + $0x2ea] sm:$0xff]
  %v4885 = vld [vmem:[%s4371 + $0x2f2] sm:$0xff]
  %v4886 = vld [vmem:[%s1 + $0x16] sm:$0x1]
  %v4887 = vlaneseq
  %v4888 = vshrl.u32 %v4887, 7
  %v4889 = vsub.s32 0, %v4888
  %v4890 = vrot.slane %v4886, %v4889
  %v4891 = vmul.f32 %v4814, %v4890
  %v4892 = vmul.f32 %v4815, %v4890
  %v4893 = vmul.f32 %v4816, %v4890
  %v4894 = vmul.f32 %v4817, %v4890
  %v4895 = vmul.f32 %v4818, %v4890
  %v4896 = vmul.f32 %v4819, %v4890
  %v4897 = vmul.f32 %v4820, %v4890
  %v4898 = vmul.f32 %v4821, %v4890
  %v4899 = vmul.f32 %v4822, %v4890
  %v4900 = vmul.f32 %v4823, %v4890
  %v4901 = vmul.f32 %v4824, %v4890
  %v4902 = vmul.f32 %v4825, %v4890
  %v4903 = vmul.f32 %v4826, %v4890
  %v4904 = vmul.f32 %v4827, %v4890
  %v4905 = vmul.f32 %v4828, %v4890
  %v4906 = vmul.f32 %v4829, %v4890
  %v4907 = vmul.f32 %v4830, %v4890
  %v4908 = vmul.f32 %v4831, %v4890
  %v4909 = vmul.f32 %v4832, %v4890
  %v4910 = vmul.f32 %v4833, %v4890
  %v4911 = vmul.f32 %v4834, %v4890
  %v4912 = vmul.f32 %v4835, %v4890
  %v4913 = vmul.f32 %v4836, %v4890
  %v4914 = vmul.f32 %v4837, %v4890
  %v4915 = vmul.f32 %v4838, %v4890
  %v4916 = vmul.f32 %v4839, %v4890
  %v4917 = vmul.f32 %v4840, %v4890
  %v4918 = vmul.f32 %v4841, %v4890
  %v4919 = vmul.f32 %v4842, %v4890
  %v4920 = vmul.f32 %v4843, %v4890
  %v4921 = vmul.f32 %v4844, %v4890
  %v4922 = vmul.f32 %v4845, %v4890
  %v4923 = vmul.f32 %v4846, %v4890
  %v4924 = vmul.f32 %v4847, %v4890
  %v4925 = vmul.f32 %v4848, %v4890
  %v4926 = vmul.f32 %v4849, %v4890
  %v4927 = vmul.f32 %v4850, %v4890
  %v4928 = vmul.f32 %v4851, %v4890
  %v4929 = vmul.f32 %v4852, %v4890
  %v4930 = vmul.f32 %v4853, %v4890
  %v4931 = vmul.f32 %v4854, %v4890
  %v4932 = vmul.f32 %v4855, %v4890
  %v4933 = vmul.f32 %v4856, %v4890
  %v4934 = vmul.f32 %v4857, %v4890
  %v4935 = vmul.f32 %v4858, %v4890
  %v4936 = vmul.f32 %v4859, %v4890
  %v4937 = vmul.f32 %v4860, %v4890
  %v4938 = vmul.f32 %v4861, %v4890
  %v4939 = vmul.f32 %v4862, %v4890
  %v4940 = vmul.f32 %v4863, %v4890
  %v4941 = vmul.f32 %v4864, %v4890
  %v4942 = vmul.f32 %v4865, %v4890
  %v4943 = vmul.f32 %v4866, %v4890
  %v4944 = vmul.f32 %v4867, %v4890
  %v4945 = vmul.f32 %v4868, %v4890
  %v4946 = vmul.f32 %v4869, %v4890
  %v4947 = vmul.f32 %v4870, %v4890
  %v4948 = vmul.f32 %v4871, %v4890
  %v4949 = vmul.f32 %v4872, %v4890
  %v4950 = vmul.f32 %v4873, %v4890
  %v4951 = vmul.f32 %v4874, %v4890
  %v4952 = vmul.f32 %v4875, %v4890
  %v4953 = vmul.f32 %v4876, %v4890
  %v4954 = vmul.f32 %v4877, %v4890
  %v4955 = vmul.f32 %v4878, %v4890
  %v4956 = vmul.f32 %v4879, %v4890
  %v4957 = vmul.f32 %v4880, %v4890
  %v4958 = vmul.f32 %v4881, %v4890
  %v4959 = vmul.f32 %v4882, %v4890
  %v4960 = vmul.f32 %v4883, %v4890
  %v4961 = vmul.f32 %v4884, %v4890
  %v4962 = vmul.f32 %v4885, %v4890
  %v4963 = vadd.f32 %v4742, %v4891
  %v4964 = vadd.f32 %v4743, %v4892
  %v4965 = vadd.f32 %v4744, %v4893
  %v4966 = vadd.f32 %v4745, %v4894
  %v4967 = vadd.f32 %v4746, %v4895
  %v4968 = vadd.f32 %v4747, %v4896
  %v4969 = vadd.f32 %v4748, %v4897
  %v4970 = vadd.f32 %v4749, %v4898
  %v4971 = vadd.f32 %v4750, %v4899
  %v4972 = vadd.f32 %v4751, %v4900
  %v4973 = vadd.f32 %v4752, %v4901
  %v4974 = vadd.f32 %v4753, %v4902
  %v4975 = vadd.f32 %v4754, %v4903
  %v4976 = vadd.f32 %v4755, %v4904
  %v4977 = vadd.f32 %v4756, %v4905
  %v4978 = vadd.f32 %v4757, %v4906
  %v4979 = vadd.f32 %v4758, %v4907
  %v4980 = vadd.f32 %v4759, %v4908
  %v4981 = vadd.f32 %v4760, %v4909
  %v4982 = vadd.f32 %v4761, %v4910
  %v4983 = vadd.f32 %v4762, %v4911
  %v4984 = vadd.f32 %v4763, %v4912
  %v4985 = vadd.f32 %v4764, %v4913
  %v4986 = vadd.f32 %v4765, %v4914
  %v4987 = vadd.f32 %v4766, %v4915
  %v4988 = vadd.f32 %v4767, %v4916
  %v4989 = vadd.f32 %v4768, %v4917
  %v4990 = vadd.f32 %v4769, %v4918
  %v4991 = vadd.f32 %v4770, %v4919
  %v4992 = vadd.f32 %v4771, %v4920
  %v4993 = vadd.f32 %v4772, %v4921
  %v4994 = vadd.f32 %v4773, %v4922
  %v4995 = vadd.f32 %v4774, %v4923
  %v4996 = vadd.f32 %v4775, %v4924
  %v4997 = vadd.f32 %v4776, %v4925
  %v4998 = vadd.f32 %v4777, %v4926
  %v4999 = vadd.f32 %v4778, %v4927
  %v5000 = vadd.f32 %v4779, %v4928
  %v5001 = vadd.f32 %v4780, %v4929
  %v5002 = vadd.f32 %v4781, %v4930
  %v5003 = vadd.f32 %v4782, %v4931
  %v5004 = vadd.f32 %v4783, %v4932
  %v5005 = vadd.f32 %v4784, %v4933
  %v5006 = vadd.f32 %v4785, %v4934
  %v5007 = vadd.f32 %v4786, %v4935
  %v5008 = vadd.f32 %v4787, %v4936
  %v5009 = vadd.f32 %v4788, %v4937
  %v5010 = vadd.f32 %v4789, %v4938
  %v5011 = vadd.f32 %v4790, %v4939
  %v5012 = vadd.f32 %v4791, %v4940
  %v5013 = vadd.f32 %v4792, %v4941
  %v5014 = vadd.f32 %v4793, %v4942
  %v5015 = vadd.f32 %v4794, %v4943
  %v5016 = vadd.f32 %v4795, %v4944
  %v5017 = vadd.f32 %v4796, %v4945
  %v5018 = vadd.f32 %v4797, %v4946
  %v5019 = vadd.f32 %v4798, %v4947
  %v5020 = vadd.f32 %v4799, %v4948
  %v5021 = vadd.f32 %v4800, %v4949
  %v5022 = vadd.f32 %v4801, %v4950
  %v5023 = vadd.f32 %v4802, %v4951
  %v5024 = vadd.f32 %v4803, %v4952
  %v5025 = vadd.f32 %v4804, %v4953
  %v5026 = vadd.f32 %v4805, %v4954
  %v5027 = vadd.f32 %v4806, %v4955
  %v5028 = vadd.f32 %v4807, %v4956
  %v5029 = vadd.f32 %v4808, %v4957
  %v5030 = vadd.f32 %v4809, %v4958
  %v5031 = vadd.f32 %v4810, %v4959
  %v5032 = vadd.f32 %v4811, %v4960
  %v5033 = vadd.f32 %v4812, %v4961
  %v5034 = vadd.f32 %v4813, %v4962
  %v5035 = vld [vmem:[%s4371 + $0x3] sm:$0xff]
  %v5036 = vld [vmem:[%s4371 + $0xb] sm:$0xff]
  %v5037 = vld [vmem:[%s4371 + $0x13] sm:$0xff]
  %v5038 = vld [vmem:[%s4371 + $0x23] sm:$0xff]
  %v5039 = vld [vmem:[%s4371 + $0x2b] sm:$0xff]
  %v5040 = vld [vmem:[%s4371 + $0x33] sm:$0xff]
  %v5041 = vld [vmem:[%s4371 + $0x43] sm:$0xff]
  %v5042 = vld [vmem:[%s4371 + $0x4b] sm:$0xff]
  %v5043 = vld [vmem:[%s4371 + $0x53] sm:$0xff]
  %v5044 = vld [vmem:[%s4371 + $0x63] sm:$0xff]
  %v5045 = vld [vmem:[%s4371 + $0x6b] sm:$0xff]
  %v5046 = vld [vmem:[%s4371 + $0x73] sm:$0xff]
  %v5047 = vld [vmem:[%s4371 + $0x83] sm:$0xff]
  %v5048 = vld [vmem:[%s4371 + $0x8b] sm:$0xff]
  %v5049 = vld [vmem:[%s4371 + $0x93] sm:$0xff]
  %v5050 = vld [vmem:[%s4371 + $0xa3] sm:$0xff]
  %v5051 = vld [vmem:[%s4371 + $0xab] sm:$0xff]
  %v5052 = vld [vmem:[%s4371 + $0xb3] sm:$0xff]
  %v5053 = vld [vmem:[%s4371 + $0xc3] sm:$0xff]
  %v5054 = vld [vmem:[%s4371 + $0xcb] sm:$0xff]
  %v5055 = vld [vmem:[%s4371 + $0xd3] sm:$0xff]
  %v5056 = vld [vmem:[%s4371 + $0xe3] sm:$0xff]
  %v5057 = vld [vmem:[%s4371 + $0xeb] sm:$0xff]
  %v5058 = vld [vmem:[%s4371 + $0xf3] sm:$0xff]
  %v5059 = vld [vmem:[%s4371 + $0x103] sm:$0xff]
  %v5060 = vld [vmem:[%s4371 + $0x10b] sm:$0xff]
  %v5061 = vld [vmem:[%s4371 + $0x113] sm:$0xff]
  %v5062 = vld [vmem:[%s4371 + $0x123] sm:$0xff]
  %v5063 = vld [vmem:[%s4371 + $0x12b] sm:$0xff]
  %v5064 = vld [vmem:[%s4371 + $0x133] sm:$0xff]
  %v5065 = vld [vmem:[%s4371 + $0x143] sm:$0xff]
  %v5066 = vld [vmem:[%s4371 + $0x14b] sm:$0xff]
  %v5067 = vld [vmem:[%s4371 + $0x153] sm:$0xff]
  %v5068 = vld [vmem:[%s4371 + $0x163] sm:$0xff]
  %v5069 = vld [vmem:[%s4371 + $0x16b] sm:$0xff]
  %v5070 = vld [vmem:[%s4371 + $0x173] sm:$0xff]
  %v5071 = vld [vmem:[%s4371 + $0x183] sm:$0xff]
  %v5072 = vld [vmem:[%s4371 + $0x18b] sm:$0xff]
  %v5073 = vld [vmem:[%s4371 + $0x193] sm:$0xff]
  %v5074 = vld [vmem:[%s4371 + $0x1a3] sm:$0xff]
  %v5075 = vld [vmem:[%s4371 + $0x1ab] sm:$0xff]
  %v5076 = vld [vmem:[%s4371 + $0x1b3] sm:$0xff]
  %v5077 = vld [vmem:[%s4371 + $0x1c3] sm:$0xff]
  %v5078 = vld [vmem:[%s4371 + $0x1cb] sm:$0xff]
  %v5079 = vld [vmem:[%s4371 + $0x1d3] sm:$0xff]
  %v5080 = vld [vmem:[%s4371 + $0x1e3] sm:$0xff]
  %v5081 = vld [vmem:[%s4371 + $0x1eb] sm:$0xff]
  %v5082 = vld [vmem:[%s4371 + $0x1f3] sm:$0xff]
  %v5083 = vld [vmem:[%s4371 + $0x203] sm:$0xff]
  %v5084 = vld [vmem:[%s4371 + $0x20b] sm:$0xff]
  %v5085 = vld [vmem:[%s4371 + $0x213] sm:$0xff]
  %v5086 = vld [vmem:[%s4371 + $0x223] sm:$0xff]
  %v5087 = vld [vmem:[%s4371 + $0x22b] sm:$0xff]
  %v5088 = vld [vmem:[%s4371 + $0x233] sm:$0xff]
  %v5089 = vld [vmem:[%s4371 + $0x243] sm:$0xff]
  %v5090 = vld [vmem:[%s4371 + $0x24b] sm:$0xff]
  %v5091 = vld [vmem:[%s4371 + $0x253] sm:$0xff]
  %v5092 = vld [vmem:[%s4371 + $0x263] sm:$0xff]
  %v5093 = vld [vmem:[%s4371 + $0x26b] sm:$0xff]
  %v5094 = vld [vmem:[%s4371 + $0x273] sm:$0xff]
  %v5095 = vld [vmem:[%s4371 + $0x283] sm:$0xff]
  %v5096 = vld [vmem:[%s4371 + $0x28b] sm:$0xff]
  %v5097 = vld [vmem:[%s4371 + $0x293] sm:$0xff]
  %v5098 = vld [vmem:[%s4371 + $0x2a3] sm:$0xff]
  %v5099 = vld [vmem:[%s4371 + $0x2ab] sm:$0xff]
  %v5100 = vld [vmem:[%s4371 + $0x2b3] sm:$0xff]
  %v5101 = vld [vmem:[%s4371 + $0x2c3] sm:$0xff]
  %v5102 = vld [vmem:[%s4371 + $0x2cb] sm:$0xff]
  %v5103 = vld [vmem:[%s4371 + $0x2d3] sm:$0xff]
  %v5104 = vld [vmem:[%s4371 + $0x2e3] sm:$0xff]
  %v5105 = vld [vmem:[%s4371 + $0x2eb] sm:$0xff]
  %v5106 = vld [vmem:[%s4371 + $0x2f3] sm:$0xff]
  %v5107 = vld [vmem:[%s1 + $0x17] sm:$0x1]
  %v5108 = vlaneseq
  %v5109 = vshrl.u32 %v5108, 7
  %v5110 = vsub.s32 0, %v5109
  %v5111 = vrot.slane %v5107, %v5110
  %v5112 = vmul.f32 %v5035, %v5111
  %v5113 = vmul.f32 %v5036, %v5111
  %v5114 = vmul.f32 %v5037, %v5111
  %v5115 = vmul.f32 %v5038, %v5111
  %v5116 = vmul.f32 %v5039, %v5111
  %v5117 = vmul.f32 %v5040, %v5111
  %v5118 = vmul.f32 %v5041, %v5111
  %v5119 = vmul.f32 %v5042, %v5111
  %v5120 = vmul.f32 %v5043, %v5111
  %v5121 = vmul.f32 %v5044, %v5111
  %v5122 = vmul.f32 %v5045, %v5111
  %v5123 = vmul.f32 %v5046, %v5111
  %v5124 = vmul.f32 %v5047, %v5111
  %v5125 = vmul.f32 %v5048, %v5111
  %v5126 = vmul.f32 %v5049, %v5111
  %v5127 = vmul.f32 %v5050, %v5111
  %v5128 = vmul.f32 %v5051, %v5111
  %v5129 = vmul.f32 %v5052, %v5111
  %v5130 = vmul.f32 %v5053, %v5111
  %v5131 = vmul.f32 %v5054, %v5111
  %v5132 = vmul.f32 %v5055, %v5111
  %v5133 = vmul.f32 %v5056, %v5111
  %v5134 = vmul.f32 %v5057, %v5111
  %v5135 = vmul.f32 %v5058, %v5111
  %v5136 = vmul.f32 %v5059, %v5111
  %v5137 = vmul.f32 %v5060, %v5111
  %v5138 = vmul.f32 %v5061, %v5111
  %v5139 = vmul.f32 %v5062, %v5111
  %v5140 = vmul.f32 %v5063, %v5111
  %v5141 = vmul.f32 %v5064, %v5111
  %v5142 = vmul.f32 %v5065, %v5111
  %v5143 = vmul.f32 %v5066, %v5111
  %v5144 = vmul.f32 %v5067, %v5111
  %v5145 = vmul.f32 %v5068, %v5111
  %v5146 = vmul.f32 %v5069, %v5111
  %v5147 = vmul.f32 %v5070, %v5111
  %v5148 = vmul.f32 %v5071, %v5111
  %v5149 = vmul.f32 %v5072, %v5111
  %v5150 = vmul.f32 %v5073, %v5111
  %v5151 = vmul.f32 %v5074, %v5111
  %v5152 = vmul.f32 %v5075, %v5111
  %v5153 = vmul.f32 %v5076, %v5111
  %v5154 = vmul.f32 %v5077, %v5111
  %v5155 = vmul.f32 %v5078, %v5111
  %v5156 = vmul.f32 %v5079, %v5111
  %v5157 = vmul.f32 %v5080, %v5111
  %v5158 = vmul.f32 %v5081, %v5111
  %v5159 = vmul.f32 %v5082, %v5111
  %v5160 = vmul.f32 %v5083, %v5111
  %v5161 = vmul.f32 %v5084, %v5111
  %v5162 = vmul.f32 %v5085, %v5111
  %v5163 = vmul.f32 %v5086, %v5111
  %v5164 = vmul.f32 %v5087, %v5111
  %v5165 = vmul.f32 %v5088, %v5111
  %v5166 = vmul.f32 %v5089, %v5111
  %v5167 = vmul.f32 %v5090, %v5111
  %v5168 = vmul.f32 %v5091, %v5111
  %v5169 = vmul.f32 %v5092, %v5111
  %v5170 = vmul.f32 %v5093, %v5111
  %v5171 = vmul.f32 %v5094, %v5111
  %v5172 = vmul.f32 %v5095, %v5111
  %v5173 = vmul.f32 %v5096, %v5111
  %v5174 = vmul.f32 %v5097, %v5111
  %v5175 = vmul.f32 %v5098, %v5111
  %v5176 = vmul.f32 %v5099, %v5111
  %v5177 = vmul.f32 %v5100, %v5111
  %v5178 = vmul.f32 %v5101, %v5111
  %v5179 = vmul.f32 %v5102, %v5111
  %v5180 = vmul.f32 %v5103, %v5111
  %v5181 = vmul.f32 %v5104, %v5111
  %v5182 = vmul.f32 %v5105, %v5111
  %v5183 = vmul.f32 %v5106, %v5111
  %v5184 = vadd.f32 %v4963, %v5112
  %v5185 = vadd.f32 %v4964, %v5113
  %v5186 = vadd.f32 %v4965, %v5114
  %v5187 = vadd.f32 %v4966, %v5115
  %v5188 = vadd.f32 %v4967, %v5116
  %v5189 = vadd.f32 %v4968, %v5117
  %v5190 = vadd.f32 %v4969, %v5118
  %v5191 = vadd.f32 %v4970, %v5119
  %v5192 = vadd.f32 %v4971, %v5120
  %v5193 = vadd.f32 %v4972, %v5121
  %v5194 = vadd.f32 %v4973, %v5122
  %v5195 = vadd.f32 %v4974, %v5123
  %v5196 = vadd.f32 %v4975, %v5124
  %v5197 = vadd.f32 %v4976, %v5125
  %v5198 = vadd.f32 %v4977, %v5126
  %v5199 = vadd.f32 %v4978, %v5127
  %v5200 = vadd.f32 %v4979, %v5128
  %v5201 = vadd.f32 %v4980, %v5129
  %v5202 = vadd.f32 %v4981, %v5130
  %v5203 = vadd.f32 %v4982, %v5131
  %v5204 = vadd.f32 %v4983, %v5132
  %v5205 = vadd.f32 %v4984, %v5133
  %v5206 = vadd.f32 %v4985, %v5134
  %v5207 = vadd.f32 %v4986, %v5135
  %v5208 = vadd.f32 %v4987, %v5136
  %v5209 = vadd.f32 %v4988, %v5137
  %v5210 = vadd.f32 %v4989, %v5138
  %v5211 = vadd.f32 %v4990, %v5139
  %v5212 = vadd.f32 %v4991, %v5140
  %v5213 = vadd.f32 %v4992, %v5141
  %v5214 = vadd.f32 %v4993, %v5142
  %v5215 = vadd.f32 %v4994, %v5143
  %v5216 = vadd.f32 %v4995, %v5144
  %v5217 = vadd.f32 %v4996, %v5145
  %v5218 = vadd.f32 %v4997, %v5146
  %v5219 = vadd.f32 %v4998, %v5147
  %v5220 = vadd.f32 %v4999, %v5148
  %v5221 = vadd.f32 %v5000, %v5149
  %v5222 = vadd.f32 %v5001, %v5150
  %v5223 = vadd.f32 %v5002, %v5151
  %v5224 = vadd.f32 %v5003, %v5152
  %v5225 = vadd.f32 %v5004, %v5153
  %v5226 = vadd.f32 %v5005, %v5154
  %v5227 = vadd.f32 %v5006, %v5155
  %v5228 = vadd.f32 %v5007, %v5156
  %v5229 = vadd.f32 %v5008, %v5157
  %v5230 = vadd.f32 %v5009, %v5158
  %v5231 = vadd.f32 %v5010, %v5159
  %v5232 = vadd.f32 %v5011, %v5160
  %v5233 = vadd.f32 %v5012, %v5161
  %v5234 = vadd.f32 %v5013, %v5162
  %v5235 = vadd.f32 %v5014, %v5163
  %v5236 = vadd.f32 %v5015, %v5164
  %v5237 = vadd.f32 %v5016, %v5165
  %v5238 = vadd.f32 %v5017, %v5166
  %v5239 = vadd.f32 %v5018, %v5167
  %v5240 = vadd.f32 %v5019, %v5168
  %v5241 = vadd.f32 %v5020, %v5169
  %v5242 = vadd.f32 %v5021, %v5170
  %v5243 = vadd.f32 %v5022, %v5171
  %v5244 = vadd.f32 %v5023, %v5172
  %v5245 = vadd.f32 %v5024, %v5173
  %v5246 = vadd.f32 %v5025, %v5174
  %v5247 = vadd.f32 %v5026, %v5175
  %v5248 = vadd.f32 %v5027, %v5176
  %v5249 = vadd.f32 %v5028, %v5177
  %v5250 = vadd.f32 %v5029, %v5178
  %v5251 = vadd.f32 %v5030, %v5179
  %v5252 = vadd.f32 %v5031, %v5180
  %v5253 = vadd.f32 %v5032, %v5181
  %v5254 = vadd.f32 %v5033, %v5182
  %v5255 = vadd.f32 %v5034, %v5183
  %v5256 = vld [vmem:[%s4371 + $0x4] sm:$0xff]
  %v5257 = vld [vmem:[%s4371 + $0xc] sm:$0xff]
  %v5258 = vld [vmem:[%s4371 + $0x14] sm:$0xff]
  %v5259 = vld [vmem:[%s4371 + $0x24] sm:$0xff]
  %v5260 = vld [vmem:[%s4371 + $0x2c] sm:$0xff]
  %v5261 = vld [vmem:[%s4371 + $0x34] sm:$0xff]
  %v5262 = vld [vmem:[%s4371 + $0x44] sm:$0xff]
  %v5263 = vld [vmem:[%s4371 + $0x4c] sm:$0xff]
  %v5264 = vld [vmem:[%s4371 + $0x54] sm:$0xff]
  %v5265 = vld [vmem:[%s4371 + $0x64] sm:$0xff]
  %v5266 = vld [vmem:[%s4371 + $0x6c] sm:$0xff]
  %v5267 = vld [vmem:[%s4371 + $0x74] sm:$0xff]
  %v5268 = vld [vmem:[%s4371 + $0x84] sm:$0xff]
  %v5269 = vld [vmem:[%s4371 + $0x8c] sm:$0xff]
  %v5270 = vld [vmem:[%s4371 + $0x94] sm:$0xff]
  %v5271 = vld [vmem:[%s4371 + $0xa4] sm:$0xff]
  %v5272 = vld [vmem:[%s4371 + $0xac] sm:$0xff]
  %v5273 = vld [vmem:[%s4371 + $0xb4] sm:$0xff]
  %v5274 = vld [vmem:[%s4371 + $0xc4] sm:$0xff]
  %v5275 = vld [vmem:[%s4371 + $0xcc] sm:$0xff]
  %v5276 = vld [vmem:[%s4371 + $0xd4] sm:$0xff]
  %v5277 = vld [vmem:[%s4371 + $0xe4] sm:$0xff]
  %v5278 = vld [vmem:[%s4371 + $0xec] sm:$0xff]
  %v5279 = vld [vmem:[%s4371 + $0xf4] sm:$0xff]
  %v5280 = vld [vmem:[%s4371 + $0x104] sm:$0xff]
  %v5281 = vld [vmem:[%s4371 + $0x10c] sm:$0xff]
  %v5282 = vld [vmem:[%s4371 + $0x114] sm:$0xff]
  %v5283 = vld [vmem:[%s4371 + $0x124] sm:$0xff]
  %v5284 = vld [vmem:[%s4371 + $0x12c] sm:$0xff]
  %v5285 = vld [vmem:[%s4371 + $0x134] sm:$0xff]
  %v5286 = vld [vmem:[%s4371 + $0x144] sm:$0xff]
  %v5287 = vld [vmem:[%s4371 + $0x14c] sm:$0xff]
  %v5288 = vld [vmem:[%s4371 + $0x154] sm:$0xff]
  %v5289 = vld [vmem:[%s4371 + $0x164] sm:$0xff]
  %v5290 = vld [vmem:[%s4371 + $0x16c] sm:$0xff]
  %v5291 = vld [vmem:[%s4371 + $0x174] sm:$0xff]
  %v5292 = vld [vmem:[%s4371 + $0x184] sm:$0xff]
  %v5293 = vld [vmem:[%s4371 + $0x18c] sm:$0xff]
  %v5294 = vld [vmem:[%s4371 + $0x194] sm:$0xff]
  %v5295 = vld [vmem:[%s4371 + $0x1a4] sm:$0xff]
  %v5296 = vld [vmem:[%s4371 + $0x1ac] sm:$0xff]
  %v5297 = vld [vmem:[%s4371 + $0x1b4] sm:$0xff]
  %v5298 = vld [vmem:[%s4371 + $0x1c4] sm:$0xff]
  %v5299 = vld [vmem:[%s4371 + $0x1cc] sm:$0xff]
  %v5300 = vld [vmem:[%s4371 + $0x1d4] sm:$0xff]
  %v5301 = vld [vmem:[%s4371 + $0x1e4] sm:$0xff]
  %v5302 = vld [vmem:[%s4371 + $0x1ec] sm:$0xff]
  %v5303 = vld [vmem:[%s4371 + $0x1f4] sm:$0xff]
  %v5304 = vld [vmem:[%s4371 + $0x204] sm:$0xff]
  %v5305 = vld [vmem:[%s4371 + $0x20c] sm:$0xff]
  %v5306 = vld [vmem:[%s4371 + $0x214] sm:$0xff]
  %v5307 = vld [vmem:[%s4371 + $0x224] sm:$0xff]
  %v5308 = vld [vmem:[%s4371 + $0x22c] sm:$0xff]
  %v5309 = vld [vmem:[%s4371 + $0x234] sm:$0xff]
  %v5310 = vld [vmem:[%s4371 + $0x244] sm:$0xff]
  %v5311 = vld [vmem:[%s4371 + $0x24c] sm:$0xff]
  %v5312 = vld [vmem:[%s4371 + $0x254] sm:$0xff]
  %v5313 = vld [vmem:[%s4371 + $0x264] sm:$0xff]
  %v5314 = vld [vmem:[%s4371 + $0x26c] sm:$0xff]
  %v5315 = vld [vmem:[%s4371 + $0x274] sm:$0xff]
  %v5316 = vld [vmem:[%s4371 + $0x284] sm:$0xff]
  %v5317 = vld [vmem:[%s4371 + $0x28c] sm:$0xff]
  %v5318 = vld [vmem:[%s4371 + $0x294] sm:$0xff]
  %v5319 = vld [vmem:[%s4371 + $0x2a4] sm:$0xff]
  %v5320 = vld [vmem:[%s4371 + $0x2ac] sm:$0xff]
  %v5321 = vld [vmem:[%s4371 + $0x2b4] sm:$0xff]
  %v5322 = vld [vmem:[%s4371 + $0x2c4] sm:$0xff]
  %v5323 = vld [vmem:[%s4371 + $0x2cc] sm:$0xff]
  %v5324 = vld [vmem:[%s4371 + $0x2d4] sm:$0xff]
  %v5325 = vld [vmem:[%s4371 + $0x2e4] sm:$0xff]
  %v5326 = vld [vmem:[%s4371 + $0x2ec] sm:$0xff]
  %v5327 = vld [vmem:[%s4371 + $0x2f4] sm:$0xff]
  %v5328 = vld [vmem:[%s1 + $0x18] sm:$0x1]
  %v5329 = vlaneseq
  %v5330 = vshrl.u32 %v5329, 7
  %v5331 = vsub.s32 0, %v5330
  %v5332 = vrot.slane %v5328, %v5331
  %v5333 = vmul.f32 %v5256, %v5332
  %v5334 = vmul.f32 %v5257, %v5332
  %v5335 = vmul.f32 %v5258, %v5332
  %v5336 = vmul.f32 %v5259, %v5332
  %v5337 = vmul.f32 %v5260, %v5332
  %v5338 = vmul.f32 %v5261, %v5332
  %v5339 = vmul.f32 %v5262, %v5332
  %v5340 = vmul.f32 %v5263, %v5332
  %v5341 = vmul.f32 %v5264, %v5332
  %v5342 = vmul.f32 %v5265, %v5332
  %v5343 = vmul.f32 %v5266, %v5332
  %v5344 = vmul.f32 %v5267, %v5332
  %v5345 = vmul.f32 %v5268, %v5332
  %v5346 = vmul.f32 %v5269, %v5332
  %v5347 = vmul.f32 %v5270, %v5332
  %v5348 = vmul.f32 %v5271, %v5332
  %v5349 = vmul.f32 %v5272, %v5332
  %v5350 = vmul.f32 %v5273, %v5332
  %v5351 = vmul.f32 %v5274, %v5332
  %v5352 = vmul.f32 %v5275, %v5332
  %v5353 = vmul.f32 %v5276, %v5332
  %v5354 = vmul.f32 %v5277, %v5332
  %v5355 = vmul.f32 %v5278, %v5332
  %v5356 = vmul.f32 %v5279, %v5332
  %v5357 = vmul.f32 %v5280, %v5332
  %v5358 = vmul.f32 %v5281, %v5332
  %v5359 = vmul.f32 %v5282, %v5332
  %v5360 = vmul.f32 %v5283, %v5332
  %v5361 = vmul.f32 %v5284, %v5332
  %v5362 = vmul.f32 %v5285, %v5332
  %v5363 = vmul.f32 %v5286, %v5332
  %v5364 = vmul.f32 %v5287, %v5332
  %v5365 = vmul.f32 %v5288, %v5332
  %v5366 = vmul.f32 %v5289, %v5332
  %v5367 = vmul.f32 %v5290, %v5332
  %v5368 = vmul.f32 %v5291, %v5332
  %v5369 = vmul.f32 %v5292, %v5332
  %v5370 = vmul.f32 %v5293, %v5332
  %v5371 = vmul.f32 %v5294, %v5332
  %v5372 = vmul.f32 %v5295, %v5332
  %v5373 = vmul.f32 %v5296, %v5332
  %v5374 = vmul.f32 %v5297, %v5332
  %v5375 = vmul.f32 %v5298, %v5332
  %v5376 = vmul.f32 %v5299, %v5332
  %v5377 = vmul.f32 %v5300, %v5332
  %v5378 = vmul.f32 %v5301, %v5332
  %v5379 = vmul.f32 %v5302, %v5332
  %v5380 = vmul.f32 %v5303, %v5332
  %v5381 = vmul.f32 %v5304, %v5332
  %v5382 = vmul.f32 %v5305, %v5332
  %v5383 = vmul.f32 %v5306, %v5332
  %v5384 = vmul.f32 %v5307, %v5332
  %v5385 = vmul.f32 %v5308, %v5332
  %v5386 = vmul.f32 %v5309, %v5332
  %v5387 = vmul.f32 %v5310, %v5332
  %v5388 = vmul.f32 %v5311, %v5332
  %v5389 = vmul.f32 %v5312, %v5332
  %v5390 = vmul.f32 %v5313, %v5332
  %v5391 = vmul.f32 %v5314, %v5332
  %v5392 = vmul.f32 %v5315, %v5332
  %v5393 = vmul.f32 %v5316, %v5332
  %v5394 = vmul.f32 %v5317, %v5332
  %v5395 = vmul.f32 %v5318, %v5332
  %v5396 = vmul.f32 %v5319, %v5332
  %v5397 = vmul.f32 %v5320, %v5332
  %v5398 = vmul.f32 %v5321, %v5332
  %v5399 = vmul.f32 %v5322, %v5332
  %v5400 = vmul.f32 %v5323, %v5332
  %v5401 = vmul.f32 %v5324, %v5332
  %v5402 = vmul.f32 %v5325, %v5332
  %v5403 = vmul.f32 %v5326, %v5332
  %v5404 = vmul.f32 %v5327, %v5332
  %v5405 = vadd.f32 %v5184, %v5333
  %v5406 = vadd.f32 %v5185, %v5334
  %v5407 = vadd.f32 %v5186, %v5335
  %v5408 = vadd.f32 %v5187, %v5336
  %v5409 = vadd.f32 %v5188, %v5337
  %v5410 = vadd.f32 %v5189, %v5338
  %v5411 = vadd.f32 %v5190, %v5339
  %v5412 = vadd.f32 %v5191, %v5340
  %v5413 = vadd.f32 %v5192, %v5341
  %v5414 = vadd.f32 %v5193, %v5342
  %v5415 = vadd.f32 %v5194, %v5343
  %v5416 = vadd.f32 %v5195, %v5344
  %v5417 = vadd.f32 %v5196, %v5345
  %v5418 = vadd.f32 %v5197, %v5346
  %v5419 = vadd.f32 %v5198, %v5347
  %v5420 = vadd.f32 %v5199, %v5348
  %v5421 = vadd.f32 %v5200, %v5349
  %v5422 = vadd.f32 %v5201, %v5350
  %v5423 = vadd.f32 %v5202, %v5351
  %v5424 = vadd.f32 %v5203, %v5352
  %v5425 = vadd.f32 %v5204, %v5353
  %v5426 = vadd.f32 %v5205, %v5354
  %v5427 = vadd.f32 %v5206, %v5355
  %v5428 = vadd.f32 %v5207, %v5356
  %v5429 = vadd.f32 %v5208, %v5357
  %v5430 = vadd.f32 %v5209, %v5358
  %v5431 = vadd.f32 %v5210, %v5359
  %v5432 = vadd.f32 %v5211, %v5360
  %v5433 = vadd.f32 %v5212, %v5361
  %v5434 = vadd.f32 %v5213, %v5362
  %v5435 = vadd.f32 %v5214, %v5363
  %v5436 = vadd.f32 %v5215, %v5364
  %v5437 = vadd.f32 %v5216, %v5365
  %v5438 = vadd.f32 %v5217, %v5366
  %v5439 = vadd.f32 %v5218, %v5367
  %v5440 = vadd.f32 %v5219, %v5368
  %v5441 = vadd.f32 %v5220, %v5369
  %v5442 = vadd.f32 %v5221, %v5370
  %v5443 = vadd.f32 %v5222, %v5371
  %v5444 = vadd.f32 %v5223, %v5372
  %v5445 = vadd.f32 %v5224, %v5373
  %v5446 = vadd.f32 %v5225, %v5374
  %v5447 = vadd.f32 %v5226, %v5375
  %v5448 = vadd.f32 %v5227, %v5376
  %v5449 = vadd.f32 %v5228, %v5377
  %v5450 = vadd.f32 %v5229, %v5378
  %v5451 = vadd.f32 %v5230, %v5379
  %v5452 = vadd.f32 %v5231, %v5380
  %v5453 = vadd.f32 %v5232, %v5381
  %v5454 = vadd.f32 %v5233, %v5382
  %v5455 = vadd.f32 %v5234, %v5383
  %v5456 = vadd.f32 %v5235, %v5384
  %v5457 = vadd.f32 %v5236, %v5385
  %v5458 = vadd.f32 %v5237, %v5386
  %v5459 = vadd.f32 %v5238, %v5387
  %v5460 = vadd.f32 %v5239, %v5388
  %v5461 = vadd.f32 %v5240, %v5389
  %v5462 = vadd.f32 %v5241, %v5390
  %v5463 = vadd.f32 %v5242, %v5391
  %v5464 = vadd.f32 %v5243, %v5392
  %v5465 = vadd.f32 %v5244, %v5393
  %v5466 = vadd.f32 %v5245, %v5394
  %v5467 = vadd.f32 %v5246, %v5395
  %v5468 = vadd.f32 %v5247, %v5396
  %v5469 = vadd.f32 %v5248, %v5397
  %v5470 = vadd.f32 %v5249, %v5398
  %v5471 = vadd.f32 %v5250, %v5399
  %v5472 = vadd.f32 %v5251, %v5400
  %v5473 = vadd.f32 %v5252, %v5401
  %v5474 = vadd.f32 %v5253, %v5402
  %v5475 = vadd.f32 %v5254, %v5403
  %v5476 = vadd.f32 %v5255, %v5404
  %v5477 = vld [vmem:[%s2] sm:$0x1]
  %v5479 = vlaneseq
  %v5480 = vshrl.u32 %v5479, 7
  %v5481 = vsub.s32 0, %v5480
  %v5482 = vrot.slane %v5477, %v5481
  %v5484 = vadd.f32 %v5405, %v5482
  %v5485 = vadd.f32 %v5406, %v5482
  %v5486 = vadd.f32 %v5407, %v5482
  %v5487 = vadd.f32 %v5408, %v5482
  %v5488 = vadd.f32 %v5409, %v5482
  %v5489 = vadd.f32 %v5410, %v5482
  %v5490 = vadd.f32 %v5411, %v5482
  %v5491 = vadd.f32 %v5412, %v5482
  %v5492 = vadd.f32 %v5413, %v5482
  %v5493 = vadd.f32 %v5414, %v5482
  %v5494 = vadd.f32 %v5415, %v5482
  %v5495 = vadd.f32 %v5416, %v5482
  %v5496 = vadd.f32 %v5417, %v5482
  %v5497 = vadd.f32 %v5418, %v5482
  %v5498 = vadd.f32 %v5419, %v5482
  %v5499 = vadd.f32 %v5420, %v5482
  %v5500 = vadd.f32 %v5421, %v5482
  %v5501 = vadd.f32 %v5422, %v5482
  %v5502 = vadd.f32 %v5423, %v5482
  %v5503 = vadd.f32 %v5424, %v5482
  %v5504 = vadd.f32 %v5425, %v5482
  %v5505 = vadd.f32 %v5426, %v5482
  %v5506 = vadd.f32 %v5427, %v5482
  %v5507 = vadd.f32 %v5428, %v5482
  %v5508 = vadd.f32 %v5429, %v5482
  %v5509 = vadd.f32 %v5430, %v5482
  %v5510 = vadd.f32 %v5431, %v5482
  %v5511 = vadd.f32 %v5432, %v5482
  %v5512 = vadd.f32 %v5433, %v5482
  %v5513 = vadd.f32 %v5434, %v5482
  %v5514 = vadd.f32 %v5435, %v5482
  %v5515 = vadd.f32 %v5436, %v5482
  %v5516 = vadd.f32 %v5437, %v5482
  %v5517 = vadd.f32 %v5438, %v5482
  %v5518 = vadd.f32 %v5439, %v5482
  %v5519 = vadd.f32 %v5440, %v5482
  %v5520 = vadd.f32 %v5441, %v5482
  %v5521 = vadd.f32 %v5442, %v5482
  %v5522 = vadd.f32 %v5443, %v5482
  %v5523 = vadd.f32 %v5444, %v5482
  %v5524 = vadd.f32 %v5445, %v5482
  %v5525 = vadd.f32 %v5446, %v5482
  %v5526 = vadd.f32 %v5447, %v5482
  %v5527 = vadd.f32 %v5448, %v5482
  %v5528 = vadd.f32 %v5449, %v5482
  %v5529 = vadd.f32 %v5450, %v5482
  %v5530 = vadd.f32 %v5451, %v5482
  %v5531 = vadd.f32 %v5452, %v5482
  %v5532 = vadd.f32 %v5453, %v5482
  %v5533 = vadd.f32 %v5454, %v5482
  %v5534 = vadd.f32 %v5455, %v5482
  %v5535 = vadd.f32 %v5456, %v5482
  %v5536 = vadd.f32 %v5457, %v5482
  %v5537 = vadd.f32 %v5458, %v5482
  %v5538 = vadd.f32 %v5459, %v5482
  %v5539 = vadd.f32 %v5460, %v5482
  %v5540 = vadd.f32 %v5461, %v5482
  %v5541 = vadd.f32 %v5462, %v5482
  %v5542 = vadd.f32 %v5463, %v5482
  %v5543 = vadd.f32 %v5464, %v5482
  %v5544 = vadd.f32 %v5465, %v5482
  %v5545 = vadd.f32 %v5466, %v5482
  %v5546 = vadd.f32 %v5467, %v5482
  %v5547 = vadd.f32 %v5468, %v5482
  %v5548 = vadd.f32 %v5469, %v5482
  %v5549 = vadd.f32 %v5470, %v5482
  %v5550 = vadd.f32 %v5471, %v5482
  %v5551 = vadd.f32 %v5472, %v5482
  %v5552 = vadd.f32 %v5473, %v5482
  %v5553 = vadd.f32 %v5474, %v5482
  %v5554 = vadd.f32 %v5475, %v5482
  %v5555 = vadd.f32 %v5476, %v5482
  %v5556 = vmax.f32 %v5484, %v5487
  %v5557 = vmax.f32 %v5485, %v5488
  %v5558 = vmax.f32 %v5486, %v5489
  %v5559 = vmax.f32 %v5490, %v5493
  %v5560 = vmax.f32 %v5491, %v5494
  %v5561 = vmax.f32 %v5492, %v5495
  %v5562 = vmax.f32 %v5496, %v5499
  %v5563 = vmax.f32 %v5497, %v5500
  %v5564 = vmax.f32 %v5498, %v5501
  %v5565 = vmax.f32 %v5502, %v5505
  %v5566 = vmax.f32 %v5503, %v5506
  %v5567 = vmax.f32 %v5504, %v5507
  %v5568 = vmax.f32 %v5508, %v5511
  %v5569 = vmax.f32 %v5509, %v5512
  %v5570 = vmax.f32 %v5510, %v5513
  %v5571 = vmax.f32 %v5514, %v5517
  %v5572 = vmax.f32 %v5515, %v5518
  %v5573 = vmax.f32 %v5516, %v5519
  %v5574 = vmax.f32 %v5520, %v5523
  %v5575 = vmax.f32 %v5521, %v5524
  %v5576 = vmax.f32 %v5522, %v5525
  %v5577 = vmax.f32 %v5526, %v5529
  %v5578 = vmax.f32 %v5527, %v5530
  %v5579 = vmax.f32 %v5528, %v5531
  %v5580 = vmax.f32 %v5532, %v5535
  %v5581 = vmax.f32 %v5533, %v5536
  %v5582 = vmax.f32 %v5534, %v5537
  %v5583 = vmax.f32 %v5538, %v5541
  %v5584 = vmax.f32 %v5539, %v5542
  %v5585 = vmax.f32 %v5540, %v5543
  %v5586 = vmax.f32 %v5544, %v5547
  %v5587 = vmax.f32 %v5545, %v5548
  %v5588 = vmax.f32 %v5546, %v5549
  %v5589 = vmax.f32 %v5550, %v5553
  %v5590 = vmax.f32 %v5551, %v5554
  %v5591 = vmax.f32 %v5552, %v5555
  %5592 = vst [vmem:[#allocation2] sm:$0xff] %v5556
  %5593 = vst [vmem:[#allocation2 + $0x8] sm:$0xff] %v5557
  %5594 = vst [vmem:[#allocation2 + $0x10] sm:$0xff] %v5558
  %5595 = vst [vmem:[#allocation2 + $0x18] sm:$0xff] %v5559
  %5596 = vst [vmem:[#allocation2 + $0x20] sm:$0xff] %v5560
  %5597 = vst [vmem:[#allocation2 + $0x28] sm:$0xff] %v5561
  %5598 = vst [vmem:[#allocation2 + $0x30] sm:$0xff] %v5562
  %5599 = vst [vmem:[#allocation2 + $0x38] sm:$0xff] %v5563
  %5600 = vst [vmem:[#allocation2 + $0x40] sm:$0xff] %v5564
  %5601 = vst [vmem:[#allocation2 + $0x48] sm:$0xff] %v5565
  %5602 = vst [vmem:[#allocation2 + $0x50] sm:$0xff] %v5566
  %5603 = vst [vmem:[#allocation2 + $0x58] sm:$0xff] %v5567
  %5604 = vst [vmem:[#allocation2 + $0x60] sm:$0xff] %v5568
  %5605 = vst [vmem:[#allocation2 + $0x68] sm:$0xff] %v5569
  %5606 = vst [vmem:[#allocation2 + $0x70] sm:$0xff] %v5570
  %5607 = vst [vmem:[#allocation2 + $0x78] sm:$0xff] %v5571
  %5608 = vst [vmem:[#allocation2 + $0x80] sm:$0xff] %v5572
  %5609 = vst [vmem:[#allocation2 + $0x88] sm:$0xff] %v5573
  %5610 = vst [vmem:[#allocation2 + $0x90] sm:$0xff] %v5574
  %5611 = vst [vmem:[#allocation2 + $0x98] sm:$0xff] %v5575
  %5612 = vst [vmem:[#allocation2 + $0xa0] sm:$0xff] %v5576
  %5613 = vst [vmem:[#allocation2 + $0xa8] sm:$0xff] %v5577
  %5614 = vst [vmem:[#allocation2 + $0xb0] sm:$0xff] %v5578
  %5615 = vst [vmem:[#allocation2 + $0xb8] sm:$0xff] %v5579
  %5616 = vst [vmem:[#allocation2 + $0xc0] sm:$0xff] %v5580
  %5617 = vst [vmem:[#allocation2 + $0xc8] sm:$0xff] %v5581
  %5618 = vst [vmem:[#allocation2 + $0xd0] sm:$0xff] %v5582
  %5619 = vst [vmem:[#allocation2 + $0xd8] sm:$0xff] %v5583
  %5620 = vst [vmem:[#allocation2 + $0xe0] sm:$0xff] %v5584
  %5621 = vst [vmem:[#allocation2 + $0xe8] sm:$0xff] %v5585
  %5622 = vst [vmem:[#allocation2 + $0xf0] sm:$0xff] %v5586
  %5623 = vst [vmem:[#allocation2 + $0xf8] sm:$0xff] %v5587
  %5624 = vst [vmem:[#allocation2 + $0x100] sm:$0xff] %v5588
  %5625 = vst [vmem:[#allocation2 + $0x108] sm:$0xff] %v5589
  %5626 = vst [vmem:[#allocation2 + $0x110] sm:$0xff] %v5590
  %5627 = vst [vmem:[#allocation2 + $0x118] sm:$0xff] %v5591
  %v5628 = vld [vmem:[#allocation2] ss:$2 sm:$0xff]
  %s5629 = scalar_lea.vmem [#allocation2], 16
  %v5630 = vld [vmem:[%s5629] ss:$2 sm:$0xf]
  %s5631 = scalar_lea.vmem [#allocation2], 24
  %v5632 = vld [vmem:[%s5631] ss:$2 sm:$0xff]
  %s5633 = scalar_lea.vmem [#allocation2], 40
  %v5634 = vld [vmem:[%s5633] ss:$2 sm:$0xf]
  %s5635 = scalar_lea.vmem [#allocation2], 48
  %v5636 = vld [vmem:[%s5635] ss:$2 sm:$0xff]
  %s5637 = scalar_lea.vmem [#allocation2], 64
  %v5638 = vld [vmem:[%s5637] ss:$2 sm:$0xf]
  %s5639 = scalar_lea.vmem [#allocation2], 72
  %v5640 = vld [vmem:[%s5639] ss:$2 sm:$0xff]
  %s5641 = scalar_lea.vmem [#allocation2], 88
  %v5642 = vld [vmem:[%s5641] ss:$2 sm:$0xf]
  %s5643 = scalar_lea.vmem [#allocation2], 96
  %v5644 = vld [vmem:[%s5643] ss:$2 sm:$0xff]
  %s5645 = scalar_lea.vmem [#allocation2], 112
  %v5646 = vld [vmem:[%s5645] ss:$2 sm:$0xf]
  %s5647 = scalar_lea.vmem [#allocation2], 120
  %v5648 = vld [vmem:[%s5647] ss:$2 sm:$0xff]
  %s5649 = scalar_lea.vmem [#allocation2], 136
  %v5650 = vld [vmem:[%s5649] ss:$2 sm:$0xf]
  %s5651 = scalar_lea.vmem [#allocation2], 144
  %v5652 = vld [vmem:[%s5651] ss:$2 sm:$0xff]
  %s5653 = scalar_lea.vmem [#allocation2], 160
  %v5654 = vld [vmem:[%s5653] ss:$2 sm:$0xf]
  %s5655 = scalar_lea.vmem [#allocation2], 168
  %v5656 = vld [vmem:[%s5655] ss:$2 sm:$0xff]
  %s5657 = scalar_lea.vmem [#allocation2], 184
  %v5658 = vld [vmem:[%s5657] ss:$2 sm:$0xf]
  %s5659 = scalar_lea.vmem [#allocation2], 192
  %v5660 = vld [vmem:[%s5659] ss:$2 sm:$0xff]
  %s5661 = scalar_lea.vmem [#allocation2], 208
  %v5662 = vld [vmem:[%s5661] ss:$2 sm:$0xf]
  %s5663 = scalar_lea.vmem [#allocation2], 216
  %v5664 = vld [vmem:[%s5663] ss:$2 sm:$0xff]
  %s5665 = scalar_lea.vmem [#allocation2], 232
  %v5666 = vld [vmem:[%s5665] ss:$2 sm:$0xf]
  %s5667 = scalar_lea.vmem [#allocation2], 240
  %v5668 = vld [vmem:[%s5667] ss:$2 sm:$0xff]
  %s5669 = scalar_lea.vmem [#allocation2], 256
  %v5670 = vld [vmem:[%s5669] ss:$2 sm:$0xf]
  %s5671 = scalar_lea.vmem [#allocation2], 264
  %v5672 = vld [vmem:[%s5671] ss:$2 sm:$0xff]
  %s5673 = scalar_lea.vmem [#allocation2], 280
  %v5674 = vld [vmem:[%s5673] ss:$2 sm:$0xf]
  %s5675 = scalar_lea.vmem [#allocation2], 1
  %v5676 = vld [vmem:[%s5675] ss:$2 sm:$0xff]
  %s5677 = scalar_lea.vmem [#allocation2], 17
  %v5678 = vld [vmem:[%s5677] ss:$2 sm:$0xf]
  %s5679 = scalar_lea.vmem [#allocation2], 25
  %v5680 = vld [vmem:[%s5679] ss:$2 sm:$0xff]
  %s5681 = scalar_lea.vmem [#allocation2], 41
  %v5682 = vld [vmem:[%s5681] ss:$2 sm:$0xf]
  %s5683 = scalar_lea.vmem [#allocation2], 49
  %v5684 = vld [vmem:[%s5683] ss:$2 sm:$0xff]
  %s5685 = scalar_lea.vmem [#allocation2], 65
  %v5686 = vld [vmem:[%s5685] ss:$2 sm:$0xf]
  %s5687 = scalar_lea.vmem [#allocation2], 73
  %v5688 = vld [vmem:[%s5687] ss:$2 sm:$0xff]
  %s5689 = scalar_lea.vmem [#allocation2], 89
  %v5690 = vld [vmem:[%s5689] ss:$2 sm:$0xf]
  %s5691 = scalar_lea.vmem [#allocation2], 97
  %v5692 = vld [vmem:[%s5691] ss:$2 sm:$0xff]
  %s5693 = scalar_lea.vmem [#allocation2], 113
  %v5694 = vld [vmem:[%s5693] ss:$2 sm:$0xf]
  %s5695 = scalar_lea.vmem [#allocation2], 121
  %v5696 = vld [vmem:[%s5695] ss:$2 sm:$0xff]
  %s5697 = scalar_lea.vmem [#allocation2], 137
  %v5698 = vld [vmem:[%s5697] ss:$2 sm:$0xf]
  %s5699 = scalar_lea.vmem [#allocation2], 145
  %v5700 = vld [vmem:[%s5699] ss:$2 sm:$0xff]
  %s5701 = scalar_lea.vmem [#allocation2], 161
  %v5702 = vld [vmem:[%s5701] ss:$2 sm:$0xf]
  %s5703 = scalar_lea.vmem [#allocation2], 169
  %v5704 = vld [vmem:[%s5703] ss:$2 sm:$0xff]
  %s5705 = scalar_lea.vmem [#allocation2], 185
  %v5706 = vld [vmem:[%s5705] ss:$2 sm:$0xf]
  %s5707 = scalar_lea.vmem [#allocation2], 193
  %v5708 = vld [vmem:[%s5707] ss:$2 sm:$0xff]
  %s5709 = scalar_lea.vmem [#allocation2], 209
  %v5710 = vld [vmem:[%s5709] ss:$2 sm:$0xf]
  %s5711 = scalar_lea.vmem [#allocation2], 217
  %v5712 = vld [vmem:[%s5711] ss:$2 sm:$0xff]
  %s5713 = scalar_lea.vmem [#allocation2], 233
  %v5714 = vld [vmem:[%s5713] ss:$2 sm:$0xf]
  %s5715 = scalar_lea.vmem [#allocation2], 241
  %v5716 = vld [vmem:[%s5715] ss:$2 sm:$0xff]
  %s5717 = scalar_lea.vmem [#allocation2], 257
  %v5718 = vld [vmem:[%s5717] ss:$2 sm:$0xf]
  %s5719 = scalar_lea.vmem [#allocation2], 265
  %v5720 = vld [vmem:[%s5719] ss:$2 sm:$0xff]
  %s5721 = scalar_lea.vmem [#allocation2], 281
  %v5722 = vld [vmem:[%s5721] ss:$2 sm:$0xf]
  %v5723 = vmax.f32 %v5628, %v5676
  %v5724 = vmax.f32 %v5630, %v5678
  %v5725 = vmax.f32 %v5632, %v5680
  %v5726 = vmax.f32 %v5634, %v5682
  %v5727 = vmax.f32 %v5636, %v5684
  %v5728 = vmax.f32 %v5638, %v5686
  %v5729 = vmax.f32 %v5640, %v5688
  %v5730 = vmax.f32 %v5642, %v5690
  %v5731 = vmax.f32 %v5644, %v5692
  %v5732 = vmax.f32 %v5646, %v5694
  %v5733 = vmax.f32 %v5648, %v5696
  %v5734 = vmax.f32 %v5650, %v5698
  %v5735 = vmax.f32 %v5652, %v5700
  %v5736 = vmax.f32 %v5654, %v5702
  %v5737 = vmax.f32 %v5656, %v5704
  %v5738 = vmax.f32 %v5658, %v5706
  %v5739 = vmax.f32 %v5660, %v5708
  %v5740 = vmax.f32 %v5662, %v5710
  %v5741 = vmax.f32 %v5664, %v5712
  %v5742 = vmax.f32 %v5666, %v5714
  %v5743 = vmax.f32 %v5668, %v5716
  %v5744 = vmax.f32 %v5670, %v5718
  %v5745 = vmax.f32 %v5672, %v5720
  %v5746 = vmax.f32 %v5674, %v5722
  %v5747 = vmax.f32 %v5723, 0.0
  %v5748 = vmax.f32 %v5724, 0.0
  %v5749 = vmax.f32 %v5725, 0.0
  %v5750 = vmax.f32 %v5726, 0.0
  %v5751 = vmax.f32 %v5727, 0.0
  %v5752 = vmax.f32 %v5728, 0.0
  %v5753 = vmax.f32 %v5729, 0.0
  %v5754 = vmax.f32 %v5730, 0.0
  %v5755 = vmax.f32 %v5731, 0.0
  %v5756 = vmax.f32 %v5732, 0.0
  %v5757 = vmax.f32 %v5733, 0.0
  %v5758 = vmax.f32 %v5734, 0.0
  %v5759 = vmax.f32 %v5735, 0.0
  %v5760 = vmax.f32 %v5736, 0.0
  %v5761 = vmax.f32 %v5737, 0.0
  %v5762 = vmax.f32 %v5738, 0.0
  %v5763 = vmax.f32 %v5739, 0.0
  %v5764 = vmax.f32 %v5740, 0.0
  %v5765 = vmax.f32 %v5741, 0.0
  %v5766 = vmax.f32 %v5742, 0.0
  %v5767 = vmax.f32 %v5743, 0.0
  %v5768 = vmax.f32 %v5744, 0.0
  %v5769 = vmax.f32 %v5745, 0.0
  %v5770 = vmax.f32 %v5746, 0.0
  %5771 = vst [vmem:[#allocation3] sm:$0xff] %v5747
  %5772 = vst [vmem:[#allocation3 + $0x8] sm:$0xf] %v5748
  %5773 = vst [vmem:[#allocation3 + $0x10] sm:$0xff] %v5749
  %5774 = vst [vmem:[#allocation3 + $0x18] sm:$0xf] %v5750
  %5775 = vst [vmem:[#allocation3 + $0x20] sm:$0xff] %v5751
  %5776 = vst [vmem:[#allocation3 + $0x28] sm:$0xf] %v5752
  %5777 = vst [vmem:[#allocation3 + $0x30] sm:$0xff] %v5753
  %5778 = vst [vmem:[#allocation3 + $0x38] sm:$0xf] %v5754
  %5779 = vst [vmem:[#allocation3 + $0x40] sm:$0xff] %v5755
  %5780 = vst [vmem:[#allocation3 + $0x48] sm:$0xf] %v5756
  %5781 = vst [vmem:[#allocation3 + $0x50] sm:$0xff] %v5757
  %5782 = vst [vmem:[#allocation3 + $0x58] sm:$0xf] %v5758
  %5783 = vst [vmem:[#allocation3 + $0x60] sm:$0xff] %v5759
  %5784 = vst [vmem:[#allocation3 + $0x68] sm:$0xf] %v5760
  %5785 = vst [vmem:[#allocation3 + $0x70] sm:$0xff] %v5761
  %5786 = vst [vmem:[#allocation3 + $0x78] sm:$0xf] %v5762
  %5787 = vst [vmem:[#allocation3 + $0x80] sm:$0xff] %v5763
  %5788 = vst [vmem:[#allocation3 + $0x88] sm:$0xf] %v5764
  %5789 = vst [vmem:[#allocation3 + $0x90] sm:$0xff] %v5765
  %5790 = vst [vmem:[#allocation3 + $0x98] sm:$0xf] %v5766
  %5791 = vst [vmem:[#allocation3 + $0xa0] sm:$0xff] %v5767
  %5792 = vst [vmem:[#allocation3 + $0xa8] sm:$0xf] %v5768
  %5793 = vst [vmem:[#allocation3 + $0xb0] sm:$0xff] %v5769
  %5794 = vst [vmem:[#allocation3 + $0xb8] sm:$0xf] %v5770
  %v5795 = vld [vmem:[#allocation3] sm:$0xff]
  %v5796 = vld [vmem:[#allocation3 + $0x10] sm:$0xff]
  %v5797 = vld [vmem:[#allocation3 + $0x20] sm:$0xff]
  %v5798 = vld [vmem:[#allocation3 + $0x30] sm:$0xff]
  %v5799 = vld [vmem:[#allocation3 + $0x40] sm:$0xff]
  %v5800 = vld [vmem:[#allocation3 + $0x50] sm:$0xff]
  %v5801 = vld [vmem:[#allocation3 + $0x60] sm:$0xff]
  %v5802 = vld [vmem:[#allocation3 + $0x70] sm:$0xff]
  %v5803 = vld [vmem:[%s3] sm:$0xff]
  %v5804 = vld [vmem:[%s3 + $0x8] sm:$0xff]
  %v5805 = vld [vmem:[%s3 + $0x10] sm:$0xff]
  %v5806 = vld [vmem:[%s3 + $0x18] sm:$0xff]
  %v5807 = vld [vmem:[%s3 + $0x20] sm:$0xff]
  %v5808 = vld [vmem:[%s3 + $0x28] sm:$0xff]
  %v5809 = vld [vmem:[%s3 + $0x30] sm:$0xff]
  %v5810 = vld [vmem:[%s3 + $0x38] sm:$0xff]
  %v5811 = vld [vmem:[%s3 + $0x40] sm:$0xff]
  %v5812 = vld [vmem:[%s3 + $0x48] sm:$0xff]
  %v5813 = vld [vmem:[%s3 + $0x50] sm:$0xff]
  %v5814 = vld [vmem:[%s3 + $0x58] sm:$0xff]
  %v5815 = vld [vmem:[%s3 + $0x60] sm:$0xff]
  %v5816 = vld [vmem:[%s3 + $0x68] sm:$0xff]
  %v5817 = vld [vmem:[%s3 + $0x70] sm:$0xff]
  %v5818 = vld [vmem:[%s3 + $0x78] sm:$0xff]
  %v5819 = vld [vmem:[#allocation3 + $0x1] sm:$0xff]
  %v5820 = vld [vmem:[#allocation3 + $0x11] sm:$0xff]
  %v5821 = vld [vmem:[#allocation3 + $0x21] sm:$0xff]
  %v5822 = vld [vmem:[#allocation3 + $0x31] sm:$0xff]
  %v5823 = vld [vmem:[#allocation3 + $0x41] sm:$0xff]
  %v5824 = vld [vmem:[#allocation3 + $0x51] sm:$0xff]
  %v5825 = vld [vmem:[#allocation3 + $0x61] sm:$0xff]
  %v5826 = vld [vmem:[#allocation3 + $0x71] sm:$0xff]
  %s5827 = scalar_lea.vmem %s3, 128
  %v5828 = vld [vmem:[%s5827] sm:$0xff]
  %v5829 = vld [vmem:[%s5827 + $0x8] sm:$0xff]
  %v5830 = vld [vmem:[%s5827 + $0x10] sm:$0xff]
  %v5831 = vld [vmem:[%s5827 + $0x18] sm:$0xff]
  %v5832 = vld [vmem:[%s5827 + $0x20] sm:$0xff]
  %v5833 = vld [vmem:[%s5827 + $0x28] sm:$0xff]
  %v5834 = vld [vmem:[%s5827 + $0x30] sm:$0xff]
  %v5835 = vld [vmem:[%s5827 + $0x38] sm:$0xff]
  %v5836 = vld [vmem:[%s5827 + $0x40] sm:$0xff]
  %v5837 = vld [vmem:[%s5827 + $0x48] sm:$0xff]
  %v5838 = vld [vmem:[%s5827 + $0x50] sm:$0xff]
  %v5839 = vld [vmem:[%s5827 + $0x58] sm:$0xff]
  %v5840 = vld [vmem:[%s5827 + $0x60] sm:$0xff]
  %v5841 = vld [vmem:[%s5827 + $0x68] sm:$0xff]
  %v5842 = vld [vmem:[%s5827 + $0x70] sm:$0xff]
  %v5843 = vld [vmem:[%s5827 + $0x78] sm:$0xff]
  %5844 = vmatprep.subr.mxu0 0.0
  %5845 = vmatpush1.msra.mxu0 %v5843
  %5846 = vmatprep.subr.mxu0 0.0
  %5847 = vmatpush1.msra.mxu0 %v5842
  %5848 = vmatprep.subr.mxu0 0.0
  %5849 = vmatpush1.msra.mxu0 %v5841
  %5850 = vmatprep.subr.mxu0 0.0
  %5851 = vmatpush1.msra.mxu0 %v5840
  %5852 = vmatprep.subr.mxu0 0.0
  %5853 = vmatpush1.msra.mxu0 %v5839
  %5854 = vmatprep.subr.mxu0 0.0
  %5855 = vmatpush1.msra.mxu0 %v5838
  %5856 = vmatprep.subr.mxu0 0.0
  %5857 = vmatpush1.msra.mxu0 %v5837
  %5858 = vmatprep.subr.mxu0 0.0
  %5859 = vmatpush1.msra.mxu0 %v5836
  %5860 = vmatprep.subr.mxu0 0.0
  %5861 = vmatpush1.msra.mxu0 %v5835
  %5862 = vmatprep.subr.mxu0 0.0
  %5863 = vmatpush1.msra.mxu0 %v5834
  %5864 = vmatprep.subr.mxu0 0.0
  %5865 = vmatpush1.msra.mxu0 %v5833
  %5866 = vmatprep.subr.mxu0 0.0
  %5867 = vmatpush1.msra.mxu0 %v5832
  %5868 = vmatprep.subr.mxu0 0.0
  %5869 = vmatpush1.msra.mxu0 %v5831
  %5870 = vmatprep.subr.mxu0 0.0
  %5871 = vmatpush1.msra.mxu0 %v5830
  %5872 = vmatprep.subr.mxu0 0.0
  %5873 = vmatpush1.msra.mxu0 %v5829
  %5874 = vmatprep.subr.mxu0 0.0
  %5875 = vmatpush1.msra.mxu0 %v5828
  %5876 = vmatprep.subr.mxu0 0.0
  %5877 = vmatpush2.msra.mxu0 0.0
  %5878 = vmatprep.subr.mxu0 0.0
  %5879 = vmatpush2.msra.mxu0 0.0
  %5880 = vmatprep.subr.mxu0 0.0
  %5881 = vmatpush2.msra.mxu0 0.0
  %5882 = vmatprep.subr.mxu0 0.0
  %5883 = vmatpush2.msra.mxu0 0.0
  %5884 = vmatprep.subr.mxu0 0.0
  %5885 = vmatpush2.msra.mxu0 0.0
  %5886 = vmatprep.subr.mxu0 0.0
  %5887 = vmatpush2.msra.mxu0 0.0
  %5888 = vmatprep.subr.mxu0 0.0
  %5889 = vmatpush2.msra.mxu0 0.0
  %5890 = vmatprep.subr.mxu0 0.0
  %5891 = vmatpush2.msra.mxu0 0.0
  %5892 = vmatprep.subr.mxu0 0.0
  %5893 = vmatpush2.msra.mxu0 0.0
  %5894 = vmatprep.subr.mxu0 0.0
  %5895 = vmatpush2.msra.mxu0 0.0
  %5896 = vmatprep.subr.mxu0 0.0
  %5897 = vmatpush2.msra.mxu0 0.0
  %5898 = vmatprep.subr.mxu0 0.0
  %5899 = vmatpush2.msra.mxu0 0.0
  %5900 = vmatprep.subr.mxu0 0.0
  %5901 = vmatpush2.msra.mxu0 0.0
  %5902 = vmatprep.subr.mxu0 0.0
  %5903 = vmatpush2.msra.mxu0 0.0
  %5904 = vmatprep.subr.mxu0 0.0
  %5905 = vmatpush2.msra.mxu0 0.0
  %5906 = vmatprep.subr.mxu0 0.0
  %5907 = vmatpush2.msra.mxu0 0.0
  %5908 = vmatprep.mubr.f32.mxu0 0.0
  %5909 = vmatmul.mubr.f32.gmra.mxu0 %v5819
  %v5910 = vpop.f32.mrf.mxu0
  %v5911 = vadd.f32 0.0, %v5910
  %v5912 = vpop.f32.mrf.mxu0
  %5913 = vmatprep.mubr.f32.mxu0 0.0
  %5914 = vmatmul.mubr.f32.gmra.mxu0 %v5820
  %v5915 = vpop.f32.mrf.mxu0
  %v5916 = vadd.f32 0.0, %v5915
  %v5917 = vpop.f32.mrf.mxu0
  %5918 = vmatprep.mubr.f32.mxu0 0.0
  %5919 = vmatmul.mubr.f32.gmra.mxu0 %v5821
  %v5920 = vpop.f32.mrf.mxu0
  %v5921 = vadd.f32 0.0, %v5920
  %v5922 = vpop.f32.mrf.mxu0
  %5923 = vmatprep.mubr.f32.mxu0 0.0
  %5924 = vmatmul.mubr.f32.gmra.mxu0 %v5822
  %v5925 = vpop.f32.mrf.mxu0
  %v5926 = vadd.f32 0.0, %v5925
  %v5927 = vpop.f32.mrf.mxu0
  %5928 = vmatprep.mubr.f32.mxu0 0.0
  %5929 = vmatmul.mubr.f32.gmra.mxu0 %v5823
  %v5930 = vpop.f32.mrf.mxu0
  %v5931 = vadd.f32 0.0, %v5930
  %v5932 = vpop.f32.mrf.mxu0
  %5933 = vmatprep.mubr.f32.mxu0 0.0
  %5934 = vmatmul.mubr.f32.gmra.mxu0 %v5824
  %v5935 = vpop.f32.mrf.mxu0
  %v5936 = vadd.f32 0.0, %v5935
  %v5937 = vpop.f32.mrf.mxu0
  %5938 = vmatprep.mubr.f32.mxu0 0.0
  %5939 = vmatmul.mubr.f32.gmra.mxu0 %v5825
  %v5940 = vpop.f32.mrf.mxu0
  %v5941 = vadd.f32 0.0, %v5940
  %v5942 = vpop.f32.mrf.mxu0
  %5943 = vmatprep.mubr.f32.mxu0 0.0
  %5944 = vmatmul.mubr.f32.gmra.mxu0 %v5826
  %v5945 = vpop.f32.mrf.mxu0
  %v5946 = vadd.f32 0.0, %v5945
  %v5947 = vpop.f32.mrf.mxu0
  %5948 = vdwg.mxu0
  %5949 = vmatprep.subr.mxu0 0.0
  %5950 = vmatpush1.msra.mxu0 %v5818
  %5951 = vmatprep.subr.mxu0 0.0
  %5952 = vmatpush1.msra.mxu0 %v5817
  %5953 = vmatprep.subr.mxu0 0.0
  %5954 = vmatpush1.msra.mxu0 %v5816
  %5955 = vmatprep.subr.mxu0 0.0
  %5956 = vmatpush1.msra.mxu0 %v5815
  %5957 = vmatprep.subr.mxu0 0.0
  %5958 = vmatpush1.msra.mxu0 %v5814
  %5959 = vmatprep.subr.mxu0 0.0
  %5960 = vmatpush1.msra.mxu0 %v5813
  %5961 = vmatprep.subr.mxu0 0.0
  %5962 = vmatpush1.msra.mxu0 %v5812
  %5963 = vmatprep.subr.mxu0 0.0
  %5964 = vmatpush1.msra.mxu0 %v5811
  %5965 = vmatprep.subr.mxu0 0.0
  %5966 = vmatpush1.msra.mxu0 %v5810
  %5967 = vmatprep.subr.mxu0 0.0
  %5968 = vmatpush1.msra.mxu0 %v5809
  %5969 = vmatprep.subr.mxu0 0.0
  %5970 = vmatpush1.msra.mxu0 %v5808
  %5971 = vmatprep.subr.mxu0 0.0
  %5972 = vmatpush1.msra.mxu0 %v5807
  %5973 = vmatprep.subr.mxu0 0.0
  %5974 = vmatpush1.msra.mxu0 %v5806
  %5975 = vmatprep.subr.mxu0 0.0
  %5976 = vmatpush1.msra.mxu0 %v5805
  %5977 = vmatprep.subr.mxu0 0.0
  %5978 = vmatpush1.msra.mxu0 %v5804
  %5979 = vmatprep.subr.mxu0 0.0
  %5980 = vmatpush1.msra.mxu0 %v5803
  %5981 = vmatprep.subr.mxu0 0.0
  %5982 = vmatpush2.msra.mxu0 0.0
  %5983 = vmatprep.subr.mxu0 0.0
  %5984 = vmatpush2.msra.mxu0 0.0
  %5985 = vmatprep.subr.mxu0 0.0
  %5986 = vmatpush2.msra.mxu0 0.0
  %5987 = vmatprep.subr.mxu0 0.0
  %5988 = vmatpush2.msra.mxu0 0.0
  %5989 = vmatprep.subr.mxu0 0.0
  %5990 = vmatpush2.msra.mxu0 0.0
  %5991 = vmatprep.subr.mxu0 0.0
  %5992 = vmatpush2.msra.mxu0 0.0
  %5993 = vmatprep.subr.mxu0 0.0
  %5994 = vmatpush2.msra.mxu0 0.0
  %5995 = vmatprep.subr.mxu0 0.0
  %5996 = vmatpush2.msra.mxu0 0.0
  %5997 = vmatprep.subr.mxu0 0.0
  %5998 = vmatpush2.msra.mxu0 0.0
  %5999 = vmatprep.subr.mxu0 0.0
  %6000 = vmatpush2.msra.mxu0 0.0
  %6001 = vmatprep.subr.mxu0 0.0
  %6002 = vmatpush2.msra.mxu0 0.0
  %6003 = vmatprep.subr.mxu0 0.0
  %6004 = vmatpush2.msra.mxu0 0.0
  %6005 = vmatprep.subr.mxu0 0.0
  %6006 = vmatpush2.msra.mxu0 0.0
  %6007 = vmatprep.subr.mxu0 0.0
  %6008 = vmatpush2.msra.mxu0 0.0
  %6009 = vmatprep.subr.mxu0 0.0
  %6010 = vmatpush2.msra.mxu0 0.0
  %6011 = vmatprep.subr.mxu0 0.0
  %6012 = vmatpush2.msra.mxu0 0.0
  %6013 = vmatprep.mubr.f32.mxu0 0.0
  %6014 = vmatmul.mubr.f32.gmra.mxu0 %v5795
  %v6015 = vpop.f32.mrf.mxu0
  %v6016 = vadd.f32 %v5911, %v6015
  %v6017 = vpop.f32.mrf.mxu0
  %6018 = vmatprep.mubr.f32.mxu0 0.0
  %6019 = vmatmul.mubr.f32.gmra.mxu0 %v5796
  %v6020 = vpop.f32.mrf.mxu0
  %v6021 = vadd.f32 %v5916, %v6020
  %v6022 = vpop.f32.mrf.mxu0
  %6023 = vmatprep.mubr.f32.mxu0 0.0
  %6024 = vmatmul.mubr.f32.gmra.mxu0 %v5797
  %v6025 = vpop.f32.mrf.mxu0
  %v6026 = vadd.f32 %v5921, %v6025
  %v6027 = vpop.f32.mrf.mxu0
  %6028 = vmatprep.mubr.f32.mxu0 0.0
  %6029 = vmatmul.mubr.f32.gmra.mxu0 %v5798
  %v6030 = vpop.f32.mrf.mxu0
  %v6031 = vadd.f32 %v5926, %v6030
  %v6032 = vpop.f32.mrf.mxu0
  %6033 = vmatprep.mubr.f32.mxu0 0.0
  %6034 = vmatmul.mubr.f32.gmra.mxu0 %v5799
  %v6035 = vpop.f32.mrf.mxu0
  %v6036 = vadd.f32 %v5931, %v6035
  %v6037 = vpop.f32.mrf.mxu0
  %6038 = vmatprep.mubr.f32.mxu0 0.0
  %6039 = vmatmul.mubr.f32.gmra.mxu0 %v5800
  %v6040 = vpop.f32.mrf.mxu0
  %v6041 = vadd.f32 %v5936, %v6040
  %v6042 = vpop.f32.mrf.mxu0
  %6043 = vmatprep.mubr.f32.mxu0 0.0
  %6044 = vmatmul.mubr.f32.gmra.mxu0 %v5801
  %v6045 = vpop.f32.mrf.mxu0
  %v6046 = vadd.f32 %v5941, %v6045
  %v6047 = vpop.f32.mrf.mxu0
  %6048 = vmatprep.mubr.f32.mxu0 0.0
  %6049 = vmatmul.mubr.f32.gmra.mxu0 %v5802
  %v6050 = vpop.f32.mrf.mxu0
  %v6051 = vadd.f32 %v5946, %v6050
  %v6052 = vpop.f32.mrf.mxu0
  %6053 = vdwg.mxu0
  %v6054 = vld [vmem:[#allocation3 + $0x2] sm:$0xff]
  %v6055 = vld [vmem:[#allocation3 + $0x12] sm:$0xff]
  %v6056 = vld [vmem:[#allocation3 + $0x22] sm:$0xff]
  %v6057 = vld [vmem:[#allocation3 + $0x32] sm:$0xff]
  %v6058 = vld [vmem:[#allocation3 + $0x42] sm:$0xff]
  %v6059 = vld [vmem:[#allocation3 + $0x52] sm:$0xff]
  %v6060 = vld [vmem:[#allocation3 + $0x62] sm:$0xff]
  %v6061 = vld [vmem:[#allocation3 + $0x72] sm:$0xff]
  %s6062 = scalar_lea.vmem %s3, 256
  %v6063 = vld [vmem:[%s6062] sm:$0xff]
  %v6064 = vld [vmem:[%s6062 + $0x8] sm:$0xff]
  %v6065 = vld [vmem:[%s6062 + $0x10] sm:$0xff]
  %v6066 = vld [vmem:[%s6062 + $0x18] sm:$0xff]
  %v6067 = vld [vmem:[%s6062 + $0x20] sm:$0xff]
  %v6068 = vld [vmem:[%s6062 + $0x28] sm:$0xff]
  %v6069 = vld [vmem:[%s6062 + $0x30] sm:$0xff]
  %v6070 = vld [vmem:[%s6062 + $0x38] sm:$0xff]
  %v6071 = vld [vmem:[%s6062 + $0x40] sm:$0xff]
  %v6072 = vld [vmem:[%s6062 + $0x48] sm:$0xff]
  %v6073 = vld [vmem:[%s6062 + $0x50] sm:$0xff]
  %v6074 = vld [vmem:[%s6062 + $0x58] sm:$0xff]
  %v6075 = vld [vmem:[%s6062 + $0x60] sm:$0xff]
  %v6076 = vld [vmem:[%s6062 + $0x68] sm:$0xff]
  %v6077 = vld [vmem:[%s6062 + $0x70] sm:$0xff]
  %v6078 = vld [vmem:[%s6062 + $0x78] sm:$0xff]
  %6079 = vmatprep.subr.mxu0 0.0
  %6080 = vmatpush1.msra.mxu0 %v6078
  %6081 = vmatprep.subr.mxu0 0.0
  %6082 = vmatpush1.msra.mxu0 %v6077
  %6083 = vmatprep.subr.mxu0 0.0
  %6084 = vmatpush1.msra.mxu0 %v6076
  %6085 = vmatprep.subr.mxu0 0.0
  %6086 = vmatpush1.msra.mxu0 %v6075
  %6087 = vmatprep.subr.mxu0 0.0
  %6088 = vmatpush1.msra.mxu0 %v6074
  %6089 = vmatprep.subr.mxu0 0.0
  %6090 = vmatpush1.msra.mxu0 %v6073
  %6091 = vmatprep.subr.mxu0 0.0
  %6092 = vmatpush1.msra.mxu0 %v6072
  %6093 = vmatprep.subr.mxu0 0.0
  %6094 = vmatpush1.msra.mxu0 %v6071
  %6095 = vmatprep.subr.mxu0 0.0
  %6096 = vmatpush1.msra.mxu0 %v6070
  %6097 = vmatprep.subr.mxu0 0.0
  %6098 = vmatpush1.msra.mxu0 %v6069
  %6099 = vmatprep.subr.mxu0 0.0
  %6100 = vmatpush1.msra.mxu0 %v6068
  %6101 = vmatprep.subr.mxu0 0.0
  %6102 = vmatpush1.msra.mxu0 %v6067
  %6103 = vmatprep.subr.mxu0 0.0
  %6104 = vmatpush1.msra.mxu0 %v6066
  %6105 = vmatprep.subr.mxu0 0.0
  %6106 = vmatpush1.msra.mxu0 %v6065
  %6107 = vmatprep.subr.mxu0 0.0
  %6108 = vmatpush1.msra.mxu0 %v6064
  %6109 = vmatprep.subr.mxu0 0.0
  %6110 = vmatpush1.msra.mxu0 %v6063
  %6111 = vmatprep.subr.mxu0 0.0
  %6112 = vmatpush2.msra.mxu0 0.0
  %6113 = vmatprep.subr.mxu0 0.0
  %6114 = vmatpush2.msra.mxu0 0.0
  %6115 = vmatprep.subr.mxu0 0.0
  %6116 = vmatpush2.msra.mxu0 0.0
  %6117 = vmatprep.subr.mxu0 0.0
  %6118 = vmatpush2.msra.mxu0 0.0
  %6119 = vmatprep.subr.mxu0 0.0
  %6120 = vmatpush2.msra.mxu0 0.0
  %6121 = vmatprep.subr.mxu0 0.0
  %6122 = vmatpush2.msra.mxu0 0.0
  %6123 = vmatprep.subr.mxu0 0.0
  %6124 = vmatpush2.msra.mxu0 0.0
  %6125 = vmatprep.subr.mxu0 0.0
  %6126 = vmatpush2.msra.mxu0 0.0
  %6127 = vmatprep.subr.mxu0 0.0
  %6128 = vmatpush2.msra.mxu0 0.0
  %6129 = vmatprep.subr.mxu0 0.0
  %6130 = vmatpush2.msra.mxu0 0.0
  %6131 = vmatprep.subr.mxu0 0.0
  %6132 = vmatpush2.msra.mxu0 0.0
  %6133 = vmatprep.subr.mxu0 0.0
  %6134 = vmatpush2.msra.mxu0 0.0
  %6135 = vmatprep.subr.mxu0 0.0
  %6136 = vmatpush2.msra.mxu0 0.0
  %6137 = vmatprep.subr.mxu0 0.0
  %6138 = vmatpush2.msra.mxu0 0.0
  %6139 = vmatprep.subr.mxu0 0.0
  %6140 = vmatpush2.msra.mxu0 0.0
  %6141 = vmatprep.subr.mxu0 0.0
  %6142 = vmatpush2.msra.mxu0 0.0
  %6143 = vmatprep.mubr.f32.mxu0 0.0
  %6144 = vmatmul.mubr.f32.gmra.mxu0 %v6054
  %v6145 = vpop.f32.mrf.mxu0
  %v6146 = vadd.f32 0.0, %v6145
  %v6147 = vpop.f32.mrf.mxu0
  %6148 = vmatprep.mubr.f32.mxu0 0.0
  %6149 = vmatmul.mubr.f32.gmra.mxu0 %v6055
  %v6150 = vpop.f32.mrf.mxu0
  %v6151 = vadd.f32 0.0, %v6150
  %v6152 = vpop.f32.mrf.mxu0
  %6153 = vmatprep.mubr.f32.mxu0 0.0
  %6154 = vmatmul.mubr.f32.gmra.mxu0 %v6056
  %v6155 = vpop.f32.mrf.mxu0
  %v6156 = vadd.f32 0.0, %v6155
  %v6157 = vpop.f32.mrf.mxu0
  %6158 = vmatprep.mubr.f32.mxu0 0.0
  %6159 = vmatmul.mubr.f32.gmra.mxu0 %v6057
  %v6160 = vpop.f32.mrf.mxu0
  %v6161 = vadd.f32 0.0, %v6160
  %v6162 = vpop.f32.mrf.mxu0
  %6163 = vmatprep.mubr.f32.mxu0 0.0
  %6164 = vmatmul.mubr.f32.gmra.mxu0 %v6058
  %v6165 = vpop.f32.mrf.mxu0
  %v6166 = vadd.f32 0.0, %v6165
  %v6167 = vpop.f32.mrf.mxu0
  %6168 = vmatprep.mubr.f32.mxu0 0.0
  %6169 = vmatmul.mubr.f32.gmra.mxu0 %v6059
  %v6170 = vpop.f32.mrf.mxu0
  %v6171 = vadd.f32 0.0, %v6170
  %v6172 = vpop.f32.mrf.mxu0
  %6173 = vmatprep.mubr.f32.mxu0 0.0
  %6174 = vmatmul.mubr.f32.gmra.mxu0 %v6060
  %v6175 = vpop.f32.mrf.mxu0
  %v6176 = vadd.f32 0.0, %v6175
  %v6177 = vpop.f32.mrf.mxu0
  %6178 = vmatprep.mubr.f32.mxu0 0.0
  %6179 = vmatmul.mubr.f32.gmra.mxu0 %v6061
  %v6180 = vpop.f32.mrf.mxu0
  %v6181 = vadd.f32 0.0, %v6180
  %v6182 = vpop.f32.mrf.mxu0
  %6183 = vdwg.mxu0
  %v6184 = vadd.f32 %v6016, %v6146
  %v6185 = vadd.f32 %v6021, %v6151
  %v6186 = vadd.f32 %v6026, %v6156
  %v6187 = vadd.f32 %v6031, %v6161
  %v6188 = vadd.f32 %v6036, %v6166
  %v6189 = vadd.f32 %v6041, %v6171
  %v6190 = vadd.f32 %v6046, %v6176
  %v6191 = vadd.f32 %v6051, %v6181
  %v6192 = vld [vmem:[#allocation3 + $0x3] sm:$0xff]
  %v6193 = vld [vmem:[#allocation3 + $0x13] sm:$0xff]
  %v6194 = vld [vmem:[#allocation3 + $0x23] sm:$0xff]
  %v6195 = vld [vmem:[#allocation3 + $0x33] sm:$0xff]
  %v6196 = vld [vmem:[#allocation3 + $0x43] sm:$0xff]
  %v6197 = vld [vmem:[#allocation3 + $0x53] sm:$0xff]
  %v6198 = vld [vmem:[#allocation3 + $0x63] sm:$0xff]
  %v6199 = vld [vmem:[#allocation3 + $0x73] sm:$0xff]
  %s6200 = scalar_lea.vmem %s3, 384
  %v6201 = vld [vmem:[%s6200] sm:$0xff]
  %v6202 = vld [vmem:[%s6200 + $0x8] sm:$0xff]
  %v6203 = vld [vmem:[%s6200 + $0x10] sm:$0xff]
  %v6204 = vld [vmem:[%s6200 + $0x18] sm:$0xff]
  %v6205 = vld [vmem:[%s6200 + $0x20] sm:$0xff]
  %v6206 = vld [vmem:[%s6200 + $0x28] sm:$0xff]
  %v6207 = vld [vmem:[%s6200 + $0x30] sm:$0xff]
  %v6208 = vld [vmem:[%s6200 + $0x38] sm:$0xff]
  %v6209 = vld [vmem:[%s6200 + $0x40] sm:$0xff]
  %v6210 = vld [vmem:[%s6200 + $0x48] sm:$0xff]
  %v6211 = vld [vmem:[%s6200 + $0x50] sm:$0xff]
  %v6212 = vld [vmem:[%s6200 + $0x58] sm:$0xff]
  %v6213 = vld [vmem:[%s6200 + $0x60] sm:$0xff]
  %v6214 = vld [vmem:[%s6200 + $0x68] sm:$0xff]
  %v6215 = vld [vmem:[%s6200 + $0x70] sm:$0xff]
  %v6216 = vld [vmem:[%s6200 + $0x78] sm:$0xff]
  %6217 = vmatprep.subr.mxu0 0.0
  %6218 = vmatpush1.msra.mxu0 %v6216
  %6219 = vmatprep.subr.mxu0 0.0
  %6220 = vmatpush1.msra.mxu0 %v6215
  %6221 = vmatprep.subr.mxu0 0.0
  %6222 = vmatpush1.msra.mxu0 %v6214
  %6223 = vmatprep.subr.mxu0 0.0
  %6224 = vmatpush1.msra.mxu0 %v6213
  %6225 = vmatprep.subr.mxu0 0.0
  %6226 = vmatpush1.msra.mxu0 %v6212
  %6227 = vmatprep.subr.mxu0 0.0
  %6228 = vmatpush1.msra.mxu0 %v6211
  %6229 = vmatprep.subr.mxu0 0.0
  %6230 = vmatpush1.msra.mxu0 %v6210
  %6231 = vmatprep.subr.mxu0 0.0
  %6232 = vmatpush1.msra.mxu0 %v6209
  %6233 = vmatprep.subr.mxu0 0.0
  %6234 = vmatpush1.msra.mxu0 %v6208
  %6235 = vmatprep.subr.mxu0 0.0
  %6236 = vmatpush1.msra.mxu0 %v6207
  %6237 = vmatprep.subr.mxu0 0.0
  %6238 = vmatpush1.msra.mxu0 %v6206
  %6239 = vmatprep.subr.mxu0 0.0
  %6240 = vmatpush1.msra.mxu0 %v6205
  %6241 = vmatprep.subr.mxu0 0.0
  %6242 = vmatpush1.msra.mxu0 %v6204
  %6243 = vmatprep.subr.mxu0 0.0
  %6244 = vmatpush1.msra.mxu0 %v6203
  %6245 = vmatprep.subr.mxu0 0.0
  %6246 = vmatpush1.msra.mxu0 %v6202
  %6247 = vmatprep.subr.mxu0 0.0
  %6248 = vmatpush1.msra.mxu0 %v6201
  %6249 = vmatprep.subr.mxu0 0.0
  %6250 = vmatpush2.msra.mxu0 0.0
  %6251 = vmatprep.subr.mxu0 0.0
  %6252 = vmatpush2.msra.mxu0 0.0
  %6253 = vmatprep.subr.mxu0 0.0
  %6254 = vmatpush2.msra.mxu0 0.0
  %6255 = vmatprep.subr.mxu0 0.0
  %6256 = vmatpush2.msra.mxu0 0.0
  %6257 = vmatprep.subr.mxu0 0.0
  %6258 = vmatpush2.msra.mxu0 0.0
  %6259 = vmatprep.subr.mxu0 0.0
  %6260 = vmatpush2.msra.mxu0 0.0
  %6261 = vmatprep.subr.mxu0 0.0
  %6262 = vmatpush2.msra.mxu0 0.0
  %6263 = vmatprep.subr.mxu0 0.0
  %6264 = vmatpush2.msra.mxu0 0.0
  %6265 = vmatprep.subr.mxu0 0.0
  %6266 = vmatpush2.msra.mxu0 0.0
  %6267 = vmatprep.subr.mxu0 0.0
  %6268 = vmatpush2.msra.mxu0 0.0
  %6269 = vmatprep.subr.mxu0 0.0
  %6270 = vmatpush2.msra.mxu0 0.0
  %6271 = vmatprep.subr.mxu0 0.0
  %6272 = vmatpush2.msra.mxu0 0.0
  %6273 = vmatprep.subr.mxu0 0.0
  %6274 = vmatpush2.msra.mxu0 0.0
  %6275 = vmatprep.subr.mxu0 0.0
  %6276 = vmatpush2.msra.mxu0 0.0
  %6277 = vmatprep.subr.mxu0 0.0
  %6278 = vmatpush2.msra.mxu0 0.0
  %6279 = vmatprep.subr.mxu0 0.0
  %6280 = vmatpush2.msra.mxu0 0.0
  %6281 = vmatprep.mubr.f32.mxu0 0.0
  %6282 = vmatmul.mubr.f32.gmra.mxu0 %v6192
  %v6283 = vpop.f32.mrf.mxu0
  %v6284 = vadd.f32 0.0, %v6283
  %v6285 = vpop.f32.mrf.mxu0
  %6286 = vmatprep.mubr.f32.mxu0 0.0
  %6287 = vmatmul.mubr.f32.gmra.mxu0 %v6193
  %v6288 = vpop.f32.mrf.mxu0
  %v6289 = vadd.f32 0.0, %v6288
  %v6290 = vpop.f32.mrf.mxu0
  %6291 = vmatprep.mubr.f32.mxu0 0.0
  %6292 = vmatmul.mubr.f32.gmra.mxu0 %v6194
  %v6293 = vpop.f32.mrf.mxu0
  %v6294 = vadd.f32 0.0, %v6293
  %v6295 = vpop.f32.mrf.mxu0
  %6296 = vmatprep.mubr.f32.mxu0 0.0
  %6297 = vmatmul.mubr.f32.gmra.mxu0 %v6195
  %v6298 = vpop.f32.mrf.mxu0
  %v6299 = vadd.f32 0.0, %v6298
  %v6300 = vpop.f32.mrf.mxu0
  %6301 = vmatprep.mubr.f32.mxu0 0.0
  %6302 = vmatmul.mubr.f32.gmra.mxu0 %v6196
  %v6303 = vpop.f32.mrf.mxu0
  %v6304 = vadd.f32 0.0, %v6303
  %v6305 = vpop.f32.mrf.mxu0
  %6306 = vmatprep.mubr.f32.mxu0 0.0
  %6307 = vmatmul.mubr.f32.gmra.mxu0 %v6197
  %v6308 = vpop.f32.mrf.mxu0
  %v6309 = vadd.f32 0.0, %v6308
  %v6310 = vpop.f32.mrf.mxu0
  %6311 = vmatprep.mubr.f32.mxu0 0.0
  %6312 = vmatmul.mubr.f32.gmra.mxu0 %v6198
  %v6313 = vpop.f32.mrf.mxu0
  %v6314 = vadd.f32 0.0, %v6313
  %v6315 = vpop.f32.mrf.mxu0
  %6316 = vmatprep.mubr.f32.mxu0 0.0
  %6317 = vmatmul.mubr.f32.gmra.mxu0 %v6199
  %v6318 = vpop.f32.mrf.mxu0
  %v6319 = vadd.f32 0.0, %v6318
  %v6320 = vpop.f32.mrf.mxu0
  %6321 = vdwg.mxu0
  %v6322 = vadd.f32 %v6184, %v6284
  %v6323 = vadd.f32 %v6185, %v6289
  %v6324 = vadd.f32 %v6186, %v6294
  %v6325 = vadd.f32 %v6187, %v6299
  %v6326 = vadd.f32 %v6188, %v6304
  %v6327 = vadd.f32 %v6189, %v6309
  %v6328 = vadd.f32 %v6190, %v6314
  %v6329 = vadd.f32 %v6191, %v6319
  %v6330 = vld [vmem:[#allocation3 + $0x4] sm:$0xff]
  %v6331 = vld [vmem:[#allocation3 + $0x14] sm:$0xff]
  %v6332 = vld [vmem:[#allocation3 + $0x24] sm:$0xff]
  %v6333 = vld [vmem:[#allocation3 + $0x34] sm:$0xff]
  %v6334 = vld [vmem:[#allocation3 + $0x44] sm:$0xff]
  %v6335 = vld [vmem:[#allocation3 + $0x54] sm:$0xff]
  %v6336 = vld [vmem:[#allocation3 + $0x64] sm:$0xff]
  %v6337 = vld [vmem:[#allocation3 + $0x74] sm:$0xff]
  %s6338 = scalar_lea.vmem %s3, 512
  %v6339 = vld [vmem:[%s6338] sm:$0xff]
  %v6340 = vld [vmem:[%s6338 + $0x8] sm:$0xff]
  %v6341 = vld [vmem:[%s6338 + $0x10] sm:$0xff]
  %v6342 = vld [vmem:[%s6338 + $0x18] sm:$0xff]
  %v6343 = vld [vmem:[%s6338 + $0x20] sm:$0xff]
  %v6344 = vld [vmem:[%s6338 + $0x28] sm:$0xff]
  %v6345 = vld [vmem:[%s6338 + $0x30] sm:$0xff]
  %v6346 = vld [vmem:[%s6338 + $0x38] sm:$0xff]
  %v6347 = vld [vmem:[%s6338 + $0x40] sm:$0xff]
  %v6348 = vld [vmem:[%s6338 + $0x48] sm:$0xff]
  %v6349 = vld [vmem:[%s6338 + $0x50] sm:$0xff]
  %v6350 = vld [vmem:[%s6338 + $0x58] sm:$0xff]
  %v6351 = vld [vmem:[%s6338 + $0x60] sm:$0xff]
  %v6352 = vld [vmem:[%s6338 + $0x68] sm:$0xff]
  %v6353 = vld [vmem:[%s6338 + $0x70] sm:$0xff]
  %v6354 = vld [vmem:[%s6338 + $0x78] sm:$0xff]
  %6355 = vmatprep.subr.mxu0 0.0
  %6356 = vmatpush1.msra.mxu0 %v6354
  %6357 = vmatprep.subr.mxu0 0.0
  %6358 = vmatpush1.msra.mxu0 %v6353
  %6359 = vmatprep.subr.mxu0 0.0
  %6360 = vmatpush1.msra.mxu0 %v6352
  %6361 = vmatprep.subr.mxu0 0.0
  %6362 = vmatpush1.msra.mxu0 %v6351
  %6363 = vmatprep.subr.mxu0 0.0
  %6364 = vmatpush1.msra.mxu0 %v6350
  %6365 = vmatprep.subr.mxu0 0.0
  %6366 = vmatpush1.msra.mxu0 %v6349
  %6367 = vmatprep.subr.mxu0 0.0
  %6368 = vmatpush1.msra.mxu0 %v6348
  %6369 = vmatprep.subr.mxu0 0.0
  %6370 = vmatpush1.msra.mxu0 %v6347
  %6371 = vmatprep.subr.mxu0 0.0
  %6372 = vmatpush1.msra.mxu0 %v6346
  %6373 = vmatprep.subr.mxu0 0.0
  %6374 = vmatpush1.msra.mxu0 %v6345
  %6375 = vmatprep.subr.mxu0 0.0
  %6376 = vmatpush1.msra.mxu0 %v6344
  %6377 = vmatprep.subr.mxu0 0.0
  %6378 = vmatpush1.msra.mxu0 %v6343
  %6379 = vmatprep.subr.mxu0 0.0
  %6380 = vmatpush1.msra.mxu0 %v6342
  %6381 = vmatprep.subr.mxu0 0.0
  %6382 = vmatpush1.msra.mxu0 %v6341
  %6383 = vmatprep.subr.mxu0 0.0
  %6384 = vmatpush1.msra.mxu0 %v6340
  %6385 = vmatprep.subr.mxu0 0.0
  %6386 = vmatpush1.msra.mxu0 %v6339
  %6387 = vmatprep.subr.mxu0 0.0
  %6388 = vmatpush2.msra.mxu0 0.0
  %6389 = vmatprep.subr.mxu0 0.0
  %6390 = vmatpush2.msra.mxu0 0.0
  %6391 = vmatprep.subr.mxu0 0.0
  %6392 = vmatpush2.msra.mxu0 0.0
  %6393 = vmatprep.subr.mxu0 0.0
  %6394 = vmatpush2.msra.mxu0 0.0
  %6395 = vmatprep.subr.mxu0 0.0
  %6396 = vmatpush2.msra.mxu0 0.0
  %6397 = vmatprep.subr.mxu0 0.0
  %6398 = vmatpush2.msra.mxu0 0.0
  %6399 = vmatprep.subr.mxu0 0.0
  %6400 = vmatpush2.msra.mxu0 0.0
  %6401 = vmatprep.subr.mxu0 0.0
  %6402 = vmatpush2.msra.mxu0 0.0
  %6403 = vmatprep.subr.mxu0 0.0
  %6404 = vmatpush2.msra.mxu0 0.0
  %6405 = vmatprep.subr.mxu0 0.0
  %6406 = vmatpush2.msra.mxu0 0.0
  %6407 = vmatprep.subr.mxu0 0.0
  %6408 = vmatpush2.msra.mxu0 0.0
  %6409 = vmatprep.subr.mxu0 0.0
  %6410 = vmatpush2.msra.mxu0 0.0
  %6411 = vmatprep.subr.mxu0 0.0
  %6412 = vmatpush2.msra.mxu0 0.0
  %6413 = vmatprep.subr.mxu0 0.0
  %6414 = vmatpush2.msra.mxu0 0.0
  %6415 = vmatprep.subr.mxu0 0.0
  %6416 = vmatpush2.msra.mxu0 0.0
  %6417 = vmatprep.subr.mxu0 0.0
  %6418 = vmatpush2.msra.mxu0 0.0
  %6419 = vmatprep.mubr.f32.mxu0 0.0
  %6420 = vmatmul.mubr.f32.gmra.mxu0 %v6330
  %v6421 = vpop.f32.mrf.mxu0
  %v6422 = vadd.f32 0.0, %v6421
  %v6423 = vpop.f32.mrf.mxu0
  %6424 = vmatprep.mubr.f32.mxu0 0.0
  %6425 = vmatmul.mubr.f32.gmra.mxu0 %v6331
  %v6426 = vpop.f32.mrf.mxu0
  %v6427 = vadd.f32 0.0, %v6426
  %v6428 = vpop.f32.mrf.mxu0
  %6429 = vmatprep.mubr.f32.mxu0 0.0
  %6430 = vmatmul.mubr.f32.gmra.mxu0 %v6332
  %v6431 = vpop.f32.mrf.mxu0
  %v6432 = vadd.f32 0.0, %v6431
  %v6433 = vpop.f32.mrf.mxu0
  %6434 = vmatprep.mubr.f32.mxu0 0.0
  %6435 = vmatmul.mubr.f32.gmra.mxu0 %v6333
  %v6436 = vpop.f32.mrf.mxu0
  %v6437 = vadd.f32 0.0, %v6436
  %v6438 = vpop.f32.mrf.mxu0
  %6439 = vmatprep.mubr.f32.mxu0 0.0
  %6440 = vmatmul.mubr.f32.gmra.mxu0 %v6334
  %v6441 = vpop.f32.mrf.mxu0
  %v6442 = vadd.f32 0.0, %v6441
  %v6443 = vpop.f32.mrf.mxu0
  %6444 = vmatprep.mubr.f32.mxu0 0.0
  %6445 = vmatmul.mubr.f32.gmra.mxu0 %v6335
  %v6446 = vpop.f32.mrf.mxu0
  %v6447 = vadd.f32 0.0, %v6446
  %v6448 = vpop.f32.mrf.mxu0
  %6449 = vmatprep.mubr.f32.mxu0 0.0
  %6450 = vmatmul.mubr.f32.gmra.mxu0 %v6336
  %v6451 = vpop.f32.mrf.mxu0
  %v6452 = vadd.f32 0.0, %v6451
  %v6453 = vpop.f32.mrf.mxu0
  %6454 = vmatprep.mubr.f32.mxu0 0.0
  %6455 = vmatmul.mubr.f32.gmra.mxu0 %v6337
  %v6456 = vpop.f32.mrf.mxu0
  %v6457 = vadd.f32 0.0, %v6456
  %v6458 = vpop.f32.mrf.mxu0
  %6459 = vdwg.mxu0
  %v6460 = vadd.f32 %v6322, %v6422
  %v6461 = vadd.f32 %v6323, %v6427
  %v6462 = vadd.f32 %v6324, %v6432
  %v6463 = vadd.f32 %v6325, %v6437
  %v6464 = vadd.f32 %v6326, %v6442
  %v6465 = vadd.f32 %v6327, %v6447
  %v6466 = vadd.f32 %v6328, %v6452
  %v6467 = vadd.f32 %v6329, %v6457
  %s6468 = scalar_lea.vmem [#allocation3], 16
  %v6469 = vld [vmem:[%s6468] sm:$0xff]
  %v6470 = vld [vmem:[%s6468 + $0x10] sm:$0xff]
  %v6471 = vld [vmem:[%s6468 + $0x20] sm:$0xff]
  %v6472 = vld [vmem:[%s6468 + $0x30] sm:$0xff]
  %v6473 = vld [vmem:[%s6468 + $0x40] sm:$0xff]
  %v6474 = vld [vmem:[%s6468 + $0x50] sm:$0xff]
  %v6475 = vld [vmem:[%s6468 + $0x60] sm:$0xff]
  %v6476 = vld [vmem:[%s6468 + $0x70] sm:$0xff]
  %s6477 = scalar_lea.vmem %s3, 640
  %v6478 = vld [vmem:[%s6477] sm:$0xff]
  %v6479 = vld [vmem:[%s6477 + $0x8] sm:$0xff]
  %v6480 = vld [vmem:[%s6477 + $0x10] sm:$0xff]
  %v6481 = vld [vmem:[%s6477 + $0x18] sm:$0xff]
  %v6482 = vld [vmem:[%s6477 + $0x20] sm:$0xff]
  %v6483 = vld [vmem:[%s6477 + $0x28] sm:$0xff]
  %v6484 = vld [vmem:[%s6477 + $0x30] sm:$0xff]
  %v6485 = vld [vmem:[%s6477 + $0x38] sm:$0xff]
  %v6486 = vld [vmem:[%s6477 + $0x40] sm:$0xff]
  %v6487 = vld [vmem:[%s6477 + $0x48] sm:$0xff]
  %v6488 = vld [vmem:[%s6477 + $0x50] sm:$0xff]
  %v6489 = vld [vmem:[%s6477 + $0x58] sm:$0xff]
  %v6490 = vld [vmem:[%s6477 + $0x60] sm:$0xff]
  %v6491 = vld [vmem:[%s6477 + $0x68] sm:$0xff]
  %v6492 = vld [vmem:[%s6477 + $0x70] sm:$0xff]
  %v6493 = vld [vmem:[%s6477 + $0x78] sm:$0xff]
  %6494 = vmatprep.subr.mxu0 0.0
  %6495 = vmatpush1.msra.mxu0 %v6493
  %6496 = vmatprep.subr.mxu0 0.0
  %6497 = vmatpush1.msra.mxu0 %v6492
  %6498 = vmatprep.subr.mxu0 0.0
  %6499 = vmatpush1.msra.mxu0 %v6491
  %6500 = vmatprep.subr.mxu0 0.0
  %6501 = vmatpush1.msra.mxu0 %v6490
  %6502 = vmatprep.subr.mxu0 0.0
  %6503 = vmatpush1.msra.mxu0 %v6489
  %6504 = vmatprep.subr.mxu0 0.0
  %6505 = vmatpush1.msra.mxu0 %v6488
  %6506 = vmatprep.subr.mxu0 0.0
  %6507 = vmatpush1.msra.mxu0 %v6487
  %6508 = vmatprep.subr.mxu0 0.0
  %6509 = vmatpush1.msra.mxu0 %v6486
  %6510 = vmatprep.subr.mxu0 0.0
  %6511 = vmatpush1.msra.mxu0 %v6485
  %6512 = vmatprep.subr.mxu0 0.0
  %6513 = vmatpush1.msra.mxu0 %v6484
  %6514 = vmatprep.subr.mxu0 0.0
  %6515 = vmatpush1.msra.mxu0 %v6483
  %6516 = vmatprep.subr.mxu0 0.0
  %6517 = vmatpush1.msra.mxu0 %v6482
  %6518 = vmatprep.subr.mxu0 0.0
  %6519 = vmatpush1.msra.mxu0 %v6481
  %6520 = vmatprep.subr.mxu0 0.0
  %6521 = vmatpush1.msra.mxu0 %v6480
  %6522 = vmatprep.subr.mxu0 0.0
  %6523 = vmatpush1.msra.mxu0 %v6479
  %6524 = vmatprep.subr.mxu0 0.0
  %6525 = vmatpush1.msra.mxu0 %v6478
  %6526 = vmatprep.subr.mxu0 0.0
  %6527 = vmatpush2.msra.mxu0 0.0
  %6528 = vmatprep.subr.mxu0 0.0
  %6529 = vmatpush2.msra.mxu0 0.0
  %6530 = vmatprep.subr.mxu0 0.0
  %6531 = vmatpush2.msra.mxu0 0.0
  %6532 = vmatprep.subr.mxu0 0.0
  %6533 = vmatpush2.msra.mxu0 0.0
  %6534 = vmatprep.subr.mxu0 0.0
  %6535 = vmatpush2.msra.mxu0 0.0
  %6536 = vmatprep.subr.mxu0 0.0
  %6537 = vmatpush2.msra.mxu0 0.0
  %6538 = vmatprep.subr.mxu0 0.0
  %6539 = vmatpush2.msra.mxu0 0.0
  %6540 = vmatprep.subr.mxu0 0.0
  %6541 = vmatpush2.msra.mxu0 0.0
  %6542 = vmatprep.subr.mxu0 0.0
  %6543 = vmatpush2.msra.mxu0 0.0
  %6544 = vmatprep.subr.mxu0 0.0
  %6545 = vmatpush2.msra.mxu0 0.0
  %6546 = vmatprep.subr.mxu0 0.0
  %6547 = vmatpush2.msra.mxu0 0.0
  %6548 = vmatprep.subr.mxu0 0.0
  %6549 = vmatpush2.msra.mxu0 0.0
  %6550 = vmatprep.subr.mxu0 0.0
  %6551 = vmatpush2.msra.mxu0 0.0
  %6552 = vmatprep.subr.mxu0 0.0
  %6553 = vmatpush2.msra.mxu0 0.0
  %6554 = vmatprep.subr.mxu0 0.0
  %6555 = vmatpush2.msra.mxu0 0.0
  %6556 = vmatprep.subr.mxu0 0.0
  %6557 = vmatpush2.msra.mxu0 0.0
  %6558 = vmatprep.mubr.f32.mxu0 0.0
  %6559 = vmatmul.mubr.f32.gmra.mxu0 %v6469
  %v6560 = vpop.f32.mrf.mxu0
  %v6561 = vadd.f32 0.0, %v6560
  %v6562 = vpop.f32.mrf.mxu0
  %6563 = vmatprep.mubr.f32.mxu0 0.0
  %6564 = vmatmul.mubr.f32.gmra.mxu0 %v6470
  %v6565 = vpop.f32.mrf.mxu0
  %v6566 = vadd.f32 0.0, %v6565
  %v6567 = vpop.f32.mrf.mxu0
  %6568 = vmatprep.mubr.f32.mxu0 0.0
  %6569 = vmatmul.mubr.f32.gmra.mxu0 %v6471
  %v6570 = vpop.f32.mrf.mxu0
  %v6571 = vadd.f32 0.0, %v6570
  %v6572 = vpop.f32.mrf.mxu0
  %6573 = vmatprep.mubr.f32.mxu0 0.0
  %6574 = vmatmul.mubr.f32.gmra.mxu0 %v6472
  %v6575 = vpop.f32.mrf.mxu0
  %v6576 = vadd.f32 0.0, %v6575
  %v6577 = vpop.f32.mrf.mxu0
  %6578 = vmatprep.mubr.f32.mxu0 0.0
  %6579 = vmatmul.mubr.f32.gmra.mxu0 %v6473
  %v6580 = vpop.f32.mrf.mxu0
  %v6581 = vadd.f32 0.0, %v6580
  %v6582 = vpop.f32.mrf.mxu0
  %6583 = vmatprep.mubr.f32.mxu0 0.0
  %6584 = vmatmul.mubr.f32.gmra.mxu0 %v6474
  %v6585 = vpop.f32.mrf.mxu0
  %v6586 = vadd.f32 0.0, %v6585
  %v6587 = vpop.f32.mrf.mxu0
  %6588 = vmatprep.mubr.f32.mxu0 0.0
  %6589 = vmatmul.mubr.f32.gmra.mxu0 %v6475
  %v6590 = vpop.f32.mrf.mxu0
  %v6591 = vadd.f32 0.0, %v6590
  %v6592 = vpop.f32.mrf.mxu0
  %6593 = vmatprep.mubr.f32.mxu0 0.0
  %6594 = vmatmul.mubr.f32.gmra.mxu0 %v6476
  %v6595 = vpop.f32.mrf.mxu0
  %v6596 = vadd.f32 0.0, %v6595
  %v6597 = vpop.f32.mrf.mxu0
  %6598 = vdwg.mxu0
  %v6599 = vadd.f32 %v6460, %v6561
  %v6600 = vadd.f32 %v6461, %v6566
  %v6601 = vadd.f32 %v6462, %v6571
  %v6602 = vadd.f32 %v6463, %v6576
  %v6603 = vadd.f32 %v6464, %v6581
  %v6604 = vadd.f32 %v6465, %v6586
  %v6605 = vadd.f32 %v6466, %v6591
  %v6606 = vadd.f32 %v6467, %v6596
  %v6607 = vld [vmem:[%s6468 + $0x1] sm:$0xff]
  %v6608 = vld [vmem:[%s6468 + $0x11] sm:$0xff]
  %v6609 = vld [vmem:[%s6468 + $0x21] sm:$0xff]
  %v6610 = vld [vmem:[%s6468 + $0x31] sm:$0xff]
  %v6611 = vld [vmem:[%s6468 + $0x41] sm:$0xff]
  %v6612 = vld [vmem:[%s6468 + $0x51] sm:$0xff]
  %v6613 = vld [vmem:[%s6468 + $0x61] sm:$0xff]
  %v6614 = vld [vmem:[%s6468 + $0x71] sm:$0xff]
  %s6615 = scalar_lea.vmem %s3, 768
  %v6616 = vld [vmem:[%s6615] sm:$0xff]
  %v6617 = vld [vmem:[%s6615 + $0x8] sm:$0xff]
  %v6618 = vld [vmem:[%s6615 + $0x10] sm:$0xff]
  %v6619 = vld [vmem:[%s6615 + $0x18] sm:$0xff]
  %v6620 = vld [vmem:[%s6615 + $0x20] sm:$0xff]
  %v6621 = vld [vmem:[%s6615 + $0x28] sm:$0xff]
  %v6622 = vld [vmem:[%s6615 + $0x30] sm:$0xff]
  %v6623 = vld [vmem:[%s6615 + $0x38] sm:$0xff]
  %v6624 = vld [vmem:[%s6615 + $0x40] sm:$0xff]
  %v6625 = vld [vmem:[%s6615 + $0x48] sm:$0xff]
  %v6626 = vld [vmem:[%s6615 + $0x50] sm:$0xff]
  %v6627 = vld [vmem:[%s6615 + $0x58] sm:$0xff]
  %v6628 = vld [vmem:[%s6615 + $0x60] sm:$0xff]
  %v6629 = vld [vmem:[%s6615 + $0x68] sm:$0xff]
  %v6630 = vld [vmem:[%s6615 + $0x70] sm:$0xff]
  %v6631 = vld [vmem:[%s6615 + $0x78] sm:$0xff]
  %6632 = vmatprep.subr.mxu0 0.0
  %6633 = vmatpush1.msra.mxu0 %v6631
  %6634 = vmatprep.subr.mxu0 0.0
  %6635 = vmatpush1.msra.mxu0 %v6630
  %6636 = vmatprep.subr.mxu0 0.0
  %6637 = vmatpush1.msra.mxu0 %v6629
  %6638 = vmatprep.subr.mxu0 0.0
  %6639 = vmatpush1.msra.mxu0 %v6628
  %6640 = vmatprep.subr.mxu0 0.0
  %6641 = vmatpush1.msra.mxu0 %v6627
  %6642 = vmatprep.subr.mxu0 0.0
  %6643 = vmatpush1.msra.mxu0 %v6626
  %6644 = vmatprep.subr.mxu0 0.0
  %6645 = vmatpush1.msra.mxu0 %v6625
  %6646 = vmatprep.subr.mxu0 0.0
  %6647 = vmatpush1.msra.mxu0 %v6624
  %6648 = vmatprep.subr.mxu0 0.0
  %6649 = vmatpush1.msra.mxu0 %v6623
  %6650 = vmatprep.subr.mxu0 0.0
  %6651 = vmatpush1.msra.mxu0 %v6622
  %6652 = vmatprep.subr.mxu0 0.0
  %6653 = vmatpush1.msra.mxu0 %v6621
  %6654 = vmatprep.subr.mxu0 0.0
  %6655 = vmatpush1.msra.mxu0 %v6620
  %6656 = vmatprep.subr.mxu0 0.0
  %6657 = vmatpush1.msra.mxu0 %v6619
  %6658 = vmatprep.subr.mxu0 0.0
  %6659 = vmatpush1.msra.mxu0 %v6618
  %6660 = vmatprep.subr.mxu0 0.0
  %6661 = vmatpush1.msra.mxu0 %v6617
  %6662 = vmatprep.subr.mxu0 0.0
  %6663 = vmatpush1.msra.mxu0 %v6616
  %6664 = vmatprep.subr.mxu0 0.0
  %6665 = vmatpush2.msra.mxu0 0.0
  %6666 = vmatprep.subr.mxu0 0.0
  %6667 = vmatpush2.msra.mxu0 0.0
  %6668 = vmatprep.subr.mxu0 0.0
  %6669 = vmatpush2.msra.mxu0 0.0
  %6670 = vmatprep.subr.mxu0 0.0
  %6671 = vmatpush2.msra.mxu0 0.0
  %6672 = vmatprep.subr.mxu0 0.0
  %6673 = vmatpush2.msra.mxu0 0.0
  %6674 = vmatprep.subr.mxu0 0.0
  %6675 = vmatpush2.msra.mxu0 0.0
  %6676 = vmatprep.subr.mxu0 0.0
  %6677 = vmatpush2.msra.mxu0 0.0
  %6678 = vmatprep.subr.mxu0 0.0
  %6679 = vmatpush2.msra.mxu0 0.0
  %6680 = vmatprep.subr.mxu0 0.0
  %6681 = vmatpush2.msra.mxu0 0.0
  %6682 = vmatprep.subr.mxu0 0.0
  %6683 = vmatpush2.msra.mxu0 0.0
  %6684 = vmatprep.subr.mxu0 0.0
  %6685 = vmatpush2.msra.mxu0 0.0
  %6686 = vmatprep.subr.mxu0 0.0
  %6687 = vmatpush2.msra.mxu0 0.0
  %6688 = vmatprep.subr.mxu0 0.0
  %6689 = vmatpush2.msra.mxu0 0.0
  %6690 = vmatprep.subr.mxu0 0.0
  %6691 = vmatpush2.msra.mxu0 0.0
  %6692 = vmatprep.subr.mxu0 0.0
  %6693 = vmatpush2.msra.mxu0 0.0
  %6694 = vmatprep.subr.mxu0 0.0
  %6695 = vmatpush2.msra.mxu0 0.0
  %6696 = vmatprep.mubr.f32.mxu0 0.0
  %6697 = vmatmul.mubr.f32.gmra.mxu0 %v6607
  %v6698 = vpop.f32.mrf.mxu0
  %v6699 = vadd.f32 0.0, %v6698
  %v6700 = vpop.f32.mrf.mxu0
  %6701 = vmatprep.mubr.f32.mxu0 0.0
  %6702 = vmatmul.mubr.f32.gmra.mxu0 %v6608
  %v6703 = vpop.f32.mrf.mxu0
  %v6704 = vadd.f32 0.0, %v6703
  %v6705 = vpop.f32.mrf.mxu0
  %6706 = vmatprep.mubr.f32.mxu0 0.0
  %6707 = vmatmul.mubr.f32.gmra.mxu0 %v6609
  %v6708 = vpop.f32.mrf.mxu0
  %v6709 = vadd.f32 0.0, %v6708
  %v6710 = vpop.f32.mrf.mxu0
  %6711 = vmatprep.mubr.f32.mxu0 0.0
  %6712 = vmatmul.mubr.f32.gmra.mxu0 %v6610
  %v6713 = vpop.f32.mrf.mxu0
  %v6714 = vadd.f32 0.0, %v6713
  %v6715 = vpop.f32.mrf.mxu0
  %6716 = vmatprep.mubr.f32.mxu0 0.0
  %6717 = vmatmul.mubr.f32.gmra.mxu0 %v6611
  %v6718 = vpop.f32.mrf.mxu0
  %v6719 = vadd.f32 0.0, %v6718
  %v6720 = vpop.f32.mrf.mxu0
  %6721 = vmatprep.mubr.f32.mxu0 0.0
  %6722 = vmatmul.mubr.f32.gmra.mxu0 %v6612
  %v6723 = vpop.f32.mrf.mxu0
  %v6724 = vadd.f32 0.0, %v6723
  %v6725 = vpop.f32.mrf.mxu0
  %6726 = vmatprep.mubr.f32.mxu0 0.0
  %6727 = vmatmul.mubr.f32.gmra.mxu0 %v6613
  %v6728 = vpop.f32.mrf.mxu0
  %v6729 = vadd.f32 0.0, %v6728
  %v6730 = vpop.f32.mrf.mxu0
  %6731 = vmatprep.mubr.f32.mxu0 0.0
  %6732 = vmatmul.mubr.f32.gmra.mxu0 %v6614
  %v6733 = vpop.f32.mrf.mxu0
  %v6734 = vadd.f32 0.0, %v6733
  %v6735 = vpop.f32.mrf.mxu0
  %6736 = vdwg.mxu0
  %v6737 = vadd.f32 %v6599, %v6699
  %v6738 = vadd.f32 %v6600, %v6704
  %v6739 = vadd.f32 %v6601, %v6709
  %v6740 = vadd.f32 %v6602, %v6714
  %v6741 = vadd.f32 %v6603, %v6719
  %v6742 = vadd.f32 %v6604, %v6724
  %v6743 = vadd.f32 %v6605, %v6729
  %v6744 = vadd.f32 %v6606, %v6734
  %v6745 = vld [vmem:[%s6468 + $0x2] sm:$0xff]
  %v6746 = vld [vmem:[%s6468 + $0x12] sm:$0xff]
  %v6747 = vld [vmem:[%s6468 + $0x22] sm:$0xff]
  %v6748 = vld [vmem:[%s6468 + $0x32] sm:$0xff]
  %v6749 = vld [vmem:[%s6468 + $0x42] sm:$0xff]
  %v6750 = vld [vmem:[%s6468 + $0x52] sm:$0xff]
  %v6751 = vld [vmem:[%s6468 + $0x62] sm:$0xff]
  %v6752 = vld [vmem:[%s6468 + $0x72] sm:$0xff]
  %s6753 = scalar_lea.vmem %s3, 896
  %v6754 = vld [vmem:[%s6753] sm:$0xff]
  %v6755 = vld [vmem:[%s6753 + $0x8] sm:$0xff]
  %v6756 = vld [vmem:[%s6753 + $0x10] sm:$0xff]
  %v6757 = vld [vmem:[%s6753 + $0x18] sm:$0xff]
  %v6758 = vld [vmem:[%s6753 + $0x20] sm:$0xff]
  %v6759 = vld [vmem:[%s6753 + $0x28] sm:$0xff]
  %v6760 = vld [vmem:[%s6753 + $0x30] sm:$0xff]
  %v6761 = vld [vmem:[%s6753 + $0x38] sm:$0xff]
  %v6762 = vld [vmem:[%s6753 + $0x40] sm:$0xff]
  %v6763 = vld [vmem:[%s6753 + $0x48] sm:$0xff]
  %v6764 = vld [vmem:[%s6753 + $0x50] sm:$0xff]
  %v6765 = vld [vmem:[%s6753 + $0x58] sm:$0xff]
  %v6766 = vld [vmem:[%s6753 + $0x60] sm:$0xff]
  %v6767 = vld [vmem:[%s6753 + $0x68] sm:$0xff]
  %v6768 = vld [vmem:[%s6753 + $0x70] sm:$0xff]
  %v6769 = vld [vmem:[%s6753 + $0x78] sm:$0xff]
  %6770 = vmatprep.subr.mxu0 0.0
  %6771 = vmatpush1.msra.mxu0 %v6769
  %6772 = vmatprep.subr.mxu0 0.0
  %6773 = vmatpush1.msra.mxu0 %v6768
  %6774 = vmatprep.subr.mxu0 0.0
  %6775 = vmatpush1.msra.mxu0 %v6767
  %6776 = vmatprep.subr.mxu0 0.0
  %6777 = vmatpush1.msra.mxu0 %v6766
  %6778 = vmatprep.subr.mxu0 0.0
  %6779 = vmatpush1.msra.mxu0 %v6765
  %6780 = vmatprep.subr.mxu0 0.0
  %6781 = vmatpush1.msra.mxu0 %v6764
  %6782 = vmatprep.subr.mxu0 0.0
  %6783 = vmatpush1.msra.mxu0 %v6763
  %6784 = vmatprep.subr.mxu0 0.0
  %6785 = vmatpush1.msra.mxu0 %v6762
  %6786 = vmatprep.subr.mxu0 0.0
  %6787 = vmatpush1.msra.mxu0 %v6761
  %6788 = vmatprep.subr.mxu0 0.0
  %6789 = vmatpush1.msra.mxu0 %v6760
  %6790 = vmatprep.subr.mxu0 0.0
  %6791 = vmatpush1.msra.mxu0 %v6759
  %6792 = vmatprep.subr.mxu0 0.0
  %6793 = vmatpush1.msra.mxu0 %v6758
  %6794 = vmatprep.subr.mxu0 0.0
  %6795 = vmatpush1.msra.mxu0 %v6757
  %6796 = vmatprep.subr.mxu0 0.0
  %6797 = vmatpush1.msra.mxu0 %v6756
  %6798 = vmatprep.subr.mxu0 0.0
  %6799 = vmatpush1.msra.mxu0 %v6755
  %6800 = vmatprep.subr.mxu0 0.0
  %6801 = vmatpush1.msra.mxu0 %v6754
  %6802 = vmatprep.subr.mxu0 0.0
  %6803 = vmatpush2.msra.mxu0 0.0
  %6804 = vmatprep.subr.mxu0 0.0
  %6805 = vmatpush2.msra.mxu0 0.0
  %6806 = vmatprep.subr.mxu0 0.0
  %6807 = vmatpush2.msra.mxu0 0.0
  %6808 = vmatprep.subr.mxu0 0.0
  %6809 = vmatpush2.msra.mxu0 0.0
  %6810 = vmatprep.subr.mxu0 0.0
  %6811 = vmatpush2.msra.mxu0 0.0
  %6812 = vmatprep.subr.mxu0 0.0
  %6813 = vmatpush2.msra.mxu0 0.0
  %6814 = vmatprep.subr.mxu0 0.0
  %6815 = vmatpush2.msra.mxu0 0.0
  %6816 = vmatprep.subr.mxu0 0.0
  %6817 = vmatpush2.msra.mxu0 0.0
  %6818 = vmatprep.subr.mxu0 0.0
  %6819 = vmatpush2.msra.mxu0 0.0
  %6820 = vmatprep.subr.mxu0 0.0
  %6821 = vmatpush2.msra.mxu0 0.0
  %6822 = vmatprep.subr.mxu0 0.0
  %6823 = vmatpush2.msra.mxu0 0.0
  %6824 = vmatprep.subr.mxu0 0.0
  %6825 = vmatpush2.msra.mxu0 0.0
  %6826 = vmatprep.subr.mxu0 0.0
  %6827 = vmatpush2.msra.mxu0 0.0
  %6828 = vmatprep.subr.mxu0 0.0
  %6829 = vmatpush2.msra.mxu0 0.0
  %6830 = vmatprep.subr.mxu0 0.0
  %6831 = vmatpush2.msra.mxu0 0.0
  %6832 = vmatprep.subr.mxu0 0.0
  %6833 = vmatpush2.msra.mxu0 0.0
  %6834 = vmatprep.mubr.f32.mxu0 0.0
  %6835 = vmatmul.mubr.f32.gmra.mxu0 %v6745
  %v6836 = vpop.f32.mrf.mxu0
  %v6837 = vadd.f32 0.0, %v6836
  %v6838 = vpop.f32.mrf.mxu0
  %6839 = vmatprep.mubr.f32.mxu0 0.0
  %6840 = vmatmul.mubr.f32.gmra.mxu0 %v6746
  %v6841 = vpop.f32.mrf.mxu0
  %v6842 = vadd.f32 0.0, %v6841
  %v6843 = vpop.f32.mrf.mxu0
  %6844 = vmatprep.mubr.f32.mxu0 0.0
  %6845 = vmatmul.mubr.f32.gmra.mxu0 %v6747
  %v6846 = vpop.f32.mrf.mxu0
  %v6847 = vadd.f32 0.0, %v6846
  %v6848 = vpop.f32.mrf.mxu0
  %6849 = vmatprep.mubr.f32.mxu0 0.0
  %6850 = vmatmul.mubr.f32.gmra.mxu0 %v6748
  %v6851 = vpop.f32.mrf.mxu0
  %v6852 = vadd.f32 0.0, %v6851
  %v6853 = vpop.f32.mrf.mxu0
  %6854 = vmatprep.mubr.f32.mxu0 0.0
  %6855 = vmatmul.mubr.f32.gmra.mxu0 %v6749
  %v6856 = vpop.f32.mrf.mxu0
  %v6857 = vadd.f32 0.0, %v6856
  %v6858 = vpop.f32.mrf.mxu0
  %6859 = vmatprep.mubr.f32.mxu0 0.0
  %6860 = vmatmul.mubr.f32.gmra.mxu0 %v6750
  %v6861 = vpop.f32.mrf.mxu0
  %v6862 = vadd.f32 0.0, %v6861
  %v6863 = vpop.f32.mrf.mxu0
  %6864 = vmatprep.mubr.f32.mxu0 0.0
  %6865 = vmatmul.mubr.f32.gmra.mxu0 %v6751
  %v6866 = vpop.f32.mrf.mxu0
  %v6867 = vadd.f32 0.0, %v6866
  %v6868 = vpop.f32.mrf.mxu0
  %6869 = vmatprep.mubr.f32.mxu0 0.0
  %6870 = vmatmul.mubr.f32.gmra.mxu0 %v6752
  %v6871 = vpop.f32.mrf.mxu0
  %v6872 = vadd.f32 0.0, %v6871
  %v6873 = vpop.f32.mrf.mxu0
  %6874 = vdwg.mxu0
  %v6875 = vadd.f32 %v6737, %v6837
  %v6876 = vadd.f32 %v6738, %v6842
  %v6877 = vadd.f32 %v6739, %v6847
  %v6878 = vadd.f32 %v6740, %v6852
  %v6879 = vadd.f32 %v6741, %v6857
  %v6880 = vadd.f32 %v6742, %v6862
  %v6881 = vadd.f32 %v6743, %v6867
  %v6882 = vadd.f32 %v6744, %v6872
  %v6883 = vld [vmem:[%s6468 + $0x3] sm:$0xff]
  %v6884 = vld [vmem:[%s6468 + $0x13] sm:$0xff]
  %v6885 = vld [vmem:[%s6468 + $0x23] sm:$0xff]
  %v6886 = vld [vmem:[%s6468 + $0x33] sm:$0xff]
  %v6887 = vld [vmem:[%s6468 + $0x43] sm:$0xff]
  %v6888 = vld [vmem:[%s6468 + $0x53] sm:$0xff]
  %v6889 = vld [vmem:[%s6468 + $0x63] sm:$0xff]
  %v6890 = vld [vmem:[%s6468 + $0x73] sm:$0xff]
  %s6891 = scalar_lea.vmem %s3, 1024
  %v6892 = vld [vmem:[%s6891] sm:$0xff]
  %v6893 = vld [vmem:[%s6891 + $0x8] sm:$0xff]
  %v6894 = vld [vmem:[%s6891 + $0x10] sm:$0xff]
  %v6895 = vld [vmem:[%s6891 + $0x18] sm:$0xff]
  %v6896 = vld [vmem:[%s6891 + $0x20] sm:$0xff]
  %v6897 = vld [vmem:[%s6891 + $0x28] sm:$0xff]
  %v6898 = vld [vmem:[%s6891 + $0x30] sm:$0xff]
  %v6899 = vld [vmem:[%s6891 + $0x38] sm:$0xff]
  %v6900 = vld [vmem:[%s6891 + $0x40] sm:$0xff]
  %v6901 = vld [vmem:[%s6891 + $0x48] sm:$0xff]
  %v6902 = vld [vmem:[%s6891 + $0x50] sm:$0xff]
  %v6903 = vld [vmem:[%s6891 + $0x58] sm:$0xff]
  %v6904 = vld [vmem:[%s6891 + $0x60] sm:$0xff]
  %v6905 = vld [vmem:[%s6891 + $0x68] sm:$0xff]
  %v6906 = vld [vmem:[%s6891 + $0x70] sm:$0xff]
  %v6907 = vld [vmem:[%s6891 + $0x78] sm:$0xff]
  %6908 = vmatprep.subr.mxu0 0.0
  %6909 = vmatpush1.msra.mxu0 %v6907
  %6910 = vmatprep.subr.mxu0 0.0
  %6911 = vmatpush1.msra.mxu0 %v6906
  %6912 = vmatprep.subr.mxu0 0.0
  %6913 = vmatpush1.msra.mxu0 %v6905
  %6914 = vmatprep.subr.mxu0 0.0
  %6915 = vmatpush1.msra.mxu0 %v6904
  %6916 = vmatprep.subr.mxu0 0.0
  %6917 = vmatpush1.msra.mxu0 %v6903
  %6918 = vmatprep.subr.mxu0 0.0
  %6919 = vmatpush1.msra.mxu0 %v6902
  %6920 = vmatprep.subr.mxu0 0.0
  %6921 = vmatpush1.msra.mxu0 %v6901
  %6922 = vmatprep.subr.mxu0 0.0
  %6923 = vmatpush1.msra.mxu0 %v6900
  %6924 = vmatprep.subr.mxu0 0.0
  %6925 = vmatpush1.msra.mxu0 %v6899
  %6926 = vmatprep.subr.mxu0 0.0
  %6927 = vmatpush1.msra.mxu0 %v6898
  %6928 = vmatprep.subr.mxu0 0.0
  %6929 = vmatpush1.msra.mxu0 %v6897
  %6930 = vmatprep.subr.mxu0 0.0
  %6931 = vmatpush1.msra.mxu0 %v6896
  %6932 = vmatprep.subr.mxu0 0.0
  %6933 = vmatpush1.msra.mxu0 %v6895
  %6934 = vmatprep.subr.mxu0 0.0
  %6935 = vmatpush1.msra.mxu0 %v6894
  %6936 = vmatprep.subr.mxu0 0.0
  %6937 = vmatpush1.msra.mxu0 %v6893
  %6938 = vmatprep.subr.mxu0 0.0
  %6939 = vmatpush1.msra.mxu0 %v6892
  %6940 = vmatprep.subr.mxu0 0.0
  %6941 = vmatpush2.msra.mxu0 0.0
  %6942 = vmatprep.subr.mxu0 0.0
  %6943 = vmatpush2.msra.mxu0 0.0
  %6944 = vmatprep.subr.mxu0 0.0
  %6945 = vmatpush2.msra.mxu0 0.0
  %6946 = vmatprep.subr.mxu0 0.0
  %6947 = vmatpush2.msra.mxu0 0.0
  %6948 = vmatprep.subr.mxu0 0.0
  %6949 = vmatpush2.msra.mxu0 0.0
  %6950 = vmatprep.subr.mxu0 0.0
  %6951 = vmatpush2.msra.mxu0 0.0
  %6952 = vmatprep.subr.mxu0 0.0
  %6953 = vmatpush2.msra.mxu0 0.0
  %6954 = vmatprep.subr.mxu0 0.0
  %6955 = vmatpush2.msra.mxu0 0.0
  %6956 = vmatprep.subr.mxu0 0.0
  %6957 = vmatpush2.msra.mxu0 0.0
  %6958 = vmatprep.subr.mxu0 0.0
  %6959 = vmatpush2.msra.mxu0 0.0
  %6960 = vmatprep.subr.mxu0 0.0
  %6961 = vmatpush2.msra.mxu0 0.0
  %6962 = vmatprep.subr.mxu0 0.0
  %6963 = vmatpush2.msra.mxu0 0.0
  %6964 = vmatprep.subr.mxu0 0.0
  %6965 = vmatpush2.msra.mxu0 0.0
  %6966 = vmatprep.subr.mxu0 0.0
  %6967 = vmatpush2.msra.mxu0 0.0
  %6968 = vmatprep.subr.mxu0 0.0
  %6969 = vmatpush2.msra.mxu0 0.0
  %6970 = vmatprep.subr.mxu0 0.0
  %6971 = vmatpush2.msra.mxu0 0.0
  %6972 = vmatprep.mubr.f32.mxu0 0.0
  %6973 = vmatmul.mubr.f32.gmra.mxu0 %v6883
  %v6974 = vpop.f32.mrf.mxu0
  %v6975 = vadd.f32 0.0, %v6974
  %v6976 = vpop.f32.mrf.mxu0
  %6977 = vmatprep.mubr.f32.mxu0 0.0
  %6978 = vmatmul.mubr.f32.gmra.mxu0 %v6884
  %v6979 = vpop.f32.mrf.mxu0
  %v6980 = vadd.f32 0.0, %v6979
  %v6981 = vpop.f32.mrf.mxu0
  %6982 = vmatprep.mubr.f32.mxu0 0.0
  %6983 = vmatmul.mubr.f32.gmra.mxu0 %v6885
  %v6984 = vpop.f32.mrf.mxu0
  %v6985 = vadd.f32 0.0, %v6984
  %v6986 = vpop.f32.mrf.mxu0
  %6987 = vmatprep.mubr.f32.mxu0 0.0
  %6988 = vmatmul.mubr.f32.gmra.mxu0 %v6886
  %v6989 = vpop.f32.mrf.mxu0
  %v6990 = vadd.f32 0.0, %v6989
  %v6991 = vpop.f32.mrf.mxu0
  %6992 = vmatprep.mubr.f32.mxu0 0.0
  %6993 = vmatmul.mubr.f32.gmra.mxu0 %v6887
  %v6994 = vpop.f32.mrf.mxu0
  %v6995 = vadd.f32 0.0, %v6994
  %v6996 = vpop.f32.mrf.mxu0
  %6997 = vmatprep.mubr.f32.mxu0 0.0
  %6998 = vmatmul.mubr.f32.gmra.mxu0 %v6888
  %v6999 = vpop.f32.mrf.mxu0
  %v7000 = vadd.f32 0.0, %v6999
  %v7001 = vpop.f32.mrf.mxu0
  %7002 = vmatprep.mubr.f32.mxu0 0.0
  %7003 = vmatmul.mubr.f32.gmra.mxu0 %v6889
  %v7004 = vpop.f32.mrf.mxu0
  %v7005 = vadd.f32 0.0, %v7004
  %v7006 = vpop.f32.mrf.mxu0
  %7007 = vmatprep.mubr.f32.mxu0 0.0
  %7008 = vmatmul.mubr.f32.gmra.mxu0 %v6890
  %v7009 = vpop.f32.mrf.mxu0
  %v7010 = vadd.f32 0.0, %v7009
  %v7011 = vpop.f32.mrf.mxu0
  %7012 = vdwg.mxu0
  %v7013 = vadd.f32 %v6875, %v6975
  %v7014 = vadd.f32 %v6876, %v6980
  %v7015 = vadd.f32 %v6877, %v6985
  %v7016 = vadd.f32 %v6878, %v6990
  %v7017 = vadd.f32 %v6879, %v6995
  %v7018 = vadd.f32 %v6880, %v7000
  %v7019 = vadd.f32 %v6881, %v7005
  %v7020 = vadd.f32 %v6882, %v7010
  %v7021 = vld [vmem:[%s6468 + $0x4] sm:$0xff]
  %v7022 = vld [vmem:[%s6468 + $0x14] sm:$0xff]
  %v7023 = vld [vmem:[%s6468 + $0x24] sm:$0xff]
  %v7024 = vld [vmem:[%s6468 + $0x34] sm:$0xff]
  %v7025 = vld [vmem:[%s6468 + $0x44] sm:$0xff]
  %v7026 = vld [vmem:[%s6468 + $0x54] sm:$0xff]
  %v7027 = vld [vmem:[%s6468 + $0x64] sm:$0xff]
  %v7028 = vld [vmem:[%s6468 + $0x74] sm:$0xff]
  %s7029 = scalar_lea.vmem %s3, 1152
  %v7030 = vld [vmem:[%s7029] sm:$0xff]
  %v7031 = vld [vmem:[%s7029 + $0x8] sm:$0xff]
  %v7032 = vld [vmem:[%s7029 + $0x10] sm:$0xff]
  %v7033 = vld [vmem:[%s7029 + $0x18] sm:$0xff]
  %v7034 = vld [vmem:[%s7029 + $0x20] sm:$0xff]
  %v7035 = vld [vmem:[%s7029 + $0x28] sm:$0xff]
  %v7036 = vld [vmem:[%s7029 + $0x30] sm:$0xff]
  %v7037 = vld [vmem:[%s7029 + $0x38] sm:$0xff]
  %v7038 = vld [vmem:[%s7029 + $0x40] sm:$0xff]
  %v7039 = vld [vmem:[%s7029 + $0x48] sm:$0xff]
  %v7040 = vld [vmem:[%s7029 + $0x50] sm:$0xff]
  %v7041 = vld [vmem:[%s7029 + $0x58] sm:$0xff]
  %v7042 = vld [vmem:[%s7029 + $0x60] sm:$0xff]
  %v7043 = vld [vmem:[%s7029 + $0x68] sm:$0xff]
  %v7044 = vld [vmem:[%s7029 + $0x70] sm:$0xff]
  %v7045 = vld [vmem:[%s7029 + $0x78] sm:$0xff]
  %7046 = vmatprep.subr.mxu0 0.0
  %7047 = vmatpush1.msra.mxu0 %v7045
  %7048 = vmatprep.subr.mxu0 0.0
  %7049 = vmatpush1.msra.mxu0 %v7044
  %7050 = vmatprep.subr.mxu0 0.0
  %7051 = vmatpush1.msra.mxu0 %v7043
  %7052 = vmatprep.subr.mxu0 0.0
  %7053 = vmatpush1.msra.mxu0 %v7042
  %7054 = vmatprep.subr.mxu0 0.0
  %7055 = vmatpush1.msra.mxu0 %v7041
  %7056 = vmatprep.subr.mxu0 0.0
  %7057 = vmatpush1.msra.mxu0 %v7040
  %7058 = vmatprep.subr.mxu0 0.0
  %7059 = vmatpush1.msra.mxu0 %v7039
  %7060 = vmatprep.subr.mxu0 0.0
  %7061 = vmatpush1.msra.mxu0 %v7038
  %7062 = vmatprep.subr.mxu0 0.0
  %7063 = vmatpush1.msra.mxu0 %v7037
  %7064 = vmatprep.subr.mxu0 0.0
  %7065 = vmatpush1.msra.mxu0 %v7036
  %7066 = vmatprep.subr.mxu0 0.0
  %7067 = vmatpush1.msra.mxu0 %v7035
  %7068 = vmatprep.subr.mxu0 0.0
  %7069 = vmatpush1.msra.mxu0 %v7034
  %7070 = vmatprep.subr.mxu0 0.0
  %7071 = vmatpush1.msra.mxu0 %v7033
  %7072 = vmatprep.subr.mxu0 0.0
  %7073 = vmatpush1.msra.mxu0 %v7032
  %7074 = vmatprep.subr.mxu0 0.0
  %7075 = vmatpush1.msra.mxu0 %v7031
  %7076 = vmatprep.subr.mxu0 0.0
  %7077 = vmatpush1.msra.mxu0 %v7030
  %7078 = vmatprep.subr.mxu0 0.0
  %7079 = vmatpush2.msra.mxu0 0.0
  %7080 = vmatprep.subr.mxu0 0.0
  %7081 = vmatpush2.msra.mxu0 0.0
  %7082 = vmatprep.subr.mxu0 0.0
  %7083 = vmatpush2.msra.mxu0 0.0
  %7084 = vmatprep.subr.mxu0 0.0
  %7085 = vmatpush2.msra.mxu0 0.0
  %7086 = vmatprep.subr.mxu0 0.0
  %7087 = vmatpush2.msra.mxu0 0.0
  %7088 = vmatprep.subr.mxu0 0.0
  %7089 = vmatpush2.msra.mxu0 0.0
  %7090 = vmatprep.subr.mxu0 0.0
  %7091 = vmatpush2.msra.mxu0 0.0
  %7092 = vmatprep.subr.mxu0 0.0
  %7093 = vmatpush2.msra.mxu0 0.0
  %7094 = vmatprep.subr.mxu0 0.0
  %7095 = vmatpush2.msra.mxu0 0.0
  %7096 = vmatprep.subr.mxu0 0.0
  %7097 = vmatpush2.msra.mxu0 0.0
  %7098 = vmatprep.subr.mxu0 0.0
  %7099 = vmatpush2.msra.mxu0 0.0
  %7100 = vmatprep.subr.mxu0 0.0
  %7101 = vmatpush2.msra.mxu0 0.0
  %7102 = vmatprep.subr.mxu0 0.0
  %7103 = vmatpush2.msra.mxu0 0.0
  %7104 = vmatprep.subr.mxu0 0.0
  %7105 = vmatpush2.msra.mxu0 0.0
  %7106 = vmatprep.subr.mxu0 0.0
  %7107 = vmatpush2.msra.mxu0 0.0
  %7108 = vmatprep.subr.mxu0 0.0
  %7109 = vmatpush2.msra.mxu0 0.0
  %7110 = vmatprep.mubr.f32.mxu0 0.0
  %7111 = vmatmul.mubr.f32.gmra.mxu0 %v7021
  %v7112 = vpop.f32.mrf.mxu0
  %v7113 = vadd.f32 0.0, %v7112
  %v7114 = vpop.f32.mrf.mxu0
  %7115 = vmatprep.mubr.f32.mxu0 0.0
  %7116 = vmatmul.mubr.f32.gmra.mxu0 %v7022
  %v7117 = vpop.f32.mrf.mxu0
  %v7118 = vadd.f32 0.0, %v7117
  %v7119 = vpop.f32.mrf.mxu0
  %7120 = vmatprep.mubr.f32.mxu0 0.0
  %7121 = vmatmul.mubr.f32.gmra.mxu0 %v7023
  %v7122 = vpop.f32.mrf.mxu0
  %v7123 = vadd.f32 0.0, %v7122
  %v7124 = vpop.f32.mrf.mxu0
  %7125 = vmatprep.mubr.f32.mxu0 0.0
  %7126 = vmatmul.mubr.f32.gmra.mxu0 %v7024
  %v7127 = vpop.f32.mrf.mxu0
  %v7128 = vadd.f32 0.0, %v7127
  %v7129 = vpop.f32.mrf.mxu0
  %7130 = vmatprep.mubr.f32.mxu0 0.0
  %7131 = vmatmul.mubr.f32.gmra.mxu0 %v7025
  %v7132 = vpop.f32.mrf.mxu0
  %v7133 = vadd.f32 0.0, %v7132
  %v7134 = vpop.f32.mrf.mxu0
  %7135 = vmatprep.mubr.f32.mxu0 0.0
  %7136 = vmatmul.mubr.f32.gmra.mxu0 %v7026
  %v7137 = vpop.f32.mrf.mxu0
  %v7138 = vadd.f32 0.0, %v7137
  %v7139 = vpop.f32.mrf.mxu0
  %7140 = vmatprep.mubr.f32.mxu0 0.0
  %7141 = vmatmul.mubr.f32.gmra.mxu0 %v7027
  %v7142 = vpop.f32.mrf.mxu0
  %v7143 = vadd.f32 0.0, %v7142
  %v7144 = vpop.f32.mrf.mxu0
  %7145 = vmatprep.mubr.f32.mxu0 0.0
  %7146 = vmatmul.mubr.f32.gmra.mxu0 %v7028
  %v7147 = vpop.f32.mrf.mxu0
  %v7148 = vadd.f32 0.0, %v7147
  %v7149 = vpop.f32.mrf.mxu0
  %7150 = vdwg.mxu0
  %v7151 = vadd.f32 %v7013, %v7113
  %v7152 = vadd.f32 %v7014, %v7118
  %v7153 = vadd.f32 %v7015, %v7123
  %v7154 = vadd.f32 %v7016, %v7128
  %v7155 = vadd.f32 %v7017, %v7133
  %v7156 = vadd.f32 %v7018, %v7138
  %v7157 = vadd.f32 %v7019, %v7143
  %v7158 = vadd.f32 %v7020, %v7148
  %s7159 = scalar_lea.vmem [#allocation3], 32
  %v7160 = vld [vmem:[%s7159] sm:$0xff]
  %v7161 = vld [vmem:[%s7159 + $0x10] sm:$0xff]
  %v7162 = vld [vmem:[%s7159 + $0x20] sm:$0xff]
  %v7163 = vld [vmem:[%s7159 + $0x30] sm:$0xff]
  %v7164 = vld [vmem:[%s7159 + $0x40] sm:$0xff]
  %v7165 = vld [vmem:[%s7159 + $0x50] sm:$0xff]
  %v7166 = vld [vmem:[%s7159 + $0x60] sm:$0xff]
  %v7167 = vld [vmem:[%s7159 + $0x70] sm:$0xff]
  %s7168 = scalar_lea.vmem %s3, 1280
  %v7169 = vld [vmem:[%s7168] sm:$0xff]
  %v7170 = vld [vmem:[%s7168 + $0x8] sm:$0xff]
  %v7171 = vld [vmem:[%s7168 + $0x10] sm:$0xff]
  %v7172 = vld [vmem:[%s7168 + $0x18] sm:$0xff]
  %v7173 = vld [vmem:[%s7168 + $0x20] sm:$0xff]
  %v7174 = vld [vmem:[%s7168 + $0x28] sm:$0xff]
  %v7175 = vld [vmem:[%s7168 + $0x30] sm:$0xff]
  %v7176 = vld [vmem:[%s7168 + $0x38] sm:$0xff]
  %v7177 = vld [vmem:[%s7168 + $0x40] sm:$0xff]
  %v7178 = vld [vmem:[%s7168 + $0x48] sm:$0xff]
  %v7179 = vld [vmem:[%s7168 + $0x50] sm:$0xff]
  %v7180 = vld [vmem:[%s7168 + $0x58] sm:$0xff]
  %v7181 = vld [vmem:[%s7168 + $0x60] sm:$0xff]
  %v7182 = vld [vmem:[%s7168 + $0x68] sm:$0xff]
  %v7183 = vld [vmem:[%s7168 + $0x70] sm:$0xff]
  %v7184 = vld [vmem:[%s7168 + $0x78] sm:$0xff]
  %7185 = vmatprep.subr.mxu0 0.0
  %7186 = vmatpush1.msra.mxu0 %v7184
  %7187 = vmatprep.subr.mxu0 0.0
  %7188 = vmatpush1.msra.mxu0 %v7183
  %7189 = vmatprep.subr.mxu0 0.0
  %7190 = vmatpush1.msra.mxu0 %v7182
  %7191 = vmatprep.subr.mxu0 0.0
  %7192 = vmatpush1.msra.mxu0 %v7181
  %7193 = vmatprep.subr.mxu0 0.0
  %7194 = vmatpush1.msra.mxu0 %v7180
  %7195 = vmatprep.subr.mxu0 0.0
  %7196 = vmatpush1.msra.mxu0 %v7179
  %7197 = vmatprep.subr.mxu0 0.0
  %7198 = vmatpush1.msra.mxu0 %v7178
  %7199 = vmatprep.subr.mxu0 0.0
  %7200 = vmatpush1.msra.mxu0 %v7177
  %7201 = vmatprep.subr.mxu0 0.0
  %7202 = vmatpush1.msra.mxu0 %v7176
  %7203 = vmatprep.subr.mxu0 0.0
  %7204 = vmatpush1.msra.mxu0 %v7175
  %7205 = vmatprep.subr.mxu0 0.0
  %7206 = vmatpush1.msra.mxu0 %v7174
  %7207 = vmatprep.subr.mxu0 0.0
  %7208 = vmatpush1.msra.mxu0 %v7173
  %7209 = vmatprep.subr.mxu0 0.0
  %7210 = vmatpush1.msra.mxu0 %v7172
  %7211 = vmatprep.subr.mxu0 0.0
  %7212 = vmatpush1.msra.mxu0 %v7171
  %7213 = vmatprep.subr.mxu0 0.0
  %7214 = vmatpush1.msra.mxu0 %v7170
  %7215 = vmatprep.subr.mxu0 0.0
  %7216 = vmatpush1.msra.mxu0 %v7169
  %7217 = vmatprep.subr.mxu0 0.0
  %7218 = vmatpush2.msra.mxu0 0.0
  %7219 = vmatprep.subr.mxu0 0.0
  %7220 = vmatpush2.msra.mxu0 0.0
  %7221 = vmatprep.subr.mxu0 0.0
  %7222 = vmatpush2.msra.mxu0 0.0
  %7223 = vmatprep.subr.mxu0 0.0
  %7224 = vmatpush2.msra.mxu0 0.0
  %7225 = vmatprep.subr.mxu0 0.0
  %7226 = vmatpush2.msra.mxu0 0.0
  %7227 = vmatprep.subr.mxu0 0.0
  %7228 = vmatpush2.msra.mxu0 0.0
  %7229 = vmatprep.subr.mxu0 0.0
  %7230 = vmatpush2.msra.mxu0 0.0
  %7231 = vmatprep.subr.mxu0 0.0
  %7232 = vmatpush2.msra.mxu0 0.0
  %7233 = vmatprep.subr.mxu0 0.0
  %7234 = vmatpush2.msra.mxu0 0.0
  %7235 = vmatprep.subr.mxu0 0.0
  %7236 = vmatpush2.msra.mxu0 0.0
  %7237 = vmatprep.subr.mxu0 0.0
  %7238 = vmatpush2.msra.mxu0 0.0
  %7239 = vmatprep.subr.mxu0 0.0
  %7240 = vmatpush2.msra.mxu0 0.0
  %7241 = vmatprep.subr.mxu0 0.0
  %7242 = vmatpush2.msra.mxu0 0.0
  %7243 = vmatprep.subr.mxu0 0.0
  %7244 = vmatpush2.msra.mxu0 0.0
  %7245 = vmatprep.subr.mxu0 0.0
  %7246 = vmatpush2.msra.mxu0 0.0
  %7247 = vmatprep.subr.mxu0 0.0
  %7248 = vmatpush2.msra.mxu0 0.0
  %7249 = vmatprep.mubr.f32.mxu0 0.0
  %7250 = vmatmul.mubr.f32.gmra.mxu0 %v7160
  %v7251 = vpop.f32.mrf.mxu0
  %v7252 = vadd.f32 0.0, %v7251
  %v7253 = vpop.f32.mrf.mxu0
  %7254 = vmatprep.mubr.f32.mxu0 0.0
  %7255 = vmatmul.mubr.f32.gmra.mxu0 %v7161
  %v7256 = vpop.f32.mrf.mxu0
  %v7257 = vadd.f32 0.0, %v7256
  %v7258 = vpop.f32.mrf.mxu0
  %7259 = vmatprep.mubr.f32.mxu0 0.0
  %7260 = vmatmul.mubr.f32.gmra.mxu0 %v7162
  %v7261 = vpop.f32.mrf.mxu0
  %v7262 = vadd.f32 0.0, %v7261
  %v7263 = vpop.f32.mrf.mxu0
  %7264 = vmatprep.mubr.f32.mxu0 0.0
  %7265 = vmatmul.mubr.f32.gmra.mxu0 %v7163
  %v7266 = vpop.f32.mrf.mxu0
  %v7267 = vadd.f32 0.0, %v7266
  %v7268 = vpop.f32.mrf.mxu0
  %7269 = vmatprep.mubr.f32.mxu0 0.0
  %7270 = vmatmul.mubr.f32.gmra.mxu0 %v7164
  %v7271 = vpop.f32.mrf.mxu0
  %v7272 = vadd.f32 0.0, %v7271
  %v7273 = vpop.f32.mrf.mxu0
  %7274 = vmatprep.mubr.f32.mxu0 0.0
  %7275 = vmatmul.mubr.f32.gmra.mxu0 %v7165
  %v7276 = vpop.f32.mrf.mxu0
  %v7277 = vadd.f32 0.0, %v7276
  %v7278 = vpop.f32.mrf.mxu0
  %7279 = vmatprep.mubr.f32.mxu0 0.0
  %7280 = vmatmul.mubr.f32.gmra.mxu0 %v7166
  %v7281 = vpop.f32.mrf.mxu0
  %v7282 = vadd.f32 0.0, %v7281
  %v7283 = vpop.f32.mrf.mxu0
  %7284 = vmatprep.mubr.f32.mxu0 0.0
  %7285 = vmatmul.mubr.f32.gmra.mxu0 %v7167
  %v7286 = vpop.f32.mrf.mxu0
  %v7287 = vadd.f32 0.0, %v7286
  %v7288 = vpop.f32.mrf.mxu0
  %7289 = vdwg.mxu0
  %v7290 = vadd.f32 %v7151, %v7252
  %v7291 = vadd.f32 %v7152, %v7257
  %v7292 = vadd.f32 %v7153, %v7262
  %v7293 = vadd.f32 %v7154, %v7267
  %v7294 = vadd.f32 %v7155, %v7272
  %v7295 = vadd.f32 %v7156, %v7277
  %v7296 = vadd.f32 %v7157, %v7282
  %v7297 = vadd.f32 %v7158, %v7287
  %v7298 = vld [vmem:[%s7159 + $0x1] sm:$0xff]
  %v7299 = vld [vmem:[%s7159 + $0x11] sm:$0xff]
  %v7300 = vld [vmem:[%s7159 + $0x21] sm:$0xff]
  %v7301 = vld [vmem:[%s7159 + $0x31] sm:$0xff]
  %v7302 = vld [vmem:[%s7159 + $0x41] sm:$0xff]
  %v7303 = vld [vmem:[%s7159 + $0x51] sm:$0xff]
  %v7304 = vld [vmem:[%s7159 + $0x61] sm:$0xff]
  %v7305 = vld [vmem:[%s7159 + $0x71] sm:$0xff]
  %s7306 = scalar_lea.vmem %s3, 1408
  %v7307 = vld [vmem:[%s7306] sm:$0xff]
  %v7308 = vld [vmem:[%s7306 + $0x8] sm:$0xff]
  %v7309 = vld [vmem:[%s7306 + $0x10] sm:$0xff]
  %v7310 = vld [vmem:[%s7306 + $0x18] sm:$0xff]
  %v7311 = vld [vmem:[%s7306 + $0x20] sm:$0xff]
  %v7312 = vld [vmem:[%s7306 + $0x28] sm:$0xff]
  %v7313 = vld [vmem:[%s7306 + $0x30] sm:$0xff]
  %v7314 = vld [vmem:[%s7306 + $0x38] sm:$0xff]
  %v7315 = vld [vmem:[%s7306 + $0x40] sm:$0xff]
  %v7316 = vld [vmem:[%s7306 + $0x48] sm:$0xff]
  %v7317 = vld [vmem:[%s7306 + $0x50] sm:$0xff]
  %v7318 = vld [vmem:[%s7306 + $0x58] sm:$0xff]
  %v7319 = vld [vmem:[%s7306 + $0x60] sm:$0xff]
  %v7320 = vld [vmem:[%s7306 + $0x68] sm:$0xff]
  %v7321 = vld [vmem:[%s7306 + $0x70] sm:$0xff]
  %v7322 = vld [vmem:[%s7306 + $0x78] sm:$0xff]
  %7323 = vmatprep.subr.mxu0 0.0
  %7324 = vmatpush1.msra.mxu0 %v7322
  %7325 = vmatprep.subr.mxu0 0.0
  %7326 = vmatpush1.msra.mxu0 %v7321
  %7327 = vmatprep.subr.mxu0 0.0
  %7328 = vmatpush1.msra.mxu0 %v7320
  %7329 = vmatprep.subr.mxu0 0.0
  %7330 = vmatpush1.msra.mxu0 %v7319
  %7331 = vmatprep.subr.mxu0 0.0
  %7332 = vmatpush1.msra.mxu0 %v7318
  %7333 = vmatprep.subr.mxu0 0.0
  %7334 = vmatpush1.msra.mxu0 %v7317
  %7335 = vmatprep.subr.mxu0 0.0
  %7336 = vmatpush1.msra.mxu0 %v7316
  %7337 = vmatprep.subr.mxu0 0.0
  %7338 = vmatpush1.msra.mxu0 %v7315
  %7339 = vmatprep.subr.mxu0 0.0
  %7340 = vmatpush1.msra.mxu0 %v7314
  %7341 = vmatprep.subr.mxu0 0.0
  %7342 = vmatpush1.msra.mxu0 %v7313
  %7343 = vmatprep.subr.mxu0 0.0
  %7344 = vmatpush1.msra.mxu0 %v7312
  %7345 = vmatprep.subr.mxu0 0.0
  %7346 = vmatpush1.msra.mxu0 %v7311
  %7347 = vmatprep.subr.mxu0 0.0
  %7348 = vmatpush1.msra.mxu0 %v7310
  %7349 = vmatprep.subr.mxu0 0.0
  %7350 = vmatpush1.msra.mxu0 %v7309
  %7351 = vmatprep.subr.mxu0 0.0
  %7352 = vmatpush1.msra.mxu0 %v7308
  %7353 = vmatprep.subr.mxu0 0.0
  %7354 = vmatpush1.msra.mxu0 %v7307
  %7355 = vmatprep.subr.mxu0 0.0
  %7356 = vmatpush2.msra.mxu0 0.0
  %7357 = vmatprep.subr.mxu0 0.0
  %7358 = vmatpush2.msra.mxu0 0.0
  %7359 = vmatprep.subr.mxu0 0.0
  %7360 = vmatpush2.msra.mxu0 0.0
  %7361 = vmatprep.subr.mxu0 0.0
  %7362 = vmatpush2.msra.mxu0 0.0
  %7363 = vmatprep.subr.mxu0 0.0
  %7364 = vmatpush2.msra.mxu0 0.0
  %7365 = vmatprep.subr.mxu0 0.0
  %7366 = vmatpush2.msra.mxu0 0.0
  %7367 = vmatprep.subr.mxu0 0.0
  %7368 = vmatpush2.msra.mxu0 0.0
  %7369 = vmatprep.subr.mxu0 0.0
  %7370 = vmatpush2.msra.mxu0 0.0
  %7371 = vmatprep.subr.mxu0 0.0
  %7372 = vmatpush2.msra.mxu0 0.0
  %7373 = vmatprep.subr.mxu0 0.0
  %7374 = vmatpush2.msra.mxu0 0.0
  %7375 = vmatprep.subr.mxu0 0.0
  %7376 = vmatpush2.msra.mxu0 0.0
  %7377 = vmatprep.subr.mxu0 0.0
  %7378 = vmatpush2.msra.mxu0 0.0
  %7379 = vmatprep.subr.mxu0 0.0
  %7380 = vmatpush2.msra.mxu0 0.0
  %7381 = vmatprep.subr.mxu0 0.0
  %7382 = vmatpush2.msra.mxu0 0.0
  %7383 = vmatprep.subr.mxu0 0.0
  %7384 = vmatpush2.msra.mxu0 0.0
  %7385 = vmatprep.subr.mxu0 0.0
  %7386 = vmatpush2.msra.mxu0 0.0
  %7387 = vmatprep.mubr.f32.mxu0 0.0
  %7388 = vmatmul.mubr.f32.gmra.mxu0 %v7298
  %v7389 = vpop.f32.mrf.mxu0
  %v7390 = vadd.f32 0.0, %v7389
  %v7391 = vpop.f32.mrf.mxu0
  %7392 = vmatprep.mubr.f32.mxu0 0.0
  %7393 = vmatmul.mubr.f32.gmra.mxu0 %v7299
  %v7394 = vpop.f32.mrf.mxu0
  %v7395 = vadd.f32 0.0, %v7394
  %v7396 = vpop.f32.mrf.mxu0
  %7397 = vmatprep.mubr.f32.mxu0 0.0
  %7398 = vmatmul.mubr.f32.gmra.mxu0 %v7300
  %v7399 = vpop.f32.mrf.mxu0
  %v7400 = vadd.f32 0.0, %v7399
  %v7401 = vpop.f32.mrf.mxu0
  %7402 = vmatprep.mubr.f32.mxu0 0.0
  %7403 = vmatmul.mubr.f32.gmra.mxu0 %v7301
  %v7404 = vpop.f32.mrf.mxu0
  %v7405 = vadd.f32 0.0, %v7404
  %v7406 = vpop.f32.mrf.mxu0
  %7407 = vmatprep.mubr.f32.mxu0 0.0
  %7408 = vmatmul.mubr.f32.gmra.mxu0 %v7302
  %v7409 = vpop.f32.mrf.mxu0
  %v7410 = vadd.f32 0.0, %v7409
  %v7411 = vpop.f32.mrf.mxu0
  %7412 = vmatprep.mubr.f32.mxu0 0.0
  %7413 = vmatmul.mubr.f32.gmra.mxu0 %v7303
  %v7414 = vpop.f32.mrf.mxu0
  %v7415 = vadd.f32 0.0, %v7414
  %v7416 = vpop.f32.mrf.mxu0
  %7417 = vmatprep.mubr.f32.mxu0 0.0
  %7418 = vmatmul.mubr.f32.gmra.mxu0 %v7304
  %v7419 = vpop.f32.mrf.mxu0
  %v7420 = vadd.f32 0.0, %v7419
  %v7421 = vpop.f32.mrf.mxu0
  %7422 = vmatprep.mubr.f32.mxu0 0.0
  %7423 = vmatmul.mubr.f32.gmra.mxu0 %v7305
  %v7424 = vpop.f32.mrf.mxu0
  %v7425 = vadd.f32 0.0, %v7424
  %v7426 = vpop.f32.mrf.mxu0
  %7427 = vdwg.mxu0
  %v7428 = vadd.f32 %v7290, %v7390
  %v7429 = vadd.f32 %v7291, %v7395
  %v7430 = vadd.f32 %v7292, %v7400
  %v7431 = vadd.f32 %v7293, %v7405
  %v7432 = vadd.f32 %v7294, %v7410
  %v7433 = vadd.f32 %v7295, %v7415
  %v7434 = vadd.f32 %v7296, %v7420
  %v7435 = vadd.f32 %v7297, %v7425
  %v7436 = vld [vmem:[%s7159 + $0x2] sm:$0xff]
  %v7437 = vld [vmem:[%s7159 + $0x12] sm:$0xff]
  %v7438 = vld [vmem:[%s7159 + $0x22] sm:$0xff]
  %v7439 = vld [vmem:[%s7159 + $0x32] sm:$0xff]
  %v7440 = vld [vmem:[%s7159 + $0x42] sm:$0xff]
  %v7441 = vld [vmem:[%s7159 + $0x52] sm:$0xff]
  %v7442 = vld [vmem:[%s7159 + $0x62] sm:$0xff]
  %v7443 = vld [vmem:[%s7159 + $0x72] sm:$0xff]
  %s7444 = scalar_lea.vmem %s3, 1536
  %v7445 = vld [vmem:[%s7444] sm:$0xff]
  %v7446 = vld [vmem:[%s7444 + $0x8] sm:$0xff]
  %v7447 = vld [vmem:[%s7444 + $0x10] sm:$0xff]
  %v7448 = vld [vmem:[%s7444 + $0x18] sm:$0xff]
  %v7449 = vld [vmem:[%s7444 + $0x20] sm:$0xff]
  %v7450 = vld [vmem:[%s7444 + $0x28] sm:$0xff]
  %v7451 = vld [vmem:[%s7444 + $0x30] sm:$0xff]
  %v7452 = vld [vmem:[%s7444 + $0x38] sm:$0xff]
  %v7453 = vld [vmem:[%s7444 + $0x40] sm:$0xff]
  %v7454 = vld [vmem:[%s7444 + $0x48] sm:$0xff]
  %v7455 = vld [vmem:[%s7444 + $0x50] sm:$0xff]
  %v7456 = vld [vmem:[%s7444 + $0x58] sm:$0xff]
  %v7457 = vld [vmem:[%s7444 + $0x60] sm:$0xff]
  %v7458 = vld [vmem:[%s7444 + $0x68] sm:$0xff]
  %v7459 = vld [vmem:[%s7444 + $0x70] sm:$0xff]
  %v7460 = vld [vmem:[%s7444 + $0x78] sm:$0xff]
  %7461 = vmatprep.subr.mxu0 0.0
  %7462 = vmatpush1.msra.mxu0 %v7460
  %7463 = vmatprep.subr.mxu0 0.0
  %7464 = vmatpush1.msra.mxu0 %v7459
  %7465 = vmatprep.subr.mxu0 0.0
  %7466 = vmatpush1.msra.mxu0 %v7458
  %7467 = vmatprep.subr.mxu0 0.0
  %7468 = vmatpush1.msra.mxu0 %v7457
  %7469 = vmatprep.subr.mxu0 0.0
  %7470 = vmatpush1.msra.mxu0 %v7456
  %7471 = vmatprep.subr.mxu0 0.0
  %7472 = vmatpush1.msra.mxu0 %v7455
  %7473 = vmatprep.subr.mxu0 0.0
  %7474 = vmatpush1.msra.mxu0 %v7454
  %7475 = vmatprep.subr.mxu0 0.0
  %7476 = vmatpush1.msra.mxu0 %v7453
  %7477 = vmatprep.subr.mxu0 0.0
  %7478 = vmatpush1.msra.mxu0 %v7452
  %7479 = vmatprep.subr.mxu0 0.0
  %7480 = vmatpush1.msra.mxu0 %v7451
  %7481 = vmatprep.subr.mxu0 0.0
  %7482 = vmatpush1.msra.mxu0 %v7450
  %7483 = vmatprep.subr.mxu0 0.0
  %7484 = vmatpush1.msra.mxu0 %v7449
  %7485 = vmatprep.subr.mxu0 0.0
  %7486 = vmatpush1.msra.mxu0 %v7448
  %7487 = vmatprep.subr.mxu0 0.0
  %7488 = vmatpush1.msra.mxu0 %v7447
  %7489 = vmatprep.subr.mxu0 0.0
  %7490 = vmatpush1.msra.mxu0 %v7446
  %7491 = vmatprep.subr.mxu0 0.0
  %7492 = vmatpush1.msra.mxu0 %v7445
  %7493 = vmatprep.subr.mxu0 0.0
  %7494 = vmatpush2.msra.mxu0 0.0
  %7495 = vmatprep.subr.mxu0 0.0
  %7496 = vmatpush2.msra.mxu0 0.0
  %7497 = vmatprep.subr.mxu0 0.0
  %7498 = vmatpush2.msra.mxu0 0.0
  %7499 = vmatprep.subr.mxu0 0.0
  %7500 = vmatpush2.msra.mxu0 0.0
  %7501 = vmatprep.subr.mxu0 0.0
  %7502 = vmatpush2.msra.mxu0 0.0
  %7503 = vmatprep.subr.mxu0 0.0
  %7504 = vmatpush2.msra.mxu0 0.0
  %7505 = vmatprep.subr.mxu0 0.0
  %7506 = vmatpush2.msra.mxu0 0.0
  %7507 = vmatprep.subr.mxu0 0.0
  %7508 = vmatpush2.msra.mxu0 0.0
  %7509 = vmatprep.subr.mxu0 0.0
  %7510 = vmatpush2.msra.mxu0 0.0
  %7511 = vmatprep.subr.mxu0 0.0
  %7512 = vmatpush2.msra.mxu0 0.0
  %7513 = vmatprep.subr.mxu0 0.0
  %7514 = vmatpush2.msra.mxu0 0.0
  %7515 = vmatprep.subr.mxu0 0.0
  %7516 = vmatpush2.msra.mxu0 0.0
  %7517 = vmatprep.subr.mxu0 0.0
  %7518 = vmatpush2.msra.mxu0 0.0
  %7519 = vmatprep.subr.mxu0 0.0
  %7520 = vmatpush2.msra.mxu0 0.0
  %7521 = vmatprep.subr.mxu0 0.0
  %7522 = vmatpush2.msra.mxu0 0.0
  %7523 = vmatprep.subr.mxu0 0.0
  %7524 = vmatpush2.msra.mxu0 0.0
  %7525 = vmatprep.mubr.f32.mxu0 0.0
  %7526 = vmatmul.mubr.f32.gmra.mxu0 %v7436
  %v7527 = vpop.f32.mrf.mxu0
  %v7528 = vadd.f32 0.0, %v7527
  %v7529 = vpop.f32.mrf.mxu0
  %7530 = vmatprep.mubr.f32.mxu0 0.0
  %7531 = vmatmul.mubr.f32.gmra.mxu0 %v7437
  %v7532 = vpop.f32.mrf.mxu0
  %v7533 = vadd.f32 0.0, %v7532
  %v7534 = vpop.f32.mrf.mxu0
  %7535 = vmatprep.mubr.f32.mxu0 0.0
  %7536 = vmatmul.mubr.f32.gmra.mxu0 %v7438
  %v7537 = vpop.f32.mrf.mxu0
  %v7538 = vadd.f32 0.0, %v7537
  %v7539 = vpop.f32.mrf.mxu0
  %7540 = vmatprep.mubr.f32.mxu0 0.0
  %7541 = vmatmul.mubr.f32.gmra.mxu0 %v7439
  %v7542 = vpop.f32.mrf.mxu0
  %v7543 = vadd.f32 0.0, %v7542
  %v7544 = vpop.f32.mrf.mxu0
  %7545 = vmatprep.mubr.f32.mxu0 0.0
  %7546 = vmatmul.mubr.f32.gmra.mxu0 %v7440
  %v7547 = vpop.f32.mrf.mxu0
  %v7548 = vadd.f32 0.0, %v7547
  %v7549 = vpop.f32.mrf.mxu0
  %7550 = vmatprep.mubr.f32.mxu0 0.0
  %7551 = vmatmul.mubr.f32.gmra.mxu0 %v7441
  %v7552 = vpop.f32.mrf.mxu0
  %v7553 = vadd.f32 0.0, %v7552
  %v7554 = vpop.f32.mrf.mxu0
  %7555 = vmatprep.mubr.f32.mxu0 0.0
  %7556 = vmatmul.mubr.f32.gmra.mxu0 %v7442
  %v7557 = vpop.f32.mrf.mxu0
  %v7558 = vadd.f32 0.0, %v7557
  %v7559 = vpop.f32.mrf.mxu0
  %7560 = vmatprep.mubr.f32.mxu0 0.0
  %7561 = vmatmul.mubr.f32.gmra.mxu0 %v7443
  %v7562 = vpop.f32.mrf.mxu0
  %v7563 = vadd.f32 0.0, %v7562
  %v7564 = vpop.f32.mrf.mxu0
  %7565 = vdwg.mxu0
  %v7566 = vadd.f32 %v7428, %v7528
  %v7567 = vadd.f32 %v7429, %v7533
  %v7568 = vadd.f32 %v7430, %v7538
  %v7569 = vadd.f32 %v7431, %v7543
  %v7570 = vadd.f32 %v7432, %v7548
  %v7571 = vadd.f32 %v7433, %v7553
  %v7572 = vadd.f32 %v7434, %v7558
  %v7573 = vadd.f32 %v7435, %v7563
  %v7574 = vld [vmem:[%s7159 + $0x3] sm:$0xff]
  %v7575 = vld [vmem:[%s7159 + $0x13] sm:$0xff]
  %v7576 = vld [vmem:[%s7159 + $0x23] sm:$0xff]
  %v7577 = vld [vmem:[%s7159 + $0x33] sm:$0xff]
  %v7578 = vld [vmem:[%s7159 + $0x43] sm:$0xff]
  %v7579 = vld [vmem:[%s7159 + $0x53] sm:$0xff]
  %v7580 = vld [vmem:[%s7159 + $0x63] sm:$0xff]
  %v7581 = vld [vmem:[%s7159 + $0x73] sm:$0xff]
  %s7582 = scalar_lea.vmem %s3, 1664
  %v7583 = vld [vmem:[%s7582] sm:$0xff]
  %v7584 = vld [vmem:[%s7582 + $0x8] sm:$0xff]
  %v7585 = vld [vmem:[%s7582 + $0x10] sm:$0xff]
  %v7586 = vld [vmem:[%s7582 + $0x18] sm:$0xff]
  %v7587 = vld [vmem:[%s7582 + $0x20] sm:$0xff]
  %v7588 = vld [vmem:[%s7582 + $0x28] sm:$0xff]
  %v7589 = vld [vmem:[%s7582 + $0x30] sm:$0xff]
  %v7590 = vld [vmem:[%s7582 + $0x38] sm:$0xff]
  %v7591 = vld [vmem:[%s7582 + $0x40] sm:$0xff]
  %v7592 = vld [vmem:[%s7582 + $0x48] sm:$0xff]
  %v7593 = vld [vmem:[%s7582 + $0x50] sm:$0xff]
  %v7594 = vld [vmem:[%s7582 + $0x58] sm:$0xff]
  %v7595 = vld [vmem:[%s7582 + $0x60] sm:$0xff]
  %v7596 = vld [vmem:[%s7582 + $0x68] sm:$0xff]
  %v7597 = vld [vmem:[%s7582 + $0x70] sm:$0xff]
  %v7598 = vld [vmem:[%s7582 + $0x78] sm:$0xff]
  %7599 = vmatprep.subr.mxu0 0.0
  %7600 = vmatpush1.msra.mxu0 %v7598
  %7601 = vmatprep.subr.mxu0 0.0
  %7602 = vmatpush1.msra.mxu0 %v7597
  %7603 = vmatprep.subr.mxu0 0.0
  %7604 = vmatpush1.msra.mxu0 %v7596
  %7605 = vmatprep.subr.mxu0 0.0
  %7606 = vmatpush1.msra.mxu0 %v7595
  %7607 = vmatprep.subr.mxu0 0.0
  %7608 = vmatpush1.msra.mxu0 %v7594
  %7609 = vmatprep.subr.mxu0 0.0
  %7610 = vmatpush1.msra.mxu0 %v7593
  %7611 = vmatprep.subr.mxu0 0.0
  %7612 = vmatpush1.msra.mxu0 %v7592
  %7613 = vmatprep.subr.mxu0 0.0
  %7614 = vmatpush1.msra.mxu0 %v7591
  %7615 = vmatprep.subr.mxu0 0.0
  %7616 = vmatpush1.msra.mxu0 %v7590
  %7617 = vmatprep.subr.mxu0 0.0
  %7618 = vmatpush1.msra.mxu0 %v7589
  %7619 = vmatprep.subr.mxu0 0.0
  %7620 = vmatpush1.msra.mxu0 %v7588
  %7621 = vmatprep.subr.mxu0 0.0
  %7622 = vmatpush1.msra.mxu0 %v7587
  %7623 = vmatprep.subr.mxu0 0.0
  %7624 = vmatpush1.msra.mxu0 %v7586
  %7625 = vmatprep.subr.mxu0 0.0
  %7626 = vmatpush1.msra.mxu0 %v7585
  %7627 = vmatprep.subr.mxu0 0.0
  %7628 = vmatpush1.msra.mxu0 %v7584
  %7629 = vmatprep.subr.mxu0 0.0
  %7630 = vmatpush1.msra.mxu0 %v7583
  %7631 = vmatprep.subr.mxu0 0.0
  %7632 = vmatpush2.msra.mxu0 0.0
  %7633 = vmatprep.subr.mxu0 0.0
  %7634 = vmatpush2.msra.mxu0 0.0
  %7635 = vmatprep.subr.mxu0 0.0
  %7636 = vmatpush2.msra.mxu0 0.0
  %7637 = vmatprep.subr.mxu0 0.0
  %7638 = vmatpush2.msra.mxu0 0.0
  %7639 = vmatprep.subr.mxu0 0.0
  %7640 = vmatpush2.msra.mxu0 0.0
  %7641 = vmatprep.subr.mxu0 0.0
  %7642 = vmatpush2.msra.mxu0 0.0
  %7643 = vmatprep.subr.mxu0 0.0
  %7644 = vmatpush2.msra.mxu0 0.0
  %7645 = vmatprep.subr.mxu0 0.0
  %7646 = vmatpush2.msra.mxu0 0.0
  %7647 = vmatprep.subr.mxu0 0.0
  %7648 = vmatpush2.msra.mxu0 0.0
  %7649 = vmatprep.subr.mxu0 0.0
  %7650 = vmatpush2.msra.mxu0 0.0
  %7651 = vmatprep.subr.mxu0 0.0
  %7652 = vmatpush2.msra.mxu0 0.0
  %7653 = vmatprep.subr.mxu0 0.0
  %7654 = vmatpush2.msra.mxu0 0.0
  %7655 = vmatprep.subr.mxu0 0.0
  %7656 = vmatpush2.msra.mxu0 0.0
  %7657 = vmatprep.subr.mxu0 0.0
  %7658 = vmatpush2.msra.mxu0 0.0
  %7659 = vmatprep.subr.mxu0 0.0
  %7660 = vmatpush2.msra.mxu0 0.0
  %7661 = vmatprep.subr.mxu0 0.0
  %7662 = vmatpush2.msra.mxu0 0.0
  %7663 = vmatprep.mubr.f32.mxu0 0.0
  %7664 = vmatmul.mubr.f32.gmra.mxu0 %v7574
  %v7665 = vpop.f32.mrf.mxu0
  %v7666 = vadd.f32 0.0, %v7665
  %v7667 = vpop.f32.mrf.mxu0
  %7668 = vmatprep.mubr.f32.mxu0 0.0
  %7669 = vmatmul.mubr.f32.gmra.mxu0 %v7575
  %v7670 = vpop.f32.mrf.mxu0
  %v7671 = vadd.f32 0.0, %v7670
  %v7672 = vpop.f32.mrf.mxu0
  %7673 = vmatprep.mubr.f32.mxu0 0.0
  %7674 = vmatmul.mubr.f32.gmra.mxu0 %v7576
  %v7675 = vpop.f32.mrf.mxu0
  %v7676 = vadd.f32 0.0, %v7675
  %v7677 = vpop.f32.mrf.mxu0
  %7678 = vmatprep.mubr.f32.mxu0 0.0
  %7679 = vmatmul.mubr.f32.gmra.mxu0 %v7577
  %v7680 = vpop.f32.mrf.mxu0
  %v7681 = vadd.f32 0.0, %v7680
  %v7682 = vpop.f32.mrf.mxu0
  %7683 = vmatprep.mubr.f32.mxu0 0.0
  %7684 = vmatmul.mubr.f32.gmra.mxu0 %v7578
  %v7685 = vpop.f32.mrf.mxu0
  %v7686 = vadd.f32 0.0, %v7685
  %v7687 = vpop.f32.mrf.mxu0
  %7688 = vmatprep.mubr.f32.mxu0 0.0
  %7689 = vmatmul.mubr.f32.gmra.mxu0 %v7579
  %v7690 = vpop.f32.mrf.mxu0
  %v7691 = vadd.f32 0.0, %v7690
  %v7692 = vpop.f32.mrf.mxu0
  %7693 = vmatprep.mubr.f32.mxu0 0.0
  %7694 = vmatmul.mubr.f32.gmra.mxu0 %v7580
  %v7695 = vpop.f32.mrf.mxu0
  %v7696 = vadd.f32 0.0, %v7695
  %v7697 = vpop.f32.mrf.mxu0
  %7698 = vmatprep.mubr.f32.mxu0 0.0
  %7699 = vmatmul.mubr.f32.gmra.mxu0 %v7581
  %v7700 = vpop.f32.mrf.mxu0
  %v7701 = vadd.f32 0.0, %v7700
  %v7702 = vpop.f32.mrf.mxu0
  %7703 = vdwg.mxu0
  %v7704 = vadd.f32 %v7566, %v7666
  %v7705 = vadd.f32 %v7567, %v7671
  %v7706 = vadd.f32 %v7568, %v7676
  %v7707 = vadd.f32 %v7569, %v7681
  %v7708 = vadd.f32 %v7570, %v7686
  %v7709 = vadd.f32 %v7571, %v7691
  %v7710 = vadd.f32 %v7572, %v7696
  %v7711 = vadd.f32 %v7573, %v7701
  %v7712 = vld [vmem:[%s7159 + $0x4] sm:$0xff]
  %v7713 = vld [vmem:[%s7159 + $0x14] sm:$0xff]
  %v7714 = vld [vmem:[%s7159 + $0x24] sm:$0xff]
  %v7715 = vld [vmem:[%s7159 + $0x34] sm:$0xff]
  %v7716 = vld [vmem:[%s7159 + $0x44] sm:$0xff]
  %v7717 = vld [vmem:[%s7159 + $0x54] sm:$0xff]
  %v7718 = vld [vmem:[%s7159 + $0x64] sm:$0xff]
  %v7719 = vld [vmem:[%s7159 + $0x74] sm:$0xff]
  %s7720 = scalar_lea.vmem %s3, 1792
  %v7721 = vld [vmem:[%s7720] sm:$0xff]
  %v7722 = vld [vmem:[%s7720 + $0x8] sm:$0xff]
  %v7723 = vld [vmem:[%s7720 + $0x10] sm:$0xff]
  %v7724 = vld [vmem:[%s7720 + $0x18] sm:$0xff]
  %v7725 = vld [vmem:[%s7720 + $0x20] sm:$0xff]
  %v7726 = vld [vmem:[%s7720 + $0x28] sm:$0xff]
  %v7727 = vld [vmem:[%s7720 + $0x30] sm:$0xff]
  %v7728 = vld [vmem:[%s7720 + $0x38] sm:$0xff]
  %v7729 = vld [vmem:[%s7720 + $0x40] sm:$0xff]
  %v7730 = vld [vmem:[%s7720 + $0x48] sm:$0xff]
  %v7731 = vld [vmem:[%s7720 + $0x50] sm:$0xff]
  %v7732 = vld [vmem:[%s7720 + $0x58] sm:$0xff]
  %v7733 = vld [vmem:[%s7720 + $0x60] sm:$0xff]
  %v7734 = vld [vmem:[%s7720 + $0x68] sm:$0xff]
  %v7735 = vld [vmem:[%s7720 + $0x70] sm:$0xff]
  %v7736 = vld [vmem:[%s7720 + $0x78] sm:$0xff]
  %7737 = vmatprep.subr.mxu0 0.0
  %7738 = vmatpush1.msra.mxu0 %v7736
  %7739 = vmatprep.subr.mxu0 0.0
  %7740 = vmatpush1.msra.mxu0 %v7735
  %7741 = vmatprep.subr.mxu0 0.0
  %7742 = vmatpush1.msra.mxu0 %v7734
  %7743 = vmatprep.subr.mxu0 0.0
  %7744 = vmatpush1.msra.mxu0 %v7733
  %7745 = vmatprep.subr.mxu0 0.0
  %7746 = vmatpush1.msra.mxu0 %v7732
  %7747 = vmatprep.subr.mxu0 0.0
  %7748 = vmatpush1.msra.mxu0 %v7731
  %7749 = vmatprep.subr.mxu0 0.0
  %7750 = vmatpush1.msra.mxu0 %v7730
  %7751 = vmatprep.subr.mxu0 0.0
  %7752 = vmatpush1.msra.mxu0 %v7729
  %7753 = vmatprep.subr.mxu0 0.0
  %7754 = vmatpush1.msra.mxu0 %v7728
  %7755 = vmatprep.subr.mxu0 0.0
  %7756 = vmatpush1.msra.mxu0 %v7727
  %7757 = vmatprep.subr.mxu0 0.0
  %7758 = vmatpush1.msra.mxu0 %v7726
  %7759 = vmatprep.subr.mxu0 0.0
  %7760 = vmatpush1.msra.mxu0 %v7725
  %7761 = vmatprep.subr.mxu0 0.0
  %7762 = vmatpush1.msra.mxu0 %v7724
  %7763 = vmatprep.subr.mxu0 0.0
  %7764 = vmatpush1.msra.mxu0 %v7723
  %7765 = vmatprep.subr.mxu0 0.0
  %7766 = vmatpush1.msra.mxu0 %v7722
  %7767 = vmatprep.subr.mxu0 0.0
  %7768 = vmatpush1.msra.mxu0 %v7721
  %7769 = vmatprep.subr.mxu0 0.0
  %7770 = vmatpush2.msra.mxu0 0.0
  %7771 = vmatprep.subr.mxu0 0.0
  %7772 = vmatpush2.msra.mxu0 0.0
  %7773 = vmatprep.subr.mxu0 0.0
  %7774 = vmatpush2.msra.mxu0 0.0
  %7775 = vmatprep.subr.mxu0 0.0
  %7776 = vmatpush2.msra.mxu0 0.0
  %7777 = vmatprep.subr.mxu0 0.0
  %7778 = vmatpush2.msra.mxu0 0.0
  %7779 = vmatprep.subr.mxu0 0.0
  %7780 = vmatpush2.msra.mxu0 0.0
  %7781 = vmatprep.subr.mxu0 0.0
  %7782 = vmatpush2.msra.mxu0 0.0
  %7783 = vmatprep.subr.mxu0 0.0
  %7784 = vmatpush2.msra.mxu0 0.0
  %7785 = vmatprep.subr.mxu0 0.0
  %7786 = vmatpush2.msra.mxu0 0.0
  %7787 = vmatprep.subr.mxu0 0.0
  %7788 = vmatpush2.msra.mxu0 0.0
  %7789 = vmatprep.subr.mxu0 0.0
  %7790 = vmatpush2.msra.mxu0 0.0
  %7791 = vmatprep.subr.mxu0 0.0
  %7792 = vmatpush2.msra.mxu0 0.0
  %7793 = vmatprep.subr.mxu0 0.0
  %7794 = vmatpush2.msra.mxu0 0.0
  %7795 = vmatprep.subr.mxu0 0.0
  %7796 = vmatpush2.msra.mxu0 0.0
  %7797 = vmatprep.subr.mxu0 0.0
  %7798 = vmatpush2.msra.mxu0 0.0
  %7799 = vmatprep.subr.mxu0 0.0
  %7800 = vmatpush2.msra.mxu0 0.0
  %7801 = vmatprep.mubr.f32.mxu0 0.0
  %7802 = vmatmul.mubr.f32.gmra.mxu0 %v7712
  %v7803 = vpop.f32.mrf.mxu0
  %v7804 = vadd.f32 0.0, %v7803
  %v7805 = vpop.f32.mrf.mxu0
  %7806 = vmatprep.mubr.f32.mxu0 0.0
  %7807 = vmatmul.mubr.f32.gmra.mxu0 %v7713
  %v7808 = vpop.f32.mrf.mxu0
  %v7809 = vadd.f32 0.0, %v7808
  %v7810 = vpop.f32.mrf.mxu0
  %7811 = vmatprep.mubr.f32.mxu0 0.0
  %7812 = vmatmul.mubr.f32.gmra.mxu0 %v7714
  %v7813 = vpop.f32.mrf.mxu0
  %v7814 = vadd.f32 0.0, %v7813
  %v7815 = vpop.f32.mrf.mxu0
  %7816 = vmatprep.mubr.f32.mxu0 0.0
  %7817 = vmatmul.mubr.f32.gmra.mxu0 %v7715
  %v7818 = vpop.f32.mrf.mxu0
  %v7819 = vadd.f32 0.0, %v7818
  %v7820 = vpop.f32.mrf.mxu0
  %7821 = vmatprep.mubr.f32.mxu0 0.0
  %7822 = vmatmul.mubr.f32.gmra.mxu0 %v7716
  %v7823 = vpop.f32.mrf.mxu0
  %v7824 = vadd.f32 0.0, %v7823
  %v7825 = vpop.f32.mrf.mxu0
  %7826 = vmatprep.mubr.f32.mxu0 0.0
  %7827 = vmatmul.mubr.f32.gmra.mxu0 %v7717
  %v7828 = vpop.f32.mrf.mxu0
  %v7829 = vadd.f32 0.0, %v7828
  %v7830 = vpop.f32.mrf.mxu0
  %7831 = vmatprep.mubr.f32.mxu0 0.0
  %7832 = vmatmul.mubr.f32.gmra.mxu0 %v7718
  %v7833 = vpop.f32.mrf.mxu0
  %v7834 = vadd.f32 0.0, %v7833
  %v7835 = vpop.f32.mrf.mxu0
  %7836 = vmatprep.mubr.f32.mxu0 0.0
  %7837 = vmatmul.mubr.f32.gmra.mxu0 %v7719
  %v7838 = vpop.f32.mrf.mxu0
  %v7839 = vadd.f32 0.0, %v7838
  %v7840 = vpop.f32.mrf.mxu0
  %7841 = vdwg.mxu0
  %v7842 = vadd.f32 %v7704, %v7804
  %v7843 = vadd.f32 %v7705, %v7809
  %v7844 = vadd.f32 %v7706, %v7814
  %v7845 = vadd.f32 %v7707, %v7819
  %v7846 = vadd.f32 %v7708, %v7824
  %v7847 = vadd.f32 %v7709, %v7829
  %v7848 = vadd.f32 %v7710, %v7834
  %v7849 = vadd.f32 %v7711, %v7839
  %s7850 = scalar_lea.vmem [#allocation3], 48
  %v7851 = vld [vmem:[%s7850] sm:$0xff]
  %v7852 = vld [vmem:[%s7850 + $0x10] sm:$0xff]
  %v7853 = vld [vmem:[%s7850 + $0x20] sm:$0xff]
  %v7854 = vld [vmem:[%s7850 + $0x30] sm:$0xff]
  %v7855 = vld [vmem:[%s7850 + $0x40] sm:$0xff]
  %v7856 = vld [vmem:[%s7850 + $0x50] sm:$0xff]
  %v7857 = vld [vmem:[%s7850 + $0x60] sm:$0xff]
  %v7858 = vld [vmem:[%s7850 + $0x70] sm:$0xff]
  %s7859 = scalar_lea.vmem %s3, 1920
  %v7860 = vld [vmem:[%s7859] sm:$0xff]
  %v7861 = vld [vmem:[%s7859 + $0x8] sm:$0xff]
  %v7862 = vld [vmem:[%s7859 + $0x10] sm:$0xff]
  %v7863 = vld [vmem:[%s7859 + $0x18] sm:$0xff]
  %v7864 = vld [vmem:[%s7859 + $0x20] sm:$0xff]
  %v7865 = vld [vmem:[%s7859 + $0x28] sm:$0xff]
  %v7866 = vld [vmem:[%s7859 + $0x30] sm:$0xff]
  %v7867 = vld [vmem:[%s7859 + $0x38] sm:$0xff]
  %v7868 = vld [vmem:[%s7859 + $0x40] sm:$0xff]
  %v7869 = vld [vmem:[%s7859 + $0x48] sm:$0xff]
  %v7870 = vld [vmem:[%s7859 + $0x50] sm:$0xff]
  %v7871 = vld [vmem:[%s7859 + $0x58] sm:$0xff]
  %v7872 = vld [vmem:[%s7859 + $0x60] sm:$0xff]
  %v7873 = vld [vmem:[%s7859 + $0x68] sm:$0xff]
  %v7874 = vld [vmem:[%s7859 + $0x70] sm:$0xff]
  %v7875 = vld [vmem:[%s7859 + $0x78] sm:$0xff]
  %7876 = vmatprep.subr.mxu0 0.0
  %7877 = vmatpush1.msra.mxu0 %v7875
  %7878 = vmatprep.subr.mxu0 0.0
  %7879 = vmatpush1.msra.mxu0 %v7874
  %7880 = vmatprep.subr.mxu0 0.0
  %7881 = vmatpush1.msra.mxu0 %v7873
  %7882 = vmatprep.subr.mxu0 0.0
  %7883 = vmatpush1.msra.mxu0 %v7872
  %7884 = vmatprep.subr.mxu0 0.0
  %7885 = vmatpush1.msra.mxu0 %v7871
  %7886 = vmatprep.subr.mxu0 0.0
  %7887 = vmatpush1.msra.mxu0 %v7870
  %7888 = vmatprep.subr.mxu0 0.0
  %7889 = vmatpush1.msra.mxu0 %v7869
  %7890 = vmatprep.subr.mxu0 0.0
  %7891 = vmatpush1.msra.mxu0 %v7868
  %7892 = vmatprep.subr.mxu0 0.0
  %7893 = vmatpush1.msra.mxu0 %v7867
  %7894 = vmatprep.subr.mxu0 0.0
  %7895 = vmatpush1.msra.mxu0 %v7866
  %7896 = vmatprep.subr.mxu0 0.0
  %7897 = vmatpush1.msra.mxu0 %v7865
  %7898 = vmatprep.subr.mxu0 0.0
  %7899 = vmatpush1.msra.mxu0 %v7864
  %7900 = vmatprep.subr.mxu0 0.0
  %7901 = vmatpush1.msra.mxu0 %v7863
  %7902 = vmatprep.subr.mxu0 0.0
  %7903 = vmatpush1.msra.mxu0 %v7862
  %7904 = vmatprep.subr.mxu0 0.0
  %7905 = vmatpush1.msra.mxu0 %v7861
  %7906 = vmatprep.subr.mxu0 0.0
  %7907 = vmatpush1.msra.mxu0 %v7860
  %7908 = vmatprep.subr.mxu0 0.0
  %7909 = vmatpush2.msra.mxu0 0.0
  %7910 = vmatprep.subr.mxu0 0.0
  %7911 = vmatpush2.msra.mxu0 0.0
  %7912 = vmatprep.subr.mxu0 0.0
  %7913 = vmatpush2.msra.mxu0 0.0
  %7914 = vmatprep.subr.mxu0 0.0
  %7915 = vmatpush2.msra.mxu0 0.0
  %7916 = vmatprep.subr.mxu0 0.0
  %7917 = vmatpush2.msra.mxu0 0.0
  %7918 = vmatprep.subr.mxu0 0.0
  %7919 = vmatpush2.msra.mxu0 0.0
  %7920 = vmatprep.subr.mxu0 0.0
  %7921 = vmatpush2.msra.mxu0 0.0
  %7922 = vmatprep.subr.mxu0 0.0
  %7923 = vmatpush2.msra.mxu0 0.0
  %7924 = vmatprep.subr.mxu0 0.0
  %7925 = vmatpush2.msra.mxu0 0.0
  %7926 = vmatprep.subr.mxu0 0.0
  %7927 = vmatpush2.msra.mxu0 0.0
  %7928 = vmatprep.subr.mxu0 0.0
  %7929 = vmatpush2.msra.mxu0 0.0
  %7930 = vmatprep.subr.mxu0 0.0
  %7931 = vmatpush2.msra.mxu0 0.0
  %7932 = vmatprep.subr.mxu0 0.0
  %7933 = vmatpush2.msra.mxu0 0.0
  %7934 = vmatprep.subr.mxu0 0.0
  %7935 = vmatpush2.msra.mxu0 0.0
  %7936 = vmatprep.subr.mxu0 0.0
  %7937 = vmatpush2.msra.mxu0 0.0
  %7938 = vmatprep.subr.mxu0 0.0
  %7939 = vmatpush2.msra.mxu0 0.0
  %7940 = vmatprep.mubr.f32.mxu0 0.0
  %7941 = vmatmul.mubr.f32.gmra.mxu0 %v7851
  %v7942 = vpop.f32.mrf.mxu0
  %v7943 = vadd.f32 0.0, %v7942
  %v7944 = vpop.f32.mrf.mxu0
  %7945 = vmatprep.mubr.f32.mxu0 0.0
  %7946 = vmatmul.mubr.f32.gmra.mxu0 %v7852
  %v7947 = vpop.f32.mrf.mxu0
  %v7948 = vadd.f32 0.0, %v7947
  %v7949 = vpop.f32.mrf.mxu0
  %7950 = vmatprep.mubr.f32.mxu0 0.0
  %7951 = vmatmul.mubr.f32.gmra.mxu0 %v7853
  %v7952 = vpop.f32.mrf.mxu0
  %v7953 = vadd.f32 0.0, %v7952
  %v7954 = vpop.f32.mrf.mxu0
  %7955 = vmatprep.mubr.f32.mxu0 0.0
  %7956 = vmatmul.mubr.f32.gmra.mxu0 %v7854
  %v7957 = vpop.f32.mrf.mxu0
  %v7958 = vadd.f32 0.0, %v7957
  %v7959 = vpop.f32.mrf.mxu0
  %7960 = vmatprep.mubr.f32.mxu0 0.0
  %7961 = vmatmul.mubr.f32.gmra.mxu0 %v7855
  %v7962 = vpop.f32.mrf.mxu0
  %v7963 = vadd.f32 0.0, %v7962
  %v7964 = vpop.f32.mrf.mxu0
  %7965 = vmatprep.mubr.f32.mxu0 0.0
  %7966 = vmatmul.mubr.f32.gmra.mxu0 %v7856
  %v7967 = vpop.f32.mrf.mxu0
  %v7968 = vadd.f32 0.0, %v7967
  %v7969 = vpop.f32.mrf.mxu0
  %7970 = vmatprep.mubr.f32.mxu0 0.0
  %7971 = vmatmul.mubr.f32.gmra.mxu0 %v7857
  %v7972 = vpop.f32.mrf.mxu0
  %v7973 = vadd.f32 0.0, %v7972
  %v7974 = vpop.f32.mrf.mxu0
  %7975 = vmatprep.mubr.f32.mxu0 0.0
  %7976 = vmatmul.mubr.f32.gmra.mxu0 %v7858
  %v7977 = vpop.f32.mrf.mxu0
  %v7978 = vadd.f32 0.0, %v7977
  %v7979 = vpop.f32.mrf.mxu0
  %7980 = vdwg.mxu0
  %v7981 = vadd.f32 %v7842, %v7943
  %v7982 = vadd.f32 %v7843, %v7948
  %v7983 = vadd.f32 %v7844, %v7953
  %v7984 = vadd.f32 %v7845, %v7958
  %v7985 = vadd.f32 %v7846, %v7963
  %v7986 = vadd.f32 %v7847, %v7968
  %v7987 = vadd.f32 %v7848, %v7973
  %v7988 = vadd.f32 %v7849, %v7978
  %v7989 = vld [vmem:[%s7850 + $0x1] sm:$0xff]
  %v7990 = vld [vmem:[%s7850 + $0x11] sm:$0xff]
  %v7991 = vld [vmem:[%s7850 + $0x21] sm:$0xff]
  %v7992 = vld [vmem:[%s7850 + $0x31] sm:$0xff]
  %v7993 = vld [vmem:[%s7850 + $0x41] sm:$0xff]
  %v7994 = vld [vmem:[%s7850 + $0x51] sm:$0xff]
  %v7995 = vld [vmem:[%s7850 + $0x61] sm:$0xff]
  %v7996 = vld [vmem:[%s7850 + $0x71] sm:$0xff]
  %s7997 = scalar_lea.vmem %s3, 2048
  %v7998 = vld [vmem:[%s7997] sm:$0xff]
  %v7999 = vld [vmem:[%s7997 + $0x8] sm:$0xff]
  %v8000 = vld [vmem:[%s7997 + $0x10] sm:$0xff]
  %v8001 = vld [vmem:[%s7997 + $0x18] sm:$0xff]
  %v8002 = vld [vmem:[%s7997 + $0x20] sm:$0xff]
  %v8003 = vld [vmem:[%s7997 + $0x28] sm:$0xff]
  %v8004 = vld [vmem:[%s7997 + $0x30] sm:$0xff]
  %v8005 = vld [vmem:[%s7997 + $0x38] sm:$0xff]
  %v8006 = vld [vmem:[%s7997 + $0x40] sm:$0xff]
  %v8007 = vld [vmem:[%s7997 + $0x48] sm:$0xff]
  %v8008 = vld [vmem:[%s7997 + $0x50] sm:$0xff]
  %v8009 = vld [vmem:[%s7997 + $0x58] sm:$0xff]
  %v8010 = vld [vmem:[%s7997 + $0x60] sm:$0xff]
  %v8011 = vld [vmem:[%s7997 + $0x68] sm:$0xff]
  %v8012 = vld [vmem:[%s7997 + $0x70] sm:$0xff]
  %v8013 = vld [vmem:[%s7997 + $0x78] sm:$0xff]
  %8014 = vmatprep.subr.mxu0 0.0
  %8015 = vmatpush1.msra.mxu0 %v8013
  %8016 = vmatprep.subr.mxu0 0.0
  %8017 = vmatpush1.msra.mxu0 %v8012
  %8018 = vmatprep.subr.mxu0 0.0
  %8019 = vmatpush1.msra.mxu0 %v8011
  %8020 = vmatprep.subr.mxu0 0.0
  %8021 = vmatpush1.msra.mxu0 %v8010
  %8022 = vmatprep.subr.mxu0 0.0
  %8023 = vmatpush1.msra.mxu0 %v8009
  %8024 = vmatprep.subr.mxu0 0.0
  %8025 = vmatpush1.msra.mxu0 %v8008
  %8026 = vmatprep.subr.mxu0 0.0
  %8027 = vmatpush1.msra.mxu0 %v8007
  %8028 = vmatprep.subr.mxu0 0.0
  %8029 = vmatpush1.msra.mxu0 %v8006
  %8030 = vmatprep.subr.mxu0 0.0
  %8031 = vmatpush1.msra.mxu0 %v8005
  %8032 = vmatprep.subr.mxu0 0.0
  %8033 = vmatpush1.msra.mxu0 %v8004
  %8034 = vmatprep.subr.mxu0 0.0
  %8035 = vmatpush1.msra.mxu0 %v8003
  %8036 = vmatprep.subr.mxu0 0.0
  %8037 = vmatpush1.msra.mxu0 %v8002
  %8038 = vmatprep.subr.mxu0 0.0
  %8039 = vmatpush1.msra.mxu0 %v8001
  %8040 = vmatprep.subr.mxu0 0.0
  %8041 = vmatpush1.msra.mxu0 %v8000
  %8042 = vmatprep.subr.mxu0 0.0
  %8043 = vmatpush1.msra.mxu0 %v7999
  %8044 = vmatprep.subr.mxu0 0.0
  %8045 = vmatpush1.msra.mxu0 %v7998
  %8046 = vmatprep.subr.mxu0 0.0
  %8047 = vmatpush2.msra.mxu0 0.0
  %8048 = vmatprep.subr.mxu0 0.0
  %8049 = vmatpush2.msra.mxu0 0.0
  %8050 = vmatprep.subr.mxu0 0.0
  %8051 = vmatpush2.msra.mxu0 0.0
  %8052 = vmatprep.subr.mxu0 0.0
  %8053 = vmatpush2.msra.mxu0 0.0
  %8054 = vmatprep.subr.mxu0 0.0
  %8055 = vmatpush2.msra.mxu0 0.0
  %8056 = vmatprep.subr.mxu0 0.0
  %8057 = vmatpush2.msra.mxu0 0.0
  %8058 = vmatprep.subr.mxu0 0.0
  %8059 = vmatpush2.msra.mxu0 0.0
  %8060 = vmatprep.subr.mxu0 0.0
  %8061 = vmatpush2.msra.mxu0 0.0
  %8062 = vmatprep.subr.mxu0 0.0
  %8063 = vmatpush2.msra.mxu0 0.0
  %8064 = vmatprep.subr.mxu0 0.0
  %8065 = vmatpush2.msra.mxu0 0.0
  %8066 = vmatprep.subr.mxu0 0.0
  %8067 = vmatpush2.msra.mxu0 0.0
  %8068 = vmatprep.subr.mxu0 0.0
  %8069 = vmatpush2.msra.mxu0 0.0
  %8070 = vmatprep.subr.mxu0 0.0
  %8071 = vmatpush2.msra.mxu0 0.0
  %8072 = vmatprep.subr.mxu0 0.0
  %8073 = vmatpush2.msra.mxu0 0.0
  %8074 = vmatprep.subr.mxu0 0.0
  %8075 = vmatpush2.msra.mxu0 0.0
  %8076 = vmatprep.subr.mxu0 0.0
  %8077 = vmatpush2.msra.mxu0 0.0
  %8078 = vmatprep.mubr.f32.mxu0 0.0
  %8079 = vmatmul.mubr.f32.gmra.mxu0 %v7989
  %v8080 = vpop.f32.mrf.mxu0
  %v8081 = vadd.f32 0.0, %v8080
  %v8082 = vpop.f32.mrf.mxu0
  %8083 = vmatprep.mubr.f32.mxu0 0.0
  %8084 = vmatmul.mubr.f32.gmra.mxu0 %v7990
  %v8085 = vpop.f32.mrf.mxu0
  %v8086 = vadd.f32 0.0, %v8085
  %v8087 = vpop.f32.mrf.mxu0
  %8088 = vmatprep.mubr.f32.mxu0 0.0
  %8089 = vmatmul.mubr.f32.gmra.mxu0 %v7991
  %v8090 = vpop.f32.mrf.mxu0
  %v8091 = vadd.f32 0.0, %v8090
  %v8092 = vpop.f32.mrf.mxu0
  %8093 = vmatprep.mubr.f32.mxu0 0.0
  %8094 = vmatmul.mubr.f32.gmra.mxu0 %v7992
  %v8095 = vpop.f32.mrf.mxu0
  %v8096 = vadd.f32 0.0, %v8095
  %v8097 = vpop.f32.mrf.mxu0
  %8098 = vmatprep.mubr.f32.mxu0 0.0
  %8099 = vmatmul.mubr.f32.gmra.mxu0 %v7993
  %v8100 = vpop.f32.mrf.mxu0
  %v8101 = vadd.f32 0.0, %v8100
  %v8102 = vpop.f32.mrf.mxu0
  %8103 = vmatprep.mubr.f32.mxu0 0.0
  %8104 = vmatmul.mubr.f32.gmra.mxu0 %v7994
  %v8105 = vpop.f32.mrf.mxu0
  %v8106 = vadd.f32 0.0, %v8105
  %v8107 = vpop.f32.mrf.mxu0
  %8108 = vmatprep.mubr.f32.mxu0 0.0
  %8109 = vmatmul.mubr.f32.gmra.mxu0 %v7995
  %v8110 = vpop.f32.mrf.mxu0
  %v8111 = vadd.f32 0.0, %v8110
  %v8112 = vpop.f32.mrf.mxu0
  %8113 = vmatprep.mubr.f32.mxu0 0.0
  %8114 = vmatmul.mubr.f32.gmra.mxu0 %v7996
  %v8115 = vpop.f32.mrf.mxu0
  %v8116 = vadd.f32 0.0, %v8115
  %v8117 = vpop.f32.mrf.mxu0
  %8118 = vdwg.mxu0
  %v8119 = vadd.f32 %v7981, %v8081
  %v8120 = vadd.f32 %v7982, %v8086
  %v8121 = vadd.f32 %v7983, %v8091
  %v8122 = vadd.f32 %v7984, %v8096
  %v8123 = vadd.f32 %v7985, %v8101
  %v8124 = vadd.f32 %v7986, %v8106
  %v8125 = vadd.f32 %v7987, %v8111
  %v8126 = vadd.f32 %v7988, %v8116
  %v8127 = vld [vmem:[%s7850 + $0x2] sm:$0xff]
  %v8128 = vld [vmem:[%s7850 + $0x12] sm:$0xff]
  %v8129 = vld [vmem:[%s7850 + $0x22] sm:$0xff]
  %v8130 = vld [vmem:[%s7850 + $0x32] sm:$0xff]
  %v8131 = vld [vmem:[%s7850 + $0x42] sm:$0xff]
  %v8132 = vld [vmem:[%s7850 + $0x52] sm:$0xff]
  %v8133 = vld [vmem:[%s7850 + $0x62] sm:$0xff]
  %v8134 = vld [vmem:[%s7850 + $0x72] sm:$0xff]
  %s8135 = scalar_lea.vmem %s3, 2176
  %v8136 = vld [vmem:[%s8135] sm:$0xff]
  %v8137 = vld [vmem:[%s8135 + $0x8] sm:$0xff]
  %v8138 = vld [vmem:[%s8135 + $0x10] sm:$0xff]
  %v8139 = vld [vmem:[%s8135 + $0x18] sm:$0xff]
  %v8140 = vld [vmem:[%s8135 + $0x20] sm:$0xff]
  %v8141 = vld [vmem:[%s8135 + $0x28] sm:$0xff]
  %v8142 = vld [vmem:[%s8135 + $0x30] sm:$0xff]
  %v8143 = vld [vmem:[%s8135 + $0x38] sm:$0xff]
  %v8144 = vld [vmem:[%s8135 + $0x40] sm:$0xff]
  %v8145 = vld [vmem:[%s8135 + $0x48] sm:$0xff]
  %v8146 = vld [vmem:[%s8135 + $0x50] sm:$0xff]
  %v8147 = vld [vmem:[%s8135 + $0x58] sm:$0xff]
  %v8148 = vld [vmem:[%s8135 + $0x60] sm:$0xff]
  %v8149 = vld [vmem:[%s8135 + $0x68] sm:$0xff]
  %v8150 = vld [vmem:[%s8135 + $0x70] sm:$0xff]
  %v8151 = vld [vmem:[%s8135 + $0x78] sm:$0xff]
  %8152 = vmatprep.subr.mxu0 0.0
  %8153 = vmatpush1.msra.mxu0 %v8151
  %8154 = vmatprep.subr.mxu0 0.0
  %8155 = vmatpush1.msra.mxu0 %v8150
  %8156 = vmatprep.subr.mxu0 0.0
  %8157 = vmatpush1.msra.mxu0 %v8149
  %8158 = vmatprep.subr.mxu0 0.0
  %8159 = vmatpush1.msra.mxu0 %v8148
  %8160 = vmatprep.subr.mxu0 0.0
  %8161 = vmatpush1.msra.mxu0 %v8147
  %8162 = vmatprep.subr.mxu0 0.0
  %8163 = vmatpush1.msra.mxu0 %v8146
  %8164 = vmatprep.subr.mxu0 0.0
  %8165 = vmatpush1.msra.mxu0 %v8145
  %8166 = vmatprep.subr.mxu0 0.0
  %8167 = vmatpush1.msra.mxu0 %v8144
  %8168 = vmatprep.subr.mxu0 0.0
  %8169 = vmatpush1.msra.mxu0 %v8143
  %8170 = vmatprep.subr.mxu0 0.0
  %8171 = vmatpush1.msra.mxu0 %v8142
  %8172 = vmatprep.subr.mxu0 0.0
  %8173 = vmatpush1.msra.mxu0 %v8141
  %8174 = vmatprep.subr.mxu0 0.0
  %8175 = vmatpush1.msra.mxu0 %v8140
  %8176 = vmatprep.subr.mxu0 0.0
  %8177 = vmatpush1.msra.mxu0 %v8139
  %8178 = vmatprep.subr.mxu0 0.0
  %8179 = vmatpush1.msra.mxu0 %v8138
  %8180 = vmatprep.subr.mxu0 0.0
  %8181 = vmatpush1.msra.mxu0 %v8137
  %8182 = vmatprep.subr.mxu0 0.0
  %8183 = vmatpush1.msra.mxu0 %v8136
  %8184 = vmatprep.subr.mxu0 0.0
  %8185 = vmatpush2.msra.mxu0 0.0
  %8186 = vmatprep.subr.mxu0 0.0
  %8187 = vmatpush2.msra.mxu0 0.0
  %8188 = vmatprep.subr.mxu0 0.0
  %8189 = vmatpush2.msra.mxu0 0.0
  %8190 = vmatprep.subr.mxu0 0.0
  %8191 = vmatpush2.msra.mxu0 0.0
  %8192 = vmatprep.subr.mxu0 0.0
  %8193 = vmatpush2.msra.mxu0 0.0
  %8194 = vmatprep.subr.mxu0 0.0
  %8195 = vmatpush2.msra.mxu0 0.0
  %8196 = vmatprep.subr.mxu0 0.0
  %8197 = vmatpush2.msra.mxu0 0.0
  %8198 = vmatprep.subr.mxu0 0.0
  %8199 = vmatpush2.msra.mxu0 0.0
  %8200 = vmatprep.subr.mxu0 0.0
  %8201 = vmatpush2.msra.mxu0 0.0
  %8202 = vmatprep.subr.mxu0 0.0
  %8203 = vmatpush2.msra.mxu0 0.0
  %8204 = vmatprep.subr.mxu0 0.0
  %8205 = vmatpush2.msra.mxu0 0.0
  %8206 = vmatprep.subr.mxu0 0.0
  %8207 = vmatpush2.msra.mxu0 0.0
  %8208 = vmatprep.subr.mxu0 0.0
  %8209 = vmatpush2.msra.mxu0 0.0
  %8210 = vmatprep.subr.mxu0 0.0
  %8211 = vmatpush2.msra.mxu0 0.0
  %8212 = vmatprep.subr.mxu0 0.0
  %8213 = vmatpush2.msra.mxu0 0.0
  %8214 = vmatprep.subr.mxu0 0.0
  %8215 = vmatpush2.msra.mxu0 0.0
  %8216 = vmatprep.mubr.f32.mxu0 0.0
  %8217 = vmatmul.mubr.f32.gmra.mxu0 %v8127
  %v8218 = vpop.f32.mrf.mxu0
  %v8219 = vadd.f32 0.0, %v8218
  %v8220 = vpop.f32.mrf.mxu0
  %8221 = vmatprep.mubr.f32.mxu0 0.0
  %8222 = vmatmul.mubr.f32.gmra.mxu0 %v8128
  %v8223 = vpop.f32.mrf.mxu0
  %v8224 = vadd.f32 0.0, %v8223
  %v8225 = vpop.f32.mrf.mxu0
  %8226 = vmatprep.mubr.f32.mxu0 0.0
  %8227 = vmatmul.mubr.f32.gmra.mxu0 %v8129
  %v8228 = vpop.f32.mrf.mxu0
  %v8229 = vadd.f32 0.0, %v8228
  %v8230 = vpop.f32.mrf.mxu0
  %8231 = vmatprep.mubr.f32.mxu0 0.0
  %8232 = vmatmul.mubr.f32.gmra.mxu0 %v8130
  %v8233 = vpop.f32.mrf.mxu0
  %v8234 = vadd.f32 0.0, %v8233
  %v8235 = vpop.f32.mrf.mxu0
  %8236 = vmatprep.mubr.f32.mxu0 0.0
  %8237 = vmatmul.mubr.f32.gmra.mxu0 %v8131
  %v8238 = vpop.f32.mrf.mxu0
  %v8239 = vadd.f32 0.0, %v8238
  %v8240 = vpop.f32.mrf.mxu0
  %8241 = vmatprep.mubr.f32.mxu0 0.0
  %8242 = vmatmul.mubr.f32.gmra.mxu0 %v8132
  %v8243 = vpop.f32.mrf.mxu0
  %v8244 = vadd.f32 0.0, %v8243
  %v8245 = vpop.f32.mrf.mxu0
  %8246 = vmatprep.mubr.f32.mxu0 0.0
  %8247 = vmatmul.mubr.f32.gmra.mxu0 %v8133
  %v8248 = vpop.f32.mrf.mxu0
  %v8249 = vadd.f32 0.0, %v8248
  %v8250 = vpop.f32.mrf.mxu0
  %8251 = vmatprep.mubr.f32.mxu0 0.0
  %8252 = vmatmul.mubr.f32.gmra.mxu0 %v8134
  %v8253 = vpop.f32.mrf.mxu0
  %v8254 = vadd.f32 0.0, %v8253
  %v8255 = vpop.f32.mrf.mxu0
  %8256 = vdwg.mxu0
  %v8257 = vadd.f32 %v8119, %v8219
  %v8258 = vadd.f32 %v8120, %v8224
  %v8259 = vadd.f32 %v8121, %v8229
  %v8260 = vadd.f32 %v8122, %v8234
  %v8261 = vadd.f32 %v8123, %v8239
  %v8262 = vadd.f32 %v8124, %v8244
  %v8263 = vadd.f32 %v8125, %v8249
  %v8264 = vadd.f32 %v8126, %v8254
  %v8265 = vld [vmem:[%s7850 + $0x3] sm:$0xff]
  %v8266 = vld [vmem:[%s7850 + $0x13] sm:$0xff]
  %v8267 = vld [vmem:[%s7850 + $0x23] sm:$0xff]
  %v8268 = vld [vmem:[%s7850 + $0x33] sm:$0xff]
  %v8269 = vld [vmem:[%s7850 + $0x43] sm:$0xff]
  %v8270 = vld [vmem:[%s7850 + $0x53] sm:$0xff]
  %v8271 = vld [vmem:[%s7850 + $0x63] sm:$0xff]
  %v8272 = vld [vmem:[%s7850 + $0x73] sm:$0xff]
  %s8273 = scalar_lea.vmem %s3, 2304
  %v8274 = vld [vmem:[%s8273] sm:$0xff]
  %v8275 = vld [vmem:[%s8273 + $0x8] sm:$0xff]
  %v8276 = vld [vmem:[%s8273 + $0x10] sm:$0xff]
  %v8277 = vld [vmem:[%s8273 + $0x18] sm:$0xff]
  %v8278 = vld [vmem:[%s8273 + $0x20] sm:$0xff]
  %v8279 = vld [vmem:[%s8273 + $0x28] sm:$0xff]
  %v8280 = vld [vmem:[%s8273 + $0x30] sm:$0xff]
  %v8281 = vld [vmem:[%s8273 + $0x38] sm:$0xff]
  %v8282 = vld [vmem:[%s8273 + $0x40] sm:$0xff]
  %v8283 = vld [vmem:[%s8273 + $0x48] sm:$0xff]
  %v8284 = vld [vmem:[%s8273 + $0x50] sm:$0xff]
  %v8285 = vld [vmem:[%s8273 + $0x58] sm:$0xff]
  %v8286 = vld [vmem:[%s8273 + $0x60] sm:$0xff]
  %v8287 = vld [vmem:[%s8273 + $0x68] sm:$0xff]
  %v8288 = vld [vmem:[%s8273 + $0x70] sm:$0xff]
  %v8289 = vld [vmem:[%s8273 + $0x78] sm:$0xff]
  %8290 = vmatprep.subr.mxu0 0.0
  %8291 = vmatpush1.msra.mxu0 %v8289
  %8292 = vmatprep.subr.mxu0 0.0
  %8293 = vmatpush1.msra.mxu0 %v8288
  %8294 = vmatprep.subr.mxu0 0.0
  %8295 = vmatpush1.msra.mxu0 %v8287
  %8296 = vmatprep.subr.mxu0 0.0
  %8297 = vmatpush1.msra.mxu0 %v8286
  %8298 = vmatprep.subr.mxu0 0.0
  %8299 = vmatpush1.msra.mxu0 %v8285
  %8300 = vmatprep.subr.mxu0 0.0
  %8301 = vmatpush1.msra.mxu0 %v8284
  %8302 = vmatprep.subr.mxu0 0.0
  %8303 = vmatpush1.msra.mxu0 %v8283
  %8304 = vmatprep.subr.mxu0 0.0
  %8305 = vmatpush1.msra.mxu0 %v8282
  %8306 = vmatprep.subr.mxu0 0.0
  %8307 = vmatpush1.msra.mxu0 %v8281
  %8308 = vmatprep.subr.mxu0 0.0
  %8309 = vmatpush1.msra.mxu0 %v8280
  %8310 = vmatprep.subr.mxu0 0.0
  %8311 = vmatpush1.msra.mxu0 %v8279
  %8312 = vmatprep.subr.mxu0 0.0
  %8313 = vmatpush1.msra.mxu0 %v8278
  %8314 = vmatprep.subr.mxu0 0.0
  %8315 = vmatpush1.msra.mxu0 %v8277
  %8316 = vmatprep.subr.mxu0 0.0
  %8317 = vmatpush1.msra.mxu0 %v8276
  %8318 = vmatprep.subr.mxu0 0.0
  %8319 = vmatpush1.msra.mxu0 %v8275
  %8320 = vmatprep.subr.mxu0 0.0
  %8321 = vmatpush1.msra.mxu0 %v8274
  %8322 = vmatprep.subr.mxu0 0.0
  %8323 = vmatpush2.msra.mxu0 0.0
  %8324 = vmatprep.subr.mxu0 0.0
  %8325 = vmatpush2.msra.mxu0 0.0
  %8326 = vmatprep.subr.mxu0 0.0
  %8327 = vmatpush2.msra.mxu0 0.0
  %8328 = vmatprep.subr.mxu0 0.0
  %8329 = vmatpush2.msra.mxu0 0.0
  %8330 = vmatprep.subr.mxu0 0.0
  %8331 = vmatpush2.msra.mxu0 0.0
  %8332 = vmatprep.subr.mxu0 0.0
  %8333 = vmatpush2.msra.mxu0 0.0
  %8334 = vmatprep.subr.mxu0 0.0
  %8335 = vmatpush2.msra.mxu0 0.0
  %8336 = vmatprep.subr.mxu0 0.0
  %8337 = vmatpush2.msra.mxu0 0.0
  %8338 = vmatprep.subr.mxu0 0.0
  %8339 = vmatpush2.msra.mxu0 0.0
  %8340 = vmatprep.subr.mxu0 0.0
  %8341 = vmatpush2.msra.mxu0 0.0
  %8342 = vmatprep.subr.mxu0 0.0
  %8343 = vmatpush2.msra.mxu0 0.0
  %8344 = vmatprep.subr.mxu0 0.0
  %8345 = vmatpush2.msra.mxu0 0.0
  %8346 = vmatprep.subr.mxu0 0.0
  %8347 = vmatpush2.msra.mxu0 0.0
  %8348 = vmatprep.subr.mxu0 0.0
  %8349 = vmatpush2.msra.mxu0 0.0
  %8350 = vmatprep.subr.mxu0 0.0
  %8351 = vmatpush2.msra.mxu0 0.0
  %8352 = vmatprep.subr.mxu0 0.0
  %8353 = vmatpush2.msra.mxu0 0.0
  %8354 = vmatprep.mubr.f32.mxu0 0.0
  %8355 = vmatmul.mubr.f32.gmra.mxu0 %v8265
  %v8356 = vpop.f32.mrf.mxu0
  %v8357 = vadd.f32 0.0, %v8356
  %v8358 = vpop.f32.mrf.mxu0
  %8359 = vmatprep.mubr.f32.mxu0 0.0
  %8360 = vmatmul.mubr.f32.gmra.mxu0 %v8266
  %v8361 = vpop.f32.mrf.mxu0
  %v8362 = vadd.f32 0.0, %v8361
  %v8363 = vpop.f32.mrf.mxu0
  %8364 = vmatprep.mubr.f32.mxu0 0.0
  %8365 = vmatmul.mubr.f32.gmra.mxu0 %v8267
  %v8366 = vpop.f32.mrf.mxu0
  %v8367 = vadd.f32 0.0, %v8366
  %v8368 = vpop.f32.mrf.mxu0
  %8369 = vmatprep.mubr.f32.mxu0 0.0
  %8370 = vmatmul.mubr.f32.gmra.mxu0 %v8268
  %v8371 = vpop.f32.mrf.mxu0
  %v8372 = vadd.f32 0.0, %v8371
  %v8373 = vpop.f32.mrf.mxu0
  %8374 = vmatprep.mubr.f32.mxu0 0.0
  %8375 = vmatmul.mubr.f32.gmra.mxu0 %v8269
  %v8376 = vpop.f32.mrf.mxu0
  %v8377 = vadd.f32 0.0, %v8376
  %v8378 = vpop.f32.mrf.mxu0
  %8379 = vmatprep.mubr.f32.mxu0 0.0
  %8380 = vmatmul.mubr.f32.gmra.mxu0 %v8270
  %v8381 = vpop.f32.mrf.mxu0
  %v8382 = vadd.f32 0.0, %v8381
  %v8383 = vpop.f32.mrf.mxu0
  %8384 = vmatprep.mubr.f32.mxu0 0.0
  %8385 = vmatmul.mubr.f32.gmra.mxu0 %v8271
  %v8386 = vpop.f32.mrf.mxu0
  %v8387 = vadd.f32 0.0, %v8386
  %v8388 = vpop.f32.mrf.mxu0
  %8389 = vmatprep.mubr.f32.mxu0 0.0
  %8390 = vmatmul.mubr.f32.gmra.mxu0 %v8272
  %v8391 = vpop.f32.mrf.mxu0
  %v8392 = vadd.f32 0.0, %v8391
  %v8393 = vpop.f32.mrf.mxu0
  %8394 = vdwg.mxu0
  %v8395 = vadd.f32 %v8257, %v8357
  %v8396 = vadd.f32 %v8258, %v8362
  %v8397 = vadd.f32 %v8259, %v8367
  %v8398 = vadd.f32 %v8260, %v8372
  %v8399 = vadd.f32 %v8261, %v8377
  %v8400 = vadd.f32 %v8262, %v8382
  %v8401 = vadd.f32 %v8263, %v8387
  %v8402 = vadd.f32 %v8264, %v8392
  %v8403 = vld [vmem:[%s7850 + $0x4] sm:$0xff]
  %v8404 = vld [vmem:[%s7850 + $0x14] sm:$0xff]
  %v8405 = vld [vmem:[%s7850 + $0x24] sm:$0xff]
  %v8406 = vld [vmem:[%s7850 + $0x34] sm:$0xff]
  %v8407 = vld [vmem:[%s7850 + $0x44] sm:$0xff]
  %v8408 = vld [vmem:[%s7850 + $0x54] sm:$0xff]
  %v8409 = vld [vmem:[%s7850 + $0x64] sm:$0xff]
  %v8410 = vld [vmem:[%s7850 + $0x74] sm:$0xff]
  %s8411 = scalar_lea.vmem %s3, 2432
  %v8412 = vld [vmem:[%s8411] sm:$0xff]
  %v8413 = vld [vmem:[%s8411 + $0x8] sm:$0xff]
  %v8414 = vld [vmem:[%s8411 + $0x10] sm:$0xff]
  %v8415 = vld [vmem:[%s8411 + $0x18] sm:$0xff]
  %v8416 = vld [vmem:[%s8411 + $0x20] sm:$0xff]
  %v8417 = vld [vmem:[%s8411 + $0x28] sm:$0xff]
  %v8418 = vld [vmem:[%s8411 + $0x30] sm:$0xff]
  %v8419 = vld [vmem:[%s8411 + $0x38] sm:$0xff]
  %v8420 = vld [vmem:[%s8411 + $0x40] sm:$0xff]
  %v8421 = vld [vmem:[%s8411 + $0x48] sm:$0xff]
  %v8422 = vld [vmem:[%s8411 + $0x50] sm:$0xff]
  %v8423 = vld [vmem:[%s8411 + $0x58] sm:$0xff]
  %v8424 = vld [vmem:[%s8411 + $0x60] sm:$0xff]
  %v8425 = vld [vmem:[%s8411 + $0x68] sm:$0xff]
  %v8426 = vld [vmem:[%s8411 + $0x70] sm:$0xff]
  %v8427 = vld [vmem:[%s8411 + $0x78] sm:$0xff]
  %8428 = vmatprep.subr.mxu0 0.0
  %8429 = vmatpush1.msra.mxu0 %v8427
  %8430 = vmatprep.subr.mxu0 0.0
  %8431 = vmatpush1.msra.mxu0 %v8426
  %8432 = vmatprep.subr.mxu0 0.0
  %8433 = vmatpush1.msra.mxu0 %v8425
  %8434 = vmatprep.subr.mxu0 0.0
  %8435 = vmatpush1.msra.mxu0 %v8424
  %8436 = vmatprep.subr.mxu0 0.0
  %8437 = vmatpush1.msra.mxu0 %v8423
  %8438 = vmatprep.subr.mxu0 0.0
  %8439 = vmatpush1.msra.mxu0 %v8422
  %8440 = vmatprep.subr.mxu0 0.0
  %8441 = vmatpush1.msra.mxu0 %v8421
  %8442 = vmatprep.subr.mxu0 0.0
  %8443 = vmatpush1.msra.mxu0 %v8420
  %8444 = vmatprep.subr.mxu0 0.0
  %8445 = vmatpush1.msra.mxu0 %v8419
  %8446 = vmatprep.subr.mxu0 0.0
  %8447 = vmatpush1.msra.mxu0 %v8418
  %8448 = vmatprep.subr.mxu0 0.0
  %8449 = vmatpush1.msra.mxu0 %v8417
  %8450 = vmatprep.subr.mxu0 0.0
  %8451 = vmatpush1.msra.mxu0 %v8416
  %8452 = vmatprep.subr.mxu0 0.0
  %8453 = vmatpush1.msra.mxu0 %v8415
  %8454 = vmatprep.subr.mxu0 0.0
  %8455 = vmatpush1.msra.mxu0 %v8414
  %8456 = vmatprep.subr.mxu0 0.0
  %8457 = vmatpush1.msra.mxu0 %v8413
  %8458 = vmatprep.subr.mxu0 0.0
  %8459 = vmatpush1.msra.mxu0 %v8412
  %8460 = vmatprep.subr.mxu0 0.0
  %8461 = vmatpush2.msra.mxu0 0.0
  %8462 = vmatprep.subr.mxu0 0.0
  %8463 = vmatpush2.msra.mxu0 0.0
  %8464 = vmatprep.subr.mxu0 0.0
  %8465 = vmatpush2.msra.mxu0 0.0
  %8466 = vmatprep.subr.mxu0 0.0
  %8467 = vmatpush2.msra.mxu0 0.0
  %8468 = vmatprep.subr.mxu0 0.0
  %8469 = vmatpush2.msra.mxu0 0.0
  %8470 = vmatprep.subr.mxu0 0.0
  %8471 = vmatpush2.msra.mxu0 0.0
  %8472 = vmatprep.subr.mxu0 0.0
  %8473 = vmatpush2.msra.mxu0 0.0
  %8474 = vmatprep.subr.mxu0 0.0
  %8475 = vmatpush2.msra.mxu0 0.0
  %8476 = vmatprep.subr.mxu0 0.0
  %8477 = vmatpush2.msra.mxu0 0.0
  %8478 = vmatprep.subr.mxu0 0.0
  %8479 = vmatpush2.msra.mxu0 0.0
  %8480 = vmatprep.subr.mxu0 0.0
  %8481 = vmatpush2.msra.mxu0 0.0
  %8482 = vmatprep.subr.mxu0 0.0
  %8483 = vmatpush2.msra.mxu0 0.0
  %8484 = vmatprep.subr.mxu0 0.0
  %8485 = vmatpush2.msra.mxu0 0.0
  %8486 = vmatprep.subr.mxu0 0.0
  %8487 = vmatpush2.msra.mxu0 0.0
  %8488 = vmatprep.subr.mxu0 0.0
  %8489 = vmatpush2.msra.mxu0 0.0
  %8490 = vmatprep.subr.mxu0 0.0
  %8491 = vmatpush2.msra.mxu0 0.0
  %8492 = vmatprep.mubr.f32.mxu0 0.0
  %8493 = vmatmul.mubr.f32.gmra.mxu0 %v8403
  %v8494 = vpop.f32.mrf.mxu0
  %v8495 = vadd.f32 0.0, %v8494
  %v8496 = vpop.f32.mrf.mxu0
  %8497 = vmatprep.mubr.f32.mxu0 0.0
  %8498 = vmatmul.mubr.f32.gmra.mxu0 %v8404
  %v8499 = vpop.f32.mrf.mxu0
  %v8500 = vadd.f32 0.0, %v8499
  %v8501 = vpop.f32.mrf.mxu0
  %8502 = vmatprep.mubr.f32.mxu0 0.0
  %8503 = vmatmul.mubr.f32.gmra.mxu0 %v8405
  %v8504 = vpop.f32.mrf.mxu0
  %v8505 = vadd.f32 0.0, %v8504
  %v8506 = vpop.f32.mrf.mxu0
  %8507 = vmatprep.mubr.f32.mxu0 0.0
  %8508 = vmatmul.mubr.f32.gmra.mxu0 %v8406
  %v8509 = vpop.f32.mrf.mxu0
  %v8510 = vadd.f32 0.0, %v8509
  %v8511 = vpop.f32.mrf.mxu0
  %8512 = vmatprep.mubr.f32.mxu0 0.0
  %8513 = vmatmul.mubr.f32.gmra.mxu0 %v8407
  %v8514 = vpop.f32.mrf.mxu0
  %v8515 = vadd.f32 0.0, %v8514
  %v8516 = vpop.f32.mrf.mxu0
  %8517 = vmatprep.mubr.f32.mxu0 0.0
  %8518 = vmatmul.mubr.f32.gmra.mxu0 %v8408
  %v8519 = vpop.f32.mrf.mxu0
  %v8520 = vadd.f32 0.0, %v8519
  %v8521 = vpop.f32.mrf.mxu0
  %8522 = vmatprep.mubr.f32.mxu0 0.0
  %8523 = vmatmul.mubr.f32.gmra.mxu0 %v8409
  %v8524 = vpop.f32.mrf.mxu0
  %v8525 = vadd.f32 0.0, %v8524
  %v8526 = vpop.f32.mrf.mxu0
  %8527 = vmatprep.mubr.f32.mxu0 0.0
  %8528 = vmatmul.mubr.f32.gmra.mxu0 %v8410
  %v8529 = vpop.f32.mrf.mxu0
  %v8530 = vadd.f32 0.0, %v8529
  %v8531 = vpop.f32.mrf.mxu0
  %8532 = vdwg.mxu0
  %v8533 = vadd.f32 %v8395, %v8495
  %v8534 = vadd.f32 %v8396, %v8500
  %v8535 = vadd.f32 %v8397, %v8505
  %v8536 = vadd.f32 %v8398, %v8510
  %v8537 = vadd.f32 %v8399, %v8515
  %v8538 = vadd.f32 %v8400, %v8520
  %v8539 = vadd.f32 %v8401, %v8525
  %v8540 = vadd.f32 %v8402, %v8530
  %s8541 = scalar_lea.vmem [#allocation3], 64
  %v8542 = vld [vmem:[%s8541] sm:$0xff]
  %v8543 = vld [vmem:[%s8541 + $0x10] sm:$0xff]
  %v8544 = vld [vmem:[%s8541 + $0x20] sm:$0xff]
  %v8545 = vld [vmem:[%s8541 + $0x30] sm:$0xff]
  %v8546 = vld [vmem:[%s8541 + $0x40] sm:$0xff]
  %v8547 = vld [vmem:[%s8541 + $0x50] sm:$0xff]
  %v8548 = vld [vmem:[%s8541 + $0x60] sm:$0xff]
  %v8549 = vld [vmem:[%s8541 + $0x70] sm:$0xff]
  %s8550 = scalar_lea.vmem %s3, 2560
  %v8551 = vld [vmem:[%s8550] sm:$0xff]
  %v8552 = vld [vmem:[%s8550 + $0x8] sm:$0xff]
  %v8553 = vld [vmem:[%s8550 + $0x10] sm:$0xff]
  %v8554 = vld [vmem:[%s8550 + $0x18] sm:$0xff]
  %v8555 = vld [vmem:[%s8550 + $0x20] sm:$0xff]
  %v8556 = vld [vmem:[%s8550 + $0x28] sm:$0xff]
  %v8557 = vld [vmem:[%s8550 + $0x30] sm:$0xff]
  %v8558 = vld [vmem:[%s8550 + $0x38] sm:$0xff]
  %v8559 = vld [vmem:[%s8550 + $0x40] sm:$0xff]
  %v8560 = vld [vmem:[%s8550 + $0x48] sm:$0xff]
  %v8561 = vld [vmem:[%s8550 + $0x50] sm:$0xff]
  %v8562 = vld [vmem:[%s8550 + $0x58] sm:$0xff]
  %v8563 = vld [vmem:[%s8550 + $0x60] sm:$0xff]
  %v8564 = vld [vmem:[%s8550 + $0x68] sm:$0xff]
  %v8565 = vld [vmem:[%s8550 + $0x70] sm:$0xff]
  %v8566 = vld [vmem:[%s8550 + $0x78] sm:$0xff]
  %8567 = vmatprep.subr.mxu0 0.0
  %8568 = vmatpush1.msra.mxu0 %v8566
  %8569 = vmatprep.subr.mxu0 0.0
  %8570 = vmatpush1.msra.mxu0 %v8565
  %8571 = vmatprep.subr.mxu0 0.0
  %8572 = vmatpush1.msra.mxu0 %v8564
  %8573 = vmatprep.subr.mxu0 0.0
  %8574 = vmatpush1.msra.mxu0 %v8563
  %8575 = vmatprep.subr.mxu0 0.0
  %8576 = vmatpush1.msra.mxu0 %v8562
  %8577 = vmatprep.subr.mxu0 0.0
  %8578 = vmatpush1.msra.mxu0 %v8561
  %8579 = vmatprep.subr.mxu0 0.0
  %8580 = vmatpush1.msra.mxu0 %v8560
  %8581 = vmatprep.subr.mxu0 0.0
  %8582 = vmatpush1.msra.mxu0 %v8559
  %8583 = vmatprep.subr.mxu0 0.0
  %8584 = vmatpush1.msra.mxu0 %v8558
  %8585 = vmatprep.subr.mxu0 0.0
  %8586 = vmatpush1.msra.mxu0 %v8557
  %8587 = vmatprep.subr.mxu0 0.0
  %8588 = vmatpush1.msra.mxu0 %v8556
  %8589 = vmatprep.subr.mxu0 0.0
  %8590 = vmatpush1.msra.mxu0 %v8555
  %8591 = vmatprep.subr.mxu0 0.0
  %8592 = vmatpush1.msra.mxu0 %v8554
  %8593 = vmatprep.subr.mxu0 0.0
  %8594 = vmatpush1.msra.mxu0 %v8553
  %8595 = vmatprep.subr.mxu0 0.0
  %8596 = vmatpush1.msra.mxu0 %v8552
  %8597 = vmatprep.subr.mxu0 0.0
  %8598 = vmatpush1.msra.mxu0 %v8551
  %8599 = vmatprep.subr.mxu0 0.0
  %8600 = vmatpush2.msra.mxu0 0.0
  %8601 = vmatprep.subr.mxu0 0.0
  %8602 = vmatpush2.msra.mxu0 0.0
  %8603 = vmatprep.subr.mxu0 0.0
  %8604 = vmatpush2.msra.mxu0 0.0
  %8605 = vmatprep.subr.mxu0 0.0
  %8606 = vmatpush2.msra.mxu0 0.0
  %8607 = vmatprep.subr.mxu0 0.0
  %8608 = vmatpush2.msra.mxu0 0.0
  %8609 = vmatprep.subr.mxu0 0.0
  %8610 = vmatpush2.msra.mxu0 0.0
  %8611 = vmatprep.subr.mxu0 0.0
  %8612 = vmatpush2.msra.mxu0 0.0
  %8613 = vmatprep.subr.mxu0 0.0
  %8614 = vmatpush2.msra.mxu0 0.0
  %8615 = vmatprep.subr.mxu0 0.0
  %8616 = vmatpush2.msra.mxu0 0.0
  %8617 = vmatprep.subr.mxu0 0.0
  %8618 = vmatpush2.msra.mxu0 0.0
  %8619 = vmatprep.subr.mxu0 0.0
  %8620 = vmatpush2.msra.mxu0 0.0
  %8621 = vmatprep.subr.mxu0 0.0
  %8622 = vmatpush2.msra.mxu0 0.0
  %8623 = vmatprep.subr.mxu0 0.0
  %8624 = vmatpush2.msra.mxu0 0.0
  %8625 = vmatprep.subr.mxu0 0.0
  %8626 = vmatpush2.msra.mxu0 0.0
  %8627 = vmatprep.subr.mxu0 0.0
  %8628 = vmatpush2.msra.mxu0 0.0
  %8629 = vmatprep.subr.mxu0 0.0
  %8630 = vmatpush2.msra.mxu0 0.0
  %8631 = vmatprep.mubr.f32.mxu0 0.0
  %8632 = vmatmul.mubr.f32.gmra.mxu0 %v8542
  %v8633 = vpop.f32.mrf.mxu0
  %v8634 = vadd.f32 0.0, %v8633
  %v8635 = vpop.f32.mrf.mxu0
  %8636 = vmatprep.mubr.f32.mxu0 0.0
  %8637 = vmatmul.mubr.f32.gmra.mxu0 %v8543
  %v8638 = vpop.f32.mrf.mxu0
  %v8639 = vadd.f32 0.0, %v8638
  %v8640 = vpop.f32.mrf.mxu0
  %8641 = vmatprep.mubr.f32.mxu0 0.0
  %8642 = vmatmul.mubr.f32.gmra.mxu0 %v8544
  %v8643 = vpop.f32.mrf.mxu0
  %v8644 = vadd.f32 0.0, %v8643
  %v8645 = vpop.f32.mrf.mxu0
  %8646 = vmatprep.mubr.f32.mxu0 0.0
  %8647 = vmatmul.mubr.f32.gmra.mxu0 %v8545
  %v8648 = vpop.f32.mrf.mxu0
  %v8649 = vadd.f32 0.0, %v8648
  %v8650 = vpop.f32.mrf.mxu0
  %8651 = vmatprep.mubr.f32.mxu0 0.0
  %8652 = vmatmul.mubr.f32.gmra.mxu0 %v8546
  %v8653 = vpop.f32.mrf.mxu0
  %v8654 = vadd.f32 0.0, %v8653
  %v8655 = vpop.f32.mrf.mxu0
  %8656 = vmatprep.mubr.f32.mxu0 0.0
  %8657 = vmatmul.mubr.f32.gmra.mxu0 %v8547
  %v8658 = vpop.f32.mrf.mxu0
  %v8659 = vadd.f32 0.0, %v8658
  %v8660 = vpop.f32.mrf.mxu0
  %8661 = vmatprep.mubr.f32.mxu0 0.0
  %8662 = vmatmul.mubr.f32.gmra.mxu0 %v8548
  %v8663 = vpop.f32.mrf.mxu0
  %v8664 = vadd.f32 0.0, %v8663
  %v8665 = vpop.f32.mrf.mxu0
  %8666 = vmatprep.mubr.f32.mxu0 0.0
  %8667 = vmatmul.mubr.f32.gmra.mxu0 %v8549
  %v8668 = vpop.f32.mrf.mxu0
  %v8669 = vadd.f32 0.0, %v8668
  %v8670 = vpop.f32.mrf.mxu0
  %8671 = vdwg.mxu0
  %v8672 = vadd.f32 %v8533, %v8634
  %v8673 = vadd.f32 %v8534, %v8639
  %v8674 = vadd.f32 %v8535, %v8644
  %v8675 = vadd.f32 %v8536, %v8649
  %v8676 = vadd.f32 %v8537, %v8654
  %v8677 = vadd.f32 %v8538, %v8659
  %v8678 = vadd.f32 %v8539, %v8664
  %v8679 = vadd.f32 %v8540, %v8669
  %v8680 = vld [vmem:[%s8541 + $0x1] sm:$0xff]
  %v8681 = vld [vmem:[%s8541 + $0x11] sm:$0xff]
  %v8682 = vld [vmem:[%s8541 + $0x21] sm:$0xff]
  %v8683 = vld [vmem:[%s8541 + $0x31] sm:$0xff]
  %v8684 = vld [vmem:[%s8541 + $0x41] sm:$0xff]
  %v8685 = vld [vmem:[%s8541 + $0x51] sm:$0xff]
  %v8686 = vld [vmem:[%s8541 + $0x61] sm:$0xff]
  %v8687 = vld [vmem:[%s8541 + $0x71] sm:$0xff]
  %s8688 = scalar_lea.vmem %s3, 2688
  %v8689 = vld [vmem:[%s8688] sm:$0xff]
  %v8690 = vld [vmem:[%s8688 + $0x8] sm:$0xff]
  %v8691 = vld [vmem:[%s8688 + $0x10] sm:$0xff]
  %v8692 = vld [vmem:[%s8688 + $0x18] sm:$0xff]
  %v8693 = vld [vmem:[%s8688 + $0x20] sm:$0xff]
  %v8694 = vld [vmem:[%s8688 + $0x28] sm:$0xff]
  %v8695 = vld [vmem:[%s8688 + $0x30] sm:$0xff]
  %v8696 = vld [vmem:[%s8688 + $0x38] sm:$0xff]
  %v8697 = vld [vmem:[%s8688 + $0x40] sm:$0xff]
  %v8698 = vld [vmem:[%s8688 + $0x48] sm:$0xff]
  %v8699 = vld [vmem:[%s8688 + $0x50] sm:$0xff]
  %v8700 = vld [vmem:[%s8688 + $0x58] sm:$0xff]
  %v8701 = vld [vmem:[%s8688 + $0x60] sm:$0xff]
  %v8702 = vld [vmem:[%s8688 + $0x68] sm:$0xff]
  %v8703 = vld [vmem:[%s8688 + $0x70] sm:$0xff]
  %v8704 = vld [vmem:[%s8688 + $0x78] sm:$0xff]
  %8705 = vmatprep.subr.mxu0 0.0
  %8706 = vmatpush1.msra.mxu0 %v8704
  %8707 = vmatprep.subr.mxu0 0.0
  %8708 = vmatpush1.msra.mxu0 %v8703
  %8709 = vmatprep.subr.mxu0 0.0
  %8710 = vmatpush1.msra.mxu0 %v8702
  %8711 = vmatprep.subr.mxu0 0.0
  %8712 = vmatpush1.msra.mxu0 %v8701
  %8713 = vmatprep.subr.mxu0 0.0
  %8714 = vmatpush1.msra.mxu0 %v8700
  %8715 = vmatprep.subr.mxu0 0.0
  %8716 = vmatpush1.msra.mxu0 %v8699
  %8717 = vmatprep.subr.mxu0 0.0
  %8718 = vmatpush1.msra.mxu0 %v8698
  %8719 = vmatprep.subr.mxu0 0.0
  %8720 = vmatpush1.msra.mxu0 %v8697
  %8721 = vmatprep.subr.mxu0 0.0
  %8722 = vmatpush1.msra.mxu0 %v8696
  %8723 = vmatprep.subr.mxu0 0.0
  %8724 = vmatpush1.msra.mxu0 %v8695
  %8725 = vmatprep.subr.mxu0 0.0
  %8726 = vmatpush1.msra.mxu0 %v8694
  %8727 = vmatprep.subr.mxu0 0.0
  %8728 = vmatpush1.msra.mxu0 %v8693
  %8729 = vmatprep.subr.mxu0 0.0
  %8730 = vmatpush1.msra.mxu0 %v8692
  %8731 = vmatprep.subr.mxu0 0.0
  %8732 = vmatpush1.msra.mxu0 %v8691
  %8733 = vmatprep.subr.mxu0 0.0
  %8734 = vmatpush1.msra.mxu0 %v8690
  %8735 = vmatprep.subr.mxu0 0.0
  %8736 = vmatpush1.msra.mxu0 %v8689
  %8737 = vmatprep.subr.mxu0 0.0
  %8738 = vmatpush2.msra.mxu0 0.0
  %8739 = vmatprep.subr.mxu0 0.0
  %8740 = vmatpush2.msra.mxu0 0.0
  %8741 = vmatprep.subr.mxu0 0.0
  %8742 = vmatpush2.msra.mxu0 0.0
  %8743 = vmatprep.subr.mxu0 0.0
  %8744 = vmatpush2.msra.mxu0 0.0
  %8745 = vmatprep.subr.mxu0 0.0
  %8746 = vmatpush2.msra.mxu0 0.0
  %8747 = vmatprep.subr.mxu0 0.0
  %8748 = vmatpush2.msra.mxu0 0.0
  %8749 = vmatprep.subr.mxu0 0.0
  %8750 = vmatpush2.msra.mxu0 0.0
  %8751 = vmatprep.subr.mxu0 0.0
  %8752 = vmatpush2.msra.mxu0 0.0
  %8753 = vmatprep.subr.mxu0 0.0
  %8754 = vmatpush2.msra.mxu0 0.0
  %8755 = vmatprep.subr.mxu0 0.0
  %8756 = vmatpush2.msra.mxu0 0.0
  %8757 = vmatprep.subr.mxu0 0.0
  %8758 = vmatpush2.msra.mxu0 0.0
  %8759 = vmatprep.subr.mxu0 0.0
  %8760 = vmatpush2.msra.mxu0 0.0
  %8761 = vmatprep.subr.mxu0 0.0
  %8762 = vmatpush2.msra.mxu0 0.0
  %8763 = vmatprep.subr.mxu0 0.0
  %8764 = vmatpush2.msra.mxu0 0.0
  %8765 = vmatprep.subr.mxu0 0.0
  %8766 = vmatpush2.msra.mxu0 0.0
  %8767 = vmatprep.subr.mxu0 0.0
  %8768 = vmatpush2.msra.mxu0 0.0
  %8769 = vmatprep.mubr.f32.mxu0 0.0
  %8770 = vmatmul.mubr.f32.gmra.mxu0 %v8680
  %v8771 = vpop.f32.mrf.mxu0
  %v8772 = vadd.f32 0.0, %v8771
  %v8773 = vpop.f32.mrf.mxu0
  %8774 = vmatprep.mubr.f32.mxu0 0.0
  %8775 = vmatmul.mubr.f32.gmra.mxu0 %v8681
  %v8776 = vpop.f32.mrf.mxu0
  %v8777 = vadd.f32 0.0, %v8776
  %v8778 = vpop.f32.mrf.mxu0
  %8779 = vmatprep.mubr.f32.mxu0 0.0
  %8780 = vmatmul.mubr.f32.gmra.mxu0 %v8682
  %v8781 = vpop.f32.mrf.mxu0
  %v8782 = vadd.f32 0.0, %v8781
  %v8783 = vpop.f32.mrf.mxu0
  %8784 = vmatprep.mubr.f32.mxu0 0.0
  %8785 = vmatmul.mubr.f32.gmra.mxu0 %v8683
  %v8786 = vpop.f32.mrf.mxu0
  %v8787 = vadd.f32 0.0, %v8786
  %v8788 = vpop.f32.mrf.mxu0
  %8789 = vmatprep.mubr.f32.mxu0 0.0
  %8790 = vmatmul.mubr.f32.gmra.mxu0 %v8684
  %v8791 = vpop.f32.mrf.mxu0
  %v8792 = vadd.f32 0.0, %v8791
  %v8793 = vpop.f32.mrf.mxu0
  %8794 = vmatprep.mubr.f32.mxu0 0.0
  %8795 = vmatmul.mubr.f32.gmra.mxu0 %v8685
  %v8796 = vpop.f32.mrf.mxu0
  %v8797 = vadd.f32 0.0, %v8796
  %v8798 = vpop.f32.mrf.mxu0
  %8799 = vmatprep.mubr.f32.mxu0 0.0
  %8800 = vmatmul.mubr.f32.gmra.mxu0 %v8686
  %v8801 = vpop.f32.mrf.mxu0
  %v8802 = vadd.f32 0.0, %v8801
  %v8803 = vpop.f32.mrf.mxu0
  %8804 = vmatprep.mubr.f32.mxu0 0.0
  %8805 = vmatmul.mubr.f32.gmra.mxu0 %v8687
  %v8806 = vpop.f32.mrf.mxu0
  %v8807 = vadd.f32 0.0, %v8806
  %v8808 = vpop.f32.mrf.mxu0
  %8809 = vdwg.mxu0
  %v8810 = vadd.f32 %v8672, %v8772
  %v8811 = vadd.f32 %v8673, %v8777
  %v8812 = vadd.f32 %v8674, %v8782
  %v8813 = vadd.f32 %v8675, %v8787
  %v8814 = vadd.f32 %v8676, %v8792
  %v8815 = vadd.f32 %v8677, %v8797
  %v8816 = vadd.f32 %v8678, %v8802
  %v8817 = vadd.f32 %v8679, %v8807
  %v8818 = vld [vmem:[%s8541 + $0x2] sm:$0xff]
  %v8819 = vld [vmem:[%s8541 + $0x12] sm:$0xff]
  %v8820 = vld [vmem:[%s8541 + $0x22] sm:$0xff]
  %v8821 = vld [vmem:[%s8541 + $0x32] sm:$0xff]
  %v8822 = vld [vmem:[%s8541 + $0x42] sm:$0xff]
  %v8823 = vld [vmem:[%s8541 + $0x52] sm:$0xff]
  %v8824 = vld [vmem:[%s8541 + $0x62] sm:$0xff]
  %v8825 = vld [vmem:[%s8541 + $0x72] sm:$0xff]
  %s8826 = scalar_lea.vmem %s3, 2816
  %v8827 = vld [vmem:[%s8826] sm:$0xff]
  %v8828 = vld [vmem:[%s8826 + $0x8] sm:$0xff]
  %v8829 = vld [vmem:[%s8826 + $0x10] sm:$0xff]
  %v8830 = vld [vmem:[%s8826 + $0x18] sm:$0xff]
  %v8831 = vld [vmem:[%s8826 + $0x20] sm:$0xff]
  %v8832 = vld [vmem:[%s8826 + $0x28] sm:$0xff]
  %v8833 = vld [vmem:[%s8826 + $0x30] sm:$0xff]
  %v8834 = vld [vmem:[%s8826 + $0x38] sm:$0xff]
  %v8835 = vld [vmem:[%s8826 + $0x40] sm:$0xff]
  %v8836 = vld [vmem:[%s8826 + $0x48] sm:$0xff]
  %v8837 = vld [vmem:[%s8826 + $0x50] sm:$0xff]
  %v8838 = vld [vmem:[%s8826 + $0x58] sm:$0xff]
  %v8839 = vld [vmem:[%s8826 + $0x60] sm:$0xff]
  %v8840 = vld [vmem:[%s8826 + $0x68] sm:$0xff]
  %v8841 = vld [vmem:[%s8826 + $0x70] sm:$0xff]
  %v8842 = vld [vmem:[%s8826 + $0x78] sm:$0xff]
  %8843 = vmatprep.subr.mxu0 0.0
  %8844 = vmatpush1.msra.mxu0 %v8842
  %8845 = vmatprep.subr.mxu0 0.0
  %8846 = vmatpush1.msra.mxu0 %v8841
  %8847 = vmatprep.subr.mxu0 0.0
  %8848 = vmatpush1.msra.mxu0 %v8840
  %8849 = vmatprep.subr.mxu0 0.0
  %8850 = vmatpush1.msra.mxu0 %v8839
  %8851 = vmatprep.subr.mxu0 0.0
  %8852 = vmatpush1.msra.mxu0 %v8838
  %8853 = vmatprep.subr.mxu0 0.0
  %8854 = vmatpush1.msra.mxu0 %v8837
  %8855 = vmatprep.subr.mxu0 0.0
  %8856 = vmatpush1.msra.mxu0 %v8836
  %8857 = vmatprep.subr.mxu0 0.0
  %8858 = vmatpush1.msra.mxu0 %v8835
  %8859 = vmatprep.subr.mxu0 0.0
  %8860 = vmatpush1.msra.mxu0 %v8834
  %8861 = vmatprep.subr.mxu0 0.0
  %8862 = vmatpush1.msra.mxu0 %v8833
  %8863 = vmatprep.subr.mxu0 0.0
  %8864 = vmatpush1.msra.mxu0 %v8832
  %8865 = vmatprep.subr.mxu0 0.0
  %8866 = vmatpush1.msra.mxu0 %v8831
  %8867 = vmatprep.subr.mxu0 0.0
  %8868 = vmatpush1.msra.mxu0 %v8830
  %8869 = vmatprep.subr.mxu0 0.0
  %8870 = vmatpush1.msra.mxu0 %v8829
  %8871 = vmatprep.subr.mxu0 0.0
  %8872 = vmatpush1.msra.mxu0 %v8828
  %8873 = vmatprep.subr.mxu0 0.0
  %8874 = vmatpush1.msra.mxu0 %v8827
  %8875 = vmatprep.subr.mxu0 0.0
  %8876 = vmatpush2.msra.mxu0 0.0
  %8877 = vmatprep.subr.mxu0 0.0
  %8878 = vmatpush2.msra.mxu0 0.0
  %8879 = vmatprep.subr.mxu0 0.0
  %8880 = vmatpush2.msra.mxu0 0.0
  %8881 = vmatprep.subr.mxu0 0.0
  %8882 = vmatpush2.msra.mxu0 0.0
  %8883 = vmatprep.subr.mxu0 0.0
  %8884 = vmatpush2.msra.mxu0 0.0
  %8885 = vmatprep.subr.mxu0 0.0
  %8886 = vmatpush2.msra.mxu0 0.0
  %8887 = vmatprep.subr.mxu0 0.0
  %8888 = vmatpush2.msra.mxu0 0.0
  %8889 = vmatprep.subr.mxu0 0.0
  %8890 = vmatpush2.msra.mxu0 0.0
  %8891 = vmatprep.subr.mxu0 0.0
  %8892 = vmatpush2.msra.mxu0 0.0
  %8893 = vmatprep.subr.mxu0 0.0
  %8894 = vmatpush2.msra.mxu0 0.0
  %8895 = vmatprep.subr.mxu0 0.0
  %8896 = vmatpush2.msra.mxu0 0.0
  %8897 = vmatprep.subr.mxu0 0.0
  %8898 = vmatpush2.msra.mxu0 0.0
  %8899 = vmatprep.subr.mxu0 0.0
  %8900 = vmatpush2.msra.mxu0 0.0
  %8901 = vmatprep.subr.mxu0 0.0
  %8902 = vmatpush2.msra.mxu0 0.0
  %8903 = vmatprep.subr.mxu0 0.0
  %8904 = vmatpush2.msra.mxu0 0.0
  %8905 = vmatprep.subr.mxu0 0.0
  %8906 = vmatpush2.msra.mxu0 0.0
  %8907 = vmatprep.mubr.f32.mxu0 0.0
  %8908 = vmatmul.mubr.f32.gmra.mxu0 %v8818
  %v8909 = vpop.f32.mrf.mxu0
  %v8910 = vadd.f32 0.0, %v8909
  %v8911 = vpop.f32.mrf.mxu0
  %8912 = vmatprep.mubr.f32.mxu0 0.0
  %8913 = vmatmul.mubr.f32.gmra.mxu0 %v8819
  %v8914 = vpop.f32.mrf.mxu0
  %v8915 = vadd.f32 0.0, %v8914
  %v8916 = vpop.f32.mrf.mxu0
  %8917 = vmatprep.mubr.f32.mxu0 0.0
  %8918 = vmatmul.mubr.f32.gmra.mxu0 %v8820
  %v8919 = vpop.f32.mrf.mxu0
  %v8920 = vadd.f32 0.0, %v8919
  %v8921 = vpop.f32.mrf.mxu0
  %8922 = vmatprep.mubr.f32.mxu0 0.0
  %8923 = vmatmul.mubr.f32.gmra.mxu0 %v8821
  %v8924 = vpop.f32.mrf.mxu0
  %v8925 = vadd.f32 0.0, %v8924
  %v8926 = vpop.f32.mrf.mxu0
  %8927 = vmatprep.mubr.f32.mxu0 0.0
  %8928 = vmatmul.mubr.f32.gmra.mxu0 %v8822
  %v8929 = vpop.f32.mrf.mxu0
  %v8930 = vadd.f32 0.0, %v8929
  %v8931 = vpop.f32.mrf.mxu0
  %8932 = vmatprep.mubr.f32.mxu0 0.0
  %8933 = vmatmul.mubr.f32.gmra.mxu0 %v8823
  %v8934 = vpop.f32.mrf.mxu0
  %v8935 = vadd.f32 0.0, %v8934
  %v8936 = vpop.f32.mrf.mxu0
  %8937 = vmatprep.mubr.f32.mxu0 0.0
  %8938 = vmatmul.mubr.f32.gmra.mxu0 %v8824
  %v8939 = vpop.f32.mrf.mxu0
  %v8940 = vadd.f32 0.0, %v8939
  %v8941 = vpop.f32.mrf.mxu0
  %8942 = vmatprep.mubr.f32.mxu0 0.0
  %8943 = vmatmul.mubr.f32.gmra.mxu0 %v8825
  %v8944 = vpop.f32.mrf.mxu0
  %v8945 = vadd.f32 0.0, %v8944
  %v8946 = vpop.f32.mrf.mxu0
  %8947 = vdwg.mxu0
  %v8948 = vadd.f32 %v8810, %v8910
  %v8949 = vadd.f32 %v8811, %v8915
  %v8950 = vadd.f32 %v8812, %v8920
  %v8951 = vadd.f32 %v8813, %v8925
  %v8952 = vadd.f32 %v8814, %v8930
  %v8953 = vadd.f32 %v8815, %v8935
  %v8954 = vadd.f32 %v8816, %v8940
  %v8955 = vadd.f32 %v8817, %v8945
  %v8956 = vld [vmem:[%s8541 + $0x3] sm:$0xff]
  %v8957 = vld [vmem:[%s8541 + $0x13] sm:$0xff]
  %v8958 = vld [vmem:[%s8541 + $0x23] sm:$0xff]
  %v8959 = vld [vmem:[%s8541 + $0x33] sm:$0xff]
  %v8960 = vld [vmem:[%s8541 + $0x43] sm:$0xff]
  %v8961 = vld [vmem:[%s8541 + $0x53] sm:$0xff]
  %v8962 = vld [vmem:[%s8541 + $0x63] sm:$0xff]
  %v8963 = vld [vmem:[%s8541 + $0x73] sm:$0xff]
  %s8964 = scalar_lea.vmem %s3, 2944
  %v8965 = vld [vmem:[%s8964] sm:$0xff]
  %v8966 = vld [vmem:[%s8964 + $0x8] sm:$0xff]
  %v8967 = vld [vmem:[%s8964 + $0x10] sm:$0xff]
  %v8968 = vld [vmem:[%s8964 + $0x18] sm:$0xff]
  %v8969 = vld [vmem:[%s8964 + $0x20] sm:$0xff]
  %v8970 = vld [vmem:[%s8964 + $0x28] sm:$0xff]
  %v8971 = vld [vmem:[%s8964 + $0x30] sm:$0xff]
  %v8972 = vld [vmem:[%s8964 + $0x38] sm:$0xff]
  %v8973 = vld [vmem:[%s8964 + $0x40] sm:$0xff]
  %v8974 = vld [vmem:[%s8964 + $0x48] sm:$0xff]
  %v8975 = vld [vmem:[%s8964 + $0x50] sm:$0xff]
  %v8976 = vld [vmem:[%s8964 + $0x58] sm:$0xff]
  %v8977 = vld [vmem:[%s8964 + $0x60] sm:$0xff]
  %v8978 = vld [vmem:[%s8964 + $0x68] sm:$0xff]
  %v8979 = vld [vmem:[%s8964 + $0x70] sm:$0xff]
  %v8980 = vld [vmem:[%s8964 + $0x78] sm:$0xff]
  %8981 = vmatprep.subr.mxu0 0.0
  %8982 = vmatpush1.msra.mxu0 %v8980
  %8983 = vmatprep.subr.mxu0 0.0
  %8984 = vmatpush1.msra.mxu0 %v8979
  %8985 = vmatprep.subr.mxu0 0.0
  %8986 = vmatpush1.msra.mxu0 %v8978
  %8987 = vmatprep.subr.mxu0 0.0
  %8988 = vmatpush1.msra.mxu0 %v8977
  %8989 = vmatprep.subr.mxu0 0.0
  %8990 = vmatpush1.msra.mxu0 %v8976
  %8991 = vmatprep.subr.mxu0 0.0
  %8992 = vmatpush1.msra.mxu0 %v8975
  %8993 = vmatprep.subr.mxu0 0.0
  %8994 = vmatpush1.msra.mxu0 %v8974
  %8995 = vmatprep.subr.mxu0 0.0
  %8996 = vmatpush1.msra.mxu0 %v8973
  %8997 = vmatprep.subr.mxu0 0.0
  %8998 = vmatpush1.msra.mxu0 %v8972
  %8999 = vmatprep.subr.mxu0 0.0
  %9000 = vmatpush1.msra.mxu0 %v8971
  %9001 = vmatprep.subr.mxu0 0.0
  %9002 = vmatpush1.msra.mxu0 %v8970
  %9003 = vmatprep.subr.mxu0 0.0
  %9004 = vmatpush1.msra.mxu0 %v8969
  %9005 = vmatprep.subr.mxu0 0.0
  %9006 = vmatpush1.msra.mxu0 %v8968
  %9007 = vmatprep.subr.mxu0 0.0
  %9008 = vmatpush1.msra.mxu0 %v8967
  %9009 = vmatprep.subr.mxu0 0.0
  %9010 = vmatpush1.msra.mxu0 %v8966
  %9011 = vmatprep.subr.mxu0 0.0
  %9012 = vmatpush1.msra.mxu0 %v8965
  %9013 = vmatprep.subr.mxu0 0.0
  %9014 = vmatpush2.msra.mxu0 0.0
  %9015 = vmatprep.subr.mxu0 0.0
  %9016 = vmatpush2.msra.mxu0 0.0
  %9017 = vmatprep.subr.mxu0 0.0
  %9018 = vmatpush2.msra.mxu0 0.0
  %9019 = vmatprep.subr.mxu0 0.0
  %9020 = vmatpush2.msra.mxu0 0.0
  %9021 = vmatprep.subr.mxu0 0.0
  %9022 = vmatpush2.msra.mxu0 0.0
  %9023 = vmatprep.subr.mxu0 0.0
  %9024 = vmatpush2.msra.mxu0 0.0
  %9025 = vmatprep.subr.mxu0 0.0
  %9026 = vmatpush2.msra.mxu0 0.0
  %9027 = vmatprep.subr.mxu0 0.0
  %9028 = vmatpush2.msra.mxu0 0.0
  %9029 = vmatprep.subr.mxu0 0.0
  %9030 = vmatpush2.msra.mxu0 0.0
  %9031 = vmatprep.subr.mxu0 0.0
  %9032 = vmatpush2.msra.mxu0 0.0
  %9033 = vmatprep.subr.mxu0 0.0
  %9034 = vmatpush2.msra.mxu0 0.0
  %9035 = vmatprep.subr.mxu0 0.0
  %9036 = vmatpush2.msra.mxu0 0.0
  %9037 = vmatprep.subr.mxu0 0.0
  %9038 = vmatpush2.msra.mxu0 0.0
  %9039 = vmatprep.subr.mxu0 0.0
  %9040 = vmatpush2.msra.mxu0 0.0
  %9041 = vmatprep.subr.mxu0 0.0
  %9042 = vmatpush2.msra.mxu0 0.0
  %9043 = vmatprep.subr.mxu0 0.0
  %9044 = vmatpush2.msra.mxu0 0.0
  %9045 = vmatprep.mubr.f32.mxu0 0.0
  %9046 = vmatmul.mubr.f32.gmra.mxu0 %v8956
  %v9047 = vpop.f32.mrf.mxu0
  %v9048 = vadd.f32 0.0, %v9047
  %v9049 = vpop.f32.mrf.mxu0
  %9050 = vmatprep.mubr.f32.mxu0 0.0
  %9051 = vmatmul.mubr.f32.gmra.mxu0 %v8957
  %v9052 = vpop.f32.mrf.mxu0
  %v9053 = vadd.f32 0.0, %v9052
  %v9054 = vpop.f32.mrf.mxu0
  %9055 = vmatprep.mubr.f32.mxu0 0.0
  %9056 = vmatmul.mubr.f32.gmra.mxu0 %v8958
  %v9057 = vpop.f32.mrf.mxu0
  %v9058 = vadd.f32 0.0, %v9057
  %v9059 = vpop.f32.mrf.mxu0
  %9060 = vmatprep.mubr.f32.mxu0 0.0
  %9061 = vmatmul.mubr.f32.gmra.mxu0 %v8959
  %v9062 = vpop.f32.mrf.mxu0
  %v9063 = vadd.f32 0.0, %v9062
  %v9064 = vpop.f32.mrf.mxu0
  %9065 = vmatprep.mubr.f32.mxu0 0.0
  %9066 = vmatmul.mubr.f32.gmra.mxu0 %v8960
  %v9067 = vpop.f32.mrf.mxu0
  %v9068 = vadd.f32 0.0, %v9067
  %v9069 = vpop.f32.mrf.mxu0
  %9070 = vmatprep.mubr.f32.mxu0 0.0
  %9071 = vmatmul.mubr.f32.gmra.mxu0 %v8961
  %v9072 = vpop.f32.mrf.mxu0
  %v9073 = vadd.f32 0.0, %v9072
  %v9074 = vpop.f32.mrf.mxu0
  %9075 = vmatprep.mubr.f32.mxu0 0.0
  %9076 = vmatmul.mubr.f32.gmra.mxu0 %v8962
  %v9077 = vpop.f32.mrf.mxu0
  %v9078 = vadd.f32 0.0, %v9077
  %v9079 = vpop.f32.mrf.mxu0
  %9080 = vmatprep.mubr.f32.mxu0 0.0
  %9081 = vmatmul.mubr.f32.gmra.mxu0 %v8963
  %v9082 = vpop.f32.mrf.mxu0
  %v9083 = vadd.f32 0.0, %v9082
  %v9084 = vpop.f32.mrf.mxu0
  %9085 = vdwg.mxu0
  %v9086 = vadd.f32 %v8948, %v9048
  %v9087 = vadd.f32 %v8949, %v9053
  %v9088 = vadd.f32 %v8950, %v9058
  %v9089 = vadd.f32 %v8951, %v9063
  %v9090 = vadd.f32 %v8952, %v9068
  %v9091 = vadd.f32 %v8953, %v9073
  %v9092 = vadd.f32 %v8954, %v9078
  %v9093 = vadd.f32 %v8955, %v9083
  %v9094 = vld [vmem:[%s8541 + $0x4] sm:$0xff]
  %v9095 = vld [vmem:[%s8541 + $0x14] sm:$0xff]
  %v9096 = vld [vmem:[%s8541 + $0x24] sm:$0xff]
  %v9097 = vld [vmem:[%s8541 + $0x34] sm:$0xff]
  %v9098 = vld [vmem:[%s8541 + $0x44] sm:$0xff]
  %v9099 = vld [vmem:[%s8541 + $0x54] sm:$0xff]
  %v9100 = vld [vmem:[%s8541 + $0x64] sm:$0xff]
  %v9101 = vld [vmem:[%s8541 + $0x74] sm:$0xff]
  %s9102 = scalar_lea.vmem %s3, 3072
  %v9103 = vld [vmem:[%s9102] sm:$0xff]
  %v9104 = vld [vmem:[%s9102 + $0x8] sm:$0xff]
  %v9105 = vld [vmem:[%s9102 + $0x10] sm:$0xff]
  %v9106 = vld [vmem:[%s9102 + $0x18] sm:$0xff]
  %v9107 = vld [vmem:[%s9102 + $0x20] sm:$0xff]
  %v9108 = vld [vmem:[%s9102 + $0x28] sm:$0xff]
  %v9109 = vld [vmem:[%s9102 + $0x30] sm:$0xff]
  %v9110 = vld [vmem:[%s9102 + $0x38] sm:$0xff]
  %v9111 = vld [vmem:[%s9102 + $0x40] sm:$0xff]
  %v9112 = vld [vmem:[%s9102 + $0x48] sm:$0xff]
  %v9113 = vld [vmem:[%s9102 + $0x50] sm:$0xff]
  %v9114 = vld [vmem:[%s9102 + $0x58] sm:$0xff]
  %v9115 = vld [vmem:[%s9102 + $0x60] sm:$0xff]
  %v9116 = vld [vmem:[%s9102 + $0x68] sm:$0xff]
  %v9117 = vld [vmem:[%s9102 + $0x70] sm:$0xff]
  %v9118 = vld [vmem:[%s9102 + $0x78] sm:$0xff]
  %9119 = vmatprep.subr.mxu0 0.0
  %9120 = vmatpush1.msra.mxu0 %v9118
  %9121 = vmatprep.subr.mxu0 0.0
  %9122 = vmatpush1.msra.mxu0 %v9117
  %9123 = vmatprep.subr.mxu0 0.0
  %9124 = vmatpush1.msra.mxu0 %v9116
  %9125 = vmatprep.subr.mxu0 0.0
  %9126 = vmatpush1.msra.mxu0 %v9115
  %9127 = vmatprep.subr.mxu0 0.0
  %9128 = vmatpush1.msra.mxu0 %v9114
  %9129 = vmatprep.subr.mxu0 0.0
  %9130 = vmatpush1.msra.mxu0 %v9113
  %9131 = vmatprep.subr.mxu0 0.0
  %9132 = vmatpush1.msra.mxu0 %v9112
  %9133 = vmatprep.subr.mxu0 0.0
  %9134 = vmatpush1.msra.mxu0 %v9111
  %9135 = vmatprep.subr.mxu0 0.0
  %9136 = vmatpush1.msra.mxu0 %v9110
  %9137 = vmatprep.subr.mxu0 0.0
  %9138 = vmatpush1.msra.mxu0 %v9109
  %9139 = vmatprep.subr.mxu0 0.0
  %9140 = vmatpush1.msra.mxu0 %v9108
  %9141 = vmatprep.subr.mxu0 0.0
  %9142 = vmatpush1.msra.mxu0 %v9107
  %9143 = vmatprep.subr.mxu0 0.0
  %9144 = vmatpush1.msra.mxu0 %v9106
  %9145 = vmatprep.subr.mxu0 0.0
  %9146 = vmatpush1.msra.mxu0 %v9105
  %9147 = vmatprep.subr.mxu0 0.0
  %9148 = vmatpush1.msra.mxu0 %v9104
  %9149 = vmatprep.subr.mxu0 0.0
  %9150 = vmatpush1.msra.mxu0 %v9103
  %9151 = vmatprep.subr.mxu0 0.0
  %9152 = vmatpush2.msra.mxu0 0.0
  %9153 = vmatprep.subr.mxu0 0.0
  %9154 = vmatpush2.msra.mxu0 0.0
  %9155 = vmatprep.subr.mxu0 0.0
  %9156 = vmatpush2.msra.mxu0 0.0
  %9157 = vmatprep.subr.mxu0 0.0
  %9158 = vmatpush2.msra.mxu0 0.0
  %9159 = vmatprep.subr.mxu0 0.0
  %9160 = vmatpush2.msra.mxu0 0.0
  %9161 = vmatprep.subr.mxu0 0.0
  %9162 = vmatpush2.msra.mxu0 0.0
  %9163 = vmatprep.subr.mxu0 0.0
  %9164 = vmatpush2.msra.mxu0 0.0
  %9165 = vmatprep.subr.mxu0 0.0
  %9166 = vmatpush2.msra.mxu0 0.0
  %9167 = vmatprep.subr.mxu0 0.0
  %9168 = vmatpush2.msra.mxu0 0.0
  %9169 = vmatprep.subr.mxu0 0.0
  %9170 = vmatpush2.msra.mxu0 0.0
  %9171 = vmatprep.subr.mxu0 0.0
  %9172 = vmatpush2.msra.mxu0 0.0
  %9173 = vmatprep.subr.mxu0 0.0
  %9174 = vmatpush2.msra.mxu0 0.0
  %9175 = vmatprep.subr.mxu0 0.0
  %9176 = vmatpush2.msra.mxu0 0.0
  %9177 = vmatprep.subr.mxu0 0.0
  %9178 = vmatpush2.msra.mxu0 0.0
  %9179 = vmatprep.subr.mxu0 0.0
  %9180 = vmatpush2.msra.mxu0 0.0
  %9181 = vmatprep.subr.mxu0 0.0
  %9182 = vmatpush2.msra.mxu0 0.0
  %9183 = vmatprep.mubr.f32.mxu0 0.0
  %9184 = vmatmul.mubr.f32.gmra.mxu0 %v9094
  %v9185 = vpop.f32.mrf.mxu0
  %v9186 = vadd.f32 0.0, %v9185
  %v9187 = vpop.f32.mrf.mxu0
  %9188 = vmatprep.mubr.f32.mxu0 0.0
  %9189 = vmatmul.mubr.f32.gmra.mxu0 %v9095
  %v9190 = vpop.f32.mrf.mxu0
  %v9191 = vadd.f32 0.0, %v9190
  %v9192 = vpop.f32.mrf.mxu0
  %9193 = vmatprep.mubr.f32.mxu0 0.0
  %9194 = vmatmul.mubr.f32.gmra.mxu0 %v9096
  %v9195 = vpop.f32.mrf.mxu0
  %v9196 = vadd.f32 0.0, %v9195
  %v9197 = vpop.f32.mrf.mxu0
  %9198 = vmatprep.mubr.f32.mxu0 0.0
  %9199 = vmatmul.mubr.f32.gmra.mxu0 %v9097
  %v9200 = vpop.f32.mrf.mxu0
  %v9201 = vadd.f32 0.0, %v9200
  %v9202 = vpop.f32.mrf.mxu0
  %9203 = vmatprep.mubr.f32.mxu0 0.0
  %9204 = vmatmul.mubr.f32.gmra.mxu0 %v9098
  %v9205 = vpop.f32.mrf.mxu0
  %v9206 = vadd.f32 0.0, %v9205
  %v9207 = vpop.f32.mrf.mxu0
  %9208 = vmatprep.mubr.f32.mxu0 0.0
  %9209 = vmatmul.mubr.f32.gmra.mxu0 %v9099
  %v9210 = vpop.f32.mrf.mxu0
  %v9211 = vadd.f32 0.0, %v9210
  %v9212 = vpop.f32.mrf.mxu0
  %9213 = vmatprep.mubr.f32.mxu0 0.0
  %9214 = vmatmul.mubr.f32.gmra.mxu0 %v9100
  %v9215 = vpop.f32.mrf.mxu0
  %v9216 = vadd.f32 0.0, %v9215
  %v9217 = vpop.f32.mrf.mxu0
  %9218 = vmatprep.mubr.f32.mxu0 0.0
  %9219 = vmatmul.mubr.f32.gmra.mxu0 %v9101
  %v9220 = vpop.f32.mrf.mxu0
  %v9221 = vadd.f32 0.0, %v9220
  %v9222 = vpop.f32.mrf.mxu0
  %9223 = vdwg.mxu0
  %v9224 = vadd.f32 %v9086, %v9186
  %v9225 = vadd.f32 %v9087, %v9191
  %v9226 = vadd.f32 %v9088, %v9196
  %v9227 = vadd.f32 %v9089, %v9201
  %v9228 = vadd.f32 %v9090, %v9206
  %v9229 = vadd.f32 %v9091, %v9211
  %v9230 = vadd.f32 %v9092, %v9216
  %v9231 = vadd.f32 %v9093, %v9221
  %v9232 = vld [vmem:[%s4] sm:$0x1]
  %v9234 = vlaneseq
  %v9235 = vshrl.u32 %v9234, 7
  %v9236 = vsub.s32 0, %v9235
  %v9237 = vrot.slane %v9232, %v9236
  %v9239 = vadd.f32 %v9224, %v9237
  %v9240 = vadd.f32 %v9225, %v9237
  %v9241 = vadd.f32 %v9226, %v9237
  %v9242 = vadd.f32 %v9227, %v9237
  %v9243 = vadd.f32 %v9228, %v9237
  %v9244 = vadd.f32 %v9229, %v9237
  %v9245 = vadd.f32 %v9230, %v9237
  %v9246 = vadd.f32 %v9231, %v9237
  %v9247 = vmax.f32 %v9239, %v9240
  %v9248 = vmax.f32 %v9241, %v9242
  %v9249 = vmax.f32 %v9243, %v9244
  %v9250 = vmax.f32 %v9245, %v9246
  %9251 = vst [vmem:[#allocation4] sm:$0xff] %v9247
  %9252 = vst [vmem:[#allocation4 + $0x8] sm:$0xff] %v9248
  %9253 = vst [vmem:[#allocation4 + $0x10] sm:$0xff] %v9249
  %9254 = vst [vmem:[#allocation4 + $0x18] sm:$0xff] %v9250
  %v9255 = vld [vmem:[#allocation4] ss:$2 sm:$0xf]
  %s9256 = scalar_lea.vmem [#allocation4], 8
  %v9257 = vld [vmem:[%s9256] ss:$2 sm:$0xf]
  %s9258 = scalar_lea.vmem [#allocation4], 16
  %v9259 = vld [vmem:[%s9258] ss:$2 sm:$0xf]
  %s9260 = scalar_lea.vmem [#allocation4], 24
  %v9261 = vld [vmem:[%s9260] ss:$2 sm:$0xf]
  %s9262 = scalar_lea.vmem [#allocation4], 1
  %v9263 = vld [vmem:[%s9262] ss:$2 sm:$0xf]
  %s9264 = scalar_lea.vmem [#allocation4], 9
  %v9265 = vld [vmem:[%s9264] ss:$2 sm:$0xf]
  %s9266 = scalar_lea.vmem [#allocation4], 17
  %v9267 = vld [vmem:[%s9266] ss:$2 sm:$0xf]
  %s9268 = scalar_lea.vmem [#allocation4], 25
  %v9269 = vld [vmem:[%s9268] ss:$2 sm:$0xf]
  %v9270 = vmax.f32 %v9255, %v9263
  %v9271 = vmax.f32 %v9257, %v9265
  %v9272 = vmax.f32 %v9259, %v9267
  %v9273 = vmax.f32 %v9261, %v9269
  %v9274 = vmax.f32 %v9270, 0.0
  %v9275 = vmax.f32 %v9271, 0.0
  %v9276 = vmax.f32 %v9272, 0.0
  %v9277 = vmax.f32 %v9273, 0.0
  %9278 = vst [vmem:[%s5] sm:$0xf] %v9274
  %9279 = vst [vmem:[%s5 + $0x4] sm:$0xf] %v9275
  %9280 = vst [vmem:[%s5 + $0x8] sm:$0xf] %v9276
  %9281 = vst [vmem:[%s5 + $0xc] sm:$0xf] %v9277
  // Predicated region
  $region22: #{net_forward.2} parent=0 // pred_check
    _
  $region23: #{net_forward.2} parent=0 // pred_check_branch
    %9283 = sbr.rel (0) target = $region25
  $region24: #{net_forward.2} parent=0 // pred_region
    _
  $region25: #{net_forward.2} parent=0 // pred_fallthru
    _
  // Predicated region
  $region26: #{net_forward.2} parent=0 // pred_check
    _
  $region27: #{net_forward.2} parent=0 // pred_check_branch
    %9285 = sbr.rel (0) target = $region29
  $region28: #{net_forward.2} parent=0 // pred_region
    _
  $region29: #{net_forward.2} parent=0 // pred_fallthru
    _

</llo_original>
